<compile_context>
chip_gen: v7x
topology: tpu7x:2x2x1
jax: 0.10.0
libtpu: 0.0.40
codegen_flags: <defaults>
</compile_context>

<pallas_src>
import functools
import math

import jax
import jax.numpy as jnp
from jax.experimental import pallas as pl
from jax.experimental.pallas import tpu as pltpu

F32 = jnp.float32
BF16 = jnp.bfloat16


def _tpu_defaults():
    """Generation-specific tiling / VMEM budget (v5e/v6e: 128 MiB, v7x: 64 MiB)."""
    vmem_cap = 64 * 1024 * 1024
    try:
        vmem_cap = int(pltpu.get_tpu_info().vmem_capacity_bytes)
    except Exception:
        pass
    if vmem_cap >= 96 * 1024 * 1024:           # v5e / v6e
        return dict(vmem_limit=100 * 1024 * 1024, tm=1024, tn=768, tk=1536)
    # v7x (or unknown): stay conservative.
    return dict(vmem_limit=44 * 1024 * 1024, tm=512, tn=512, tk=1024)


CFG = _tpu_defaults()


def _tile(dim, target, align):
    """Largest tile <= target that divides dim and is a multiple of align.
    Falls back to the full dim (always legal) if nothing divides."""
    if dim <= target:
        return dim
    t = (target // align) * align
    while t >= align:
        if dim % t == 0:
            return t
        t -= align
    return dim


def _head_group(nh, dh):
    """Heads per flash-attention grid step: lane-dense (>=128) output blocks."""
    divs = [d for d in range(1, nh + 1) if nh % d == 0]
    ok = [d for d in divs if (d * dh) % 128 == 0]
    pref = [d for d in ok if d * dh <= 256]
    if pref:
        return max(pref)
    if ok:
        return min(ok)
    return nh


# --------------------------------------------------------------------------
# Dense matmul kernels (bf16 MXU, f32 accumulation, fused epilogues, bf16 out)
# --------------------------------------------------------------------------
def _matmul_kernel(x_ref, w_ref, b_ref, o_ref, acc_ref, *, act):
    @pl.when(pl.program_id(2) == 0)
    def _():
        acc_ref[...] = jnp.zeros(acc_ref.shape, acc_ref.dtype)

    acc_ref[...] += jnp.dot(x_ref[...].astype(BF16), w_ref[...],
                            preferred_element_type=F32)

    @pl.when(pl.program_id(2) == pl.num_programs(2) - 1)
    def _():
        y = acc_ref[...] + b_ref[...]
        if act == "gelu":
            # TODO(synk): HF BERT uses exact erf-GELU; tanh approximation used here.
            y = 0.5 * y * (1.0 + jnp.tanh(0.7978845608028654 * (y + 0.044715 * y * y * y)))
        o_ref[...] = y.astype(o_ref.dtype)


def dense(x, w, b, act=None):
    m, k = x.shape
    n = w.shape[1]
    tm = _tile(m, CFG["tm"], 8)
    tn = _tile(n, CFG["tn"], 256)
    tk = _tile(k, CFG["tk"], 128)
    grid = (m // tm, n // tn, k // tk)
    return pl.pallas_call(
        functools.partial(_matmul_kernel, act=act),
        out_shape=jax.ShapeDtypeStruct((m, n), BF16),
        grid=grid,
        in_specs=[pl.BlockSpec((tm, tk), lambda i, j, kk: (i, kk)),
                  pl.BlockSpec((tk, tn), lambda i, j, kk: (kk, j)),
                  pl.BlockSpec((1, tn), lambda i, j, kk: (0, j))],
        out_specs=pl.BlockSpec((tm, tn), lambda i, j, kk: (i, j)),
        scratch_shapes=[pltpu.VMEM((tm, tn), F32)],
        compiler_params=pltpu.CompilerParams(
            dimension_semantics=("parallel", "parallel", "arbitrary"),
            vmem_limit_bytes=CFG["vmem_limit"]),
    )(x, w, b.reshape(1, n))


def _matmul_res_ln_kernel(x_ref, w_ref, b_ref, res_ref, g_ref, be_ref,
                          o_ref, acc_ref, *, eps):
    @pl.when(pl.program_id(1) == 0)
    def _():
        acc_ref[...] = jnp.zeros(acc_ref.shape, acc_ref.dtype)

    acc_ref[...] += jnp.dot(x_ref[...].astype(BF16), w_ref[...],
                            preferred_element_type=F32)

    @pl.when(pl.program_id(1) == pl.num_programs(1) - 1)
    def _():
        y = acc_ref[...] + b_ref[...] + res_ref[...].astype(F32)
        mu = jnp.mean(y, axis=-1, keepdims=True)
        yc = y - mu
        var = jnp.mean(yc * yc, axis=-1, keepdims=True)
        o_ref[...] = (yc * jax.lax.rsqrt(var + eps) * g_ref[...] + be_ref[...]
                      ).astype(o_ref.dtype)


def dense_res_ln(x, w, b, res, gamma, beta, eps=1e-12):
    """out = LayerNorm(x @ w + b + res).  N is not tiled (LN needs full rows)."""
    m, k = x.shape
    n = w.shape[1]
    tm = _tile(m, CFG["tm"], 8)
    tk = _tile(k, CFG["tk"], 128)
    grid = (m // tm, k // tk)
    return pl.pallas_call(
        functools.partial(_matmul_res_ln_kernel, eps=eps),
        out_shape=jax.ShapeDtypeStruct((m, n), BF16),
        grid=grid,
        in_specs=[pl.BlockSpec((tm, tk), lambda i, kk: (i, kk)),
                  pl.BlockSpec((tk, n), lambda i, kk: (kk, 0)),
                  pl.BlockSpec((1, n), lambda i, kk: (0, 0)),
                  pl.BlockSpec((tm, n), lambda i, kk: (i, 0)),
                  pl.BlockSpec((1, n), lambda i, kk: (0, 0)),
                  pl.BlockSpec((1, n), lambda i, kk: (0, 0))],
        out_specs=pl.BlockSpec((tm, n), lambda i, kk: (i, 0)),
        scratch_shapes=[pltpu.VMEM((tm, n), F32)],
        compiler_params=pltpu.CompilerParams(
            dimension_semantics=("parallel", "arbitrary"),
            vmem_limit_bytes=CFG["vmem_limit"]),
    )(x, w, b.reshape(1, n), res, gamma.reshape(1, n), beta.reshape(1, n))


# --------------------------------------------------------------------------
# Plain LayerNorm (embedding LN — no residual)
# --------------------------------------------------------------------------
def _ln_kernel(x_ref, g_ref, b_ref, o_ref, *, eps):
    x = x_ref[...].astype(F32)
    mu = jnp.mean(x, axis=-1, keepdims=True)
    xc = x - mu
    var = jnp.mean(xc * xc, axis=-1, keepdims=True)
    o_ref[...] = (xc * jax.lax.rsqrt(var + eps) * g_ref[...] + b_ref[...]
                  ).astype(o_ref.dtype)


def layernorm(x, gamma, beta, eps=1e-12):
    m, n = x.shape
    tm = _tile(m, CFG["tm"], 8)
    return pl.pallas_call(
        functools.partial(_ln_kernel, eps=eps),
        out_shape=jax.ShapeDtypeStruct((m, n), BF16),
        grid=(m // tm,),
        in_specs=[pl.BlockSpec((tm, n), lambda i: (i, 0)),
                  pl.BlockSpec((1, n), lambda i: (0, 0)),
                  pl.BlockSpec((1, n), lambda i: (0, 0))],
        out_specs=pl.BlockSpec((tm, n), lambda i: (i, 0)),
        compiler_params=pltpu.CompilerParams(
            dimension_semantics=("parallel",),
            vmem_limit_bytes=CFG["vmem_limit"]),
    )(x, gamma.reshape(1, n), beta.reshape(1, n))


# --------------------------------------------------------------------------
# Flash-style attention, reading Q/K/V directly from the fused (B, S, 3H)
# QKV projection (column order [Q heads | K heads | V heads]) and writing the
# context straight into a (B, S, H) slab.  hg heads are processed per grid
# step so stores are lane-dense (hg*dh >= 128 when possible).
# --------------------------------------------------------------------------
def _flash_kernel(q_ref, k_ref, v_ref, bias_ref, o_ref, m_sc, l_sc, acc_sc,
                  *, scale, hg, dh):
    ki = pl.program_id(3)

    @pl.when(ki == 0)
    def _():
        m_sc[...] = jnp.full(m_sc.shape, -jnp.inf, m_sc.dtype)
        l_sc[...] = jnp.zeros(l_sc.shape, l_sc.dtype)
        acc_sc[...] = jnp.zeros(acc_sc.shape, acc_sc.dtype)

    bias = bias_ref[0]                              # (1, tkv) f32, broadcast over q rows

    for h in range(hg):
        sl = slice(h * dh, (h + 1) * dh)
        q = q_ref[0, :, sl]                         # (tq, dh)  bf16
        k = k_ref[0, :, sl]                         # (tkv, dh) bf16
        v = v_ref[0, :, sl]                         # (tkv, dh) bf16
        s = jax.lax.dot_general(q, k, (((1,), (1,)), ((), ())),
                                preferred_element_type=F32) * scale + bias
        m_prev = m_sc[h]                            # (tq, 1)
        m_new = jnp.maximum(m_prev, jnp.max(s, axis=-1, keepdims=True))
        alpha = jnp.exp(m_prev - m_new)
        p = jnp.exp(s - m_new)
        l_sc[h] = alpha * l_sc[h] + jnp.sum(p, axis=-1, keepdims=True)
        acc_sc[h] = alpha * acc_sc[h] + jnp.dot(p.astype(BF16), v,
                                                preferred_element_type=F32)
        m_sc[h] = m_new

    @pl.when(ki == pl.num_programs(3) - 1)
    def _():
        cols = [acc_sc[h] * pl.reciprocal(l_sc[h], approx=False) for h in range(hg)]
        o_ref[0] = jnp.concatenate(cols, axis=-1).astype(o_ref.dtype)


def flash_attention(qkv, bias, *, nh, dh, scale, tq_target=256, tkv_target=256):
    B, S, threeH = qkv.shape
    H = nh * dh
    hg = _head_group(nh, dh)
    nhg = nh // hg
    gdh = hg * dh
    assert gdh % 128 == 0 or gdh == threeH, (
        "head-group width must be lane-aligned (multiple of 128) for direct QKV slicing")
    tq = _tile(S, tq_target, 16)
    tkv = _tile(S, tkv_target, 128)
    grid = (B, nhg, S // tq, S // tkv)
    return pl.pallas_call(
        functools.partial(_flash_kernel, scale=scale, hg=hg, dh=dh),
        out_shape=jax.ShapeDtypeStruct((B, S, H), BF16),
        grid=grid,
        in_specs=[
            pl.BlockSpec((1, tq, gdh), lambda b, h, qi, ki: (b, qi, h)),
            pl.BlockSpec((1, tkv, gdh), lambda b, h, qi, ki: (b, ki, nhg + h)),
            pl.BlockSpec((1, tkv, gdh), lambda b, h, qi, ki: (b, ki, 2 * nhg + h)),
            pl.BlockSpec((1, 1, tkv), lambda b, h, qi, ki: (b, 0, ki)),
        ],
        out_specs=pl.BlockSpec((1, tq, gdh), lambda b, h, qi, ki: (b, qi, h)),
        scratch_shapes=[pltpu.VMEM((hg, tq, 1), F32),
                        pltpu.VMEM((hg, tq, 1), F32),
                        pltpu.VMEM((hg, tq, dh), F32)],
        compiler_params=pltpu.CompilerParams(
            dimension_semantics=("parallel", "parallel", "parallel", "arbitrary"),
            vmem_limit_bytes=CFG["vmem_limit"]),
    )(qkv, qkv, qkv, bias)


# --------------------------------------------------------------------------
# Fused bidirectional LSTM recurrence.
#   xg : (B, S, 8Hl) gate pre-activations, direction-major gate-major columns
#        [fwd: i f g o | bwd: i f g o], batch-major (no time transpose needed).
#   whh: (2, Hl, 4Hl) per-direction recurrent weights.
#   out: (B, S, 2Hl)  columns [h_fwd | h_bwd] at their natural time positions.
# Grid: (direction, time-block).  Backward time reversal lives entirely in the
# index_maps + a reversed static in-kernel loop.
# --------------------------------------------------------------------------
def _bilstm_kernel(xg_ref, whh_ref, o_ref, h_sc, c_sc, *, hl, tb):
    d = pl.program_id(0)

    @pl.when(pl.program_id(1) == 0)
    def _():
        h_sc[...] = jnp.zeros(h_sc.shape, h_sc.dtype)
        c_sc[...] = jnp.zeros(c_sc.shape, c_sc.dtype)

    whh = whh_ref[0]                                        # (Hl, 4Hl) bf16

    def cell(g_in, h, c):
        g = g_in.astype(F32) + jnp.dot(h.astype(BF16), whh,
                                       preferred_element_type=F32)
        i_g = jax.nn.sigmoid(g[:, 0:hl])
        f_g = jax.nn.sigmoid(g[:, hl:2 * hl])
        g_g = jnp.tanh(g[:, 2 * hl:3 * hl])
        o_g = jax.nn.sigmoid(g[:, 3 * hl:4 * hl])
        c = f_g * c + i_g * g_g
        h = o_g * jnp.tanh(c)
        return h, c

    def run(order):
        h, c = h_sc[...], c_sc[...]
        for t in order:                                     # static, unrolled
            h, c = cell(xg_ref[:, t, :], h, c)
            o_ref[:, t, :] = h.astype(o_ref.dtype)
        h_sc[...] = h
        c_sc[...] = c

    @pl.when(d == 0)
    def _():
        run(range(tb))

    @pl.when(d == 1)
    def _():
        run(range(tb - 1, -1, -1))


def bilstm(xg_bsd, whh, hl, tb_target=16):
    b, s, _ = xg_bsd.shape
    tb = _tile(s, tb_target, 8)
    nblk = s // tb
    row = lambda dd, tt: dd * (nblk - 1) + (1 - 2 * dd) * tt   # block-level time reversal
    return pl.pallas_call(
        functools.partial(_bilstm_kernel, hl=hl, tb=tb),
        out_shape=jax.ShapeDtypeStruct((b, s, 2 * hl), BF16),
        grid=(2, nblk),
        in_specs=[pl.BlockSpec((b, tb, 4 * hl), lambda d, t: (0, row(d, t), d)),
                  pl.BlockSpec((1, hl, 4 * hl), lambda d, t: (d, 0, 0))],
        out_specs=pl.BlockSpec((b, tb, hl), lambda d, t: (0, row(d, t), d)),
        scratch_shapes=[pltpu.VMEM((b, hl), F32),
                        pltpu.VMEM((b, hl), F32)],
        compiler_params=pltpu.CompilerParams(
            dimension_semantics=("parallel", "arbitrary"),   # v7x: one direction per TC
            vmem_limit_bytes=CFG["vmem_limit"]),
    )(xg_bsd, whh)


# --------------------------------------------------------------------------
# Final projection + positional encoding (PE added in-kernel, tiled over seq)
# --------------------------------------------------------------------------
def _proj_pe_kernel(x_ref, w_ref, b_ref, pe_ref, o_ref):
    y = jnp.dot(x_ref[0].astype(BF16), w_ref[...], preferred_element_type=F32)
    o_ref[0] = (y + b_ref[...] + pe_ref[...]).astype(o_ref.dtype)


def proj_with_pe(x, w, b, pe, ts_target=256):
    bsz, s, k = x.shape
    d = w.shape[1]
    ts = _tile(s, ts_target, 8)
    return pl.pallas_call(
        _proj_pe_kernel,
        out_shape=jax.ShapeDtypeStruct((bsz, s, d), F32),
        grid=(bsz, s // ts),
        in_specs=[pl.BlockSpec((1, ts, k), lambda bi, si: (bi, si, 0)),
                  pl.BlockSpec((k, d), lambda bi, si: (0, 0)),
                  pl.BlockSpec((1, d), lambda bi, si: (0, 0)),
                  pl.BlockSpec((ts, d), lambda bi, si: (si, 0))],
        out_specs=pl.BlockSpec((1, ts, d), lambda bi, si: (bi, si, 0)),
        compiler_params=pltpu.CompilerParams(
            dimension_semantics=("parallel", "parallel"),
            vmem_limit_bytes=CFG["vmem_limit"]),
    )(x, w, b.reshape(1, d), pe)


# --------------------------------------------------------------------------
# Parameters (deterministic synthetic init — no checkpoint loading)
# --------------------------------------------------------------------------
def init_params(key, cfg):
    H, inter, Hl, D = cfg["hidden"], cfg["inter"], cfg["lstm_hidden"], cfg["proj_dim"]
    keys = iter(jax.random.split(key, 256))
    nk = lambda: next(keys)
    nrm = lambda k, shape, s=0.02: (s * jax.random.normal(k, shape)).astype(F32)

    p = {
        "word_emb": nrm(nk(), (cfg["vocab"], H)),
        "pos_emb": nrm(nk(), (cfg["max_pos"], H)),
        "type_emb": nrm(nk(), (2, H)),
        "emb_ln_g": jnp.ones((H,), F32),
        "emb_ln_b": jnp.zeros((H,), F32),
        "layers": [],
    }
    for _ in range(cfg["layers"]):
        p["layers"].append({
            "wq": nrm(nk(), (H, H)), "bq": jnp.zeros((H,), F32),
            "wk": nrm(nk(), (H, H)), "bk": jnp.zeros((H,), F32),
            "wv": nrm(nk(), (H, H)), "bv": jnp.zeros((H,), F32),
            "wo": nrm(nk(), (H, H)), "bo": jnp.zeros((H,), F32),
            "ln1_g": jnp.ones((H,), F32), "ln1_b": jnp.zeros((H,), F32),
            "wi": nrm(nk(), (H, inter)), "bi": jnp.zeros((inter,), F32),
            "wo2": nrm(nk(), (inter, H)), "bo2": jnp.zeros((H,), F32),
            "ln2_g": jnp.ones((H,), F32), "ln2_b": jnp.zeros((H,), F32),
        })
    for prefix in ("fwd_", "bwd_"):
        p[prefix + "w_ih"] = nrm(nk(), (4 * Hl, H), 0.1)
        p[prefix + "w_hh"] = nrm(nk(), (4 * Hl, Hl), 0.1)
        p[prefix + "b_ih"] = nrm(nk(), (4 * Hl,), 0.1)
        p[prefix + "b_hh"] = nrm(nk(), (4 * Hl,), 0.1)
    p["lin_w"] = nrm(nk(), (2 * Hl, D), 0.05)
    p["lin_b"] = jnp.zeros((D,), F32)
    return p


def prepare_params(raw, cfg):
    """Pre-fuse / pre-transpose weights into kernel-friendly bf16 layouts."""
    bf = lambda a: a.astype(BF16)
    p = {
        "word_emb": raw["word_emb"],
        "pos_emb": raw["pos_emb"],
        "type_emb": raw["type_emb"],
        "emb_ln_g": raw["emb_ln_g"], "emb_ln_b": raw["emb_ln_b"],
        "layers": [],
    }
    for lyr in raw["layers"]:
        p["layers"].append({
            # Fused QKV: columns = [Q heads | K heads | V heads]
            "wqkv": bf(jnp.concatenate([lyr["wq"], lyr["wk"], lyr["wv"]], axis=1)),
            "bqkv": jnp.concatenate([lyr["bq"], lyr["bk"], lyr["bv"]]),
            "wo": bf(lyr["wo"]), "bo": lyr["bo"],
            "ln1_g": lyr["ln1_g"], "ln1_b": lyr["ln1_b"],
            "wi": bf(lyr["wi"]), "bi": lyr["bi"],
            "wo2": bf(lyr["wo2"]), "bo2": lyr["bo2"],
            "ln2_g": lyr["ln2_g"], "ln2_b": lyr["ln2_b"],
        })

    # BiLSTM: direction-major, gate-major (PyTorch order i,f,g,o) columns.
    p["lstm_w_ih"] = bf(jnp.concatenate([raw["fwd_w_ih"].T, raw["bwd_w_ih"].T], axis=1))
    p["lstm_b"] = jnp.concatenate([raw["fwd_b_ih"] + raw["fwd_b_hh"],
                                   raw["bwd_b_ih"] + raw["bwd_b_hh"]])
    p["lstm_w_hh"] = bf(jnp.stack([raw["fwd_w_hh"].T, raw["bwd_w_hh"].T], axis=0))

    p["lin_w"] = bf(raw["lin_w"])
    p["lin_b"] = raw["lin_b"]
    return p


def positional_encoding(seq_len, d_model):
    position = jnp.arange(seq_len, dtype=F32)[:, None]
    div_term = jnp.exp(jnp.arange(0, d_model, 2, dtype=F32) * (-math.log(10000.0) / d_model))
    pe = jnp.zeros((seq_len, d_model), F32)
    pe = pe.at[:, 0::2].set(jnp.sin(position * div_term))
    pe = pe.at[:, 1::2].set(jnp.cos(position * div_term))
    return pe


# --------------------------------------------------------------------------
# Forward pass (BERT encoder -> BiLSTM -> Linear -> PositionalEncoding)
# --------------------------------------------------------------------------
def forward(params, input_ids, attention_mask, cfg):
    B, S = input_ids.shape
    H, nh = cfg["hidden"], cfg["heads"]
    dh = H // nh
    Hl = cfg["lstm_hidden"]
    D = cfg["proj_dim"]

    # --- BERT embeddings (gathers in glue, LayerNorm in a kernel) ---
    # TODO(synk): token_type_ids assumed all-zero (type_emb[0]).
    emb = (params["word_emb"][input_ids]
           + params["pos_emb"][:S][None, :, :]
           + params["type_emb"][0][None, None, :])
    x = layernorm(emb.reshape(B * S, H), params["emb_ln_g"], params["emb_ln_b"])

    # --- additive attention mask bias (classic BERT: (1-mask) * -10000) ---
    mask_bias = ((1.0 - attention_mask.astype(F32)) * -10000.0).reshape(B, 1, S)
    scale = 1.0 / math.sqrt(dh)

    # --- transformer encoder layers ---
    for lyr in params["layers"]:
        qkv = dense(x, lyr["wqkv"], lyr["bqkv"])                       # (B*S, 3H) bf16
        ctx = flash_attention(qkv.reshape(B, S, 3 * H), mask_bias,
                              nh=nh, dh=dh, scale=scale)               # (B, S, H) bf16
        x = dense_res_ln(ctx.reshape(B * S, H), lyr["wo"], lyr["bo"], x,
                         lyr["ln1_g"], lyr["ln1_b"])
        ffn = dense(x, lyr["wi"], lyr["bi"], act="gelu")
        x = dense_res_ln(ffn, lyr["wo2"], lyr["bo2"], x, lyr["ln2_g"], lyr["ln2_b"])

    # --- bidirectional LSTM (batch_first, 1 layer), directions fused in 1 kernel ---
    xg = dense(x, params["lstm_w_ih"], params["lstm_b"])               # (B*S, 8Hl) bf16
    lstm_out = bilstm(xg.reshape(B, S, 8 * Hl), params["lstm_w_hh"], Hl)   # (B, S, 2Hl)

    # --- linear -> dropout (eval: identity) -> positional encoding ---
    # TODO(synk): dropout implemented as identity (inference/eval semantics).
    pe = positional_encoding(S, D)                                     # (S, D), added in-kernel
    out = proj_with_pe(lstm_out, params["lin_w"], params["lin_b"], pe)
    return out                                                         # (B, S, D)


# --------------------------------------------------------------------------
if __name__ == "__main__":
    # Small but TPU-layout-friendly shapes (head width 64, lstm_hidden mult of 128).
    cfg = dict(vocab=64, hidden=128, heads=2, inter=256, layers=2,
               max_pos=64, lstm_hidden=128, proj_dim=512)

    raw = init_params(jax.random.PRNGKey(0), cfg)
    params = prepare_params(raw, cfg)

    B, S = 2, 8
    k_ids, _ = jax.random.split(jax.random.PRNGKey(0))
    input_ids = jax.random.randint(k_ids, (B, S), 0, cfg["vocab"], dtype=jnp.int32)
    attention_mask = jnp.array([[1, 1, 1, 1, 1, 1, 1, 1],
                                [1, 1, 1, 1, 1, 0, 0, 0]], dtype=jnp.int32)

    fwd = jax.jit(functools.partial(forward, cfg=cfg))
    out = fwd(params, input_ids, attention_mask)
    out = jax.block_until_ready(out)
    assert out.shape == (B, S, cfg["proj_dim"]), out.shape
    assert bool(jnp.all(jnp.isfinite(out)))
    print("KERNEL_OK")
</pallas_src>

<mosaic_0001>
module attributes {stable_mosaic.version = 11 : i64} {
  func.func @_matmul_kernel(%arg0: i32, %arg1: i32, %arg2: i32, %arg3: memref<16x128xbf16, #tpu.memory_space<vmem>>, %arg4: memref<128x384xbf16, #tpu.memory_space<vmem>>, %arg5: memref<1x384xf32, #tpu.memory_space<vmem>>, %arg6: memref<16x384xbf16, #tpu.memory_space<vmem>>, %arg7: memref<16x384xf32, #tpu.memory_space<vmem>>) attributes {dimension_semantics = [#tpu.dimension_semantics<parallel>, #tpu.dimension_semantics<parallel>, #tpu.dimension_semantics<arbitrary>], iteration_bounds = array<i64: 1, 1, 1>, scalar_prefetch = 0 : i64, scratch_operands = 1 : i64, tpu.core_type = #tpu.core_type<tc>, window_params = [{transform_indices = @transform_0, window_bounds = array<i64: 16, 128>}, {transform_indices = @transform_1, window_bounds = array<i64: 128, 384>}, {transform_indices = @transform_2, window_bounds = array<i64: 1, 384>}, {transform_indices = @transform_3, window_bounds = array<i64: 16, 384>}]} {
    %c0_i32 = arith.constant 0 : i32
    %0 = arith.cmpi eq, %arg2, %c0_i32 : i32
    %1 = arith.extui %0 : i1 to i32
    %c0_i32_0 = arith.constant 0 : i32
    %2 = arith.cmpi ne, %1, %c0_i32_0 : i32
    scf.if %2 {
      %cst_10 = arith.constant 0.000000e+00 : f32
      %12 = vector.broadcast %cst_10 : f32 to vector<16x384xf32>
      %c0_11 = arith.constant 0 : index
      %c0_12 = arith.constant 0 : index
      %13 = vector.load %arg7[%c0_11, %c0_12] : memref<16x384xf32, #tpu.memory_space<vmem>>, vector<16x384xf32>
      tpu.vector_store %arg7[%c0_11, %c0_12], %12 {strides = array<i32>} : memref<16x384xf32, #tpu.memory_space<vmem>>, vector<16x384xf32>,
    } else {
    }
    %c0 = arith.constant 0 : index
    %c0_1 = arith.constant 0 : index
    %3 = vector.load %arg7[%c0, %c0_1] : memref<16x384xf32, #tpu.memory_space<vmem>>, vector<16x384xf32>
    %c0_2 = arith.constant 0 : index
    %c0_3 = arith.constant 0 : index
    %4 = vector.load %arg3[%c0_2, %c0_3] : memref<16x128xbf16, #tpu.memory_space<vmem>>, vector<16x128xbf16>
    %c0_4 = arith.constant 0 : index
    %c0_5 = arith.constant 0 : index
    %5 = vector.load %arg4[%c0_4, %c0_5] : memref<128x384xbf16, #tpu.memory_space<vmem>>, vector<128x384xbf16>
    %cst = arith.constant dense<0.000000e+00> : vector<16x384xf32>
    %6 = tpu.matmul %4, %5, %cst {dimension_numbers = #tpu.dot_dimension_numbers<[1], [0], [0], [1], [0, 0, 1, 1], [], []>} : vector<16x128xbf16>, vector<128x384xbf16>, vector<16x384xf32> -> vector<16x384xf32>
    %7 = arith.addf %3, %6 : vector<16x384xf32>
    %c0_6 = arith.constant 0 : index
    %c0_7 = arith.constant 0 : index
    %8 = vector.load %arg7[%c0_6, %c0_7] : memref<16x384xf32, #tpu.memory_space<vmem>>, vector<16x384xf32>
    tpu.vector_store %arg7[%c0_6, %c0_7], %7 {strides = array<i32>} : memref<16x384xf32, #tpu.memory_space<vmem>>, vector<16x384xf32>,
    %c0_i32_8 = arith.constant 0 : i32
    %9 = arith.cmpi eq, %arg2, %c0_i32_8 : i32
    %10 = arith.extui %9 : i1 to i32
    %c0_i32_9 = arith.constant 0 : i32
    %11 = arith.cmpi ne, %10, %c0_i32_9 : i32
    scf.if %11 {
      %c0_10 = arith.constant 0 : index
      %c0_11 = arith.constant 0 : index
      %12 = vector.load %arg7[%c0_10, %c0_11] : memref<16x384xf32, #tpu.memory_space<vmem>>, vector<16x384xf32>
      %c0_12 = arith.constant 0 : index
      %c0_13 = arith.constant 0 : index
      %13 = vector.load %arg5[%c0_12, %c0_13] : memref<1x384xf32, #tpu.memory_space<vmem>>, vector<1x384xf32>
      %14 = vector.broadcast %13 : vector<1x384xf32> to vector<16x384xf32>
      %15 = arith.addf %12, %14 : vector<16x384xf32>
      %16 = arith.truncf %15 : vector<16x384xf32> to vector<16x384xbf16>
      %c0_14 = arith.constant 0 : index
      %c0_15 = arith.constant 0 : index
      %17 = vector.load %arg6[%c0_14, %c0_15] : memref<16x384xbf16, #tpu.memory_space<vmem>>, vector<16x384xbf16>
      tpu.vector_store %arg6[%c0_14, %c0_15], %16 {strides = array<i32>} : memref<16x384xbf16, #tpu.memory_space<vmem>>, vector<16x384xbf16>,
    } else {
    }
    return
  }
  func.func @transform_0(%arg0: i32, %arg1: i32, %arg2: i32) -> (i32, i32) {
    %c0_i32 = arith.constant 0 : i32
    return %arg0, %arg2 : i32, i32
  }
  func.func @transform_1(%arg0: i32, %arg1: i32, %arg2: i32) -> (i32, i32) {
    %c0_i32 = arith.constant 0 : i32
    return %arg2, %arg1 : i32, i32
  }
  func.func @transform_2(%arg0: i32, %arg1: i32, %arg2: i32) -> (i32, i32) {
    %c0_i32 = arith.constant 0 : i32
    %c0_i32_0 = arith.constant 0 : i32
    return %c0_i32, %arg1 : i32, i32
  }
  func.func @transform_3(%arg0: i32, %arg1: i32, %arg2: i32) -> (i32, i32) {
    %c0_i32 = arith.constant 0 : i32
    return %arg0, %arg1 : i32, i32
  }
}

module attributes {stable_mosaic.version = 11 : i64} {
  func.func @_ln_kernel(%arg0: i32, %arg1: memref<16x128xf32, #tpu.memory_space<vmem>>, %arg2: memref<1x128xf32, #tpu.memory_space<vmem>>, %arg3: memref<1x128xf32, #tpu.memory_space<vmem>>, %arg4: memref<16x128xbf16, #tpu.memory_space<vmem>>) attributes {dimension_semantics = [#tpu.dimension_semantics<parallel>], iteration_bounds = array<i64: 1>, scalar_prefetch = 0 : i64, scratch_operands = 0 : i64, tpu.core_type = #tpu.core_type<tc>, window_params = [{transform_indices = @transform_0, window_bounds = array<i64: 16, 128>}, {pipeline_mode = #tpu.pipeline_mode<synchronous>, transform_indices = @transform_1, window_bounds = array<i64: 1, 128>}, {pipeline_mode = #tpu.pipeline_mode<synchronous>, transform_indices = @transform_2, window_bounds = array<i64: 1, 128>}, {transform_indices = @transform_3, window_bounds = array<i64: 16, 128>}]} {
    %c0 = arith.constant 0 : index
    %c0_0 = arith.constant 0 : index
    %0 = vector.load %arg1[%c0, %c0_0] : memref<16x128xf32, #tpu.memory_space<vmem>>, vector<16x128xf32>
    %cst = arith.constant dense<0.000000e+00> : vector<16xf32>
    %1 = vector.multi_reduction <add>, %0, %cst [1] : vector<16x128xf32> to vector<16xf32>
    %2 = vector.shape_cast %1 : vector<16xf32> to vector<16x1xf32>
    %cst_1 = arith.constant 1.280000e+02 : f32
    %3 = vector.broadcast %cst_1 : f32 to vector<16x1xf32>
    %4 = arith.divf %2, %3 : vector<16x1xf32>
    %5 = vector.broadcast %4 : vector<16x1xf32> to vector<16x128xf32>
    %6 = arith.subf %0, %5 : vector<16x128xf32>
    %7 = arith.mulf %6, %6 : vector<16x128xf32>
    %cst_2 = arith.constant dense<0.000000e+00> : vector<16xf32>
    %8 = vector.multi_reduction <add>, %7, %cst_2 [1] : vector<16x128xf32> to vector<16xf32>
    %9 = vector.shape_cast %8 : vector<16xf32> to vector<16x1xf32>
    %cst_3 = arith.constant 1.280000e+02 : f32
    %10 = vector.broadcast %cst_3 : f32 to vector<16x1xf32>
    %11 = arith.divf %9, %10 : vector<16x1xf32>
    %cst_4 = arith.constant 9.99999996E-13 : f32
    %12 = vector.broadcast %cst_4 : f32 to vector<16x1xf32>
    %13 = arith.addf %11, %12 : vector<16x1xf32>
    %14 = math.rsqrt %13 : vector<16x1xf32>
    %15 = vector.broadcast %14 : vector<16x1xf32> to vector<16x128xf32>
    %16 = arith.mulf %6, %15 : vector<16x128xf32>
    %c0_5 = arith.constant 0 : index
    %c0_6 = arith.constant 0 : index
    %17 = vector.load %arg2[%c0_5, %c0_6] : memref<1x128xf32, #tpu.memory_space<vmem>>, vector<1x128xf32>
    %18 = vector.broadcast %17 : vector<1x128xf32> to vector<16x128xf32>
    %19 = arith.mulf %16, %18 : vector<16x128xf32>
    %c0_7 = arith.constant 0 : index
    %c0_8 = arith.constant 0 : index
    %20 = vector.load %arg3[%c0_7, %c0_8] : memref<1x128xf32, #tpu.memory_space<vmem>>, vector<1x128xf32>
    %21 = vector.broadcast %20 : vector<1x128xf32> to vector<16x128xf32>
    %22 = arith.addf %19, %21 : vector<16x128xf32>
    %23 = arith.truncf %22 : vector<16x128xf32> to vector<16x128xbf16>
    %c0_9 = arith.constant 0 : index
    %c0_10 = arith.constant 0 : index
    %24 = vector.load %arg4[%c0_9, %c0_10] : memref<16x128xbf16, #tpu.memory_space<vmem>>, vector<16x128xbf16>
    tpu.vector_store %arg4[%c0_9, %c0_10], %23 {strides = array<i32>} : memref<16x128xbf16, #tpu.memory_space<vmem>>, vector<16x128xbf16>,
    return
  }
  func.func @transform_0(%arg0: i32) -> (i32, i32) {
    %c0_i32 = arith.constant 0 : i32
    %c0_i32_0 = arith.constant 0 : i32
    return %arg0, %c0_i32 : i32, i32
  }
  func.func @transform_1(%arg0: i32) -> (i32, i32) {
    %c0_i32 = arith.constant 0 : i32
    %c0_i32_0 = arith.constant 0 : i32
    %c0_i32_1 = arith.constant 0 : i32
    return %c0_i32, %c0_i32_0 : i32, i32
  }
  func.func @transform_2(%arg0: i32) -> (i32, i32) {
    %c0_i32 = arith.constant 0 : i32
    %c0_i32_0 = arith.constant 0 : i32
    %c0_i32_1 = arith.constant 0 : i32
    return %c0_i32, %c0_i32_0 : i32, i32
  }
  func.func @transform_3(%arg0: i32) -> (i32, i32) {
    %c0_i32 = arith.constant 0 : i32
    %c0_i32_0 = arith.constant 0 : i32
    return %arg0, %c0_i32 : i32, i32
  }
}

module attributes {stable_mosaic.version = 11 : i64} {
  func.func @_flash_kernel(%arg0: i32, %arg1: i32, %arg2: i32, %arg3: i32, %arg4: memref<1x8x128xbf16, #tpu.memory_space<vmem>>, %arg5: memref<1x8x128xbf16, #tpu.memory_space<vmem>>, %arg6: memref<1x8x128xbf16, #tpu.memory_space<vmem>>, %arg7: memref<1x1x8xf32, #tpu.memory_space<vmem>>, %arg8: memref<1x8x128xbf16, #tpu.memory_space<vmem>>, %arg9: memref<2x8x1xf32, #tpu.memory_space<vmem>>, %arg10: memref<2x8x1xf32, #tpu.memory_space<vmem>>, %arg11: memref<2x8x64xf32, #tpu.memory_space<vmem>>) attributes {dimension_semantics = [#tpu.dimension_semantics<parallel>, #tpu.dimension_semantics<parallel>, #tpu.dimension_semantics<parallel>, #tpu.dimension_semantics<arbitrary>], iteration_bounds = array<i64: 2, 1, 1, 1>, scalar_prefetch = 0 : i64, scratch_operands = 3 : i64, tpu.core_type = #tpu.core_type<tc>, window_params = [{transform_indices = @transform_0, window_bounds = array<i64: 1, 8, 128>}, {transform_indices = @transform_1, window_bounds = array<i64: 1, 8, 128>}, {transform_indices = @transform_2, window_bounds = array<i64: 1, 8, 128>}, {transform_indices = @transform_3, window_bounds = array<i64: 1, 1, 8>}, {transform_indices = @transform_4, window_bounds = array<i64: 1, 8, 128>}]} {
    %c0_i32 = arith.constant 0 : i32
    %0 = arith.cmpi eq, %arg3, %c0_i32 : i32
    %1 = arith.extui %0 : i1 to i32
    %c0_i32_0 = arith.constant 0 : i32
    %2 = arith.cmpi ne, %1, %c0_i32_0 : i32
    scf.if %2 {
      %cst_66 = arith.constant 0xFF800000 : f32
      %94 = vector.broadcast %cst_66 : f32 to vector<2x8x1xf32>
      %c0_67 = arith.constant 0 : index
      %c0_68 = arith.constant 0 : index
      %c0_69 = arith.constant 0 : index
      %95 = vector.load %arg9[%c0_67, %c0_68, %c0_69] : memref<2x8x1xf32, #tpu.memory_space<vmem>>, vector<2x8x1xf32>
      tpu.vector_store %arg9[%c0_67, %c0_68, %c0_69], %94 {strides = array<i32>} : memref<2x8x1xf32, #tpu.memory_space<vmem>>, vector<2x8x1xf32>,
      %cst_70 = arith.constant 0.000000e+00 : f32
      %96 = vector.broadcast %cst_70 : f32 to vector<2x8x1xf32>
      %c0_71 = arith.constant 0 : index
      %c0_72 = arith.constant 0 : index
      %c0_73 = arith.constant 0 : index
      %97 = vector.load %arg10[%c0_71, %c0_72, %c0_73] : memref<2x8x1xf32, #tpu.memory_space<vmem>>, vector<2x8x1xf32>
      tpu.vector_store %arg10[%c0_71, %c0_72, %c0_73], %96 {strides = array<i32>} : memref<2x8x1xf32, #tpu.memory_space<vmem>>, vector<2x8x1xf32>,
      %cst_74 = arith.constant 0.000000e+00 : f32
      %98 = vector.broadcast %cst_74 : f32 to vector<2x8x64xf32>
      %c0_75 = arith.constant 0 : index
      %c0_76 = arith.constant 0 : index
      %c0_77 = arith.constant 0 : index
      %99 = vector.load %arg11[%c0_75, %c0_76, %c0_77] : memref<2x8x64xf32, #tpu.memory_space<vmem>>, vector<2x8x64xf32>
      tpu.vector_store %arg11[%c0_75, %c0_76, %c0_77], %98 {strides = array<i32>} : memref<2x8x64xf32, #tpu.memory_space<vmem>>, vector<2x8x64xf32>,
    } else {
    }
    %c0 = arith.constant 0 : index
    %c0_1 = arith.constant 0 : index
    %c0_2 = arith.constant 0 : index
    %3 = vector.load %arg7[%c0, %c0_1, %c0_2] : memref<1x1x8xf32, #tpu.memory_space<vmem>>, vector<1x1x8xf32>
    %4 = vector.shape_cast %3 : vector<1x1x8xf32> to vector<1x8xf32>
    %c0_3 = arith.constant 0 : index
    %c0_4 = arith.constant 0 : index
    %c0_5 = arith.constant 0 : index
    %5 = vector.load %arg4[%c0_3, %c0_4, %c0_5] : memref<1x8x128xbf16, #tpu.memory_space<vmem>>, vector<1x8x64xbf16>
    %6 = vector.shape_cast %5 : vector<1x8x64xbf16> to vector<8x64xbf16>
    %c0_6 = arith.constant 0 : index
    %c0_7 = arith.constant 0 : index
    %c0_8 = arith.constant 0 : index
    %7 = vector.load %arg5[%c0_6, %c0_7, %c0_8] : memref<1x8x128xbf16, #tpu.memory_space<vmem>>, vector<1x8x64xbf16>
    %8 = vector.shape_cast %7 : vector<1x8x64xbf16> to vector<8x64xbf16>
    %c0_9 = arith.constant 0 : index
    %c0_10 = arith.constant 0 : index
    %c0_11 = arith.constant 0 : index
    %9 = vector.load %arg6[%c0_9, %c0_10, %c0_11] : memref<1x8x128xbf16, #tpu.memory_space<vmem>>, vector<1x8x64xbf16>
    %10 = vector.shape_cast %9 : vector<1x8x64xbf16> to vector<8x64xbf16>
    %cst = arith.constant dense<0.000000e+00> : vector<8x8xf32>
    %11 = tpu.matmul %6, %8, %cst {dimension_numbers = #tpu.dot_dimension_numbers<[1], [1], [0], [0], [0, 0, 1, 0], [], []>} : vector<8x64xbf16>, vector<8x64xbf16>, vector<8x8xf32> -> vector<8x8xf32>
    %cst_12 = arith.constant 1.250000e-01 : f32
    %12 = vector.broadcast %cst_12 : f32 to vector<8x8xf32>
    %13 = arith.mulf %11, %12 : vector<8x8xf32>
    %14 = vector.broadcast %4 : vector<1x8xf32> to vector<8x8xf32>
    %15 = arith.addf %13, %14 : vector<8x8xf32>
    %c0_13 = arith.constant 0 : index
    %c0_14 = arith.constant 0 : index
    %c0_15 = arith.constant 0 : index
    %16 = vector.load %arg9[%c0_13, %c0_14, %c0_15] : memref<2x8x1xf32, #tpu.memory_space<vmem>>, vector<1x8x1xf32>
    %17 = vector.shape_cast %16 : vector<1x8x1xf32> to vector<8x1xf32>
    %cst_16 = arith.constant dense<0xFF800000> : vector<8xf32>
    %18 = vector.multi_reduction <maximumf>, %15, %cst_16 [1] : vector<8x8xf32> to vector<8xf32>
    %19 = vector.shape_cast %18 : vector<8xf32> to vector<8x1xf32>
    %20 = arith.maximumf %17, %19 : vector<8x1xf32>
    %21 = arith.subf %17, %20 : vector<8x1xf32>
    %22 = math.exp %21 : vector<8x1xf32>
    %23 = vector.broadcast %20 : vector<8x1xf32> to vector<8x8xf32>
    %24 = arith.subf %15, %23 : vector<8x8xf32>
    %25 = math.exp %24 : vector<8x8xf32>
    %c0_17 = arith.constant 0 : index
    %c0_18 = arith.constant 0 : index
    %c0_19 = arith.constant 0 : index
    %26 = vector.load %arg10[%c0_17, %c0_18, %c0_19] : memref<2x8x1xf32, #tpu.memory_space<vmem>>, vector<1x8x1xf32>
    %27 = vector.shape_cast %26 : vector<1x8x1xf32> to vector<8x1xf32>
    %28 = arith.mulf %22, %27 : vector<8x1xf32>
    %cst_20 = arith.constant dense<0.000000e+00> : vector<8xf32>
    %29 = vector.multi_reduction <add>, %25, %cst_20 [1] : vector<8x8xf32> to vector<8xf32>
    %30 = vector.shape_cast %29 : vector<8xf32> to vector<8x1xf32>
    %31 = arith.addf %28, %30 : vector<8x1xf32>
    %c0_21 = arith.constant 0 : index
    %c0_22 = arith.constant 0 : index
    %c0_23 = arith.constant 0 : index
    %32 = vector.load %arg10[%c0_21, %c0_22, %c0_23] : memref<2x8x1xf32, #tpu.memory_space<vmem>>, vector<1x8x1xf32>
    %33 = vector.shape_cast %32 : vector<1x8x1xf32> to vector<8x1xf32>
    %34 = vector.shape_cast %31 : vector<8x1xf32> to vector<1x8x1xf32>
    tpu.vector_store %arg10[%c0_21, %c0_22, %c0_23], %34 {strides = array<i32>} : memref<2x8x1xf32, #tpu.memory_space<vmem>>, vector<1x8x1xf32>,
    %c0_24 = arith.constant 0 : index
    %c0_25 = arith.constant 0 : index
    %c0_26 = arith.constant 0 : index
    %35 = vector.load %arg11[%c0_24, %c0_25, %c0_26] : memref<2x8x64xf32, #tpu.memory_space<vmem>>, vector<1x8x64xf32>
    %36 = vector.shape_cast %35 : vector<1x8x64xf32> to vector<8x64xf32>
    %37 = vector.broadcast %22 : vector<8x1xf32> to vector<8x64xf32>
    %38 = arith.mulf %37, %36 : vector<8x64xf32>
    %39 = arith.truncf %25 : vector<8x8xf32> to vector<8x8xbf16>
    %cst_27 = arith.constant dense<0.000000e+00> : vector<8x64xf32>
    %40 = tpu.matmul %39, %10, %cst_27 {dimension_numbers = #tpu.dot_dimension_numbers<[1], [0], [0], [1], [0, 0, 1, 1], [], []>} : vector<8x8xbf16>, vector<8x64xbf16>, vector<8x64xf32> -> vector<8x64xf32>
    %41 = arith.addf %38, %40 : vector<8x64xf32>
    %c0_28 = arith.constant 0 : index
    %c0_29 = arith.constant 0 : index
    %c0_30 = arith.constant 0 : index
    %42 = vector.load %arg11[%c0_28, %c0_29, %c0_30] : memref<2x8x64xf32, #tpu.memory_space<vmem>>, vector<1x8x64xf32>
    %43 = vector.shape_cast %42 : vector<1x8x64xf32> to vector<8x64xf32>
    %44 = vector.shape_cast %41 : vector<8x64xf32> to vector<1x8x64xf32>
    tpu.vector_store %arg11[%c0_28, %c0_29, %c0_30], %44 {strides = array<i32>} : memref<2x8x64xf32, #tpu.memory_space<vmem>>, vector<1x8x64xf32>,
    %c0_31 = arith.constant 0 : index
    %c0_32 = arith.constant 0 : index
    %c0_33 = arith.constant 0 : index
    %45 = vector.load %arg9[%c0_31, %c0_32, %c0_33] : memref<2x8x1xf32, #tpu.memory_space<vmem>>, vector<1x8x1xf32>
    %46 = vector.shape_cast %45 : vector<1x8x1xf32> to vector<8x1xf32>
    %47 = vector.shape_cast %20 : vector<8x1xf32> to vector<1x8x1xf32>
    tpu.vector_store %arg9[%c0_31, %c0_32, %c0_33], %47 {strides = array<i32>} : memref<2x8x1xf32, #tpu.memory_space<vmem>>, vector<1x8x1xf32>,
    %c0_34 = arith.constant 0 : index
    %c0_35 = arith.constant 0 : index
    %c64 = arith.constant 64 : index
    %48 = vector.load %arg4[%c0_34, %c0_35, %c64] : memref<1x8x128xbf16, #tpu.memory_space<vmem>>, vector<1x8x64xbf16>
    %49 = vector.shape_cast %48 : vector<1x8x64xbf16> to vector<8x64xbf16>
    %c0_36 = arith.constant 0 : index
    %c0_37 = arith.constant 0 : index
    %c64_38 = arith.constant 64 : index
    %50 = vector.load %arg5[%c0_36, %c0_37, %c64_38] : memref<1x8x128xbf16, #tpu.memory_space<vmem>>, vector<1x8x64xbf16>
    %51 = vector.shape_cast %50 : vector<1x8x64xbf16> to vector<8x64xbf16>
    %c0_39 = arith.constant 0 : index
    %c0_40 = arith.constant 0 : index
    %c64_41 = arith.constant 64 : index
    %52 = vector.load %arg6[%c0_39, %c0_40, %c64_41] : memref<1x8x128xbf16, #tpu.memory_space<vmem>>, vector<1x8x64xbf16>
    %53 = vector.shape_cast %52 : vector<1x8x64xbf16> to vector<8x64xbf16>
    %cst_42 = arith.constant dense<0.000000e+00> : vector<8x8xf32>
    %54 = tpu.matmul %49, %51, %cst_42 {dimension_numbers = #tpu.dot_dimension_numbers<[1], [1], [0], [0], [0, 0, 1, 0], [], []>} : vector<8x64xbf16>, vector<8x64xbf16>, vector<8x8xf32> -> vector<8x8xf32>
    %cst_43 = arith.constant 1.250000e-01 : f32
    %55 = vector.broadcast %cst_43 : f32 to vector<8x8xf32>
    %56 = arith.mulf %54, %55 : vector<8x8xf32>
    %57 = vector.broadcast %4 : vector<1x8xf32> to vector<8x8xf32>
    %58 = arith.addf %56, %57 : vector<8x8xf32>
    %c1 = arith.constant 1 : index
    %c0_44 = arith.constant 0 : index
    %c0_45 = arith.constant 0 : index
    %59 = vector.load %arg9[%c1, %c0_44, %c0_45] : memref<2x8x1xf32, #tpu.memory_space<vmem>>, vector<1x8x1xf32>
    %60 = vector.shape_cast %59 : vector<1x8x1xf32> to vector<8x1xf32>
    %cst_46 = arith.constant dense<0xFF800000> : vector<8xf32>
    %61 = vector.multi_reduction <maximumf>, %58, %cst_46 [1] : vector<8x8xf32> to vector<8xf32>
    %62 = vector.shape_cast %61 : vector<8xf32> to vector<8x1xf32>
    %63 = arith.maximumf %60, %62 : vector<8x1xf32>
    %64 = arith.subf %60, %63 : vector<8x1xf32>
    %65 = math.exp %64 : vector<8x1xf32>
    %66 = vector.broadcast %63 : vector<8x1xf32> to vector<8x8xf32>
    %67 = arith.subf %58, %66 : vector<8x8xf32>
    %68 = math.exp %67 : vector<8x8xf32>
    %c1_47 = arith.constant 1 : index
    %c0_48 = arith.constant 0 : index
    %c0_49 = arith.constant 0 : index
    %69 = vector.load %arg10[%c1_47, %c0_48, %c0_49] : memref<2x8x1xf32, #tpu.memory_space<vmem>>, vector<1x8x1xf32>
    %70 = vector.shape_cast %69 : vector<1x8x1xf32> to vector<8x1xf32>
    %71 = arith.mulf %65, %70 : vector<8x1xf32>
    %cst_50 = arith.constant dense<0.000000e+00> : vector<8xf32>
    %72 = vector.multi_reduction <add>, %68, %cst_50 [1] : vector<8x8xf32> to vector<8xf32>
    %73 = vector.shape_cast %72 : vector<8xf32> to vector<8x1xf32>
    %74 = arith.addf %71, %73 : vector<8x1xf32>
    %c1_51 = arith.constant 1 : index
    %c0_52 = arith.constant 0 : index
    %c0_53 = arith.constant 0 : index
    %75 = vector.load %arg10[%c1_51, %c0_52, %c0_53] : memref<2x8x1xf32, #tpu.memory_space<vmem>>, vector<1x8x1xf32>
    %76 = vector.shape_cast %75 : vector<1x8x1xf32> to vector<8x1xf32>
    %77 = vector.shape_cast %74 : vector<8x1xf32> to vector<1x8x1xf32>
    tpu.vector_store %arg10[%c1_51, %c0_52, %c0_53], %77 {strides = array<i32>} : memref<2x8x1xf32, #tpu.memory_space<vmem>>, vector<1x8x1xf32>,
    %c1_54 = arith.constant 1 : index
    %c0_55 = arith.constant 0 : index
    %c0_56 = arith.constant 0 : index
    %78 = vector.load %arg11[%c1_54, %c0_55, %c0_56] : memref<2x8x64xf32, #tpu.memory_space<vmem>>, vector<1x8x64xf32>
    %79 = vector.shape_cast %78 : vector<1x8x64xf32> to vector<8x64xf32>
    %80 = vector.broadcast %65 : vector<8x1xf32> to vector<8x64xf32>
    %81 = arith.mulf %80, %79 : vector<8x64xf32>
    %82 = arith.truncf %68 : vector<8x8xf32> to vector<8x8xbf16>
    %cst_57 = arith.constant dense<0.000000e+00> : vector<8x64xf32>
    %83 = tpu.matmul %82, %53, %cst_57 {dimension_numbers = #tpu.dot_dimension_numbers<[1], [0], [0], [1], [0, 0, 1, 1], [], []>} : vector<8x8xbf16>, vector<8x64xbf16>, vector<8x64xf32> -> vector<8x64xf32>
    %84 = arith.addf %81, %83 : vector<8x64xf32>
    %c1_58 = arith.constant 1 : index
    %c0_59 = arith.constant 0 : index
    %c0_60 = arith.constant 0 : index
    %85 = vector.load %arg11[%c1_58, %c0_59, %c0_60] : memref<2x8x64xf32, #tpu.memory_space<vmem>>, vector<1x8x64xf32>
    %86 = vector.shape_cast %85 : vector<1x8x64xf32> to vector<8x64xf32>
    %87 = vector.shape_cast %84 : vector<8x64xf32> to vector<1x8x64xf32>
    tpu.vector_store %arg11[%c1_58, %c0_59, %c0_60], %87 {strides = array<i32>} : memref<2x8x64xf32, #tpu.memory_space<vmem>>, vector<1x8x64xf32>,
    %c1_61 = arith.constant 1 : index
    %c0_62 = arith.constant 0 : index
    %c0_63 = arith.constant 0 : index
    %88 = vector.load %arg9[%c1_61, %c0_62, %c0_63] : memref<2x8x1xf32, #tpu.memory_space<vmem>>, vector<1x8x1xf32>
    %89 = vector.shape_cast %88 : vector<1x8x1xf32> to vector<8x1xf32>
    %90 = vector.shape_cast %63 : vector<8x1xf32> to vector<1x8x1xf32>
    tpu.vector_store %arg9[%c1_61, %c0_62, %c0_63], %90 {strides = array<i32>} : memref<2x8x1xf32, #tpu.memory_space<vmem>>, vector<1x8x1xf32>,
    %c0_i32_64 = arith.constant 0 : i32
    %91 = arith.cmpi eq, %arg3, %c0_i32_64 : i32
    %92 = arith.extui %91 : i1 to i32
    %c0_i32_65 = arith.constant 0 : i32
    %93 = arith.cmpi ne, %92, %c0_i32_65 : i32
    scf.if %93 {
      %c0_66 = arith.constant 0 : index
      %c0_67 = arith.constant 0 : index
      %c0_68 = arith.constant 0 : index
      %94 = vector.load %arg11[%c0_66, %c0_67, %c0_68] : memref<2x8x64xf32, #tpu.memory_space<vmem>>, vector<1x8x64xf32>
      %95 = vector.shape_cast %94 : vector<1x8x64xf32> to vector<8x64xf32>
      %c0_69 = arith.constant 0 : index
      %c0_70 = arith.constant 0 : index
      %c0_71 = arith.constant 0 : index
      %96 = vector.load %arg10[%c0_69, %c0_70, %c0_71] : memref<2x8x1xf32, #tpu.memory_space<vmem>>, vector<1x8x1xf32>
      %97 = vector.shape_cast %96 : vector<1x8x1xf32> to vector<8x1xf32>
      %98 = tpu.reciprocal %97 : vector<8x1xf32> -> vector<8x1xf32>
      %99 = vector.broadcast %98 : vector<8x1xf32> to vector<8x64xf32>
      %100 = arith.mulf %95, %99 : vector<8x64xf32>
      %c1_72 = arith.constant 1 : index
      %c0_73 = arith.constant 0 : index
      %c0_74 = arith.constant 0 : index
      %101 = vector.load %arg11[%c1_72, %c0_73, %c0_74] : memref<2x8x64xf32, #tpu.memory_space<vmem>>, vector<1x8x64xf32>
      %102 = vector.shape_cast %101 : vector<1x8x64xf32> to vector<8x64xf32>
      %c1_75 = arith.constant 1 : index
      %c0_76 = arith.constant 0 : index
      %c0_77 = arith.constant 0 : index
      %103 = vector.load %arg10[%c1_75, %c0_76, %c0_77] : memref<2x8x1xf32, #tpu.memory_space<vmem>>, vector<1x8x1xf32>
      %104 = vector.shape_cast %103 : vector<1x8x1xf32> to vector<8x1xf32>
      %105 = tpu.reciprocal %104 : vector<8x1xf32> -> vector<8x1xf32>
      %106 = vector.broadcast %105 : vector<8x1xf32> to vector<8x64xf32>
      %107 = arith.mulf %102, %106 : vector<8x64xf32>
      %108 = tpu.concatenate %100, %107 in 1 : vector<8x64xf32>, vector<8x64xf32> -> vector<8x128xf32>
      %109 = arith.truncf %108 : vector<8x128xf32> to vector<8x128xbf16>
      %c0_78 = arith.constant 0 : index
      %c0_79 = arith.constant 0 : index
      %c0_80 = arith.constant 0 : index
      %110 = vector.load %arg8[%c0_78, %c0_79, %c0_80] : memref<1x8x128xbf16, #tpu.memory_space<vmem>>, vector<1x8x128xbf16>
      %111 = vector.shape_cast %110 : vector<1x8x128xbf16> to vector<8x128xbf16>
      %112 = vector.shape_cast %109 : vector<8x128xbf16> to vector<1x8x128xbf16>
      tpu.vector_store %arg8[%c0_78, %c0_79, %c0_80], %112 {strides = array<i32>} : memref<1x8x128xbf16, #tpu.memory_space<vmem>>, vector<1x8x128xbf16>,
    } else {
    }
    return
  }
  func.func @transform_0(%arg0: i32, %arg1: i32, %arg2: i32, %arg3: i32) -> (i32, i32, i32) {
    %c0_i32 = arith.constant 0 : i32
    return %arg0, %arg2, %arg1 : i32, i32, i32
  }
  func.func @transform_1(%arg0: i32, %arg1: i32, %arg2: i32, %arg3: i32) -> (i32, i32, i32) {
    %c1_i32 = arith.constant 1 : i32
    %0 = arith.addi %c1_i32, %arg1 : i32
    %c0_i32 = arith.constant 0 : i32
    return %arg0, %arg3, %0 : i32, i32, i32
  }
  func.func @transform_2(%arg0: i32, %arg1: i32, %arg2: i32, %arg3: i32) -> (i32, i32, i32) {
    %c2_i32 = arith.constant 2 : i32
    %0 = arith.addi %c2_i32, %arg1 : i32
    %c0_i32 = arith.constant 0 : i32
    return %arg0, %arg3, %0 : i32, i32, i32
  }
  func.func @transform_3(%arg0: i32, %arg1: i32, %arg2: i32, %arg3: i32) -> (i32, i32, i32) {
    %c0_i32 = arith.constant 0 : i32
    %c0_i32_0 = arith.constant 0 : i32
    return %arg0, %c0_i32, %arg3 : i32, i32, i32
  }
  func.func @transform_4(%arg0: i32, %arg1: i32, %arg2: i32, %arg3: i32) -> (i32, i32, i32) {
    %c0_i32 = arith.constant 0 : i32
    return %arg0, %arg2, %arg1 : i32, i32, i32
  }
}

module attributes {stable_mosaic.version = 11 : i64} {
  func.func @_matmul_res_ln_kernel(%arg0: i32, %arg1: i32, %arg2: memref<16x128xbf16, #tpu.memory_space<vmem>>, %arg3: memref<128x128xbf16, #tpu.memory_space<vmem>>, %arg4: memref<1x128xf32, #tpu.memory_space<vmem>>, %arg5: memref<16x128xbf16, #tpu.memory_space<vmem>>, %arg6: memref<1x128xf32, #tpu.memory_space<vmem>>, %arg7: memref<1x128xf32, #tpu.memory_space<vmem>>, %arg8: memref<16x128xbf16, #tpu.memory_space<vmem>>, %arg9: memref<16x128xf32, #tpu.memory_space<vmem>>) attributes {dimension_semantics = [#tpu.dimension_semantics<parallel>, #tpu.dimension_semantics<arbitrary>], iteration_bounds = array<i64: 1, 1>, scalar_prefetch = 0 : i64, scratch_operands = 1 : i64, tpu.core_type = #tpu.core_type<tc>, window_params = [{transform_indices = @transform_0, window_bounds = array<i64: 16, 128>}, {transform_indices = @transform_1, window_bounds = array<i64: 128, 128>}, {pipeline_mode = #tpu.pipeline_mode<synchronous>, transform_indices = @transform_2, window_bounds = array<i64: 1, 128>}, {transform_indices = @transform_3, window_bounds = array<i64: 16, 128>}, {pipeline_mode = #tpu.pipeline_mode<synchronous>, transform_indices = @transform_4, window_bounds = array<i64: 1, 128>}, {pipeline_mode = #tpu.pipeline_mode<synchronous>, transform_indices = @transform_5, window_bounds = array<i64: 1, 128>}, {transform_indices = @transform_6, window_bounds = array<i64: 16, 128>}]} {
    %c0_i32 = arith.constant 0 : i32
    %0 = arith.cmpi eq, %arg1, %c0_i32 : i32
    %1 = arith.extui %0 : i1 to i32
    %c0_i32_0 = arith.constant 0 : i32
    %2 = arith.cmpi ne, %1, %c0_i32_0 : i32
    scf.if %2 {
      %cst_10 = arith.constant 0.000000e+00 : f32
      %12 = vector.broadcast %cst_10 : f32 to vector<16x128xf32>
      %c0_11 = arith.constant 0 : index
      %c0_12 = arith.constant 0 : index
      %13 = vector.load %arg9[%c0_11, %c0_12] : memref<16x128xf32, #tpu.memory_space<vmem>>, vector<16x128xf32>
      tpu.vector_store %arg9[%c0_11, %c0_12], %12 {strides = array<i32>} : memref<16x128xf32, #tpu.memory_space<vmem>>, vector<16x128xf32>,
    } else {
    }
    %c0 = arith.constant 0 : index
    %c0_1 = arith.constant 0 : index
    %3 = vector.load %arg9[%c0, %c0_1] : memref<16x128xf32, #tpu.memory_space<vmem>>, vector<16x128xf32>
    %c0_2 = arith.constant 0 : index
    %c0_3 = arith.constant 0 : index
    %4 = vector.load %arg2[%c0_2, %c0_3] : memref<16x128xbf16, #tpu.memory_space<vmem>>, vector<16x128xbf16>
    %c0_4 = arith.constant 0 : index
    %c0_5 = arith.constant 0 : index
    %5 = vector.load %arg3[%c0_4, %c0_5] : memref<128x128xbf16, #tpu.memory_space<vmem>>, vector<128x128xbf16>
    %cst = arith.constant dense<0.000000e+00> : vector<16x128xf32>
    %6 = tpu.matmul %4, %5, %cst {dimension_numbers = #tpu.dot_dimension_numbers<[1], [0], [0], [1], [0, 0, 1, 1], [], []>} : vector<16x128xbf16>, vector<128x128xbf16>, vector<16x128xf32> -> vector<16x128xf32>
    %7 = arith.addf %3, %6 : vector<16x128xf32>
    %c0_6 = arith.constant 0 : index
    %c0_7 = arith.constant 0 : index
    %8 = vector.load %arg9[%c0_6, %c0_7] : memref<16x128xf32, #tpu.memory_space<vmem>>, vector<16x128xf32>
    tpu.vector_store %arg9[%c0_6, %c0_7], %7 {strides = array<i32>} : memref<16x128xf32, #tpu.memory_space<vmem>>, vector<16x128xf32>,
    %c0_i32_8 = arith.constant 0 : i32
    %9 = arith.cmpi eq, %arg1, %c0_i32_8 : i32
    %10 = arith.extui %9 : i1 to i32
    %c0_i32_9 = arith.constant 0 : i32
    %11 = arith.cmpi ne, %10, %c0_i32_9 : i32
    scf.if %11 {
      %c0_10 = arith.constant 0 : index
      %c0_11 = arith.constant 0 : index
      %12 = vector.load %arg9[%c0_10, %c0_11] : memref<16x128xf32, #tpu.memory_space<vmem>>, vector<16x128xf32>
      %c0_12 = arith.constant 0 : index
      %c0_13 = arith.constant 0 : index
      %13 = vector.load %arg4[%c0_12, %c0_13] : memref<1x128xf32, #tpu.memory_space<vmem>>, vector<1x128xf32>
      %14 = vector.broadcast %13 : vector<1x128xf32> to vector<16x128xf32>
      %15 = arith.addf %12, %14 : vector<16x128xf32>
      %c0_14 = arith.constant 0 : index
      %c0_15 = arith.constant 0 : index
      %16 = vector.load %arg5[%c0_14, %c0_15] : memref<16x128xbf16, #tpu.memory_space<vmem>>, vector<16x128xbf16>
      %17 = arith.extf %16 : vector<16x128xbf16> to vector<16x128xf32>
      %18 = arith.addf %15, %17 : vector<16x128xf32>
      %cst_16 = arith.constant dense<0.000000e+00> : vector<16xf32>
      %19 = vector.multi_reduction <add>, %18, %cst_16 [1] : vector<16x128xf32> to vector<16xf32>
      %20 = vector.shape_cast %19 : vector<16xf32> to vector<16x1xf32>
      %cst_17 = arith.constant 1.280000e+02 : f32
      %21 = vector.broadcast %cst_17 : f32 to vector<16x1xf32>
      %22 = arith.divf %20, %21 : vector<16x1xf32>
      %23 = vector.broadcast %22 : vector<16x1xf32> to vector<16x128xf32>
      %24 = arith.subf %18, %23 : vector<16x128xf32>
      %25 = arith.mulf %24, %24 : vector<16x128xf32>
      %cst_18 = arith.constant dense<0.000000e+00> : vector<16xf32>
      %26 = vector.multi_reduction <add>, %25, %cst_18 [1] : vector<16x128xf32> to vector<16xf32>
      %27 = vector.shape_cast %26 : vector<16xf32> to vector<16x1xf32>
      %cst_19 = arith.constant 1.280000e+02 : f32
      %28 = vector.broadcast %cst_19 : f32 to vector<16x1xf32>
      %29 = arith.divf %27, %28 : vector<16x1xf32>
      %cst_20 = arith.constant 9.99999996E-13 : f32
      %30 = vector.broadcast %cst_20 : f32 to vector<16x1xf32>
      %31 = arith.addf %29, %30 : vector<16x1xf32>
      %32 = math.rsqrt %31 : vector<16x1xf32>
      %33 = vector.broadcast %32 : vector<16x1xf32> to vector<16x128xf32>
      %34 = arith.mulf %24, %33 : vector<16x128xf32>
      %c0_21 = arith.constant 0 : index
      %c0_22 = arith.constant 0 : index
      %35 = vector.load %arg6[%c0_21, %c0_22] : memref<1x128xf32, #tpu.memory_space<vmem>>, vector<1x128xf32>
      %36 = vector.broadcast %35 : vector<1x128xf32> to vector<16x128xf32>
      %37 = arith.mulf %34, %36 : vector<16x128xf32>
      %c0_23 = arith.constant 0 : index
      %c0_24 = arith.constant 0 : index
      %38 = vector.load %arg7[%c0_23, %c0_24] : memref<1x128xf32, #tpu.memory_space<vmem>>, vector<1x128xf32>
      %39 = vector.broadcast %38 : vector<1x128xf32> to vector<16x128xf32>
      %40 = arith.addf %37, %39 : vector<16x128xf32>
      %41 = arith.truncf %40 : vector<16x128xf32> to vector<16x128xbf16>
      %c0_25 = arith.constant 0 : index
      %c0_26 = arith.constant 0 : index
      %42 = vector.load %arg8[%c0_25, %c0_26] : memref<16x128xbf16, #tpu.memory_space<vmem>>, vector<16x128xbf16>
      tpu.vector_store %arg8[%c0_25, %c0_26], %41 {strides = array<i32>} : memref<16x128xbf16, #tpu.memory_space<vmem>>, vector<16x128xbf16>,
    } else {
    }
    return
  }
  func.func @transform_0(%arg0: i32, %arg1: i32) -> (i32, i32) {
    %c0_i32 = arith.constant 0 : i32
    return %arg0, %arg1 : i32, i32
  }
  func.func @transform_1(%arg0: i32, %arg1: i32) -> (i32, i32) {
    %c0_i32 = arith.constant 0 : i32
    %c0_i32_0 = arith.constant 0 : i32
    return %arg1, %c0_i32 : i32, i32
  }
  func.func @transform_2(%arg0: i32, %arg1: i32) -> (i32, i32) {
    %c0_i32 = arith.constant 0 : i32
    %c0_i32_0 = arith.constant 0 : i32
    %c0_i32_1 = arith.constant 0 : i32
    return %c0_i32, %c0_i32_0 : i32, i32
  }
  func.func @transform_3(%arg0: i32, %arg1: i32) -> (i32, i32) {
    %c0_i32 = arith.constant 0 : i32
    %c0_i32_0 = arith.constant 0 : i32
    return %arg0, %c0_i32 : i32, i32
  }
  func.func @transform_4(%arg0: i32, %arg1: i32) -> (i32, i32) {
    %c0_i32 = arith.constant 0 : i32
    %c0_i32_0 = arith.constant 0 : i32
    %c0_i32_1 = arith.constant 0 : i32
    return %c0_i32, %c0_i32_0 : i32, i32
  }
  func.func @transform_5(%arg0: i32, %arg1: i32) -> (i32, i32) {
    %c0_i32 = arith.constant 0 : i32
    %c0_i32_0 = arith.constant 0 : i32
    %c0_i32_1 = arith.constant 0 : i32
    return %c0_i32, %c0_i32_0 : i32, i32
  }
  func.func @transform_6(%arg0: i32, %arg1: i32) -> (i32, i32) {
    %c0_i32 = arith.constant 0 : i32
    %c0_i32_0 = arith.constant 0 : i32
    return %arg0, %c0_i32 : i32, i32
  }
}

module attributes {stable_mosaic.version = 11 : i64} {
  func.func @_matmul_kernel(%arg0: i32, %arg1: i32, %arg2: i32, %arg3: memref<16x128xbf16, #tpu.memory_space<vmem>>, %arg4: memref<128x256xbf16, #tpu.memory_space<vmem>>, %arg5: memref<1x256xf32, #tpu.memory_space<vmem>>, %arg6: memref<16x256xbf16, #tpu.memory_space<vmem>>, %arg7: memref<16x256xf32, #tpu.memory_space<vmem>>) attributes {dimension_semantics = [#tpu.dimension_semantics<parallel>, #tpu.dimension_semantics<parallel>, #tpu.dimension_semantics<arbitrary>], iteration_bounds = array<i64: 1, 1, 1>, scalar_prefetch = 0 : i64, scratch_operands = 1 : i64, tpu.core_type = #tpu.core_type<tc>, window_params = [{transform_indices = @transform_0, window_bounds = array<i64: 16, 128>}, {transform_indices = @transform_1, window_bounds = array<i64: 128, 256>}, {transform_indices = @transform_2, window_bounds = array<i64: 1, 256>}, {transform_indices = @transform_3, window_bounds = array<i64: 16, 256>}]} {
    %c0_i32 = arith.constant 0 : i32
    %0 = arith.cmpi eq, %arg2, %c0_i32 : i32
    %1 = arith.extui %0 : i1 to i32
    %c0_i32_0 = arith.constant 0 : i32
    %2 = arith.cmpi ne, %1, %c0_i32_0 : i32
    scf.if %2 {
      %cst_10 = arith.constant 0.000000e+00 : f32
      %12 = vector.broadcast %cst_10 : f32 to vector<16x256xf32>
      %c0_11 = arith.constant 0 : index
      %c0_12 = arith.constant 0 : index
      %13 = vector.load %arg7[%c0_11, %c0_12] : memref<16x256xf32, #tpu.memory_space<vmem>>, vector<16x256xf32>
      tpu.vector_store %arg7[%c0_11, %c0_12], %12 {strides = array<i32>} : memref<16x256xf32, #tpu.memory_space<vmem>>, vector<16x256xf32>,
    } else {
    }
    %c0 = arith.constant 0 : index
    %c0_1 = arith.constant 0 : index
    %3 = vector.load %arg7[%c0, %c0_1] : memref<16x256xf32, #tpu.memory_space<vmem>>, vector<16x256xf32>
    %c0_2 = arith.constant 0 : index
    %c0_3 = arith.constant 0 : index
    %4 = vector.load %arg3[%c0_2, %c0_3] : memref<16x128xbf16, #tpu.memory_space<vmem>>, vector<16x128xbf16>
    %c0_4 = arith.constant 0 : index
    %c0_5 = arith.constant 0 : index
    %5 = vector.load %arg4[%c0_4, %c0_5] : memref<128x256xbf16, #tpu.memory_space<vmem>>, vector<128x256xbf16>
    %cst = arith.constant dense<0.000000e+00> : vector<16x256xf32>
    %6 = tpu.matmul %4, %5, %cst {dimension_numbers = #tpu.dot_dimension_numbers<[1], [0], [0], [1], [0, 0, 1, 1], [], []>} : vector<16x128xbf16>, vector<128x256xbf16>, vector<16x256xf32> -> vector<16x256xf32>
    %7 = arith.addf %3, %6 : vector<16x256xf32>
    %c0_6 = arith.constant 0 : index
    %c0_7 = arith.constant 0 : index
    %8 = vector.load %arg7[%c0_6, %c0_7] : memref<16x256xf32, #tpu.memory_space<vmem>>, vector<16x256xf32>
    tpu.vector_store %arg7[%c0_6, %c0_7], %7 {strides = array<i32>} : memref<16x256xf32, #tpu.memory_space<vmem>>, vector<16x256xf32>,
    %c0_i32_8 = arith.constant 0 : i32
    %9 = arith.cmpi eq, %arg2, %c0_i32_8 : i32
    %10 = arith.extui %9 : i1 to i32
    %c0_i32_9 = arith.constant 0 : i32
    %11 = arith.cmpi ne, %10, %c0_i32_9 : i32
    scf.if %11 {
      %c0_10 = arith.constant 0 : index
      %c0_11 = arith.constant 0 : index
      %12 = vector.load %arg7[%c0_10, %c0_11] : memref<16x256xf32, #tpu.memory_space<vmem>>, vector<16x256xf32>
      %c0_12 = arith.constant 0 : index
      %c0_13 = arith.constant 0 : index
      %13 = vector.load %arg5[%c0_12, %c0_13] : memref<1x256xf32, #tpu.memory_space<vmem>>, vector<1x256xf32>
      %14 = vector.broadcast %13 : vector<1x256xf32> to vector<16x256xf32>
      %15 = arith.addf %12, %14 : vector<16x256xf32>
      %cst_14 = arith.constant 5.000000e-01 : f32
      %16 = vector.broadcast %cst_14 : f32 to vector<16x256xf32>
      %17 = arith.mulf %16, %15 : vector<16x256xf32>
      %cst_15 = arith.constant 4.471500e-02 : f32
      %18 = vector.broadcast %cst_15 : f32 to vector<16x256xf32>
      %19 = arith.mulf %18, %15 : vector<16x256xf32>
      %20 = arith.mulf %19, %15 : vector<16x256xf32>
      %21 = arith.mulf %20, %15 : vector<16x256xf32>
      %22 = arith.addf %15, %21 : vector<16x256xf32>
      %cst_16 = arith.constant 0.797884583 : f32
      %23 = vector.broadcast %cst_16 : f32 to vector<16x256xf32>
      %24 = arith.mulf %23, %22 : vector<16x256xf32>
      %25 = math.tanh %24 : vector<16x256xf32>
      %cst_17 = arith.constant 1.000000e+00 : f32
      %26 = vector.broadcast %cst_17 : f32 to vector<16x256xf32>
      %27 = arith.addf %26, %25 : vector<16x256xf32>
      %28 = arith.mulf %17, %27 : vector<16x256xf32>
      %29 = arith.truncf %28 : vector<16x256xf32> to vector<16x256xbf16>
      %c0_18 = arith.constant 0 : index
      %c0_19 = arith.constant 0 : index
      %30 = vector.load %arg6[%c0_18, %c0_19] : memref<16x256xbf16, #tpu.memory_space<vmem>>, vector<16x256xbf16>
      tpu.vector_store %arg6[%c0_18, %c0_19], %29 {strides = array<i32>} : memref<16x256xbf16, #tpu.memory_space<vmem>>, vector<16x256xbf16>,
    } else {
    }
    return
  }
  func.func @transform_0(%arg0: i32, %arg1: i32, %arg2: i32) -> (i32, i32) {
    %c0_i32 = arith.constant 0 : i32
    return %arg0, %arg2 : i32, i32
  }
  func.func @transform_1(%arg0: i32, %arg1: i32, %arg2: i32) -> (i32, i32) {
    %c0_i32 = arith.constant 0 : i32
    return %arg2, %arg1 : i32, i32
  }
  func.func @transform_2(%arg0: i32, %arg1: i32, %arg2: i32) -> (i32, i32) {
    %c0_i32 = arith.constant 0 : i32
    %c0_i32_0 = arith.constant 0 : i32
    return %c0_i32, %arg1 : i32, i32
  }
  func.func @transform_3(%arg0: i32, %arg1: i32, %arg2: i32) -> (i32, i32) {
    %c0_i32 = arith.constant 0 : i32
    return %arg0, %arg1 : i32, i32
  }
}

module attributes {stable_mosaic.version = 11 : i64} {
  func.func @_matmul_kernel(%arg0: i32, %arg1: i32, %arg2: i32, %arg3: memref<16x128xbf16, #tpu.memory_space<vmem>>, %arg4: memref<128x512xbf16, #tpu.memory_space<vmem>>, %arg5: memref<1x512xf32, #tpu.memory_space<vmem>>, %arg6: memref<16x512xbf16, #tpu.memory_space<vmem>>, %arg7: memref<16x512xf32, #tpu.memory_space<vmem>>) attributes {dimension_semantics = [#tpu.dimension_semantics<parallel>, #tpu.dimension_semantics<parallel>, #tpu.dimension_semantics<arbitrary>], iteration_bounds = array<i64: 1, 2, 1>, scalar_prefetch = 0 : i64, scratch_operands = 1 : i64, tpu.core_type = #tpu.core_type<tc>, window_params = [{transform_indices = @transform_0, window_bounds = array<i64: 16, 128>}, {transform_indices = @transform_1, window_bounds = array<i64: 128, 512>}, {transform_indices = @transform_2, window_bounds = array<i64: 1, 512>}, {transform_indices = @transform_3, window_bounds = array<i64: 16, 512>}]} {
    %c0_i32 = arith.constant 0 : i32
    %0 = arith.cmpi eq, %arg2, %c0_i32 : i32
    %1 = arith.extui %0 : i1 to i32
    %c0_i32_0 = arith.constant 0 : i32
    %2 = arith.cmpi ne, %1, %c0_i32_0 : i32
    scf.if %2 {
      %cst_10 = arith.constant 0.000000e+00 : f32
      %12 = vector.broadcast %cst_10 : f32 to vector<16x512xf32>
      %c0_11 = arith.constant 0 : index
      %c0_12 = arith.constant 0 : index
      %13 = vector.load %arg7[%c0_11, %c0_12] : memref<16x512xf32, #tpu.memory_space<vmem>>, vector<16x512xf32>
      tpu.vector_store %arg7[%c0_11, %c0_12], %12 {strides = array<i32>} : memref<16x512xf32, #tpu.memory_space<vmem>>, vector<16x512xf32>,
    } else {
    }
    %c0 = arith.constant 0 : index
    %c0_1 = arith.constant 0 : index
    %3 = vector.load %arg7[%c0, %c0_1] : memref<16x512xf32, #tpu.memory_space<vmem>>, vector<16x512xf32>
    %c0_2 = arith.constant 0 : index
    %c0_3 = arith.constant 0 : index
    %4 = vector.load %arg3[%c0_2, %c0_3] : memref<16x128xbf16, #tpu.memory_space<vmem>>, vector<16x128xbf16>
    %c0_4 = arith.constant 0 : index
    %c0_5 = arith.constant 0 : index
    %5 = vector.load %arg4[%c0_4, %c0_5] : memref<128x512xbf16, #tpu.memory_space<vmem>>, vector<128x512xbf16>
    %cst = arith.constant dense<0.000000e+00> : vector<16x512xf32>
    %6 = tpu.matmul %4, %5, %cst {dimension_numbers = #tpu.dot_dimension_numbers<[1], [0], [0], [1], [0, 0, 1, 1], [], []>} : vector<16x128xbf16>, vector<128x512xbf16>, vector<16x512xf32> -> vector<16x512xf32>
    %7 = arith.addf %3, %6 : vector<16x512xf32>
    %c0_6 = arith.constant 0 : index
    %c0_7 = arith.constant 0 : index
    %8 = vector.load %arg7[%c0_6, %c0_7] : memref<16x512xf32, #tpu.memory_space<vmem>>, vector<16x512xf32>
    tpu.vector_store %arg7[%c0_6, %c0_7], %7 {strides = array<i32>} : memref<16x512xf32, #tpu.memory_space<vmem>>, vector<16x512xf32>,
    %c0_i32_8 = arith.constant 0 : i32
    %9 = arith.cmpi eq, %arg2, %c0_i32_8 : i32
    %10 = arith.extui %9 : i1 to i32
    %c0_i32_9 = arith.constant 0 : i32
    %11 = arith.cmpi ne, %10, %c0_i32_9 : i32
    scf.if %11 {
      %c0_10 = arith.constant 0 : index
      %c0_11 = arith.constant 0 : index
      %12 = vector.load %arg7[%c0_10, %c0_11] : memref<16x512xf32, #tpu.memory_space<vmem>>, vector<16x512xf32>
      %c0_12 = arith.constant 0 : index
      %c0_13 = arith.constant 0 : index
      %13 = vector.load %arg5[%c0_12, %c0_13] : memref<1x512xf32, #tpu.memory_space<vmem>>, vector<1x512xf32>
      %14 = vector.broadcast %13 : vector<1x512xf32> to vector<16x512xf32>
      %15 = arith.addf %12, %14 : vector<16x512xf32>
      %16 = arith.truncf %15 : vector<16x512xf32> to vector<16x512xbf16>
      %c0_14 = arith.constant 0 : index
      %c0_15 = arith.constant 0 : index
      %17 = vector.load %arg6[%c0_14, %c0_15] : memref<16x512xbf16, #tpu.memory_space<vmem>>, vector<16x512xbf16>
      tpu.vector_store %arg6[%c0_14, %c0_15], %16 {strides = array<i32>} : memref<16x512xbf16, #tpu.memory_space<vmem>>, vector<16x512xbf16>,
    } else {
    }
    return
  }
  func.func @transform_0(%arg0: i32, %arg1: i32, %arg2: i32) -> (i32, i32) {
    %c0_i32 = arith.constant 0 : i32
    return %arg0, %arg2 : i32, i32
  }
  func.func @transform_1(%arg0: i32, %arg1: i32, %arg2: i32) -> (i32, i32) {
    %c0_i32 = arith.constant 0 : i32
    return %arg2, %arg1 : i32, i32
  }
  func.func @transform_2(%arg0: i32, %arg1: i32, %arg2: i32) -> (i32, i32) {
    %c0_i32 = arith.constant 0 : i32
    %c0_i32_0 = arith.constant 0 : i32
    return %c0_i32, %arg1 : i32, i32
  }
  func.func @transform_3(%arg0: i32, %arg1: i32, %arg2: i32) -> (i32, i32) {
    %c0_i32 = arith.constant 0 : i32
    return %arg0, %arg1 : i32, i32
  }
}

module attributes {stable_mosaic.version = 11 : i64} {
  func.func @_matmul_res_ln_kernel(%arg0: i32, %arg1: i32, %arg2: memref<16x256xbf16, #tpu.memory_space<vmem>>, %arg3: memref<256x128xbf16, #tpu.memory_space<vmem>>, %arg4: memref<1x128xf32, #tpu.memory_space<vmem>>, %arg5: memref<16x128xbf16, #tpu.memory_space<vmem>>, %arg6: memref<1x128xf32, #tpu.memory_space<vmem>>, %arg7: memref<1x128xf32, #tpu.memory_space<vmem>>, %arg8: memref<16x128xbf16, #tpu.memory_space<vmem>>, %arg9: memref<16x128xf32, #tpu.memory_space<vmem>>) attributes {dimension_semantics = [#tpu.dimension_semantics<parallel>, #tpu.dimension_semantics<arbitrary>], iteration_bounds = array<i64: 1, 1>, scalar_prefetch = 0 : i64, scratch_operands = 1 : i64, tpu.core_type = #tpu.core_type<tc>, window_params = [{transform_indices = @transform_0, window_bounds = array<i64: 16, 256>}, {transform_indices = @transform_1, window_bounds = array<i64: 256, 128>}, {pipeline_mode = #tpu.pipeline_mode<synchronous>, transform_indices = @transform_2, window_bounds = array<i64: 1, 128>}, {transform_indices = @transform_3, window_bounds = array<i64: 16, 128>}, {pipeline_mode = #tpu.pipeline_mode<synchronous>, transform_indices = @transform_4, window_bounds = array<i64: 1, 128>}, {pipeline_mode = #tpu.pipeline_mode<synchronous>, transform_indices = @transform_5, window_bounds = array<i64: 1, 128>}, {transform_indices = @transform_6, window_bounds = array<i64: 16, 128>}]} {
    %c0_i32 = arith.constant 0 : i32
    %0 = arith.cmpi eq, %arg1, %c0_i32 : i32
    %1 = arith.extui %0 : i1 to i32
    %c0_i32_0 = arith.constant 0 : i32
    %2 = arith.cmpi ne, %1, %c0_i32_0 : i32
    scf.if %2 {
      %cst_10 = arith.constant 0.000000e+00 : f32
      %12 = vector.broadcast %cst_10 : f32 to vector<16x128xf32>
      %c0_11 = arith.constant 0 : index
      %c0_12 = arith.constant 0 : index
      %13 = vector.load %arg9[%c0_11, %c0_12] : memref<16x128xf32, #tpu.memory_space<vmem>>, vector<16x128xf32>
      tpu.vector_store %arg9[%c0_11, %c0_12], %12 {strides = array<i32>} : memref<16x128xf32, #tpu.memory_space<vmem>>, vector<16x128xf32>,
    } else {
    }
    %c0 = arith.constant 0 : index
    %c0_1 = arith.constant 0 : index
    %3 = vector.load %arg9[%c0, %c0_1] : memref<16x128xf32, #tpu.memory_space<vmem>>, vector<16x128xf32>
    %c0_2 = arith.constant 0 : index
    %c0_3 = arith.constant 0 : index
    %4 = vector.load %arg2[%c0_2, %c0_3] : memref<16x256xbf16, #tpu.memory_space<vmem>>, vector<16x256xbf16>
    %c0_4 = arith.constant 0 : index
    %c0_5 = arith.constant 0 : index
    %5 = vector.load %arg3[%c0_4, %c0_5] : memref<256x128xbf16, #tpu.memory_space<vmem>>, vector<256x128xbf16>
    %cst = arith.constant dense<0.000000e+00> : vector<16x128xf32>
    %6 = tpu.matmul %4, %5, %cst {dimension_numbers = #tpu.dot_dimension_numbers<[1], [0], [0], [1], [0, 0, 1, 1], [], []>} : vector<16x256xbf16>, vector<256x128xbf16>, vector<16x128xf32> -> vector<16x128xf32>
    %7 = arith.addf %3, %6 : vector<16x128xf32>
    %c0_6 = arith.constant 0 : index
    %c0_7 = arith.constant 0 : index
    %8 = vector.load %arg9[%c0_6, %c0_7] : memref<16x128xf32, #tpu.memory_space<vmem>>, vector<16x128xf32>
    tpu.vector_store %arg9[%c0_6, %c0_7], %7 {strides = array<i32>} : memref<16x128xf32, #tpu.memory_space<vmem>>, vector<16x128xf32>,
    %c0_i32_8 = arith.constant 0 : i32
    %9 = arith.cmpi eq, %arg1, %c0_i32_8 : i32
    %10 = arith.extui %9 : i1 to i32
    %c0_i32_9 = arith.constant 0 : i32
    %11 = arith.cmpi ne, %10, %c0_i32_9 : i32
    scf.if %11 {
      %c0_10 = arith.constant 0 : index
      %c0_11 = arith.constant 0 : index
      %12 = vector.load %arg9[%c0_10, %c0_11] : memref<16x128xf32, #tpu.memory_space<vmem>>, vector<16x128xf32>
      %c0_12 = arith.constant 0 : index
      %c0_13 = arith.constant 0 : index
      %13 = vector.load %arg4[%c0_12, %c0_13] : memref<1x128xf32, #tpu.memory_space<vmem>>, vector<1x128xf32>
      %14 = vector.broadcast %13 : vector<1x128xf32> to vector<16x128xf32>
      %15 = arith.addf %12, %14 : vector<16x128xf32>
      %c0_14 = arith.constant 0 : index
      %c0_15 = arith.constant 0 : index
      %16 = vector.load %arg5[%c0_14, %c0_15] : memref<16x128xbf16, #tpu.memory_space<vmem>>, vector<16x128xbf16>
      %17 = arith.extf %16 : vector<16x128xbf16> to vector<16x128xf32>
      %18 = arith.addf %15, %17 : vector<16x128xf32>
      %cst_16 = arith.constant dense<0.000000e+00> : vector<16xf32>
      %19 = vector.multi_reduction <add>, %18, %cst_16 [1] : vector<16x128xf32> to vector<16xf32>
      %20 = vector.shape_cast %19 : vector<16xf32> to vector<16x1xf32>
      %cst_17 = arith.constant 1.280000e+02 : f32
      %21 = vector.broadcast %cst_17 : f32 to vector<16x1xf32>
      %22 = arith.divf %20, %21 : vector<16x1xf32>
      %23 = vector.broadcast %22 : vector<16x1xf32> to vector<16x128xf32>
      %24 = arith.subf %18, %23 : vector<16x128xf32>
      %25 = arith.mulf %24, %24 : vector<16x128xf32>
      %cst_18 = arith.constant dense<0.000000e+00> : vector<16xf32>
      %26 = vector.multi_reduction <add>, %25, %cst_18 [1] : vector<16x128xf32> to vector<16xf32>
      %27 = vector.shape_cast %26 : vector<16xf32> to vector<16x1xf32>
      %cst_19 = arith.constant 1.280000e+02 : f32
      %28 = vector.broadcast %cst_19 : f32 to vector<16x1xf32>
      %29 = arith.divf %27, %28 : vector<16x1xf32>
      %cst_20 = arith.constant 9.99999996E-13 : f32
      %30 = vector.broadcast %cst_20 : f32 to vector<16x1xf32>
      %31 = arith.addf %29, %30 : vector<16x1xf32>
      %32 = math.rsqrt %31 : vector<16x1xf32>
      %33 = vector.broadcast %32 : vector<16x1xf32> to vector<16x128xf32>
      %34 = arith.mulf %24, %33 : vector<16x128xf32>
      %c0_21 = arith.constant 0 : index
      %c0_22 = arith.constant 0 : index
      %35 = vector.load %arg6[%c0_21, %c0_22] : memref<1x128xf32, #tpu.memory_space<vmem>>, vector<1x128xf32>
      %36 = vector.broadcast %35 : vector<1x128xf32> to vector<16x128xf32>
      %37 = arith.mulf %34, %36 : vector<16x128xf32>
      %c0_23 = arith.constant 0 : index
      %c0_24 = arith.constant 0 : index
      %38 = vector.load %arg7[%c0_23, %c0_24] : memref<1x128xf32, #tpu.memory_space<vmem>>, vector<1x128xf32>
      %39 = vector.broadcast %38 : vector<1x128xf32> to vector<16x128xf32>
      %40 = arith.addf %37, %39 : vector<16x128xf32>
      %41 = arith.truncf %40 : vector<16x128xf32> to vector<16x128xbf16>
      %c0_25 = arith.constant 0 : index
      %c0_26 = arith.constant 0 : index
      %42 = vector.load %arg8[%c0_25, %c0_26] : memref<16x128xbf16, #tpu.memory_space<vmem>>, vector<16x128xbf16>
      tpu.vector_store %arg8[%c0_25, %c0_26], %41 {strides = array<i32>} : memref<16x128xbf16, #tpu.memory_space<vmem>>, vector<16x128xbf16>,
    } else {
    }
    return
  }
  func.func @transform_0(%arg0: i32, %arg1: i32) -> (i32, i32) {
    %c0_i32 = arith.constant 0 : i32
    return %arg0, %arg1 : i32, i32
  }
  func.func @transform_1(%arg0: i32, %arg1: i32) -> (i32, i32) {
    %c0_i32 = arith.constant 0 : i32
    %c0_i32_0 = arith.constant 0 : i32
    return %arg1, %c0_i32 : i32, i32
  }
  func.func @transform_2(%arg0: i32, %arg1: i32) -> (i32, i32) {
    %c0_i32 = arith.constant 0 : i32
    %c0_i32_0 = arith.constant 0 : i32
    %c0_i32_1 = arith.constant 0 : i32
    return %c0_i32, %c0_i32_0 : i32, i32
  }
  func.func @transform_3(%arg0: i32, %arg1: i32) -> (i32, i32) {
    %c0_i32 = arith.constant 0 : i32
    %c0_i32_0 = arith.constant 0 : i32
    return %arg0, %c0_i32 : i32, i32
  }
  func.func @transform_4(%arg0: i32, %arg1: i32) -> (i32, i32) {
    %c0_i32 = arith.constant 0 : i32
    %c0_i32_0 = arith.constant 0 : i32
    %c0_i32_1 = arith.constant 0 : i32
    return %c0_i32, %c0_i32_0 : i32, i32
  }
  func.func @transform_5(%arg0: i32, %arg1: i32) -> (i32, i32) {
    %c0_i32 = arith.constant 0 : i32
    %c0_i32_0 = arith.constant 0 : i32
    %c0_i32_1 = arith.constant 0 : i32
    return %c0_i32, %c0_i32_0 : i32, i32
  }
  func.func @transform_6(%arg0: i32, %arg1: i32) -> (i32, i32) {
    %c0_i32 = arith.constant 0 : i32
    %c0_i32_0 = arith.constant 0 : i32
    return %arg0, %c0_i32 : i32, i32
  }
}

module attributes {stable_mosaic.version = 11 : i64} {
  func.func @_bilstm_kernel(%arg0: i32, %arg1: i32, %arg2: memref<2x8x512xbf16, #tpu.memory_space<vmem>>, %arg3: memref<1x128x512xbf16, #tpu.memory_space<vmem>>, %arg4: memref<2x8x128xbf16, #tpu.memory_space<vmem>>, %arg5: memref<2x128xf32, #tpu.memory_space<vmem>>, %arg6: memref<2x128xf32, #tpu.memory_space<vmem>>) attributes {dimension_semantics = [#tpu.dimension_semantics<parallel>, #tpu.dimension_semantics<arbitrary>], iteration_bounds = array<i64: 2, 1>, scalar_prefetch = 0 : i64, scratch_operands = 2 : i64, tpu.core_type = #tpu.core_type<tc>, window_params = [{transform_indices = @transform_0, window_bounds = array<i64: 2, 8, 512>}, {transform_indices = @transform_1, window_bounds = array<i64: 1, 128, 512>}, {transform_indices = @transform_2, window_bounds = array<i64: 2, 8, 128>}]} {
    %c0_i32 = arith.constant 0 : i32
    %0 = arith.cmpi eq, %arg1, %c0_i32 : i32
    %1 = arith.extui %0 : i1 to i32
    %c0_i32_0 = arith.constant 0 : i32
    %2 = arith.cmpi ne, %1, %c0_i32_0 : i32
    scf.if %2 {
      %cst = arith.constant 0.000000e+00 : f32
      %11 = vector.broadcast %cst : f32 to vector<2x128xf32>
      %c0_6 = arith.constant 0 : index
      %c0_7 = arith.constant 0 : index
      %12 = vector.load %arg5[%c0_6, %c0_7] : memref<2x128xf32, #tpu.memory_space<vmem>>, vector<2x128xf32>
      tpu.vector_store %arg5[%c0_6, %c0_7], %11 {strides = array<i32>} : memref<2x128xf32, #tpu.memory_space<vmem>>, vector<2x128xf32>,
      %cst_8 = arith.constant 0.000000e+00 : f32
      %13 = vector.broadcast %cst_8 : f32 to vector<2x128xf32>
      %c0_9 = arith.constant 0 : index
      %c0_10 = arith.constant 0 : index
      %14 = vector.load %arg6[%c0_9, %c0_10] : memref<2x128xf32, #tpu.memory_space<vmem>>, vector<2x128xf32>
      tpu.vector_store %arg6[%c0_9, %c0_10], %13 {strides = array<i32>} : memref<2x128xf32, #tpu.memory_space<vmem>>, vector<2x128xf32>,
    } else {
    }
    %c0 = arith.constant 0 : index
    %c0_1 = arith.constant 0 : index
    %c0_2 = arith.constant 0 : index
    %3 = vector.load %arg3[%c0, %c0_1, %c0_2] : memref<1x128x512xbf16, #tpu.memory_space<vmem>>, vector<1x128x512xbf16>
    %4 = vector.shape_cast %3 : vector<1x128x512xbf16> to vector<128x512xbf16>
    %c0_i32_3 = arith.constant 0 : i32
    %5 = arith.cmpi eq, %arg0, %c0_i32_3 : i32
    %6 = arith.extui %5 : i1 to i32
    %c0_i32_4 = arith.constant 0 : i32
    %7 = arith.cmpi ne, %6, %c0_i32_4 : i32
    scf.if %7 {
      %c0_6 = arith.constant 0 : index
      %c0_7 = arith.constant 0 : index
      %11 = vector.load %arg5[%c0_6, %c0_7] : memref<2x128xf32, #tpu.memory_space<vmem>>, vector<2x128xf32>
      %c0_8 = arith.constant 0 : index
      %c0_9 = arith.constant 0 : index
      %12 = vector.load %arg6[%c0_8, %c0_9] : memref<2x128xf32, #tpu.memory_space<vmem>>, vector<2x128xf32>
      %c0_10 = arith.constant 0 : index
      %c0_11 = arith.constant 0 : index
      %c0_12 = arith.constant 0 : index
      %13 = vector.load %arg2[%c0_10, %c0_11, %c0_12] : memref<2x8x512xbf16, #tpu.memory_space<vmem>>, vector<2x1x512xbf16>
      %14 = vector.shape_cast %13 : vector<2x1x512xbf16> to vector<2x512xbf16>
      %15 = arith.extf %14 : vector<2x512xbf16> to vector<2x512xf32>
      %16 = arith.truncf %11 : vector<2x128xf32> to vector<2x128xbf16>
      %cst = arith.constant dense<0.000000e+00> : vector<2x512xf32>
      %17 = tpu.matmul %16, %4, %cst {dimension_numbers = #tpu.dot_dimension_numbers<[1], [0], [0], [1], [0, 0, 1, 1], [], []>} : vector<2x128xbf16>, vector<128x512xbf16>, vector<2x512xf32> -> vector<2x512xf32>
      %18 = arith.addf %15, %17 : vector<2x512xf32>
      %19 = vector.extract_strided_slice %18 {offsets = [0, 0], sizes = [2, 128], strides = [1, 1]} : vector<2x512xf32> to vector<2x128xf32>
      %20 = arith.negf %19 : vector<2x128xf32>
      %21 = math.exp %20 : vector<2x128xf32>
      %cst_13 = arith.constant 1.000000e+00 : f32
      %22 = vector.broadcast %cst_13 : f32 to vector<2x128xf32>
      %23 = arith.addf %22, %21 : vector<2x128xf32>
      %24 = arith.divf %22, %23 : vector<2x128xf32>
      %25 = vector.extract_strided_slice %18 {offsets = [0, 128], sizes = [2, 128], strides = [1, 1]} : vector<2x512xf32> to vector<2x128xf32>
      %26 = arith.negf %25 : vector<2x128xf32>
      %27 = math.exp %26 : vector<2x128xf32>
      %cst_14 = arith.constant 1.000000e+00 : f32
      %28 = vector.broadcast %cst_14 : f32 to vector<2x128xf32>
      %29 = arith.addf %28, %27 : vector<2x128xf32>
      %30 = arith.divf %28, %29 : vector<2x128xf32>
      %31 = vector.extract_strided_slice %18 {offsets = [0, 256], sizes = [2, 128], strides = [1, 1]} : vector<2x512xf32> to vector<2x128xf32>
      %32 = math.tanh %31 : vector<2x128xf32>
      %33 = vector.extract_strided_slice %18 {offsets = [0, 384], sizes = [2, 128], strides = [1, 1]} : vector<2x512xf32> to vector<2x128xf32>
      %34 = arith.negf %33 : vector<2x128xf32>
      %35 = math.exp %34 : vector<2x128xf32>
      %cst_15 = arith.constant 1.000000e+00 : f32
      %36 = vector.broadcast %cst_15 : f32 to vector<2x128xf32>
      %37 = arith.addf %36, %35 : vector<2x128xf32>
      %38 = arith.divf %36, %37 : vector<2x128xf32>
      %39 = arith.mulf %30, %12 : vector<2x128xf32>
      %40 = arith.mulf %24, %32 : vector<2x128xf32>
      %41 = arith.addf %39, %40 : vector<2x128xf32>
      %42 = math.tanh %41 : vector<2x128xf32>
      %43 = arith.mulf %38, %42 : vector<2x128xf32>
      %44 = arith.truncf %43 : vector<2x128xf32> to vector<2x128xbf16>
      %c0_16 = arith.constant 0 : index
      %c0_17 = arith.constant 0 : index
      %c0_18 = arith.constant 0 : index
      %45 = vector.load %arg4[%c0_16, %c0_17, %c0_18] : memref<2x8x128xbf16, #tpu.memory_space<vmem>>, vector<2x1x128xbf16>
      %46 = vector.shape_cast %45 : vector<2x1x128xbf16> to vector<2x128xbf16>
      %47 = vector.shape_cast %44 : vector<2x128xbf16> to vector<2x1x128xbf16>
      tpu.vector_store %arg4[%c0_16, %c0_17, %c0_18], %47 {strides = array<i32>} : memref<2x8x128xbf16, #tpu.memory_space<vmem>>, vector<2x1x128xbf16>,
      %c0_19 = arith.constant 0 : index
      %c1 = arith.constant 1 : index
      %c0_20 = arith.constant 0 : index
      %48 = vector.load %arg2[%c0_19, %c1, %c0_20] : memref<2x8x512xbf16, #tpu.memory_space<vmem>>, vector<2x1x512xbf16>
      %49 = vector.shape_cast %48 : vector<2x1x512xbf16> to vector<2x512xbf16>
      %50 = arith.extf %49 : vector<2x512xbf16> to vector<2x512xf32>
      %51 = arith.truncf %43 : vector<2x128xf32> to vector<2x128xbf16>
      %cst_21 = arith.constant dense<0.000000e+00> : vector<2x512xf32>
      %52 = tpu.matmul %51, %4, %cst_21 {dimension_numbers = #tpu.dot_dimension_numbers<[1], [0], [0], [1], [0, 0, 1, 1], [], []>} : vector<2x128xbf16>, vector<128x512xbf16>, vector<2x512xf32> -> vector<2x512xf32>
      %53 = arith.addf %50, %52 : vector<2x512xf32>
      %54 = vector.extract_strided_slice %53 {offsets = [0, 0], sizes = [2, 128], strides = [1, 1]} : vector<2x512xf32> to vector<2x128xf32>
      %55 = arith.negf %54 : vector<2x128xf32>
      %56 = math.exp %55 : vector<2x128xf32>
      %cst_22 = arith.constant 1.000000e+00 : f32
      %57 = vector.broadcast %cst_22 : f32 to vector<2x128xf32>
      %58 = arith.addf %57, %56 : vector<2x128xf32>
      %59 = arith.divf %57, %58 : vector<2x128xf32>
      %60 = vector.extract_strided_slice %53 {offsets = [0, 128], sizes = [2, 128], strides = [1, 1]} : vector<2x512xf32> to vector<2x128xf32>
      %61 = arith.negf %60 : vector<2x128xf32>
      %62 = math.exp %61 : vector<2x128xf32>
      %cst_23 = arith.constant 1.000000e+00 : f32
      %63 = vector.broadcast %cst_23 : f32 to vector<2x128xf32>
      %64 = arith.addf %63, %62 : vector<2x128xf32>
      %65 = arith.divf %63, %64 : vector<2x128xf32>
      %66 = vector.extract_strided_slice %53 {offsets = [0, 256], sizes = [2, 128], strides = [1, 1]} : vector<2x512xf32> to vector<2x128xf32>
      %67 = math.tanh %66 : vector<2x128xf32>
      %68 = vector.extract_strided_slice %53 {offsets = [0, 384], sizes = [2, 128], strides = [1, 1]} : vector<2x512xf32> to vector<2x128xf32>
      %69 = arith.negf %68 : vector<2x128xf32>
      %70 = math.exp %69 : vector<2x128xf32>
      %cst_24 = arith.constant 1.000000e+00 : f32
      %71 = vector.broadcast %cst_24 : f32 to vector<2x128xf32>
      %72 = arith.addf %71, %70 : vector<2x128xf32>
      %73 = arith.divf %71, %72 : vector<2x128xf32>
      %74 = arith.mulf %65, %41 : vector<2x128xf32>
      %75 = arith.mulf %59, %67 : vector<2x128xf32>
      %76 = arith.addf %74, %75 : vector<2x128xf32>
      %77 = math.tanh %76 : vector<2x128xf32>
      %78 = arith.mulf %73, %77 : vector<2x128xf32>
      %79 = arith.truncf %78 : vector<2x128xf32> to vector<2x128xbf16>
      %c0_25 = arith.constant 0 : index
      %c1_26 = arith.constant 1 : index
      %c0_27 = arith.constant 0 : index
      %80 = vector.load %arg4[%c0_25, %c1_26, %c0_27] : memref<2x8x128xbf16, #tpu.memory_space<vmem>>, vector<2x1x128xbf16>
      %81 = vector.shape_cast %80 : vector<2x1x128xbf16> to vector<2x128xbf16>
      %82 = vector.shape_cast %79 : vector<2x128xbf16> to vector<2x1x128xbf16>
      tpu.vector_store %arg4[%c0_25, %c1_26, %c0_27], %82 {strides = array<i32>} : memref<2x8x128xbf16, #tpu.memory_space<vmem>>, vector<2x1x128xbf16>,
      %c0_28 = arith.constant 0 : index
      %c2 = arith.constant 2 : index
      %c0_29 = arith.constant 0 : index
      %83 = vector.load %arg2[%c0_28, %c2, %c0_29] : memref<2x8x512xbf16, #tpu.memory_space<vmem>>, vector<2x1x512xbf16>
      %84 = vector.shape_cast %83 : vector<2x1x512xbf16> to vector<2x512xbf16>
      %85 = arith.extf %84 : vector<2x512xbf16> to vector<2x512xf32>
      %86 = arith.truncf %78 : vector<2x128xf32> to vector<2x128xbf16>
      %cst_30 = arith.constant dense<0.000000e+00> : vector<2x512xf32>
      %87 = tpu.matmul %86, %4, %cst_30 {dimension_numbers = #tpu.dot_dimension_numbers<[1], [0], [0], [1], [0, 0, 1, 1], [], []>} : vector<2x128xbf16>, vector<128x512xbf16>, vector<2x512xf32> -> vector<2x512xf32>
      %88 = arith.addf %85, %87 : vector<2x512xf32>
      %89 = vector.extract_strided_slice %88 {offsets = [0, 0], sizes = [2, 128], strides = [1, 1]} : vector<2x512xf32> to vector<2x128xf32>
      %90 = arith.negf %89 : vector<2x128xf32>
      %91 = math.exp %90 : vector<2x128xf32>
      %cst_31 = arith.constant 1.000000e+00 : f32
      %92 = vector.broadcast %cst_31 : f32 to vector<2x128xf32>
      %93 = arith.addf %92, %91 : vector<2x128xf32>
      %94 = arith.divf %92, %93 : vector<2x128xf32>
      %95 = vector.extract_strided_slice %88 {offsets = [0, 128], sizes = [2, 128], strides = [1, 1]} : vector<2x512xf32> to vector<2x128xf32>
      %96 = arith.negf %95 : vector<2x128xf32>
      %97 = math.exp %96 : vector<2x128xf32>
      %cst_32 = arith.constant 1.000000e+00 : f32
      %98 = vector.broadcast %cst_32 : f32 to vector<2x128xf32>
      %99 = arith.addf %98, %97 : vector<2x128xf32>
      %100 = arith.divf %98, %99 : vector<2x128xf32>
      %101 = vector.extract_strided_slice %88 {offsets = [0, 256], sizes = [2, 128], strides = [1, 1]} : vector<2x512xf32> to vector<2x128xf32>
      %102 = math.tanh %101 : vector<2x128xf32>
      %103 = vector.extract_strided_slice %88 {offsets = [0, 384], sizes = [2, 128], strides = [1, 1]} : vector<2x512xf32> to vector<2x128xf32>
      %104 = arith.negf %103 : vector<2x128xf32>
      %105 = math.exp %104 : vector<2x128xf32>
      %cst_33 = arith.constant 1.000000e+00 : f32
      %106 = vector.broadcast %cst_33 : f32 to vector<2x128xf32>
      %107 = arith.addf %106, %105 : vector<2x128xf32>
      %108 = arith.divf %106, %107 : vector<2x128xf32>
      %109 = arith.mulf %100, %76 : vector<2x128xf32>
      %110 = arith.mulf %94, %102 : vector<2x128xf32>
      %111 = arith.addf %109, %110 : vector<2x128xf32>
      %112 = math.tanh %111 : vector<2x128xf32>
      %113 = arith.mulf %108, %112 : vector<2x128xf32>
      %114 = arith.truncf %113 : vector<2x128xf32> to vector<2x128xbf16>
      %c0_34 = arith.constant 0 : index
      %c2_35 = arith.constant 2 : index
      %c0_36 = arith.constant 0 : index
      %115 = vector.load %arg4[%c0_34, %c2_35, %c0_36] : memref<2x8x128xbf16, #tpu.memory_space<vmem>>, vector<2x1x128xbf16>
      %116 = vector.shape_cast %115 : vector<2x1x128xbf16> to vector<2x128xbf16>
      %117 = vector.shape_cast %114 : vector<2x128xbf16> to vector<2x1x128xbf16>
      tpu.vector_store %arg4[%c0_34, %c2_35, %c0_36], %117 {strides = array<i32>} : memref<2x8x128xbf16, #tpu.memory_space<vmem>>, vector<2x1x128xbf16>,
      %c0_37 = arith.constant 0 : index
      %c3 = arith.constant 3 : index
      %c0_38 = arith.constant 0 : index
      %118 = vector.load %arg2[%c0_37, %c3, %c0_38] : memref<2x8x512xbf16, #tpu.memory_space<vmem>>, vector<2x1x512xbf16>
      %119 = vector.shape_cast %118 : vector<2x1x512xbf16> to vector<2x512xbf16>
      %120 = arith.extf %119 : vector<2x512xbf16> to vector<2x512xf32>
      %121 = arith.truncf %113 : vector<2x128xf32> to vector<2x128xbf16>
      %cst_39 = arith.constant dense<0.000000e+00> : vector<2x512xf32>
      %122 = tpu.matmul %121, %4, %cst_39 {dimension_numbers = #tpu.dot_dimension_numbers<[1], [0], [0], [1], [0, 0, 1, 1], [], []>} : vector<2x128xbf16>, vector<128x512xbf16>, vector<2x512xf32> -> vector<2x512xf32>
      %123 = arith.addf %120, %122 : vector<2x512xf32>
      %124 = vector.extract_strided_slice %123 {offsets = [0, 0], sizes = [2, 128], strides = [1, 1]} : vector<2x512xf32> to vector<2x128xf32>
      %125 = arith.negf %124 : vector<2x128xf32>
      %126 = math.exp %125 : vector<2x128xf32>
      %cst_40 = arith.constant 1.000000e+00 : f32
      %127 = vector.broadcast %cst_40 : f32 to vector<2x128xf32>
      %128 = arith.addf %127, %126 : vector<2x128xf32>
      %129 = arith.divf %127, %128 : vector<2x128xf32>
      %130 = vector.extract_strided_slice %123 {offsets = [0, 128], sizes = [2, 128], strides = [1, 1]} : vector<2x512xf32> to vector<2x128xf32>
      %131 = arith.negf %130 : vector<2x128xf32>
      %132 = math.exp %131 : vector<2x128xf32>
      %cst_41 = arith.constant 1.000000e+00 : f32
      %133 = vector.broadcast %cst_41 : f32 to vector<2x128xf32>
      %134 = arith.addf %133, %132 : vector<2x128xf32>
      %135 = arith.divf %133, %134 : vector<2x128xf32>
      %136 = vector.extract_strided_slice %123 {offsets = [0, 256], sizes = [2, 128], strides = [1, 1]} : vector<2x512xf32> to vector<2x128xf32>
      %137 = math.tanh %136 : vector<2x128xf32>
      %138 = vector.extract_strided_slice %123 {offsets = [0, 384], sizes = [2, 128], strides = [1, 1]} : vector<2x512xf32> to vector<2x128xf32>
      %139 = arith.negf %138 : vector<2x128xf32>
      %140 = math.exp %139 : vector<2x128xf32>
      %cst_42 = arith.constant 1.000000e+00 : f32
      %141 = vector.broadcast %cst_42 : f32 to vector<2x128xf32>
      %142 = arith.addf %141, %140 : vector<2x128xf32>
      %143 = arith.divf %141, %142 : vector<2x128xf32>
      %144 = arith.mulf %135, %111 : vector<2x128xf32>
      %145 = arith.mulf %129, %137 : vector<2x128xf32>
      %146 = arith.addf %144, %145 : vector<2x128xf32>
      %147 = math.tanh %146 : vector<2x128xf32>
      %148 = arith.mulf %143, %147 : vector<2x128xf32>
      %149 = arith.truncf %148 : vector<2x128xf32> to vector<2x128xbf16>
      %c0_43 = arith.constant 0 : index
      %c3_44 = arith.constant 3 : index
      %c0_45 = arith.constant 0 : index
      %150 = vector.load %arg4[%c0_43, %c3_44, %c0_45] : memref<2x8x128xbf16, #tpu.memory_space<vmem>>, vector<2x1x128xbf16>
      %151 = vector.shape_cast %150 : vector<2x1x128xbf16> to vector<2x128xbf16>
      %152 = vector.shape_cast %149 : vector<2x128xbf16> to vector<2x1x128xbf16>
      tpu.vector_store %arg4[%c0_43, %c3_44, %c0_45], %152 {strides = array<i32>} : memref<2x8x128xbf16, #tpu.memory_space<vmem>>, vector<2x1x128xbf16>,
      %c0_46 = arith.constant 0 : index
      %c4 = arith.constant 4 : index
      %c0_47 = arith.constant 0 : index
      %153 = vector.load %arg2[%c0_46, %c4, %c0_47] : memref<2x8x512xbf16, #tpu.memory_space<vmem>>, vector<2x1x512xbf16>
      %154 = vector.shape_cast %153 : vector<2x1x512xbf16> to vector<2x512xbf16>
      %155 = arith.extf %154 : vector<2x512xbf16> to vector<2x512xf32>
      %156 = arith.truncf %148 : vector<2x128xf32> to vector<2x128xbf16>
      %cst_48 = arith.constant dense<0.000000e+00> : vector<2x512xf32>
      %157 = tpu.matmul %156, %4, %cst_48 {dimension_numbers = #tpu.dot_dimension_numbers<[1], [0], [0], [1], [0, 0, 1, 1], [], []>} : vector<2x128xbf16>, vector<128x512xbf16>, vector<2x512xf32> -> vector<2x512xf32>
      %158 = arith.addf %155, %157 : vector<2x512xf32>
      %159 = vector.extract_strided_slice %158 {offsets = [0, 0], sizes = [2, 128], strides = [1, 1]} : vector<2x512xf32> to vector<2x128xf32>
      %160 = arith.negf %159 : vector<2x128xf32>
      %161 = math.exp %160 : vector<2x128xf32>
      %cst_49 = arith.constant 1.000000e+00 : f32
      %162 = vector.broadcast %cst_49 : f32 to vector<2x128xf32>
      %163 = arith.addf %162, %161 : vector<2x128xf32>
      %164 = arith.divf %162, %163 : vector<2x128xf32>
      %165 = vector.extract_strided_slice %158 {offsets = [0, 128], sizes = [2, 128], strides = [1, 1]} : vector<2x512xf32> to vector<2x128xf32>
      %166 = arith.negf %165 : vector<2x128xf32>
      %167 = math.exp %166 : vector<2x128xf32>
      %cst_50 = arith.constant 1.000000e+00 : f32
      %168 = vector.broadcast %cst_50 : f32 to vector<2x128xf32>
      %169 = arith.addf %168, %167 : vector<2x128xf32>
      %170 = arith.divf %168, %169 : vector<2x128xf32>
      %171 = vector.extract_strided_slice %158 {offsets = [0, 256], sizes = [2, 128], strides = [1, 1]} : vector<2x512xf32> to vector<2x128xf32>
      %172 = math.tanh %171 : vector<2x128xf32>
      %173 = vector.extract_strided_slice %158 {offsets = [0, 384], sizes = [2, 128], strides = [1, 1]} : vector<2x512xf32> to vector<2x128xf32>
      %174 = arith.negf %173 : vector<2x128xf32>
      %175 = math.exp %174 : vector<2x128xf32>
      %cst_51 = arith.constant 1.000000e+00 : f32
      %176 = vector.broadcast %cst_51 : f32 to vector<2x128xf32>
      %177 = arith.addf %176, %175 : vector<2x128xf32>
      %178 = arith.divf %176, %177 : vector<2x128xf32>
      %179 = arith.mulf %170, %146 : vector<2x128xf32>
      %180 = arith.mulf %164, %172 : vector<2x128xf32>
      %181 = arith.addf %179, %180 : vector<2x128xf32>
      %182 = math.tanh %181 : vector<2x128xf32>
      %183 = arith.mulf %178, %182 : vector<2x128xf32>
      %184 = arith.truncf %183 : vector<2x128xf32> to vector<2x128xbf16>
      %c0_52 = arith.constant 0 : index
      %c4_53 = arith.constant 4 : index
      %c0_54 = arith.constant 0 : index
      %185 = vector.load %arg4[%c0_52, %c4_53, %c0_54] : memref<2x8x128xbf16, #tpu.memory_space<vmem>>, vector<2x1x128xbf16>
      %186 = vector.shape_cast %185 : vector<2x1x128xbf16> to vector<2x128xbf16>
      %187 = vector.shape_cast %184 : vector<2x128xbf16> to vector<2x1x128xbf16>
      tpu.vector_store %arg4[%c0_52, %c4_53, %c0_54], %187 {strides = array<i32>} : memref<2x8x128xbf16, #tpu.memory_space<vmem>>, vector<2x1x128xbf16>,
      %c0_55 = arith.constant 0 : index
      %c5 = arith.constant 5 : index
      %c0_56 = arith.constant 0 : index
      %188 = vector.load %arg2[%c0_55, %c5, %c0_56] : memref<2x8x512xbf16, #tpu.memory_space<vmem>>, vector<2x1x512xbf16>
      %189 = vector.shape_cast %188 : vector<2x1x512xbf16> to vector<2x512xbf16>
      %190 = arith.extf %189 : vector<2x512xbf16> to vector<2x512xf32>
      %191 = arith.truncf %183 : vector<2x128xf32> to vector<2x128xbf16>
      %cst_57 = arith.constant dense<0.000000e+00> : vector<2x512xf32>
      %192 = tpu.matmul %191, %4, %cst_57 {dimension_numbers = #tpu.dot_dimension_numbers<[1], [0], [0], [1], [0, 0, 1, 1], [], []>} : vector<2x128xbf16>, vector<128x512xbf16>, vector<2x512xf32> -> vector<2x512xf32>
      %193 = arith.addf %190, %192 : vector<2x512xf32>
      %194 = vector.extract_strided_slice %193 {offsets = [0, 0], sizes = [2, 128], strides = [1, 1]} : vector<2x512xf32> to vector<2x128xf32>
      %195 = arith.negf %194 : vector<2x128xf32>
      %196 = math.exp %195 : vector<2x128xf32>
      %cst_58 = arith.constant 1.000000e+00 : f32
      %197 = vector.broadcast %cst_58 : f32 to vector<2x128xf32>
      %198 = arith.addf %197, %196 : vector<2x128xf32>
      %199 = arith.divf %197, %198 : vector<2x128xf32>
      %200 = vector.extract_strided_slice %193 {offsets = [0, 128], sizes = [2, 128], strides = [1, 1]} : vector<2x512xf32> to vector<2x128xf32>
      %201 = arith.negf %200 : vector<2x128xf32>
      %202 = math.exp %201 : vector<2x128xf32>
      %cst_59 = arith.constant 1.000000e+00 : f32
      %203 = vector.broadcast %cst_59 : f32 to vector<2x128xf32>
      %204 = arith.addf %203, %202 : vector<2x128xf32>
      %205 = arith.divf %203, %204 : vector<2x128xf32>
      %206 = vector.extract_strided_slice %193 {offsets = [0, 256], sizes = [2, 128], strides = [1, 1]} : vector<2x512xf32> to vector<2x128xf32>
      %207 = math.tanh %206 : vector<2x128xf32>
      %208 = vector.extract_strided_slice %193 {offsets = [0, 384], sizes = [2, 128], strides = [1, 1]} : vector<2x512xf32> to vector<2x128xf32>
      %209 = arith.negf %208 : vector<2x128xf32>
      %210 = math.exp %209 : vector<2x128xf32>
      %cst_60 = arith.constant 1.000000e+00 : f32
      %211 = vector.broadcast %cst_60 : f32 to vector<2x128xf32>
      %212 = arith.addf %211, %210 : vector<2x128xf32>
      %213 = arith.divf %211, %212 : vector<2x128xf32>
      %214 = arith.mulf %205, %181 : vector<2x128xf32>
      %215 = arith.mulf %199, %207 : vector<2x128xf32>
      %216 = arith.addf %214, %215 : vector<2x128xf32>
      %217 = math.tanh %216 : vector<2x128xf32>
      %218 = arith.mulf %213, %217 : vector<2x128xf32>
      %219 = arith.truncf %218 : vector<2x128xf32> to vector<2x128xbf16>
      %c0_61 = arith.constant 0 : index
      %c5_62 = arith.constant 5 : index
      %c0_63 = arith.constant 0 : index
      %220 = vector.load %arg4[%c0_61, %c5_62, %c0_63] : memref<2x8x128xbf16, #tpu.memory_space<vmem>>, vector<2x1x128xbf16>
      %221 = vector.shape_cast %220 : vector<2x1x128xbf16> to vector<2x128xbf16>
      %222 = vector.shape_cast %219 : vector<2x128xbf16> to vector<2x1x128xbf16>
      tpu.vector_store %arg4[%c0_61, %c5_62, %c0_63], %222 {strides = array<i32>} : memref<2x8x128xbf16, #tpu.memory_space<vmem>>, vector<2x1x128xbf16>,
      %c0_64 = arith.constant 0 : index
      %c6 = arith.constant 6 : index
      %c0_65 = arith.constant 0 : index
      %223 = vector.load %arg2[%c0_64, %c6, %c0_65] : memref<2x8x512xbf16, #tpu.memory_space<vmem>>, vector<2x1x512xbf16>
      %224 = vector.shape_cast %223 : vector<2x1x512xbf16> to vector<2x512xbf16>
      %225 = arith.extf %224 : vector<2x512xbf16> to vector<2x512xf32>
      %226 = arith.truncf %218 : vector<2x128xf32> to vector<2x128xbf16>
      %cst_66 = arith.constant dense<0.000000e+00> : vector<2x512xf32>
      %227 = tpu.matmul %226, %4, %cst_66 {dimension_numbers = #tpu.dot_dimension_numbers<[1], [0], [0], [1], [0, 0, 1, 1], [], []>} : vector<2x128xbf16>, vector<128x512xbf16>, vector<2x512xf32> -> vector<2x512xf32>
      %228 = arith.addf %225, %227 : vector<2x512xf32>
      %229 = vector.extract_strided_slice %228 {offsets = [0, 0], sizes = [2, 128], strides = [1, 1]} : vector<2x512xf32> to vector<2x128xf32>
      %230 = arith.negf %229 : vector<2x128xf32>
      %231 = math.exp %230 : vector<2x128xf32>
      %cst_67 = arith.constant 1.000000e+00 : f32
      %232 = vector.broadcast %cst_67 : f32 to vector<2x128xf32>
      %233 = arith.addf %232, %231 : vector<2x128xf32>
      %234 = arith.divf %232, %233 : vector<2x128xf32>
      %235 = vector.extract_strided_slice %228 {offsets = [0, 128], sizes = [2, 128], strides = [1, 1]} : vector<2x512xf32> to vector<2x128xf32>
      %236 = arith.negf %235 : vector<2x128xf32>
      %237 = math.exp %236 : vector<2x128xf32>
      %cst_68 = arith.constant 1.000000e+00 : f32
      %238 = vector.broadcast %cst_68 : f32 to vector<2x128xf32>
      %239 = arith.addf %238, %237 : vector<2x128xf32>
      %240 = arith.divf %238, %239 : vector<2x128xf32>
      %241 = vector.extract_strided_slice %228 {offsets = [0, 256], sizes = [2, 128], strides = [1, 1]} : vector<2x512xf32> to vector<2x128xf32>
      %242 = math.tanh %241 : vector<2x128xf32>
      %243 = vector.extract_strided_slice %228 {offsets = [0, 384], sizes = [2, 128], strides = [1, 1]} : vector<2x512xf32> to vector<2x128xf32>
      %244 = arith.negf %243 : vector<2x128xf32>
      %245 = math.exp %244 : vector<2x128xf32>
      %cst_69 = arith.constant 1.000000e+00 : f32
      %246 = vector.broadcast %cst_69 : f32 to vector<2x128xf32>
      %247 = arith.addf %246, %245 : vector<2x128xf32>
      %248 = arith.divf %246, %247 : vector<2x128xf32>
      %249 = arith.mulf %240, %216 : vector<2x128xf32>
      %250 = arith.mulf %234, %242 : vector<2x128xf32>
      %251 = arith.addf %249, %250 : vector<2x128xf32>
      %252 = math.tanh %251 : vector<2x128xf32>
      %253 = arith.mulf %248, %252 : vector<2x128xf32>
      %254 = arith.truncf %253 : vector<2x128xf32> to vector<2x128xbf16>
      %c0_70 = arith.constant 0 : index
      %c6_71 = arith.constant 6 : index
      %c0_72 = arith.constant 0 : index
      %255 = vector.load %arg4[%c0_70, %c6_71, %c0_72] : memref<2x8x128xbf16, #tpu.memory_space<vmem>>, vector<2x1x128xbf16>
      %256 = vector.shape_cast %255 : vector<2x1x128xbf16> to vector<2x128xbf16>
      %257 = vector.shape_cast %254 : vector<2x128xbf16> to vector<2x1x128xbf16>
      tpu.vector_store %arg4[%c0_70, %c6_71, %c0_72], %257 {strides = array<i32>} : memref<2x8x128xbf16, #tpu.memory_space<vmem>>, vector<2x1x128xbf16>,
      %c0_73 = arith.constant 0 : index
      %c7 = arith.constant 7 : index
      %c0_74 = arith.constant 0 : index
      %258 = vector.load %arg2[%c0_73, %c7, %c0_74] : memref<2x8x512xbf16, #tpu.memory_space<vmem>>, vector<2x1x512xbf16>
      %259 = vector.shape_cast %258 : vector<2x1x512xbf16> to vector<2x512xbf16>
      %260 = arith.extf %259 : vector<2x512xbf16> to vector<2x512xf32>
      %261 = arith.truncf %253 : vector<2x128xf32> to vector<2x128xbf16>
      %cst_75 = arith.constant dense<0.000000e+00> : vector<2x512xf32>
      %262 = tpu.matmul %261, %4, %cst_75 {dimension_numbers = #tpu.dot_dimension_numbers<[1], [0], [0], [1], [0, 0, 1, 1], [], []>} : vector<2x128xbf16>, vector<128x512xbf16>, vector<2x512xf32> -> vector<2x512xf32>
      %263 = arith.addf %260, %262 : vector<2x512xf32>
      %264 = vector.extract_strided_slice %263 {offsets = [0, 0], sizes = [2, 128], strides = [1, 1]} : vector<2x512xf32> to vector<2x128xf32>
      %265 = arith.negf %264 : vector<2x128xf32>
      %266 = math.exp %265 : vector<2x128xf32>
      %cst_76 = arith.constant 1.000000e+00 : f32
      %267 = vector.broadcast %cst_76 : f32 to vector<2x128xf32>
      %268 = arith.addf %267, %266 : vector<2x128xf32>
      %269 = arith.divf %267, %268 : vector<2x128xf32>
      %270 = vector.extract_strided_slice %263 {offsets = [0, 128], sizes = [2, 128], strides = [1, 1]} : vector<2x512xf32> to vector<2x128xf32>
      %271 = arith.negf %270 : vector<2x128xf32>
      %272 = math.exp %271 : vector<2x128xf32>
      %cst_77 = arith.constant 1.000000e+00 : f32
      %273 = vector.broadcast %cst_77 : f32 to vector<2x128xf32>
      %274 = arith.addf %273, %272 : vector<2x128xf32>
      %275 = arith.divf %273, %274 : vector<2x128xf32>
      %276 = vector.extract_strided_slice %263 {offsets = [0, 256], sizes = [2, 128], strides = [1, 1]} : vector<2x512xf32> to vector<2x128xf32>
      %277 = math.tanh %276 : vector<2x128xf32>
      %278 = vector.extract_strided_slice %263 {offsets = [0, 384], sizes = [2, 128], strides = [1, 1]} : vector<2x512xf32> to vector<2x128xf32>
      %279 = arith.negf %278 : vector<2x128xf32>
      %280 = math.exp %279 : vector<2x128xf32>
      %cst_78 = arith.constant 1.000000e+00 : f32
      %281 = vector.broadcast %cst_78 : f32 to vector<2x128xf32>
      %282 = arith.addf %281, %280 : vector<2x128xf32>
      %283 = arith.divf %281, %282 : vector<2x128xf32>
      %284 = arith.mulf %275, %251 : vector<2x128xf32>
      %285 = arith.mulf %269, %277 : vector<2x128xf32>
      %286 = arith.addf %284, %285 : vector<2x128xf32>
      %287 = math.tanh %286 : vector<2x128xf32>
      %288 = arith.mulf %283, %287 : vector<2x128xf32>
      %289 = arith.truncf %288 : vector<2x128xf32> to vector<2x128xbf16>
      %c0_79 = arith.constant 0 : index
      %c7_80 = arith.constant 7 : index
      %c0_81 = arith.constant 0 : index
      %290 = vector.load %arg4[%c0_79, %c7_80, %c0_81] : memref<2x8x128xbf16, #tpu.memory_space<vmem>>, vector<2x1x128xbf16>
      %291 = vector.shape_cast %290 : vector<2x1x128xbf16> to vector<2x128xbf16>
      %292 = vector.shape_cast %289 : vector<2x128xbf16> to vector<2x1x128xbf16>
      tpu.vector_store %arg4[%c0_79, %c7_80, %c0_81], %292 {strides = array<i32>} : memref<2x8x128xbf16, #tpu.memory_space<vmem>>, vector<2x1x128xbf16>,
      %c0_82 = arith.constant 0 : index
      %c0_83 = arith.constant 0 : index
      %293 = vector.load %arg5[%c0_82, %c0_83] : memref<2x128xf32, #tpu.memory_space<vmem>>, vector<2x128xf32>
      tpu.vector_store %arg5[%c0_82, %c0_83], %288 {strides = array<i32>} : memref<2x128xf32, #tpu.memory_space<vmem>>, vector<2x128xf32>,
      %c0_84 = arith.constant 0 : index
      %c0_85 = arith.constant 0 : index
      %294 = vector.load %arg6[%c0_84, %c0_85] : memref<2x128xf32, #tpu.memory_space<vmem>>, vector<2x128xf32>
      tpu.vector_store %arg6[%c0_84, %c0_85], %286 {strides = array<i32>} : memref<2x128xf32, #tpu.memory_space<vmem>>, vector<2x128xf32>,
    } else {
    }
    %c1_i32 = arith.constant 1 : i32
    %8 = arith.cmpi eq, %arg0, %c1_i32 : i32
    %9 = arith.extui %8 : i1 to i32
    %c0_i32_5 = arith.constant 0 : i32
    %10 = arith.cmpi ne, %9, %c0_i32_5 : i32
    scf.if %10 {
      %c0_6 = arith.constant 0 : index
      %c0_7 = arith.constant 0 : index
      %11 = vector.load %arg5[%c0_6, %c0_7] : memref<2x128xf32, #tpu.memory_space<vmem>>, vector<2x128xf32>
      %c0_8 = arith.constant 0 : index
      %c0_9 = arith.constant 0 : index
      %12 = vector.load %arg6[%c0_8, %c0_9] : memref<2x128xf32, #tpu.memory_space<vmem>>, vector<2x128xf32>
      %c0_10 = arith.constant 0 : index
      %c7 = arith.constant 7 : index
      %c0_11 = arith.constant 0 : index
      %13 = vector.load %arg2[%c0_10, %c7, %c0_11] : memref<2x8x512xbf16, #tpu.memory_space<vmem>>, vector<2x1x512xbf16>
      %14 = vector.shape_cast %13 : vector<2x1x512xbf16> to vector<2x512xbf16>
      %15 = arith.extf %14 : vector<2x512xbf16> to vector<2x512xf32>
      %16 = arith.truncf %11 : vector<2x128xf32> to vector<2x128xbf16>
      %cst = arith.constant dense<0.000000e+00> : vector<2x512xf32>
      %17 = tpu.matmul %16, %4, %cst {dimension_numbers = #tpu.dot_dimension_numbers<[1], [0], [0], [1], [0, 0, 1, 1], [], []>} : vector<2x128xbf16>, vector<128x512xbf16>, vector<2x512xf32> -> vector<2x512xf32>
      %18 = arith.addf %15, %17 : vector<2x512xf32>
      %19 = vector.extract_strided_slice %18 {offsets = [0, 0], sizes = [2, 128], strides = [1, 1]} : vector<2x512xf32> to vector<2x128xf32>
      %20 = arith.negf %19 : vector<2x128xf32>
      %21 = math.exp %20 : vector<2x128xf32>
      %cst_12 = arith.constant 1.000000e+00 : f32
      %22 = vector.broadcast %cst_12 : f32 to vector<2x128xf32>
      %23 = arith.addf %22, %21 : vector<2x128xf32>
      %24 = arith.divf %22, %23 : vector<2x128xf32>
      %25 = vector.extract_strided_slice %18 {offsets = [0, 128], sizes = [2, 128], strides = [1, 1]} : vector<2x512xf32> to vector<2x128xf32>
      %26 = arith.negf %25 : vector<2x128xf32>
      %27 = math.exp %26 : vector<2x128xf32>
      %cst_13 = arith.constant 1.000000e+00 : f32
      %28 = vector.broadcast %cst_13 : f32 to vector<2x128xf32>
      %29 = arith.addf %28, %27 : vector<2x128xf32>
      %30 = arith.divf %28, %29 : vector<2x128xf32>
      %31 = vector.extract_strided_slice %18 {offsets = [0, 256], sizes = [2, 128], strides = [1, 1]} : vector<2x512xf32> to vector<2x128xf32>
      %32 = math.tanh %31 : vector<2x128xf32>
      %33 = vector.extract_strided_slice %18 {offsets = [0, 384], sizes = [2, 128], strides = [1, 1]} : vector<2x512xf32> to vector<2x128xf32>
      %34 = arith.negf %33 : vector<2x128xf32>
      %35 = math.exp %34 : vector<2x128xf32>
      %cst_14 = arith.constant 1.000000e+00 : f32
      %36 = vector.broadcast %cst_14 : f32 to vector<2x128xf32>
      %37 = arith.addf %36, %35 : vector<2x128xf32>
      %38 = arith.divf %36, %37 : vector<2x128xf32>
      %39 = arith.mulf %30, %12 : vector<2x128xf32>
      %40 = arith.mulf %24, %32 : vector<2x128xf32>
      %41 = arith.addf %39, %40 : vector<2x128xf32>
      %42 = math.tanh %41 : vector<2x128xf32>
      %43 = arith.mulf %38, %42 : vector<2x128xf32>
      %44 = arith.truncf %43 : vector<2x128xf32> to vector<2x128xbf16>
      %c0_15 = arith.constant 0 : index
      %c7_16 = arith.constant 7 : index
      %c0_17 = arith.constant 0 : index
      %45 = vector.load %arg4[%c0_15, %c7_16, %c0_17] : memref<2x8x128xbf16, #tpu.memory_space<vmem>>, vector<2x1x128xbf16>
      %46 = vector.shape_cast %45 : vector<2x1x128xbf16> to vector<2x128xbf16>
      %47 = vector.shape_cast %44 : vector<2x128xbf16> to vector<2x1x128xbf16>
      tpu.vector_store %arg4[%c0_15, %c7_16, %c0_17], %47 {strides = array<i32>} : memref<2x8x128xbf16, #tpu.memory_space<vmem>>, vector<2x1x128xbf16>,
      %c0_18 = arith.constant 0 : index
      %c6 = arith.constant 6 : index
      %c0_19 = arith.constant 0 : index
      %48 = vector.load %arg2[%c0_18, %c6, %c0_19] : memref<2x8x512xbf16, #tpu.memory_space<vmem>>, vector<2x1x512xbf16>
      %49 = vector.shape_cast %48 : vector<2x1x512xbf16> to vector<2x512xbf16>
      %50 = arith.extf %49 : vector<2x512xbf16> to vector<2x512xf32>
      %51 = arith.truncf %43 : vector<2x128xf32> to vector<2x128xbf16>
      %cst_20 = arith.constant dense<0.000000e+00> : vector<2x512xf32>
      %52 = tpu.matmul %51, %4, %cst_20 {dimension_numbers = #tpu.dot_dimension_numbers<[1], [0], [0], [1], [0, 0, 1, 1], [], []>} : vector<2x128xbf16>, vector<128x512xbf16>, vector<2x512xf32> -> vector<2x512xf32>
      %53 = arith.addf %50, %52 : vector<2x512xf32>
      %54 = vector.extract_strided_slice %53 {offsets = [0, 0], sizes = [2, 128], strides = [1, 1]} : vector<2x512xf32> to vector<2x128xf32>
      %55 = arith.negf %54 : vector<2x128xf32>
      %56 = math.exp %55 : vector<2x128xf32>
      %cst_21 = arith.constant 1.000000e+00 : f32
      %57 = vector.broadcast %cst_21 : f32 to vector<2x128xf32>
      %58 = arith.addf %57, %56 : vector<2x128xf32>
      %59 = arith.divf %57, %58 : vector<2x128xf32>
      %60 = vector.extract_strided_slice %53 {offsets = [0, 128], sizes = [2, 128], strides = [1, 1]} : vector<2x512xf32> to vector<2x128xf32>
      %61 = arith.negf %60 : vector<2x128xf32>
      %62 = math.exp %61 : vector<2x128xf32>
      %cst_22 = arith.constant 1.000000e+00 : f32
      %63 = vector.broadcast %cst_22 : f32 to vector<2x128xf32>
      %64 = arith.addf %63, %62 : vector<2x128xf32>
      %65 = arith.divf %63, %64 : vector<2x128xf32>
      %66 = vector.extract_strided_slice %53 {offsets = [0, 256], sizes = [2, 128], strides = [1, 1]} : vector<2x512xf32> to vector<2x128xf32>
      %67 = math.tanh %66 : vector<2x128xf32>
      %68 = vector.extract_strided_slice %53 {offsets = [0, 384], sizes = [2, 128], strides = [1, 1]} : vector<2x512xf32> to vector<2x128xf32>
      %69 = arith.negf %68 : vector<2x128xf32>
      %70 = math.exp %69 : vector<2x128xf32>
      %cst_23 = arith.constant 1.000000e+00 : f32
      %71 = vector.broadcast %cst_23 : f32 to vector<2x128xf32>
      %72 = arith.addf %71, %70 : vector<2x128xf32>
      %73 = arith.divf %71, %72 : vector<2x128xf32>
      %74 = arith.mulf %65, %41 : vector<2x128xf32>
      %75 = arith.mulf %59, %67 : vector<2x128xf32>
      %76 = arith.addf %74, %75 : vector<2x128xf32>
      %77 = math.tanh %76 : vector<2x128xf32>
      %78 = arith.mulf %73, %77 : vector<2x128xf32>
      %79 = arith.truncf %78 : vector<2x128xf32> to vector<2x128xbf16>
      %c0_24 = arith.constant 0 : index
      %c6_25 = arith.constant 6 : index
      %c0_26 = arith.constant 0 : index
      %80 = vector.load %arg4[%c0_24, %c6_25, %c0_26] : memref<2x8x128xbf16, #tpu.memory_space<vmem>>, vector<2x1x128xbf16>
      %81 = vector.shape_cast %80 : vector<2x1x128xbf16> to vector<2x128xbf16>
      %82 = vector.shape_cast %79 : vector<2x128xbf16> to vector<2x1x128xbf16>
      tpu.vector_store %arg4[%c0_24, %c6_25, %c0_26], %82 {strides = array<i32>} : memref<2x8x128xbf16, #tpu.memory_space<vmem>>, vector<2x1x128xbf16>,
      %c0_27 = arith.constant 0 : index
      %c5 = arith.constant 5 : index
      %c0_28 = arith.constant 0 : index
      %83 = vector.load %arg2[%c0_27, %c5, %c0_28] : memref<2x8x512xbf16, #tpu.memory_space<vmem>>, vector<2x1x512xbf16>
      %84 = vector.shape_cast %83 : vector<2x1x512xbf16> to vector<2x512xbf16>
      %85 = arith.extf %84 : vector<2x512xbf16> to vector<2x512xf32>
      %86 = arith.truncf %78 : vector<2x128xf32> to vector<2x128xbf16>
      %cst_29 = arith.constant dense<0.000000e+00> : vector<2x512xf32>
      %87 = tpu.matmul %86, %4, %cst_29 {dimension_numbers = #tpu.dot_dimension_numbers<[1], [0], [0], [1], [0, 0, 1, 1], [], []>} : vector<2x128xbf16>, vector<128x512xbf16>, vector<2x512xf32> -> vector<2x512xf32>
      %88 = arith.addf %85, %87 : vector<2x512xf32>
      %89 = vector.extract_strided_slice %88 {offsets = [0, 0], sizes = [2, 128], strides = [1, 1]} : vector<2x512xf32> to vector<2x128xf32>
      %90 = arith.negf %89 : vector<2x128xf32>
      %91 = math.exp %90 : vector<2x128xf32>
      %cst_30 = arith.constant 1.000000e+00 : f32
      %92 = vector.broadcast %cst_30 : f32 to vector<2x128xf32>
      %93 = arith.addf %92, %91 : vector<2x128xf32>
      %94 = arith.divf %92, %93 : vector<2x128xf32>
      %95 = vector.extract_strided_slice %88 {offsets = [0, 128], sizes = [2, 128], strides = [1, 1]} : vector<2x512xf32> to vector<2x128xf32>
      %96 = arith.negf %95 : vector<2x128xf32>
      %97 = math.exp %96 : vector<2x128xf32>
      %cst_31 = arith.constant 1.000000e+00 : f32
      %98 = vector.broadcast %cst_31 : f32 to vector<2x128xf32>
      %99 = arith.addf %98, %97 : vector<2x128xf32>
      %100 = arith.divf %98, %99 : vector<2x128xf32>
      %101 = vector.extract_strided_slice %88 {offsets = [0, 256], sizes = [2, 128], strides = [1, 1]} : vector<2x512xf32> to vector<2x128xf32>
      %102 = math.tanh %101 : vector<2x128xf32>
      %103 = vector.extract_strided_slice %88 {offsets = [0, 384], sizes = [2, 128], strides = [1, 1]} : vector<2x512xf32> to vector<2x128xf32>
      %104 = arith.negf %103 : vector<2x128xf32>
      %105 = math.exp %104 : vector<2x128xf32>
      %cst_32 = arith.constant 1.000000e+00 : f32
      %106 = vector.broadcast %cst_32 : f32 to vector<2x128xf32>
      %107 = arith.addf %106, %105 : vector<2x128xf32>
      %108 = arith.divf %106, %107 : vector<2x128xf32>
      %109 = arith.mulf %100, %76 : vector<2x128xf32>
      %110 = arith.mulf %94, %102 : vector<2x128xf32>
      %111 = arith.addf %109, %110 : vector<2x128xf32>
      %112 = math.tanh %111 : vector<2x128xf32>
      %113 = arith.mulf %108, %112 : vector<2x128xf32>
      %114 = arith.truncf %113 : vector<2x128xf32> to vector<2x128xbf16>
      %c0_33 = arith.constant 0 : index
      %c5_34 = arith.constant 5 : index
      %c0_35 = arith.constant 0 : index
      %115 = vector.load %arg4[%c0_33, %c5_34, %c0_35] : memref<2x8x128xbf16, #tpu.memory_space<vmem>>, vector<2x1x128xbf16>
      %116 = vector.shape_cast %115 : vector<2x1x128xbf16> to vector<2x128xbf16>
      %117 = vector.shape_cast %114 : vector<2x128xbf16> to vector<2x1x128xbf16>
      tpu.vector_store %arg4[%c0_33, %c5_34, %c0_35], %117 {strides = array<i32>} : memref<2x8x128xbf16, #tpu.memory_space<vmem>>, vector<2x1x128xbf16>,
      %c0_36 = arith.constant 0 : index
      %c4 = arith.constant 4 : index
      %c0_37 = arith.constant 0 : index
      %118 = vector.load %arg2[%c0_36, %c4, %c0_37] : memref<2x8x512xbf16, #tpu.memory_space<vmem>>, vector<2x1x512xbf16>
      %119 = vector.shape_cast %118 : vector<2x1x512xbf16> to vector<2x512xbf16>
      %120 = arith.extf %119 : vector<2x512xbf16> to vector<2x512xf32>
      %121 = arith.truncf %113 : vector<2x128xf32> to vector<2x128xbf16>
      %cst_38 = arith.constant dense<0.000000e+00> : vector<2x512xf32>
      %122 = tpu.matmul %121, %4, %cst_38 {dimension_numbers = #tpu.dot_dimension_numbers<[1], [0], [0], [1], [0, 0, 1, 1], [], []>} : vector<2x128xbf16>, vector<128x512xbf16>, vector<2x512xf32> -> vector<2x512xf32>
      %123 = arith.addf %120, %122 : vector<2x512xf32>
      %124 = vector.extract_strided_slice %123 {offsets = [0, 0], sizes = [2, 128], strides = [1, 1]} : vector<2x512xf32> to vector<2x128xf32>
      %125 = arith.negf %124 : vector<2x128xf32>
      %126 = math.exp %125 : vector<2x128xf32>
      %cst_39 = arith.constant 1.000000e+00 : f32
      %127 = vector.broadcast %cst_39 : f32 to vector<2x128xf32>
      %128 = arith.addf %127, %126 : vector<2x128xf32>
      %129 = arith.divf %127, %128 : vector<2x128xf32>
      %130 = vector.extract_strided_slice %123 {offsets = [0, 128], sizes = [2, 128], strides = [1, 1]} : vector<2x512xf32> to vector<2x128xf32>
      %131 = arith.negf %130 : vector<2x128xf32>
      %132 = math.exp %131 : vector<2x128xf32>
      %cst_40 = arith.constant 1.000000e+00 : f32
      %133 = vector.broadcast %cst_40 : f32 to vector<2x128xf32>
      %134 = arith.addf %133, %132 : vector<2x128xf32>
      %135 = arith.divf %133, %134 : vector<2x128xf32>
      %136 = vector.extract_strided_slice %123 {offsets = [0, 256], sizes = [2, 128], strides = [1, 1]} : vector<2x512xf32> to vector<2x128xf32>
      %137 = math.tanh %136 : vector<2x128xf32>
      %138 = vector.extract_strided_slice %123 {offsets = [0, 384], sizes = [2, 128], strides = [1, 1]} : vector<2x512xf32> to vector<2x128xf32>
      %139 = arith.negf %138 : vector<2x128xf32>
      %140 = math.exp %139 : vector<2x128xf32>
      %cst_41 = arith.constant 1.000000e+00 : f32
      %141 = vector.broadcast %cst_41 : f32 to vector<2x128xf32>
      %142 = arith.addf %141, %140 : vector<2x128xf32>
      %143 = arith.divf %141, %142 : vector<2x128xf32>
      %144 = arith.mulf %135, %111 : vector<2x128xf32>
      %145 = arith.mulf %129, %137 : vector<2x128xf32>
      %146 = arith.addf %144, %145 : vector<2x128xf32>
      %147 = math.tanh %146 : vector<2x128xf32>
      %148 = arith.mulf %143, %147 : vector<2x128xf32>
      %149 = arith.truncf %148 : vector<2x128xf32> to vector<2x128xbf16>
      %c0_42 = arith.constant 0 : index
      %c4_43 = arith.constant 4 : index
      %c0_44 = arith.constant 0 : index
      %150 = vector.load %arg4[%c0_42, %c4_43, %c0_44] : memref<2x8x128xbf16, #tpu.memory_space<vmem>>, vector<2x1x128xbf16>
      %151 = vector.shape_cast %150 : vector<2x1x128xbf16> to vector<2x128xbf16>
      %152 = vector.shape_cast %149 : vector<2x128xbf16> to vector<2x1x128xbf16>
      tpu.vector_store %arg4[%c0_42, %c4_43, %c0_44], %152 {strides = array<i32>} : memref<2x8x128xbf16, #tpu.memory_space<vmem>>, vector<2x1x128xbf16>,
      %c0_45 = arith.constant 0 : index
      %c3 = arith.constant 3 : index
      %c0_46 = arith.constant 0 : index
      %153 = vector.load %arg2[%c0_45, %c3, %c0_46] : memref<2x8x512xbf16, #tpu.memory_space<vmem>>, vector<2x1x512xbf16>
      %154 = vector.shape_cast %153 : vector<2x1x512xbf16> to vector<2x512xbf16>
      %155 = arith.extf %154 : vector<2x512xbf16> to vector<2x512xf32>
      %156 = arith.truncf %148 : vector<2x128xf32> to vector<2x128xbf16>
      %cst_47 = arith.constant dense<0.000000e+00> : vector<2x512xf32>
      %157 = tpu.matmul %156, %4, %cst_47 {dimension_numbers = #tpu.dot_dimension_numbers<[1], [0], [0], [1], [0, 0, 1, 1], [], []>} : vector<2x128xbf16>, vector<128x512xbf16>, vector<2x512xf32> -> vector<2x512xf32>
      %158 = arith.addf %155, %157 : vector<2x512xf32>
      %159 = vector.extract_strided_slice %158 {offsets = [0, 0], sizes = [2, 128], strides = [1, 1]} : vector<2x512xf32> to vector<2x128xf32>
      %160 = arith.negf %159 : vector<2x128xf32>
      %161 = math.exp %160 : vector<2x128xf32>
      %cst_48 = arith.constant 1.000000e+00 : f32
      %162 = vector.broadcast %cst_48 : f32 to vector<2x128xf32>
      %163 = arith.addf %162, %161 : vector<2x128xf32>
      %164 = arith.divf %162, %163 : vector<2x128xf32>
      %165 = vector.extract_strided_slice %158 {offsets = [0, 128], sizes = [2, 128], strides = [1, 1]} : vector<2x512xf32> to vector<2x128xf32>
      %166 = arith.negf %165 : vector<2x128xf32>
      %167 = math.exp %166 : vector<2x128xf32>
      %cst_49 = arith.constant 1.000000e+00 : f32
      %168 = vector.broadcast %cst_49 : f32 to vector<2x128xf32>
      %169 = arith.addf %168, %167 : vector<2x128xf32>
      %170 = arith.divf %168, %169 : vector<2x128xf32>
      %171 = vector.extract_strided_slice %158 {offsets = [0, 256], sizes = [2, 128], strides = [1, 1]} : vector<2x512xf32> to vector<2x128xf32>
      %172 = math.tanh %171 : vector<2x128xf32>
      %173 = vector.extract_strided_slice %158 {offsets = [0, 384], sizes = [2, 128], strides = [1, 1]} : vector<2x512xf32> to vector<2x128xf32>
      %174 = arith.negf %173 : vector<2x128xf32>
      %175 = math.exp %174 : vector<2x128xf32>
      %cst_50 = arith.constant 1.000000e+00 : f32
      %176 = vector.broadcast %cst_50 : f32 to vector<2x128xf32>
      %177 = arith.addf %176, %175 : vector<2x128xf32>
      %178 = arith.divf %176, %177 : vector<2x128xf32>
      %179 = arith.mulf %170, %146 : vector<2x128xf32>
      %180 = arith.mulf %164, %172 : vector<2x128xf32>
      %181 = arith.addf %179, %180 : vector<2x128xf32>
      %182 = math.tanh %181 : vector<2x128xf32>
      %183 = arith.mulf %178, %182 : vector<2x128xf32>
      %184 = arith.truncf %183 : vector<2x128xf32> to vector<2x128xbf16>
      %c0_51 = arith.constant 0 : index
      %c3_52 = arith.constant 3 : index
      %c0_53 = arith.constant 0 : index
      %185 = vector.load %arg4[%c0_51, %c3_52, %c0_53] : memref<2x8x128xbf16, #tpu.memory_space<vmem>>, vector<2x1x128xbf16>
      %186 = vector.shape_cast %185 : vector<2x1x128xbf16> to vector<2x128xbf16>
      %187 = vector.shape_cast %184 : vector<2x128xbf16> to vector<2x1x128xbf16>
      tpu.vector_store %arg4[%c0_51, %c3_52, %c0_53], %187 {strides = array<i32>} : memref<2x8x128xbf16, #tpu.memory_space<vmem>>, vector<2x1x128xbf16>,
      %c0_54 = arith.constant 0 : index
      %c2 = arith.constant 2 : index
      %c0_55 = arith.constant 0 : index
      %188 = vector.load %arg2[%c0_54, %c2, %c0_55] : memref<2x8x512xbf16, #tpu.memory_space<vmem>>, vector<2x1x512xbf16>
      %189 = vector.shape_cast %188 : vector<2x1x512xbf16> to vector<2x512xbf16>
      %190 = arith.extf %189 : vector<2x512xbf16> to vector<2x512xf32>
      %191 = arith.truncf %183 : vector<2x128xf32> to vector<2x128xbf16>
      %cst_56 = arith.constant dense<0.000000e+00> : vector<2x512xf32>
      %192 = tpu.matmul %191, %4, %cst_56 {dimension_numbers = #tpu.dot_dimension_numbers<[1], [0], [0], [1], [0, 0, 1, 1], [], []>} : vector<2x128xbf16>, vector<128x512xbf16>, vector<2x512xf32> -> vector<2x512xf32>
      %193 = arith.addf %190, %192 : vector<2x512xf32>
      %194 = vector.extract_strided_slice %193 {offsets = [0, 0], sizes = [2, 128], strides = [1, 1]} : vector<2x512xf32> to vector<2x128xf32>
      %195 = arith.negf %194 : vector<2x128xf32>
      %196 = math.exp %195 : vector<2x128xf32>
      %cst_57 = arith.constant 1.000000e+00 : f32
      %197 = vector.broadcast %cst_57 : f32 to vector<2x128xf32>
      %198 = arith.addf %197, %196 : vector<2x128xf32>
      %199 = arith.divf %197, %198 : vector<2x128xf32>
      %200 = vector.extract_strided_slice %193 {offsets = [0, 128], sizes = [2, 128], strides = [1, 1]} : vector<2x512xf32> to vector<2x128xf32>
      %201 = arith.negf %200 : vector<2x128xf32>
      %202 = math.exp %201 : vector<2x128xf32>
      %cst_58 = arith.constant 1.000000e+00 : f32
      %203 = vector.broadcast %cst_58 : f32 to vector<2x128xf32>
      %204 = arith.addf %203, %202 : vector<2x128xf32>
      %205 = arith.divf %203, %204 : vector<2x128xf32>
      %206 = vector.extract_strided_slice %193 {offsets = [0, 256], sizes = [2, 128], strides = [1, 1]} : vector<2x512xf32> to vector<2x128xf32>
      %207 = math.tanh %206 : vector<2x128xf32>
      %208 = vector.extract_strided_slice %193 {offsets = [0, 384], sizes = [2, 128], strides = [1, 1]} : vector<2x512xf32> to vector<2x128xf32>
      %209 = arith.negf %208 : vector<2x128xf32>
      %210 = math.exp %209 : vector<2x128xf32>
      %cst_59 = arith.constant 1.000000e+00 : f32
      %211 = vector.broadcast %cst_59 : f32 to vector<2x128xf32>
      %212 = arith.addf %211, %210 : vector<2x128xf32>
      %213 = arith.divf %211, %212 : vector<2x128xf32>
      %214 = arith.mulf %205, %181 : vector<2x128xf32>
      %215 = arith.mulf %199, %207 : vector<2x128xf32>
      %216 = arith.addf %214, %215 : vector<2x128xf32>
      %217 = math.tanh %216 : vector<2x128xf32>
      %218 = arith.mulf %213, %217 : vector<2x128xf32>
      %219 = arith.truncf %218 : vector<2x128xf32> to vector<2x128xbf16>
      %c0_60 = arith.constant 0 : index
      %c2_61 = arith.constant 2 : index
      %c0_62 = arith.constant 0 : index
      %220 = vector.load %arg4[%c0_60, %c2_61, %c0_62] : memref<2x8x128xbf16, #tpu.memory_space<vmem>>, vector<2x1x128xbf16>
      %221 = vector.shape_cast %220 : vector<2x1x128xbf16> to vector<2x128xbf16>
      %222 = vector.shape_cast %219 : vector<2x128xbf16> to vector<2x1x128xbf16>
      tpu.vector_store %arg4[%c0_60, %c2_61, %c0_62], %222 {strides = array<i32>} : memref<2x8x128xbf16, #tpu.memory_space<vmem>>, vector<2x1x128xbf16>,
      %c0_63 = arith.constant 0 : index
      %c1 = arith.constant 1 : index
      %c0_64 = arith.constant 0 : index
      %223 = vector.load %arg2[%c0_63, %c1, %c0_64] : memref<2x8x512xbf16, #tpu.memory_space<vmem>>, vector<2x1x512xbf16>
      %224 = vector.shape_cast %223 : vector<2x1x512xbf16> to vector<2x512xbf16>
      %225 = arith.extf %224 : vector<2x512xbf16> to vector<2x512xf32>
      %226 = arith.truncf %218 : vector<2x128xf32> to vector<2x128xbf16>
      %cst_65 = arith.constant dense<0.000000e+00> : vector<2x512xf32>
      %227 = tpu.matmul %226, %4, %cst_65 {dimension_numbers = #tpu.dot_dimension_numbers<[1], [0], [0], [1], [0, 0, 1, 1], [], []>} : vector<2x128xbf16>, vector<128x512xbf16>, vector<2x512xf32> -> vector<2x512xf32>
      %228 = arith.addf %225, %227 : vector<2x512xf32>
      %229 = vector.extract_strided_slice %228 {offsets = [0, 0], sizes = [2, 128], strides = [1, 1]} : vector<2x512xf32> to vector<2x128xf32>
      %230 = arith.negf %229 : vector<2x128xf32>
      %231 = math.exp %230 : vector<2x128xf32>
      %cst_66 = arith.constant 1.000000e+00 : f32
      %232 = vector.broadcast %cst_66 : f32 to vector<2x128xf32>
      %233 = arith.addf %232, %231 : vector<2x128xf32>
      %234 = arith.divf %232, %233 : vector<2x128xf32>
      %235 = vector.extract_strided_slice %228 {offsets = [0, 128], sizes = [2, 128], strides = [1, 1]} : vector<2x512xf32> to vector<2x128xf32>
      %236 = arith.negf %235 : vector<2x128xf32>
      %237 = math.exp %236 : vector<2x128xf32>
      %cst_67 = arith.constant 1.000000e+00 : f32
      %238 = vector.broadcast %cst_67 : f32 to vector<2x128xf32>
      %239 = arith.addf %238, %237 : vector<2x128xf32>
      %240 = arith.divf %238, %239 : vector<2x128xf32>
      %241 = vector.extract_strided_slice %228 {offsets = [0, 256], sizes = [2, 128], strides = [1, 1]} : vector<2x512xf32> to vector<2x128xf32>
      %242 = math.tanh %241 : vector<2x128xf32>
      %243 = vector.extract_strided_slice %228 {offsets = [0, 384], sizes = [2, 128], strides = [1, 1]} : vector<2x512xf32> to vector<2x128xf32>
      %244 = arith.negf %243 : vector<2x128xf32>
      %245 = math.exp %244 : vector<2x128xf32>
      %cst_68 = arith.constant 1.000000e+00 : f32
      %246 = vector.broadcast %cst_68 : f32 to vector<2x128xf32>
      %247 = arith.addf %246, %245 : vector<2x128xf32>
      %248 = arith.divf %246, %247 : vector<2x128xf32>
      %249 = arith.mulf %240, %216 : vector<2x128xf32>
      %250 = arith.mulf %234, %242 : vector<2x128xf32>
      %251 = arith.addf %249, %250 : vector<2x128xf32>
      %252 = math.tanh %251 : vector<2x128xf32>
      %253 = arith.mulf %248, %252 : vector<2x128xf32>
      %254 = arith.truncf %253 : vector<2x128xf32> to vector<2x128xbf16>
      %c0_69 = arith.constant 0 : index
      %c1_70 = arith.constant 1 : index
      %c0_71 = arith.constant 0 : index
      %255 = vector.load %arg4[%c0_69, %c1_70, %c0_71] : memref<2x8x128xbf16, #tpu.memory_space<vmem>>, vector<2x1x128xbf16>
      %256 = vector.shape_cast %255 : vector<2x1x128xbf16> to vector<2x128xbf16>
      %257 = vector.shape_cast %254 : vector<2x128xbf16> to vector<2x1x128xbf16>
      tpu.vector_store %arg4[%c0_69, %c1_70, %c0_71], %257 {strides = array<i32>} : memref<2x8x128xbf16, #tpu.memory_space<vmem>>, vector<2x1x128xbf16>,
      %c0_72 = arith.constant 0 : index
      %c0_73 = arith.constant 0 : index
      %c0_74 = arith.constant 0 : index
      %258 = vector.load %arg2[%c0_72, %c0_73, %c0_74] : memref<2x8x512xbf16, #tpu.memory_space<vmem>>, vector<2x1x512xbf16>
      %259 = vector.shape_cast %258 : vector<2x1x512xbf16> to vector<2x512xbf16>
      %260 = arith.extf %259 : vector<2x512xbf16> to vector<2x512xf32>
      %261 = arith.truncf %253 : vector<2x128xf32> to vector<2x128xbf16>
      %cst_75 = arith.constant dense<0.000000e+00> : vector<2x512xf32>
      %262 = tpu.matmul %261, %4, %cst_75 {dimension_numbers = #tpu.dot_dimension_numbers<[1], [0], [0], [1], [0, 0, 1, 1], [], []>} : vector<2x128xbf16>, vector<128x512xbf16>, vector<2x512xf32> -> vector<2x512xf32>
      %263 = arith.addf %260, %262 : vector<2x512xf32>
      %264 = vector.extract_strided_slice %263 {offsets = [0, 0], sizes = [2, 128], strides = [1, 1]} : vector<2x512xf32> to vector<2x128xf32>
      %265 = arith.negf %264 : vector<2x128xf32>
      %266 = math.exp %265 : vector<2x128xf32>
      %cst_76 = arith.constant 1.000000e+00 : f32
      %267 = vector.broadcast %cst_76 : f32 to vector<2x128xf32>
      %268 = arith.addf %267, %266 : vector<2x128xf32>
      %269 = arith.divf %267, %268 : vector<2x128xf32>
      %270 = vector.extract_strided_slice %263 {offsets = [0, 128], sizes = [2, 128], strides = [1, 1]} : vector<2x512xf32> to vector<2x128xf32>
      %271 = arith.negf %270 : vector<2x128xf32>
      %272 = math.exp %271 : vector<2x128xf32>
      %cst_77 = arith.constant 1.000000e+00 : f32
      %273 = vector.broadcast %cst_77 : f32 to vector<2x128xf32>
      %274 = arith.addf %273, %272 : vector<2x128xf32>
      %275 = arith.divf %273, %274 : vector<2x128xf32>
      %276 = vector.extract_strided_slice %263 {offsets = [0, 256], sizes = [2, 128], strides = [1, 1]} : vector<2x512xf32> to vector<2x128xf32>
      %277 = math.tanh %276 : vector<2x128xf32>
      %278 = vector.extract_strided_slice %263 {offsets = [0, 384], sizes = [2, 128], strides = [1, 1]} : vector<2x512xf32> to vector<2x128xf32>
      %279 = arith.negf %278 : vector<2x128xf32>
      %280 = math.exp %279 : vector<2x128xf32>
      %cst_78 = arith.constant 1.000000e+00 : f32
      %281 = vector.broadcast %cst_78 : f32 to vector<2x128xf32>
      %282 = arith.addf %281, %280 : vector<2x128xf32>
      %283 = arith.divf %281, %282 : vector<2x128xf32>
      %284 = arith.mulf %275, %251 : vector<2x128xf32>
      %285 = arith.mulf %269, %277 : vector<2x128xf32>
      %286 = arith.addf %284, %285 : vector<2x128xf32>
      %287 = math.tanh %286 : vector<2x128xf32>
      %288 = arith.mulf %283, %287 : vector<2x128xf32>
      %289 = arith.truncf %288 : vector<2x128xf32> to vector<2x128xbf16>
      %c0_79 = arith.constant 0 : index
      %c0_80 = arith.constant 0 : index
      %c0_81 = arith.constant 0 : index
      %290 = vector.load %arg4[%c0_79, %c0_80, %c0_81] : memref<2x8x128xbf16, #tpu.memory_space<vmem>>, vector<2x1x128xbf16>
      %291 = vector.shape_cast %290 : vector<2x1x128xbf16> to vector<2x128xbf16>
      %292 = vector.shape_cast %289 : vector<2x128xbf16> to vector<2x1x128xbf16>
      tpu.vector_store %arg4[%c0_79, %c0_80, %c0_81], %292 {strides = array<i32>} : memref<2x8x128xbf16, #tpu.memory_space<vmem>>, vector<2x1x128xbf16>,
      %c0_82 = arith.constant 0 : index
      %c0_83 = arith.constant 0 : index
      %293 = vector.load %arg5[%c0_82, %c0_83] : memref<2x128xf32, #tpu.memory_space<vmem>>, vector<2x128xf32>
      tpu.vector_store %arg5[%c0_82, %c0_83], %288 {strides = array<i32>} : memref<2x128xf32, #tpu.memory_space<vmem>>, vector<2x128xf32>,
      %c0_84 = arith.constant 0 : index
      %c0_85 = arith.constant 0 : index
      %294 = vector.load %arg6[%c0_84, %c0_85] : memref<2x128xf32, #tpu.memory_space<vmem>>, vector<2x128xf32>
      tpu.vector_store %arg6[%c0_84, %c0_85], %286 {strides = array<i32>} : memref<2x128xf32, #tpu.memory_space<vmem>>, vector<2x128xf32>,
    } else {
    }
    return
  }
  func.func @transform_0(%arg0: i32, %arg1: i32) -> (i32, i32, i32) {
    %c0_i32 = arith.constant 0 : i32
    %0 = arith.muli %arg0, %c0_i32 : i32
    %c2_i32 = arith.constant 2 : i32
    %1 = arith.muli %c2_i32, %arg0 : i32
    %c1_i32 = arith.constant 1 : i32
    %2 = arith.subi %c1_i32, %1 : i32
    %3 = arith.muli %2, %arg1 : i32
    %4 = arith.addi %0, %3 : i32
    %c0_i32_0 = arith.constant 0 : i32
    %c0_i32_1 = arith.constant 0 : i32
    return %c0_i32_0, %4, %arg0 : i32, i32, i32
  }
  func.func @transform_1(%arg0: i32, %arg1: i32) -> (i32, i32, i32) {
    %c0_i32 = arith.constant 0 : i32
    %c0_i32_0 = arith.constant 0 : i32
    %c0_i32_1 = arith.constant 0 : i32
    return %arg0, %c0_i32, %c0_i32_0 : i32, i32, i32
  }
  func.func @transform_2(%arg0: i32, %arg1: i32) -> (i32, i32, i32) {
    %c0_i32 = arith.constant 0 : i32
    %0 = arith.muli %arg0, %c0_i32 : i32
    %c2_i32 = arith.constant 2 : i32
    %1 = arith.muli %c2_i32, %arg0 : i32
    %c1_i32 = arith.constant 1 : i32
    %2 = arith.subi %c1_i32, %1 : i32
    %3 = arith.muli %2, %arg1 : i32
    %4 = arith.addi %0, %3 : i32
    %c0_i32_0 = arith.constant 0 : i32
    %c0_i32_1 = arith.constant 0 : i32
    return %c0_i32_0, %4, %arg0 : i32, i32, i32
  }
}

module attributes {stable_mosaic.version = 11 : i64} {
  func.func @_proj_pe_kernel(%arg0: i32, %arg1: i32, %arg2: memref<1x8x256xbf16, #tpu.memory_space<vmem>>, %arg3: memref<256x512xbf16, #tpu.memory_space<vmem>>, %arg4: memref<1x512xf32, #tpu.memory_space<vmem>>, %arg5: memref<8x512xf32, #tpu.memory_space<vmem>>, %arg6: memref<1x8x512xf32, #tpu.memory_space<vmem>>) attributes {dimension_semantics = [#tpu.dimension_semantics<parallel>, #tpu.dimension_semantics<parallel>], iteration_bounds = array<i64: 2, 1>, scalar_prefetch = 0 : i64, scratch_operands = 0 : i64, tpu.core_type = #tpu.core_type<tc>, window_params = [{transform_indices = @transform_0, window_bounds = array<i64: 1, 8, 256>}, {pipeline_mode = #tpu.pipeline_mode<synchronous>, transform_indices = @transform_1, window_bounds = array<i64: 256, 512>}, {pipeline_mode = #tpu.pipeline_mode<synchronous>, transform_indices = @transform_2, window_bounds = array<i64: 1, 512>}, {transform_indices = @transform_3, window_bounds = array<i64: 8, 512>}, {transform_indices = @transform_4, window_bounds = array<i64: 1, 8, 512>}]} {
    %c0 = arith.constant 0 : index
    %c0_0 = arith.constant 0 : index
    %c0_1 = arith.constant 0 : index
    %0 = vector.load %arg2[%c0, %c0_0, %c0_1] : memref<1x8x256xbf16, #tpu.memory_space<vmem>>, vector<1x8x256xbf16>
    %1 = vector.shape_cast %0 : vector<1x8x256xbf16> to vector<8x256xbf16>
    %c0_2 = arith.constant 0 : index
    %c0_3 = arith.constant 0 : index
    %2 = vector.load %arg3[%c0_2, %c0_3] : memref<256x512xbf16, #tpu.memory_space<vmem>>, vector<256x512xbf16>
    %cst = arith.constant dense<0.000000e+00> : vector<8x512xf32>
    %3 = tpu.matmul %1, %2, %cst {dimension_numbers = #tpu.dot_dimension_numbers<[1], [0], [0], [1], [0, 0, 1, 1], [], []>} : vector<8x256xbf16>, vector<256x512xbf16>, vector<8x512xf32> -> vector<8x512xf32>
    %c0_4 = arith.constant 0 : index
    %c0_5 = arith.constant 0 : index
    %4 = vector.load %arg4[%c0_4, %c0_5] : memref<1x512xf32, #tpu.memory_space<vmem>>, vector<1x512xf32>
    %5 = vector.broadcast %4 : vector<1x512xf32> to vector<8x512xf32>
    %6 = arith.addf %3, %5 : vector<8x512xf32>
    %c0_6 = arith.constant 0 : index
    %c0_7 = arith.constant 0 : index
    %7 = vector.load %arg5[%c0_6, %c0_7] : memref<8x512xf32, #tpu.memory_space<vmem>>, vector<8x512xf32>
    %8 = arith.addf %6, %7 : vector<8x512xf32>
    %c0_8 = arith.constant 0 : index
    %c0_9 = arith.constant 0 : index
    %c0_10 = arith.constant 0 : index
    %9 = vector.load %arg6[%c0_8, %c0_9, %c0_10] : memref<1x8x512xf32, #tpu.memory_space<vmem>>, vector<1x8x512xf32>
    %10 = vector.shape_cast %9 : vector<1x8x512xf32> to vector<8x512xf32>
    %11 = vector.shape_cast %8 : vector<8x512xf32> to vector<1x8x512xf32>
    tpu.vector_store %arg6[%c0_8, %c0_9, %c0_10], %11 {strides = array<i32>} : memref<1x8x512xf32, #tpu.memory_space<vmem>>, vector<1x8x512xf32>,
    return
  }
  func.func @transform_0(%arg0: i32, %arg1: i32) -> (i32, i32, i32) {
    %c0_i32 = arith.constant 0 : i32
    %c0_i32_0 = arith.constant 0 : i32
    return %arg0, %arg1, %c0_i32 : i32, i32, i32
  }
  func.func @transform_1(%arg0: i32, %arg1: i32) -> (i32, i32) {
    %c0_i32 = arith.constant 0 : i32
    %c0_i32_0 = arith.constant 0 : i32
    %c0_i32_1 = arith.constant 0 : i32
    return %c0_i32, %c0_i32_0 : i32, i32
  }
  func.func @transform_2(%arg0: i32, %arg1: i32) -> (i32, i32) {
    %c0_i32 = arith.constant 0 : i32
    %c0_i32_0 = arith.constant 0 : i32
    %c0_i32_1 = arith.constant 0 : i32
    return %c0_i32, %c0_i32_0 : i32, i32
  }
  func.func @transform_3(%arg0: i32, %arg1: i32) -> (i32, i32) {
    %c0_i32 = arith.constant 0 : i32
    %c0_i32_0 = arith.constant 0 : i32
    return %arg1, %c0_i32 : i32, i32
  }
  func.func @transform_4(%arg0: i32, %arg1: i32) -> (i32, i32, i32) {
    %c0_i32 = arith.constant 0 : i32
    %c0_i32_0 = arith.constant 0 : i32
    return %arg0, %arg1, %c0_i32 : i32, i32, i32
  }
}

</mosaic_0001>

<llo_original>
// kernel: forward.14
$region0: #{forward.14}
  #allocation0 [shape = 'u32[]', space=smem, size = 0x4, offset = 0x4, fixed_abs, tag = 'smem constant byte address 0x4 - core index']
  #allocation1 [shape = 'u32[144,128]{1,0:T(1,128)}', space=vmem, size = 0x12000, scoped, tag = 'internal scratch']
  %s0 = inlined_call_operand.vmem [shape: f32[16,128], index: 0, kind: input, shape index: {}]
  %s1 = inlined_call_operand.vmem [shape: f32[1,128], index: 1, kind: input, shape index: {}]
  %s2 = inlined_call_operand.vmem [shape: f32[1,128], index: 2, kind: input, shape index: {}]
  %s3 = inlined_call_operand.vmem [shape: bf16[16,128], index: 3, kind: output, shape index: {}]
  %s4 = sld [smem:[#allocation0]]
  $region22: #{forward.14} parent=0
    _
  %s6 = ssub.s32 1, %s4
  %s7 = scalar_select 0, %s6, %s4
  // Predicated region
  $region2: #{forward.14} parent=0 // pred_check
    _
  $region3: #{forward.14} parent=0 // pred_check_branch
    %9 = sbr.rel (0) target = $region5
  $region4: #{forward.14} parent=0 // pred_region
    _
  $region5: #{forward.14} parent=0 // pred_fallthru
    _
  // Predicated region
  $region6: #{forward.14} parent=0 // pred_check
    _
  $region7: #{forward.14} parent=0 // pred_check_branch
    %11 = sbr.rel (0) target = $region9
  $region8: #{forward.14} parent=0 // pred_region
    _
  $region9: #{forward.14} parent=0 // pred_fallthru
    _
  // Predicated region
  $region10: #{forward.14} parent=0 // pred_check
    _
  $region11: #{forward.14} parent=0 // pred_check_branch
    %13 = sbr.rel (0) target = $region13
  $region12: #{forward.14} parent=0 // pred_region
    _
  $region13: #{forward.14} parent=0 // pred_fallthru
    _
  %v14 = vld [vmem:[%s0] sm:$0xff]
  %v15 = vld [vmem:[%s0 + $0x8] sm:$0xff]
  %16 = vadd.xlane.f32.xlu0 %v14
  %v17 = vpop.xlane.xlu0 %16
  %18 = vadd.xlane.f32.xlu0 %v15
  %v19 = vpop.xlane.xlu0 %18
  %v20 = vrcp.pop 128.0
  %v21 = vmul.f32 %v17, %v20
  %v22 = vmul.f32 %v19, %v20
  %v23 = vsub.f32 %v14, %v21
  %v24 = vsub.f32 %v15, %v22
  %v25 = vmul.f32 %v23, %v23
  %v26 = vmul.f32 %v24, %v24
  %27 = vadd.xlane.f32.xlu0 %v25
  %v28 = vpop.xlane.xlu0 %27
  %29 = vadd.xlane.f32.xlu0 %v26
  %v30 = vpop.xlane.xlu0 %29
  %v31 = vmul.f32 %v28, %v20
  %v32 = vmul.f32 %v30, %v20
  %v33 = vadd.f32 %v31, 1e-12
  %v34 = vadd.f32 %v32, 1e-12
  %v35 = vrsqrt.pop %v33
  %v36 = vrsqrt.pop %v34
  %v37 = vmul.f32 %v23, %v35
  %v38 = vmul.f32 %v24, %v36
  %v39 = vld [vmem:[%s1] sm:$0x1]
  %v41 = vlaneseq
  %v42 = vshrl.u32 %v41, 7
  %v43 = vsub.s32 0, %v42
  %v44 = vrot.slane %v39, %v43
  %v46 = vmul.f32 %v37, %v44
  %v47 = vmul.f32 %v38, %v44
  %v48 = vld [vmem:[%s2] sm:$0x1]
  %v50 = vlaneseq
  %v51 = vshrl.u32 %v50, 7
  %v52 = vsub.s32 0, %v51
  %v53 = vrot.slane %v48, %v52
  %v55 = vadd.f32 %v46, %v53
  %v56 = vadd.f32 %v47, %v53
  %v57 = vpack.c.bf16 %v56, %v55
  %v59 = vunpack.c.l.b16 %v57
  %v60 = vunpack.c.h.b16 %v57
  %v61 = vpack.c.b16 %v59, %v59
  %v62 = vpack.c.b16 %v60, %v60
  %65 = vst [vmem:[%s3] sm:$0xf] %v61
  %66 = vst [vmem:[%s3 + $0x4] sm:$0xf] %v62
  // Predicated region
  $region14: #{forward.14} parent=0 // pred_check
    _
  $region15: #{forward.14} parent=0 // pred_check_branch
    %68 = sbr.rel (0) target = $region17
  $region16: #{forward.14} parent=0 // pred_region
    _
  $region17: #{forward.14} parent=0 // pred_fallthru
    _
  // Predicated region
  $region18: #{forward.14} parent=0 // pred_check
    _
  $region19: #{forward.14} parent=0 // pred_check_branch
    %70 = sbr.rel (0) target = $region21
  $region20: #{forward.14} parent=0 // pred_region
    _
  $region21: #{forward.14} parent=0 // pred_fallthru
    _

// kernel: forward.17
$region0: #{forward.17}
  #allocation0 [shape = 'u32[]', space=smem, size = 0x4, offset = 0x4, fixed_abs, tag = 'smem constant byte address 0x4 - core index']
  #allocation1 [shape = 'u32[144,128]{1,0:T(1,128)}', space=vmem, size = 0x12000, scoped, tag = 'internal scratch']
  #allocation2 [shape = 'f32[16,128]{1,0:T(8,128)}', space=vmem, size = 0x2000, scoped, tag = 'scratch operand']
  %s0 = inlined_call_operand.vmem [shape: bf16[16,128], index: 0, kind: input, shape index: {}]
  %s1 = inlined_call_operand.vmem [shape: bf16[128,128], index: 1, kind: input, shape index: {}]
  %s2 = inlined_call_operand.vmem [shape: f32[1,128], index: 2, kind: input, shape index: {}]
  %s3 = inlined_call_operand.vmem [shape: bf16[16,128], index: 3, kind: input, shape index: {}]
  %s4 = inlined_call_operand.vmem [shape: f32[1,128], index: 4, kind: input, shape index: {}]
  %s5 = inlined_call_operand.vmem [shape: f32[1,128], index: 5, kind: input, shape index: {}]
  %s6 = inlined_call_operand.vmem [shape: bf16[16,128], index: 6, kind: output, shape index: {}]
  %s7 = sld [smem:[#allocation0]]
  $region42: #{forward.17} parent=0
    _
  %s9 = ssub.s32 1, %s7
  %s10 = scalar_select 0, %s9, %s7
  // Predicated region
  $region2: #{forward.17} parent=0 // pred_check
    _
  $region3: #{forward.17} parent=0 // pred_check_branch
    %12 = sbr.rel (0) target = $region5
  $region4: #{forward.17} parent=0 // pred_region
    _
  $region5: #{forward.17} parent=0 // pred_fallthru
    _
  // Predicated region
  $region6: #{forward.17} parent=0 // pred_check
    _
  $region7: #{forward.17} parent=0 // pred_check_branch
    %14 = sbr.rel (0) target = $region9
  $region8: #{forward.17} parent=0 // pred_region
    _
  $region9: #{forward.17} parent=0 // pred_fallthru
    _
  // Predicated region
  $region10: #{forward.17} parent=0 // pred_check
    _
  $region11: #{forward.17} parent=0 // pred_check_branch
    %16 = sbr.rel (0) target = $region13
  $region12: #{forward.17} parent=0 // pred_region
    _
  $region13: #{forward.17} parent=0 // pred_fallthru
    _
  // Predicated region
  $region14: #{forward.17} parent=0 // pred_check
    _
  $region15: #{forward.17} parent=0 // pred_check_branch
    %18 = sbr.rel (0) target = $region17
  $region16: #{forward.17} parent=0 // pred_region
    _
  $region17: #{forward.17} parent=0 // pred_fallthru
    _
  // Predicated region
  $region18: #{forward.17} parent=0 // pred_check
    _
  $region19: #{forward.17} parent=0 // pred_check_branch
    %20 = sbr.rel (0) target = $region21
  $region20: #{forward.17} parent=0 // pred_region
    _
  $region21: #{forward.17} parent=0 // pred_fallthru
    _
  // Predicated region
  $region22: #{forward.17} parent=0 // pred_check
    _
  $region23: #{forward.17} parent=0 // pred_check_branch
    %22 = sbr.rel (0) target = $region25
  $region24: #{forward.17} parent=0 // pred_region
    _
  $region25: #{forward.17} parent=0 // pred_fallthru
    _
  %p24 = scmp.eq.s32.totalorder 0, 0
  // Predicated region
  $region26: #{forward.17} parent=0 // pred_check
    %p25 = pneg %p24
  $region27: #{forward.17} parent=0 // pred_check_branch
    %27 = sbr.rel (%p25) target = $region29
  $region28: #{forward.17} parent=0 // pred_region
    %28 = vst [vmem:[#allocation2] sm:$0xff] 0.0
    %29 = vst [vmem:[#allocation2 + $0x8] sm:$0xff] 0.0
  $region29: #{forward.17} parent=0 // pred_fallthru
    _
  %v30 = vld [vmem:[#allocation2] sm:$0xff]
  %v31 = vld [vmem:[#allocation2 + $0x8] sm:$0xff]
  %v32 = vld [vmem:[%s0] sm:$0xf]
  %v33 = vld [vmem:[%s0 + $0x4] sm:$0xf]
  %v34 = vld [vmem:[%s1] sm:$0xf]
  %v35 = vld [vmem:[%s1 + $0x4] sm:$0xf]
  %v36 = vld [vmem:[%s1 + $0x8] sm:$0xf]
  %v37 = vld [vmem:[%s1 + $0xc] sm:$0xf]
  %v38 = vld [vmem:[%s1 + $0x10] sm:$0xf]
  %v39 = vld [vmem:[%s1 + $0x14] sm:$0xf]
  %v40 = vld [vmem:[%s1 + $0x18] sm:$0xf]
  %v41 = vld [vmem:[%s1 + $0x1c] sm:$0xf]
  %v42 = vld [vmem:[%s1 + $0x20] sm:$0xf]
  %v43 = vld [vmem:[%s1 + $0x24] sm:$0xf]
  %v44 = vld [vmem:[%s1 + $0x28] sm:$0xf]
  %v45 = vld [vmem:[%s1 + $0x2c] sm:$0xf]
  %v46 = vld [vmem:[%s1 + $0x30] sm:$0xf]
  %v47 = vld [vmem:[%s1 + $0x34] sm:$0xf]
  %v48 = vld [vmem:[%s1 + $0x38] sm:$0xf]
  %v49 = vld [vmem:[%s1 + $0x3c] sm:$0xf]
  %v52 = vunpack.c.l.b16 %v32
  %v53 = vunpack.c.l.b16 %v33
  %v54 = vpack.c.b16 %v53, %v52
  %v72 = vunpack.c.l.b16 %v34
  %v73 = vunpack.c.l.b16 %v35
  %v74 = vunpack.c.l.b16 %v36
  %v75 = vunpack.c.l.b16 %v37
  %v76 = vunpack.c.l.b16 %v38
  %v77 = vunpack.c.l.b16 %v39
  %v78 = vunpack.c.l.b16 %v40
  %v79 = vunpack.c.l.b16 %v41
  %v80 = vunpack.c.l.b16 %v42
  %v81 = vunpack.c.l.b16 %v43
  %v82 = vunpack.c.l.b16 %v44
  %v83 = vunpack.c.l.b16 %v45
  %v84 = vunpack.c.l.b16 %v46
  %v85 = vunpack.c.l.b16 %v47
  %v86 = vunpack.c.l.b16 %v48
  %v87 = vunpack.c.l.b16 %v49
  %v88 = vpack.c.b16 %v73, %v72
  %v89 = vpack.c.b16 %v75, %v74
  %v90 = vpack.c.b16 %v77, %v76
  %v91 = vpack.c.b16 %v79, %v78
  %v92 = vpack.c.b16 %v81, %v80
  %v93 = vpack.c.b16 %v83, %v82
  %v94 = vpack.c.b16 %v85, %v84
  %v95 = vpack.c.b16 %v87, %v86
  %104 = vmatprep.subr.bf16.mxu0 0
  %105 = vmatpush1.bf16.msra.mxu0 %v88
  %106 = vmatprep.subr.bf16.mxu0 0
  %107 = vmatpush1.bf16.msra.mxu0 %v89
  %108 = vmatprep.subr.bf16.mxu0 0
  %109 = vmatpush1.bf16.msra.mxu0 %v90
  %110 = vmatprep.subr.bf16.mxu0 0
  %111 = vmatpush1.bf16.msra.mxu0 %v91
  %112 = vmatprep.subr.bf16.mxu0 0
  %113 = vmatpush1.bf16.msra.mxu0 %v92
  %114 = vmatprep.subr.bf16.mxu0 0
  %115 = vmatpush1.bf16.msra.mxu0 %v93
  %116 = vmatprep.subr.bf16.mxu0 0
  %117 = vmatpush1.bf16.msra.mxu0 %v94
  %118 = vmatprep.subr.bf16.mxu0 0
  %119 = vmatpush1.bf16.msra.mxu0 %v95
  %120 = vmatprep.subr.bf16.mxu0 0
  %121 = vmatpush1.bf16.msra.mxu0 0
  %122 = vmatprep.subr.bf16.mxu0 0
  %123 = vmatpush1.bf16.msra.mxu0 0
  %124 = vmatprep.subr.bf16.mxu0 0
  %125 = vmatpush1.bf16.msra.mxu0 0
  %126 = vmatprep.subr.bf16.mxu0 0
  %127 = vmatpush1.bf16.msra.mxu0 0
  %128 = vmatprep.subr.bf16.mxu0 0
  %129 = vmatpush1.bf16.msra.mxu0 0
  %130 = vmatprep.subr.bf16.mxu0 0
  %131 = vmatpush1.bf16.msra.mxu0 0
  %132 = vmatprep.subr.bf16.mxu0 0
  %133 = vmatpush1.bf16.msra.mxu0 0
  %134 = vmatprep.subr.bf16.mxu0 0
  %135 = vmatpush1.bf16.msra.mxu0 0
  %136 = vmatprep.mubr.bf16.mxu0 0
  %137 = vmatmul.mubr.bf16.gmra.mrb[0].mxu0 %v54
  %v138 = vpop.f32.mrb[0].mxu0
  %v139 = vadd.f32 0.0, %v138
  %v140 = vpop.f32.mrb[0].mxu0
  %v141 = vpop.f32.mrb[0].mxu0
  %v142 = vadd.f32 0.0, %v141
  %v143 = vpop.f32.mrb[0].mxu0
  %144 = vdwg.mxu0
  %v145 = vadd.f32 %v30, %v139
  %v146 = vadd.f32 %v31, %v142
  %147 = vst [vmem:[#allocation2] sm:$0xff] %v145
  %148 = vst [vmem:[#allocation2 + $0x8] sm:$0xff] %v146
  // Predicated region
  $region30: #{forward.17} parent=0 // pred_check
    %p149 = pneg %p24
  $region31: #{forward.17} parent=0 // pred_check_branch
    %151 = sbr.rel (%p149) target = $region33
  $region32: #{forward.17} parent=0 // pred_region
    %v152 = vld [vmem:[#allocation2] sm:$0xff]
    %v153 = vld [vmem:[#allocation2 + $0x8] sm:$0xff]
    %v154 = vld [vmem:[%s2] sm:$0x1]
    %v156 = vlaneseq
    %v157 = vshrl.u32 %v156, 7
    %v158 = vsub.s32 0, %v157
    %v159 = vrot.slane %v154, %v158
    %v161 = vadd.f32 %v152, %v159
    %v162 = vadd.f32 %v153, %v159
    %v163 = vld [vmem:[%s3] sm:$0xf]
    %v164 = vld [vmem:[%s3 + $0x4] sm:$0xf]
    %v165 = vunpack.c.l.bf16 %v163
    %v166 = vunpack.c.l.bf16 %v164
    %v167 = vadd.f32 %v161, %v165
    %v168 = vadd.f32 %v162, %v166
    %169 = vadd.xlane.f32.xlu0 %v167
    %v170 = vpop.xlane.xlu0 %169
    %171 = vadd.xlane.f32.xlu0 %v168
    %v172 = vpop.xlane.xlu0 %171
    %v173 = vrcp.pop 128.0
    %v174 = vmul.f32 %v170, %v173
    %v175 = vmul.f32 %v172, %v173
    %v176 = vsub.f32 %v167, %v174
    %v177 = vsub.f32 %v168, %v175
    %v178 = vmul.f32 %v176, %v176
    %v179 = vmul.f32 %v177, %v177
    %180 = vadd.xlane.f32.xlu0 %v178
    %v181 = vpop.xlane.xlu0 %180
    %182 = vadd.xlane.f32.xlu0 %v179
    %v183 = vpop.xlane.xlu0 %182
    %v184 = vmul.f32 %v181, %v173
    %v185 = vmul.f32 %v183, %v173
    %v186 = vadd.f32 %v184, 1e-12
    %v187 = vadd.f32 %v185, 1e-12
    %v188 = vrsqrt.pop %v186
    %v189 = vrsqrt.pop %v187
    %v190 = vmul.f32 %v176, %v188
    %v191 = vmul.f32 %v177, %v189
    %v192 = vld [vmem:[%s4] sm:$0x1]
    %v194 = vlaneseq
    %v195 = vshrl.u32 %v194, 7
    %v196 = vsub.s32 0, %v195
    %v197 = vrot.slane %v192, %v196
    %v199 = vmul.f32 %v190, %v197
    %v200 = vmul.f32 %v191, %v197
    %v201 = vld [vmem:[%s5] sm:$0x1]
    %v203 = vlaneseq
    %v204 = vshrl.u32 %v203, 7
    %v205 = vsub.s32 0, %v204
    %v206 = vrot.slane %v201, %v205
    %v208 = vadd.f32 %v199, %v206
    %v209 = vadd.f32 %v200, %v206
    %v210 = vpack.c.bf16 %v209, %v208
    %v212 = vunpack.c.l.b16 %v210
    %v213 = vunpack.c.h.b16 %v210
    %v214 = vpack.c.b16 %v212, %v212
    %v215 = vpack.c.b16 %v213, %v213
    %218 = vst [vmem:[%s6] sm:$0xf] %v214
    %219 = vst [vmem:[%s6 + $0x4] sm:$0xf] %v215
  $region33: #{forward.17} parent=0 // pred_fallthru
    _
  // Predicated region
  $region34: #{forward.17} parent=0 // pred_check
    _
  $region35: #{forward.17} parent=0 // pred_check_branch
    %221 = sbr.rel (0) target = $region37
  $region36: #{forward.17} parent=0 // pred_region
    _
  $region37: #{forward.17} parent=0 // pred_fallthru
    _
  // Predicated region
  $region38: #{forward.17} parent=0 // pred_check
    _
  $region39: #{forward.17} parent=0 // pred_check_branch
    %223 = sbr.rel (0) target = $region41
  $region40: #{forward.17} parent=0 // pred_region
    _
  $region41: #{forward.17} parent=0 // pred_fallthru
    _

// kernel: forward.15
$region0: #{forward.15}
  #allocation0 [shape = 'u32[]', space=smem, size = 0x4, offset = 0x4, fixed_abs, tag = 'smem constant byte address 0x4 - core index']
  #allocation1 [shape = 'u32[144,128]{1,0:T(1,128)}', space=vmem, size = 0x12000, scoped, tag = 'internal scratch']
  #allocation2 [shape = 'f32[16,384]{1,0:T(8,128)}', space=vmem, size = 0x6000, scoped, tag = 'scratch operand']
  %s0 = inlined_call_operand.vmem [shape: bf16[16,128], index: 0, kind: input, shape index: {}]
  %s1 = inlined_call_operand.vmem [shape: bf16[128,384], index: 1, kind: input, shape index: {}]
  %s2 = inlined_call_operand.vmem [shape: f32[1,384], index: 2, kind: input, shape index: {}]
  %s3 = inlined_call_operand.vmem [shape: bf16[16,384], index: 3, kind: output, shape index: {}]
  %s4 = sld [smem:[#allocation0]]
  $region30: #{forward.15} parent=0
    _
  %s6 = ssub.s32 1, %s4
  %s7 = scalar_select 0, %s6, %s4
  // Predicated region
  $region2: #{forward.15} parent=0 // pred_check
    _
  $region3: #{forward.15} parent=0 // pred_check_branch
    %9 = sbr.rel (0) target = $region5
  $region4: #{forward.15} parent=0 // pred_region
    _
  $region5: #{forward.15} parent=0 // pred_fallthru
    _
  // Predicated region
  $region6: #{forward.15} parent=0 // pred_check
    _
  $region7: #{forward.15} parent=0 // pred_check_branch
    %11 = sbr.rel (0) target = $region9
  $region8: #{forward.15} parent=0 // pred_region
    _
  $region9: #{forward.15} parent=0 // pred_fallthru
    _
  // Predicated region
  $region10: #{forward.15} parent=0 // pred_check
    _
  $region11: #{forward.15} parent=0 // pred_check_branch
    %13 = sbr.rel (0) target = $region13
  $region12: #{forward.15} parent=0 // pred_region
    _
  $region13: #{forward.15} parent=0 // pred_fallthru
    _
  %p15 = scmp.eq.s32.totalorder 0, 0
  // Predicated region
  $region14: #{forward.15} parent=0 // pred_check
    %p16 = pneg %p15
  $region15: #{forward.15} parent=0 // pred_check_branch
    %18 = sbr.rel (%p16) target = $region17
  $region16: #{forward.15} parent=0 // pred_region
    %19 = vst [vmem:[#allocation2] sm:$0xff] 0.0
    %20 = vst [vmem:[#allocation2 + $0x8] sm:$0xff] 0.0
    %21 = vst [vmem:[#allocation2 + $0x10] sm:$0xff] 0.0
    %22 = vst [vmem:[#allocation2 + $0x18] sm:$0xff] 0.0
    %23 = vst [vmem:[#allocation2 + $0x20] sm:$0xff] 0.0
    %24 = vst [vmem:[#allocation2 + $0x28] sm:$0xff] 0.0
  $region17: #{forward.15} parent=0 // pred_fallthru
    _
  %v25 = vld [vmem:[#allocation2] sm:$0xff]
  %v26 = vld [vmem:[#allocation2 + $0x8] sm:$0xff]
  %v27 = vld [vmem:[#allocation2 + $0x10] sm:$0xff]
  %v28 = vld [vmem:[#allocation2 + $0x18] sm:$0xff]
  %v29 = vld [vmem:[#allocation2 + $0x20] sm:$0xff]
  %v30 = vld [vmem:[#allocation2 + $0x28] sm:$0xff]
  %v31 = vld [vmem:[%s0] sm:$0xf]
  %v32 = vld [vmem:[%s0 + $0x4] sm:$0xf]
  %v33 = vld [vmem:[%s1] sm:$0xff]
  %v34 = vld [vmem:[%s1 + $0x8] sm:$0xf]
  %v35 = vld [vmem:[%s1 + $0xc] sm:$0xff]
  %v36 = vld [vmem:[%s1 + $0x14] sm:$0xf]
  %v37 = vld [vmem:[%s1 + $0x18] sm:$0xff]
  %v38 = vld [vmem:[%s1 + $0x20] sm:$0xf]
  %v39 = vld [vmem:[%s1 + $0x24] sm:$0xff]
  %v40 = vld [vmem:[%s1 + $0x2c] sm:$0xf]
  %v41 = vld [vmem:[%s1 + $0x30] sm:$0xff]
  %v42 = vld [vmem:[%s1 + $0x38] sm:$0xf]
  %v43 = vld [vmem:[%s1 + $0x3c] sm:$0xff]
  %v44 = vld [vmem:[%s1 + $0x44] sm:$0xf]
  %v45 = vld [vmem:[%s1 + $0x48] sm:$0xff]
  %v46 = vld [vmem:[%s1 + $0x50] sm:$0xf]
  %v47 = vld [vmem:[%s1 + $0x54] sm:$0xff]
  %v48 = vld [vmem:[%s1 + $0x5c] sm:$0xf]
  %v49 = vld [vmem:[%s1 + $0x60] sm:$0xff]
  %v50 = vld [vmem:[%s1 + $0x68] sm:$0xf]
  %v51 = vld [vmem:[%s1 + $0x6c] sm:$0xff]
  %v52 = vld [vmem:[%s1 + $0x74] sm:$0xf]
  %v53 = vld [vmem:[%s1 + $0x78] sm:$0xff]
  %v54 = vld [vmem:[%s1 + $0x80] sm:$0xf]
  %v55 = vld [vmem:[%s1 + $0x84] sm:$0xff]
  %v56 = vld [vmem:[%s1 + $0x8c] sm:$0xf]
  %v57 = vld [vmem:[%s1 + $0x90] sm:$0xff]
  %v58 = vld [vmem:[%s1 + $0x98] sm:$0xf]
  %v59 = vld [vmem:[%s1 + $0x9c] sm:$0xff]
  %v60 = vld [vmem:[%s1 + $0xa4] sm:$0xf]
  %v61 = vld [vmem:[%s1 + $0xa8] sm:$0xff]
  %v62 = vld [vmem:[%s1 + $0xb0] sm:$0xf]
  %v63 = vld [vmem:[%s1 + $0xb4] sm:$0xff]
  %v64 = vld [vmem:[%s1 + $0xbc] sm:$0xf]
  %v67 = vunpack.c.l.b16 %v31
  %v68 = vunpack.c.l.b16 %v32
  %v69 = vpack.c.b16 %v68, %v67
  %v103 = vunpack.c.l.b16 %v33
  %v104 = vunpack.c.h.b16 %v33
  %v105 = vunpack.c.l.b16 %v34
  %v106 = vunpack.c.l.b16 %v35
  %v107 = vunpack.c.h.b16 %v35
  %v108 = vunpack.c.l.b16 %v36
  %v109 = vunpack.c.l.b16 %v37
  %v110 = vunpack.c.h.b16 %v37
  %v111 = vunpack.c.l.b16 %v38
  %v112 = vunpack.c.l.b16 %v39
  %v113 = vunpack.c.h.b16 %v39
  %v114 = vunpack.c.l.b16 %v40
  %v115 = vunpack.c.l.b16 %v41
  %v116 = vunpack.c.h.b16 %v41
  %v117 = vunpack.c.l.b16 %v42
  %v118 = vunpack.c.l.b16 %v43
  %v119 = vunpack.c.h.b16 %v43
  %v120 = vunpack.c.l.b16 %v44
  %v121 = vunpack.c.l.b16 %v45
  %v122 = vunpack.c.h.b16 %v45
  %v123 = vunpack.c.l.b16 %v46
  %v124 = vunpack.c.l.b16 %v47
  %v125 = vunpack.c.h.b16 %v47
  %v126 = vunpack.c.l.b16 %v48
  %v127 = vunpack.c.l.b16 %v49
  %v128 = vunpack.c.h.b16 %v49
  %v129 = vunpack.c.l.b16 %v50
  %v130 = vunpack.c.l.b16 %v51
  %v131 = vunpack.c.h.b16 %v51
  %v132 = vunpack.c.l.b16 %v52
  %v133 = vunpack.c.l.b16 %v53
  %v134 = vunpack.c.h.b16 %v53
  %v135 = vunpack.c.l.b16 %v54
  %v136 = vunpack.c.l.b16 %v55
  %v137 = vunpack.c.h.b16 %v55
  %v138 = vunpack.c.l.b16 %v56
  %v139 = vunpack.c.l.b16 %v57
  %v140 = vunpack.c.h.b16 %v57
  %v141 = vunpack.c.l.b16 %v58
  %v142 = vunpack.c.l.b16 %v59
  %v143 = vunpack.c.h.b16 %v59
  %v144 = vunpack.c.l.b16 %v60
  %v145 = vunpack.c.l.b16 %v61
  %v146 = vunpack.c.h.b16 %v61
  %v147 = vunpack.c.l.b16 %v62
  %v148 = vunpack.c.l.b16 %v63
  %v149 = vunpack.c.h.b16 %v63
  %v150 = vunpack.c.l.b16 %v64
  %v151 = vpack.c.b16 %v106, %v103
  %v152 = vpack.c.b16 %v107, %v104
  %v153 = vpack.c.b16 %v108, %v105
  %v154 = vpack.c.b16 %v112, %v109
  %v155 = vpack.c.b16 %v113, %v110
  %v156 = vpack.c.b16 %v114, %v111
  %v157 = vpack.c.b16 %v118, %v115
  %v158 = vpack.c.b16 %v119, %v116
  %v159 = vpack.c.b16 %v120, %v117
  %v160 = vpack.c.b16 %v124, %v121
  %v161 = vpack.c.b16 %v125, %v122
  %v162 = vpack.c.b16 %v126, %v123
  %v163 = vpack.c.b16 %v130, %v127
  %v164 = vpack.c.b16 %v131, %v128
  %v165 = vpack.c.b16 %v132, %v129
  %v166 = vpack.c.b16 %v136, %v133
  %v167 = vpack.c.b16 %v137, %v134
  %v168 = vpack.c.b16 %v138, %v135
  %v169 = vpack.c.b16 %v142, %v139
  %v170 = vpack.c.b16 %v143, %v140
  %v171 = vpack.c.b16 %v144, %v141
  %v172 = vpack.c.b16 %v148, %v145
  %v173 = vpack.c.b16 %v149, %v146
  %v174 = vpack.c.b16 %v150, %v147
  %199 = vmatprep.subr.bf16.mxu0 %v152
  %200 = vmatpush1.bf16.msra.mxu0 %v151
  %201 = vmatprep.subr.bf16.mxu0 %v155
  %202 = vmatpush1.bf16.msra.mxu0 %v154
  %203 = vmatprep.subr.bf16.mxu0 %v158
  %204 = vmatpush1.bf16.msra.mxu0 %v157
  %205 = vmatprep.subr.bf16.mxu0 %v161
  %206 = vmatpush1.bf16.msra.mxu0 %v160
  %207 = vmatprep.subr.bf16.mxu0 %v164
  %208 = vmatpush1.bf16.msra.mxu0 %v163
  %209 = vmatprep.subr.bf16.mxu0 %v167
  %210 = vmatpush1.bf16.msra.mxu0 %v166
  %211 = vmatprep.subr.bf16.mxu0 %v170
  %212 = vmatpush1.bf16.msra.mxu0 %v169
  %213 = vmatprep.subr.bf16.mxu0 %v173
  %214 = vmatpush1.bf16.msra.mxu0 %v172
  %215 = vmatprep.subr.bf16.mxu0 0
  %216 = vmatpush1.bf16.msra.mxu0 0
  %217 = vmatprep.subr.bf16.mxu0 0
  %218 = vmatpush1.bf16.msra.mxu0 0
  %219 = vmatprep.subr.bf16.mxu0 0
  %220 = vmatpush1.bf16.msra.mxu0 0
  %221 = vmatprep.subr.bf16.mxu0 0
  %222 = vmatpush1.bf16.msra.mxu0 0
  %223 = vmatprep.subr.bf16.mxu0 0
  %224 = vmatpush1.bf16.msra.mxu0 0
  %225 = vmatprep.subr.bf16.mxu0 0
  %226 = vmatpush1.bf16.msra.mxu0 0
  %227 = vmatprep.subr.bf16.mxu0 0
  %228 = vmatpush1.bf16.msra.mxu0 0
  %229 = vmatprep.subr.bf16.mxu0 0
  %230 = vmatpush1.bf16.msra.mxu0 0
  %231 = vmatprep.mubr.bf16.mxu0 0
  %232 = vmatmul.mubr.bf16.gmra.mrb[0].mxu0 %v69
  %v233 = vpop.f32.mrb[0].mxu0
  %v234 = vadd.f32 0.0, %v233
  %v235 = vpop.f32.mrb[0].mxu0
  %v236 = vadd.f32 0.0, %v235
  %v237 = vpop.f32.mrb[0].mxu0
  %v238 = vadd.f32 0.0, %v237
  %v239 = vpop.f32.mrb[0].mxu0
  %v240 = vadd.f32 0.0, %v239
  %241 = vdwg.mxu0
  %242 = vmatprep.subr.bf16.mxu0 0
  %243 = vmatpush1.bf16.msra.mxu0 %v153
  %244 = vmatprep.subr.bf16.mxu0 0
  %245 = vmatpush1.bf16.msra.mxu0 %v156
  %246 = vmatprep.subr.bf16.mxu0 0
  %247 = vmatpush1.bf16.msra.mxu0 %v159
  %248 = vmatprep.subr.bf16.mxu0 0
  %249 = vmatpush1.bf16.msra.mxu0 %v162
  %250 = vmatprep.subr.bf16.mxu0 0
  %251 = vmatpush1.bf16.msra.mxu0 %v165
  %252 = vmatprep.subr.bf16.mxu0 0
  %253 = vmatpush1.bf16.msra.mxu0 %v168
  %254 = vmatprep.subr.bf16.mxu0 0
  %255 = vmatpush1.bf16.msra.mxu0 %v171
  %256 = vmatprep.subr.bf16.mxu0 0
  %257 = vmatpush1.bf16.msra.mxu0 %v174
  %258 = vmatprep.subr.bf16.mxu0 0
  %259 = vmatpush1.bf16.msra.mxu0 0
  %260 = vmatprep.subr.bf16.mxu0 0
  %261 = vmatpush1.bf16.msra.mxu0 0
  %262 = vmatprep.subr.bf16.mxu0 0
  %263 = vmatpush1.bf16.msra.mxu0 0
  %264 = vmatprep.subr.bf16.mxu0 0
  %265 = vmatpush1.bf16.msra.mxu0 0
  %266 = vmatprep.subr.bf16.mxu0 0
  %267 = vmatpush1.bf16.msra.mxu0 0
  %268 = vmatprep.subr.bf16.mxu0 0
  %269 = vmatpush1.bf16.msra.mxu0 0
  %270 = vmatprep.subr.bf16.mxu0 0
  %271 = vmatpush1.bf16.msra.mxu0 0
  %272 = vmatprep.subr.bf16.mxu0 0
  %273 = vmatpush1.bf16.msra.mxu0 0
  %274 = vmatprep.mubr.bf16.mxu0 0
  %275 = vmatmul.mubr.bf16.gmra.mrb[0].mxu0 %v69
  %v276 = vpop.f32.mrb[0].mxu0
  %v277 = vadd.f32 0.0, %v276
  %v278 = vpop.f32.mrb[0].mxu0
  %v279 = vpop.f32.mrb[0].mxu0
  %v280 = vadd.f32 0.0, %v279
  %v281 = vpop.f32.mrb[0].mxu0
  %282 = vdwg.mxu0
  %v283 = vadd.f32 %v25, %v234
  %v284 = vadd.f32 %v26, %v236
  %v285 = vadd.f32 %v27, %v277
  %v286 = vadd.f32 %v28, %v238
  %v287 = vadd.f32 %v29, %v240
  %v288 = vadd.f32 %v30, %v280
  %289 = vst [vmem:[#allocation2] sm:$0xff] %v283
  %290 = vst [vmem:[#allocation2 + $0x8] sm:$0xff] %v284
  %291 = vst [vmem:[#allocation2 + $0x10] sm:$0xff] %v285
  %292 = vst [vmem:[#allocation2 + $0x18] sm:$0xff] %v286
  %293 = vst [vmem:[#allocation2 + $0x20] sm:$0xff] %v287
  %294 = vst [vmem:[#allocation2 + $0x28] sm:$0xff] %v288
  // Predicated region
  $region18: #{forward.15} parent=0 // pred_check
    %p295 = pneg %p15
  $region19: #{forward.15} parent=0 // pred_check_branch
    %297 = sbr.rel (%p295) target = $region21
  $region20: #{forward.15} parent=0 // pred_region
    %v298 = vld [vmem:[#allocation2] sm:$0xff]
    %v299 = vld [vmem:[#allocation2 + $0x8] sm:$0xff]
    %v300 = vld [vmem:[#allocation2 + $0x10] sm:$0xff]
    %v301 = vld [vmem:[#allocation2 + $0x18] sm:$0xff]
    %v302 = vld [vmem:[#allocation2 + $0x20] sm:$0xff]
    %v303 = vld [vmem:[#allocation2 + $0x28] sm:$0xff]
    %v304 = vld [vmem:[%s2] sm:$0x7]
    %v306 = vlaneseq
    %v307 = vshrl.u32 %v306, 7
    %v308 = vsub.s32 0, %v307
    %v309 = vrot.slane %v304, %v308
    %v310 = vlaneseq
    %v311 = vshrl.u32 %v310, 7
    %v312 = vsub.s32 1, %v311
    %v313 = vrot.slane %v304, %v312
    %v314 = vlaneseq
    %v315 = vshrl.u32 %v314, 7
    %v316 = vsub.s32 2, %v315
    %v317 = vrot.slane %v304, %v316
    %v321 = vadd.f32 %v298, %v309
    %v322 = vadd.f32 %v299, %v313
    %v323 = vadd.f32 %v300, %v317
    %v324 = vadd.f32 %v301, %v309
    %v325 = vadd.f32 %v302, %v313
    %v326 = vadd.f32 %v303, %v317
    %v327 = vpack.c.bf16 %v324, %v321
    %v328 = vpack.c.bf16 %v325, %v322
    %v329 = vpack.c.bf16 %v326, %v323
    %v333 = vunpack.c.l.b16 %v327
    %v334 = vunpack.c.l.b16 %v328
    %v335 = vunpack.c.l.b16 %v329
    %v336 = vunpack.c.h.b16 %v327
    %v337 = vunpack.c.h.b16 %v328
    %v338 = vunpack.c.h.b16 %v329
    %v339 = vpack.c.b16 %v334, %v333
    %v340 = vpack.c.b16 %v335, %v335
    %v341 = vpack.c.b16 %v337, %v336
    %v342 = vpack.c.b16 %v338, %v338
    %347 = vst [vmem:[%s3] sm:$0xff] %v339
    %348 = vst [vmem:[%s3 + $0x8] sm:$0xf] %v340
    %349 = vst [vmem:[%s3 + $0xc] sm:$0xff] %v341
    %350 = vst [vmem:[%s3 + $0x14] sm:$0xf] %v342
  $region21: #{forward.15} parent=0 // pred_fallthru
    _
  // Predicated region
  $region22: #{forward.15} parent=0 // pred_check
    _
  $region23: #{forward.15} parent=0 // pred_check_branch
    %352 = sbr.rel (0) target = $region25
  $region24: #{forward.15} parent=0 // pred_region
    _
  $region25: #{forward.15} parent=0 // pred_fallthru
    _
  // Predicated region
  $region26: #{forward.15} parent=0 // pred_check
    _
  $region27: #{forward.15} parent=0 // pred_check_branch
    %354 = sbr.rel (0) target = $region29
  $region28: #{forward.15} parent=0 // pred_region
    _
  $region29: #{forward.15} parent=0 // pred_fallthru
    _

// kernel: forward.16
$region0: #{forward.16}
  #allocation0 [shape = 'u32[]', space=smem, size = 0x4, offset = 0x4, fixed_abs, tag = 'smem constant byte address 0x4 - core index']
  #allocation1 [shape = 'u32[144,128]{1,0:T(1,128)}', space=vmem, size = 0x12000, scoped, tag = 'internal scratch']
  #allocation2 [shape = 'f32[2,8,1]{2,1,0:T(8,128)}', space=vmem, size = 0x2000, scoped, tag = 'scratch operand']
  #allocation3 [shape = 'f32[2,8,1]{2,1,0:T(8,128)}', space=vmem, size = 0x2000, scoped, tag = 'scratch operand']
  #allocation4 [shape = 'f32[2,8,64]{2,1,0:T(8,128)}', space=vmem, size = 0x2000, scoped, tag = 'scratch operand']
  %s0 = inlined_call_operand.vmem [shape: bf16[2,8,384], index: 0, kind: input, shape index: {}, may-alias: {0,1,2}]
  %s1 = inlined_call_operand.vmem [shape: bf16[2,8,384], index: 1, kind: input, shape index: {}, may-alias: {0,1,2}]
  %s2 = inlined_call_operand.vmem [shape: bf16[2,8,384], index: 2, kind: input, shape index: {}, may-alias: {0,1,2}]
  %s3 = inlined_call_operand.vmem [shape: f32[2,1,8], index: 3, kind: input, shape index: {}]
  %s4 = inlined_call_operand.vmem [shape: bf16[2,8,128], index: 4, kind: output, shape index: {}]
  %s5 = sld [smem:[#allocation0]]
  $region57: #{forward.16} parent=0
    _
  %s7 = ssub.s32 1, %s5
  %s8 = scalar_select 0, %s7, %s5
  loop: start=0, step=1, limit=4
  $region2: #{forward.16} parent=0 // loop_pre_header
    _
  $region3: #{forward.16} parent=0 // loop_header
    %s10 = sphi 0, %s14
    %p11 = scmp.ge.s32.totalorder %s10, 4
    %s17 = sphi 0, %s43
    %s18 = sphi 0, %s39
    %s19 = sphi 0, %s35
    %s20 = sphi 0, %s31
    %s21 = sphi 0, %s17
    %s22 = sphi 0, %s18
    %s23 = sphi 0, %s19
    %s24 = sphi 0, %s20
    %s25 = sphi 0, %s21
    %s26 = sphi 0, %s22
    %s27 = sphi 0, %s23
    %s28 = sphi 0, %s24
    %s50 = sphi 0, %s52
    %s53 = sphi 0, %s50
    %s54 = sphi 0, %s53
    %s70 = sphi 0, %s54
    %s82 = sphi 0, %s84
    %s85 = sphi 0, %s82
    %s86 = sphi 0, %s85
    %s102 = sphi 0, %s86
    %s114 = sphi 0, %s116
    %s117 = sphi 0, %s114
    %s118 = sphi 0, %s117
    %s134 = sphi 0, %s118
    %s142 = sphi 0, %s144
    %s145 = sphi 0, %s142
    %s146 = sphi 0, %s145
    %s162 = sphi 0, %s146
    %s172 = sphi 0, %s174
    %s175 = sphi 0, %s172
    %s176 = sphi 0, %s175
    %s192 = sphi 0, %s176
  $region4: #{forward.16} parent=0 // loop_header_branch
    %13 = sbr.rel (%p11) target = $region8
  $region5: #{forward.16} parent=0 // loop_body
    %s15 = ssub.s32 %s10, 1
    %s16 = ssub.s32 %s10, 2
    %s29 = sadd.s32 1, %s20
    %p30 = scmp.ge.s32.totalorder %s29, 1
    %s31 = scalar_select %p30, 0, %s29
    %s32 = sadd.s32 1, %s19
    %s33 = scalar_select %p30, %s32, %s19
    %p34 = scmp.ge.s32.totalorder %s33, 1
    %s35 = scalar_select %p34, 0, %s33
    %s36 = sadd.s32 1, %s18
    %s37 = scalar_select %p34, %s36, %s18
    %p38 = scmp.ge.s32.totalorder %s37, 1
    %s39 = scalar_select %p38, 0, %s37
    %s40 = sadd.s32 1, %s17
    %s41 = scalar_select %p38, %s40, %s17
    %p42 = scmp.ge.s32.totalorder %s41, 2
    %s43 = scalar_select %p42, 0, %s41
    %s44 = ssub.s32 %s17, %s43
    %s45 = ssub.s32 %s19, %s35
    %s46 = sor.u32 %s44, %s45
    %s47 = ssub.s32 %s18, %s39
    %s48 = sor.u32 %s46, %s47
    %p49 = scmp.eq.s32.totalorder %s48, 0
    %s51 = sadd.s32 %s50, 1
    %s52 = scalar_select %p49, %s50, %s51
    %p55 = pneg %p49
    %p56 = scmp.eq.s32.totalorder %s10, 1
    %p57 = por %p55, %p56
    %p58 = scmp.ne.s32.totalorder %s50, %s53
    %p59 = scmp.eq.s32.totalorder %s10, 0
    %p60 = por %p58, %p59
    %p61 = scmp.ne.s32.totalorder %s50, %s53
    %p62 = scmp.eq.s32.totalorder %s15, 1
    %p63 = por %p61, %p62
    %p64 = scmp.ne.s32.totalorder %s53, %s54
    %p65 = scmp.eq.s32.totalorder %s15, 0
    %p66 = por %p64, %p65
    %p67 = scmp.ne.s32.totalorder %s53, %s54
    %p68 = scmp.eq.s32.totalorder %s16, 1
    %p69 = por %p67, %p68
    %p71 = scmp.ne.s32.totalorder %s54, %s70
    %p72 = scmp.eq.s32.totalorder %s16, 0
    %p73 = por %p71, %p72
    %s74 = sadd.s32 %s18, 1
    %s75 = sadd.s32 %s39, 1
    %s76 = ssub.s32 %s17, %s43
    %s77 = ssub.s32 %s20, %s31
    %s78 = sor.u32 %s76, %s77
    %s79 = ssub.s32 %s74, %s75
    %s80 = sor.u32 %s78, %s79
    %p81 = scmp.eq.s32.totalorder %s80, 0
    %s83 = sadd.s32 %s82, 1
    %s84 = scalar_select %p81, %s82, %s83
    %p87 = pneg %p81
    %p88 = scmp.eq.s32.totalorder %s10, 1
    %p89 = por %p87, %p88
    %p90 = scmp.ne.s32.totalorder %s82, %s85
    %p91 = scmp.eq.s32.totalorder %s10, 0
    %p92 = por %p90, %p91
    %p93 = scmp.ne.s32.totalorder %s82, %s85
    %p94 = scmp.eq.s32.totalorder %s15, 1
    %p95 = por %p93, %p94
    %p96 = scmp.ne.s32.totalorder %s85, %s86
    %p97 = scmp.eq.s32.totalorder %s15, 0
    %p98 = por %p96, %p97
    %p99 = scmp.ne.s32.totalorder %s85, %s86
    %p100 = scmp.eq.s32.totalorder %s16, 1
    %p101 = por %p99, %p100
    %p103 = scmp.ne.s32.totalorder %s86, %s102
    %p104 = scmp.eq.s32.totalorder %s16, 0
    %p105 = por %p103, %p104
    %s106 = sadd.s32 %s18, 2
    %s107 = sadd.s32 %s39, 2
    %s108 = ssub.s32 %s17, %s43
    %s109 = ssub.s32 %s20, %s31
    %s110 = sor.u32 %s108, %s109
    %s111 = ssub.s32 %s106, %s107
    %s112 = sor.u32 %s110, %s111
    %p113 = scmp.eq.s32.totalorder %s112, 0
    %s115 = sadd.s32 %s114, 1
    %s116 = scalar_select %p113, %s114, %s115
    %p119 = pneg %p113
    %p120 = scmp.eq.s32.totalorder %s10, 1
    %p121 = por %p119, %p120
    %p122 = scmp.ne.s32.totalorder %s114, %s117
    %p123 = scmp.eq.s32.totalorder %s10, 0
    %p124 = por %p122, %p123
    %p125 = scmp.ne.s32.totalorder %s114, %s117
    %p126 = scmp.eq.s32.totalorder %s15, 1
    %p127 = por %p125, %p126
    %p128 = scmp.ne.s32.totalorder %s117, %s118
    %p129 = scmp.eq.s32.totalorder %s15, 0
    %p130 = por %p128, %p129
    %p131 = scmp.ne.s32.totalorder %s117, %s118
    %p132 = scmp.eq.s32.totalorder %s16, 1
    %p133 = por %p131, %p132
    %p135 = scmp.ne.s32.totalorder %s118, %s134
    %p136 = scmp.eq.s32.totalorder %s16, 0
    %p137 = por %p135, %p136
    %s138 = ssub.s32 %s17, %s43
    %s139 = ssub.s32 %s20, %s31
    %s140 = sor.u32 %s138, %s139
    %p141 = scmp.eq.s32.totalorder %s140, 0
    %s143 = sadd.s32 %s142, 1
    %s144 = scalar_select %p141, %s142, %s143
    %p147 = pneg %p141
    %p148 = scmp.eq.s32.totalorder %s10, 1
    %p149 = por %p147, %p148
    %p150 = scmp.ne.s32.totalorder %s142, %s145
    %p151 = scmp.eq.s32.totalorder %s10, 0
    %p152 = por %p150, %p151
    %p153 = scmp.ne.s32.totalorder %s142, %s145
    %p154 = scmp.eq.s32.totalorder %s15, 1
    %p155 = por %p153, %p154
    %p156 = scmp.ne.s32.totalorder %s145, %s146
    %p157 = scmp.eq.s32.totalorder %s15, 0
    %p158 = por %p156, %p157
    %p159 = scmp.ne.s32.totalorder %s145, %s146
    %p160 = scmp.eq.s32.totalorder %s16, 1
    %p161 = por %p159, %p160
    %p163 = scmp.ne.s32.totalorder %s146, %s162
    %p164 = scmp.eq.s32.totalorder %s16, 0
    %p165 = por %p163, %p164
    %s166 = ssub.s32 %s17, %s43
    %s167 = ssub.s32 %s19, %s35
    %s168 = sor.u32 %s166, %s167
    %s169 = ssub.s32 %s18, %s39
    %s170 = sor.u32 %s168, %s169
    %p171 = scmp.eq.s32.totalorder %s170, 0
    %s173 = sadd.s32 %s172, 1
    %s174 = scalar_select %p171, %s172, %s173
    %p177 = pneg %p171
    %p178 = scmp.eq.s32.totalorder %s10, 1
    %p179 = por %p177, %p178
    %p180 = scmp.ne.s32.totalorder %s172, %s175
    %p181 = scmp.eq.s32.totalorder %s10, 0
    %p182 = por %p180, %p181
    %p183 = scmp.ne.s32.totalorder %s172, %s175
    %p184 = scmp.eq.s32.totalorder %s15, 1
    %p185 = por %p183, %p184
    %p186 = scmp.ne.s32.totalorder %s175, %s176
    %p187 = scmp.eq.s32.totalorder %s15, 0
    %p188 = por %p186, %p187
    %p189 = scmp.ne.s32.totalorder %s175, %s176
    %p190 = scmp.eq.s32.totalorder %s16, 1
    %p191 = por %p189, %p190
    %p193 = scmp.ne.s32.totalorder %s176, %s192
    %p194 = scmp.eq.s32.totalorder %s16, 0
    %p195 = por %p193, %p194
    %p196 = scmp.le.s32.totalorder 1, %s10
    %p197 = scmp.lt.s32.totalorder %s10, 3
    %p198 = pnand %p196, %p197
    %p199 = pneg %p198
    // Predicated region
    $region9: #{forward.16} parent=5 // pred_check
      _
    $region10: #{forward.16} parent=5 // pred_check_branch
      %201 = sbr.rel (%p198) target = $region12
    $region11: #{forward.16} parent=5 // pred_region
      %s202 = ssub.s32 %s10, 1
    $region12: #{forward.16} parent=5 // pred_fallthru
      _
    %p203 = scmp.lt.s32.totalorder %s10, 2
    // Predicated region
    $region13: #{forward.16} parent=5 // pred_check
      %p204 = pneg %p203
    $region14: #{forward.16} parent=5 // pred_check_branch
      %206 = sbr.rel (%p204) target = $region16
    $region15: #{forward.16} parent=5 // pred_region
      // Predicated region
      $region17: #{forward.16} parent=15 // pred_check
        %p207 = pneg %p60
      $region18: #{forward.16} parent=15 // pred_check_branch
        %209 = sbr.rel (%p207) target = $region20
      $region19: #{forward.16} parent=15 // pred_region
        %p210 = scmp.lt.s32.totalorder %s17, 1
        %s211 = scalar_select %p210, %s17, 1
        %p212 = scmp.lt.s32.totalorder %s19, 0
        %s213 = scalar_select %p212, %s19, 0
        %p214 = scmp.lt.s32.totalorder %s18, 2
        %s215 = scalar_select %p214, %s18, 2
        %s216 = smul.addr %s213, 3
        %s217 = sadd.s32 %s215, %s216
        %s218 = smul.addr %s211, 3
        %s219 = sadd.s32 %s217, %s218
        %s220 = smul.addr %s219, 4
        %s221 = scalar_lea.vmem %s0, %s220
      $region20: #{forward.16} parent=15 // pred_fallthru
        _
      // Predicated region
      $region21: #{forward.16} parent=15 // pred_check
        %p222 = pneg %p92
      $region22: #{forward.16} parent=15 // pred_check_branch
        %224 = sbr.rel (%p222) target = $region24
      $region23: #{forward.16} parent=15 // pred_region
        %s225 = sadd.s32 %s18, 1
        %p226 = scmp.lt.s32.totalorder %s17, 1
        %s227 = scalar_select %p226, %s17, 1
        %p228 = scmp.lt.s32.totalorder %s20, 0
        %s229 = scalar_select %p228, %s20, 0
        %p230 = scmp.lt.s32.totalorder %s225, 2
        %s231 = scalar_select %p230, %s225, 2
        %s232 = smul.addr %s229, 3
        %s233 = sadd.s32 %s231, %s232
        %s234 = smul.addr %s227, 3
        %s235 = sadd.s32 %s233, %s234
        %s236 = smul.addr %s235, 4
        %s237 = scalar_lea.vmem %s1, %s236
        %s238 = sadd.s32 %s18, 1
      $region24: #{forward.16} parent=15 // pred_fallthru
        _
      // Predicated region
      $region25: #{forward.16} parent=15 // pred_check
        %p239 = pneg %p124
      $region26: #{forward.16} parent=15 // pred_check_branch
        %241 = sbr.rel (%p239) target = $region28
      $region27: #{forward.16} parent=15 // pred_region
        %s242 = sadd.s32 %s18, 2
        %p243 = scmp.lt.s32.totalorder %s17, 1
        %s244 = scalar_select %p243, %s17, 1
        %p245 = scmp.lt.s32.totalorder %s20, 0
        %s246 = scalar_select %p245, %s20, 0
        %p247 = scmp.lt.s32.totalorder %s242, 2
        %s248 = scalar_select %p247, %s242, 2
        %s249 = smul.addr %s246, 3
        %s250 = sadd.s32 %s248, %s249
        %s251 = smul.addr %s244, 3
        %s252 = sadd.s32 %s250, %s251
        %s253 = smul.addr %s252, 4
        %s254 = scalar_lea.vmem %s2, %s253
        %s255 = sadd.s32 %s18, 2
      $region28: #{forward.16} parent=15 // pred_fallthru
        _
      // Predicated region
      $region29: #{forward.16} parent=15 // pred_check
        %p256 = pneg %p152
      $region30: #{forward.16} parent=15 // pred_check_branch
        %258 = sbr.rel (%p256) target = $region32
      $region31: #{forward.16} parent=15 // pred_region
        %p259 = scmp.lt.s32.totalorder %s17, 1
        %s260 = scalar_select %p259, %s17, 1
        %p261 = scmp.lt.s32.totalorder %s20, 0
        %s262 = scalar_select %p261, %s20, 0
        %s263 = sadd.s32 %s262, %s260
        %s264 = scalar_lea.vmem %s3, %s263
      $region32: #{forward.16} parent=15 // pred_fallthru
        _
    $region16: #{forward.16} parent=5 // pred_fallthru
      _
    %p265 = scmp.le.s32.totalorder 1, %s10
    %p266 = scmp.lt.s32.totalorder %s10, 3
    %p267 = pnand %p265, %p266
    %p268 = pneg %p267
    // Predicated region
    $region33: #{forward.16} parent=5 // pred_check
      _
    $region34: #{forward.16} parent=5 // pred_check_branch
      %270 = sbr.rel (%p267) target = $region36
    $region35: #{forward.16} parent=5 // pred_region
      %s271 = ssub.s32 %s10, 1
      %p272 = scmp.lt.s32.totalorder %s21, 1
      %s273 = scalar_select %p272, %s21, 1
      %p274 = scmp.lt.s32.totalorder %s23, 0
      %s275 = scalar_select %p274, %s23, 0
      %p276 = scmp.lt.s32.totalorder %s22, 2
      %s277 = scalar_select %p276, %s22, 2
      %s278 = smul.addr %s275, 3
      %s279 = sadd.s32 %s277, %s278
      %s280 = smul.addr %s273, 3
      %s281 = sadd.s32 %s279, %s280
      %s282 = smul.addr %s281, 4
      %s283 = scalar_lea.vmem %s0, %s282
      %p284 = pneg %p66
      %p285 = pneg %p63
      %s286 = sadd.s32 %s22, 1
      %p287 = scmp.lt.s32.totalorder %s21, 1
      %s288 = scalar_select %p287, %s21, 1
      %p289 = scmp.lt.s32.totalorder %s24, 0
      %s290 = scalar_select %p289, %s24, 0
      %p291 = scmp.lt.s32.totalorder %s286, 2
      %s292 = scalar_select %p291, %s286, 2
      %s293 = smul.addr %s290, 3
      %s294 = sadd.s32 %s292, %s293
      %s295 = smul.addr %s288, 3
      %s296 = sadd.s32 %s294, %s295
      %s297 = smul.addr %s296, 4
      %s298 = scalar_lea.vmem %s1, %s297
      %p299 = pneg %p98
      %p300 = pneg %p95
      %s301 = sadd.s32 %s22, 2
      %p302 = scmp.lt.s32.totalorder %s21, 1
      %s303 = scalar_select %p302, %s21, 1
      %p304 = scmp.lt.s32.totalorder %s24, 0
      %s305 = scalar_select %p304, %s24, 0
      %p306 = scmp.lt.s32.totalorder %s301, 2
      %s307 = scalar_select %p306, %s301, 2
      %s308 = smul.addr %s305, 3
      %s309 = sadd.s32 %s307, %s308
      %s310 = smul.addr %s303, 3
      %s311 = sadd.s32 %s309, %s310
      %s312 = smul.addr %s311, 4
      %s313 = scalar_lea.vmem %s2, %s312
      %p314 = pneg %p130
      %p315 = pneg %p127
      %p316 = scmp.lt.s32.totalorder %s21, 1
      %s317 = scalar_select %p316, %s21, 1
      %p318 = scmp.lt.s32.totalorder %s24, 0
      %s319 = scalar_select %p318, %s24, 0
      %s320 = sadd.s32 %s319, %s317
      %s321 = scalar_lea.vmem %s3, %s320
      %p322 = pneg %p158
      %p323 = pneg %p155
      %p324 = pneg %p188
      %p325 = pneg %p185
      %p326 = scmp.lt.s32.totalorder %s21, 1
      %s327 = scalar_select %p326, %s21, 1
      %p328 = scmp.lt.s32.totalorder %s23, 0
      %s329 = scalar_select %p328, %s23, 0
      %p330 = scmp.lt.s32.totalorder %s22, 0
      %s331 = scalar_select %p330, %s22, 0
      %s332 = sadd.s32 %s331, %s329
      %s333 = sadd.s32 %s332, %s327
      %s334 = smul.addr %s333, 4
      %s335 = scalar_lea.vmem %s4, %s334
      %p336 = scmp.lt.s32.totalorder %s21, 1
      %s337 = scalar_select %p336, %s21, 1
      %p338 = scmp.lt.s32.totalorder %s23, 0
      %s339 = scalar_select %p338, %s23, 0
      %p340 = scmp.lt.s32.totalorder %s22, 2
      %s341 = scalar_select %p340, %s22, 2
      %s342 = smul.addr %s339, 3
      %s343 = sadd.s32 %s341, %s342
      %s344 = smul.addr %s337, 3
      %s345 = sadd.s32 %s343, %s344
      %s346 = smul.addr %s345, 4
      %s347 = scalar_lea.vmem %s0, %s346
      %s348 = sadd.s32 %s22, 1
      %p349 = scmp.lt.s32.totalorder %s21, 1
      %s350 = scalar_select %p349, %s21, 1
      %p351 = scmp.lt.s32.totalorder %s24, 0
      %s352 = scalar_select %p351, %s24, 0
      %p353 = scmp.lt.s32.totalorder %s348, 2
      %s354 = scalar_select %p353, %s348, 2
      %s355 = smul.addr %s352, 3
      %s356 = sadd.s32 %s354, %s355
      %s357 = smul.addr %s350, 3
      %s358 = sadd.s32 %s356, %s357
      %s359 = smul.addr %s358, 4
      %s360 = scalar_lea.vmem %s1, %s359
      %s361 = sadd.s32 %s22, 1
      %s362 = sadd.s32 %s22, 2
      %p363 = scmp.lt.s32.totalorder %s21, 1
      %s364 = scalar_select %p363, %s21, 1
      %p365 = scmp.lt.s32.totalorder %s24, 0
      %s366 = scalar_select %p365, %s24, 0
      %p367 = scmp.lt.s32.totalorder %s362, 2
      %s368 = scalar_select %p367, %s362, 2
      %s369 = smul.addr %s366, 3
      %s370 = sadd.s32 %s368, %s369
      %s371 = smul.addr %s364, 3
      %s372 = sadd.s32 %s370, %s371
      %s373 = smul.addr %s372, 4
      %s374 = scalar_lea.vmem %s2, %s373
      %s375 = sadd.s32 %s22, 2
      %p376 = scmp.lt.s32.totalorder %s21, 1
      %s377 = scalar_select %p376, %s21, 1
      %p378 = scmp.lt.s32.totalorder %s24, 0
      %s379 = scalar_select %p378, %s24, 0
      %s380 = sadd.s32 %s379, %s377
      %s381 = scalar_lea.vmem %s3, %s380
      %p382 = scmp.lt.s32.totalorder %s21, 1
      %s383 = scalar_select %p382, %s21, 1
      %p384 = scmp.lt.s32.totalorder %s23, 0
      %s385 = scalar_select %p384, %s23, 0
      %p386 = scmp.lt.s32.totalorder %s22, 0
      %s387 = scalar_select %p386, %s22, 0
      %s388 = sadd.s32 %s387, %s385
      %s389 = sadd.s32 %s388, %s383
      %s390 = smul.addr %s389, 4
      %s391 = scalar_lea.vmem %s4, %s390
      %p393 = scmp.eq.s32.totalorder %s24, 0
      // Predicated region
      $region37: #{forward.16} parent=35 // pred_check
        %p394 = pneg %p393
      $region38: #{forward.16} parent=35 // pred_check_branch
        %396 = sbr.rel (%p394) target = $region40
      $region39: #{forward.16} parent=35 // pred_region
        %vm397 = vcmask 7168
        %398 = vst.msk [vmem:[#allocation2] sm:$0xff] %vm397, -inf
        %399 = vst.msk [vmem:[#allocation2 + $0x8] sm:$0xff] %vm397, -inf
        %400 = vst.msk [vmem:[#allocation3] sm:$0xff] %vm397, 0.0
        %401 = vst.msk [vmem:[#allocation3 + $0x8] sm:$0xff] %vm397, 0.0
        %vm402 = vcmask 523264
        %403 = vst.msk [vmem:[#allocation4] sm:$0xff] %vm402, 0.0
        %404 = vst.msk [vmem:[#allocation4 + $0x8] sm:$0xff] %vm402, 0.0
      $region40: #{forward.16} parent=35 // pred_fallthru
        _
      %v405 = vld [vmem:[%s381] sm:$0x1]
      %v406 = vld [vmem:[%s347] sm:$0xf]
      %v407 = vld [vmem:[%s360] sm:$0xf]
      %v408 = vld [vmem:[%s374] sm:$0xf]
      %vm409 = vcmask 523264
      %v411 = vsel %vm409, %v406, 0
      %v414 = vsel %vm409, %v407, 0
      %416 = vmatprep.subr.bf16.mxu0 0
      %417 = vmatpush1.bf16.xpose.msra.mxu0 %v414
      %418 = vmatprep.subr.bf16.mxu0 0
      %419 = vmatpush1.bf16.xpose.msra.mxu0 0
      %420 = vmatprep.subr.bf16.mxu0 0
      %421 = vmatpush1.bf16.xpose.msra.mxu0 0
      %422 = vmatprep.subr.bf16.mxu0 0
      %423 = vmatpush1.bf16.xpose.msra.mxu0 0
      %424 = vmatprep.subr.bf16.mxu0 0
      %425 = vmatpush1.bf16.xpose.msra.mxu0 0
      %426 = vmatprep.subr.bf16.mxu0 0
      %427 = vmatpush1.bf16.xpose.msra.mxu0 0
      %428 = vmatprep.subr.bf16.mxu0 0
      %429 = vmatpush1.bf16.xpose.msra.mxu0 0
      %430 = vmatprep.subr.bf16.mxu0 0
      %431 = vmatpush1.bf16.xpose.msra.mxu0 0
      %432 = vmatprep.subr.bf16.mxu0 0
      %433 = vmatpush1.bf16.xpose.msra.mxu0 0
      %434 = vmatprep.subr.bf16.mxu0 0
      %435 = vmatpush1.bf16.xpose.msra.mxu0 0
      %436 = vmatprep.subr.bf16.mxu0 0
      %437 = vmatpush1.bf16.xpose.msra.mxu0 0
      %438 = vmatprep.subr.bf16.mxu0 0
      %439 = vmatpush1.bf16.xpose.msra.mxu0 0
      %440 = vmatprep.subr.bf16.mxu0 0
      %441 = vmatpush1.bf16.xpose.msra.mxu0 0
      %442 = vmatprep.subr.bf16.mxu0 0
      %443 = vmatpush1.bf16.xpose.msra.mxu0 0
      %444 = vmatprep.subr.bf16.mxu0 0
      %445 = vmatpush1.bf16.xpose.msra.mxu0 0
      %446 = vmatprep.subr.bf16.mxu0 0
      %447 = vmatpush1.bf16.xpose.msra.mxu0 0
      %448 = vmatprep.mubr.bf16.mxu0 0
      %449 = vmatmul.mubr.bf16.gmra.mrb[0].mxu0 %v411
      %v450 = vpop.f32.mrb[0].mxu0
      %v451 = vadd.f32 0.0, %v450
      %v452 = vpop.f32.mrb[0].mxu0
      %v453 = vpop.f32.mrb[0].mxu0
      %v454 = vpop.f32.mrb[0].mxu0
      %455 = vdwg.mxu0
      %v456 = vmul.f32 %v451, 0.125
      %v458 = vlaneseq
      %v459 = vshrl.u32 %v458, 7
      %v460 = vsub.s32 0, %v459
      %v461 = vrot.slane %v405, %v460
      %v463 = vadd.f32 %v456, %v461
      %v464 = vld [vmem:[#allocation2] sm:$0xff]
      %vm465 = vcmask 64512
      %v466 = vsel %vm465, %v463, -inf
      %467 = vmax.xlane.f32.xlu0 %v466
      %v468 = vpop.xlane.xlu0 %467
      %v469 = vmax.f32 %v464, %v468
      %v470 = vsub.f32 %v464, %v469
      %v471 = vmul.f32 %v470, 1.442695
      %v472 = vpow.pop %v471
      %474 = vset.pattern.permute.xlu0 0
      %475 = vperm.xlu0 %474, %v469
      %v476 = vpop.permute.xlu0 %475
      %v478 = vsub.f32 %v463, %v476
      %v479 = vmul.f32 %v478, 1.442695
      %v480 = vpow.pop %v479
      %v481 = vld [vmem:[#allocation3] sm:$0xff]
      %v482 = vmul.f32 %v472, %v481
      %v483 = vsel %vm465, %v480, 0.0
      %484 = vadd.xlane.f32.xlu0 %v483
      %v485 = vpop.xlane.xlu0 %484
      %v486 = vadd.f32 %v482, %v485
      %vm487 = vcmask 7168
      %488 = vst.msk [vmem:[#allocation3] sm:$0xff] %vm487, %v486
      %v489 = vld [vmem:[#allocation4] sm:$0xff]
      %491 = vset.pattern.permute.xlu0 0
      %492 = vperm.xlu0 %491, %v472
      %v493 = vpop.permute.xlu0 %492
      %v495 = vmul.f32 %v493, %v489
      %v496 = vpack.c.bf16 %v480, %v480
      %v498 = vsel %vm465, %v496, 0
      %vm500 = vcmask 1043456
      %v502 = vsel %vm500, %v408, 0
      %504 = vmatprep.subr.bf16.mxu0 0
      %505 = vmatpush1.bf16.msra.mxu0 %v502
      %506 = vmatprep.subr.bf16.mxu0 0
      %507 = vmatpush1.bf16.msra.mxu0 0
      %508 = vmatprep.subr.bf16.mxu0 0
      %509 = vmatpush1.bf16.msra.mxu0 0
      %510 = vmatprep.subr.bf16.mxu0 0
      %511 = vmatpush1.bf16.msra.mxu0 0
      %512 = vmatprep.subr.bf16.mxu0 0
      %513 = vmatpush1.bf16.msra.mxu0 0
      %514 = vmatprep.subr.bf16.mxu0 0
      %515 = vmatpush1.bf16.msra.mxu0 0
      %516 = vmatprep.subr.bf16.mxu0 0
      %517 = vmatpush1.bf16.msra.mxu0 0
      %518 = vmatprep.subr.bf16.mxu0 0
      %519 = vmatpush1.bf16.msra.mxu0 0
      %520 = vmatprep.subr.bf16.mxu0 0
      %521 = vmatpush1.bf16.msra.mxu0 0
      %522 = vmatprep.subr.bf16.mxu0 0
      %523 = vmatpush1.bf16.msra.mxu0 0
      %524 = vmatprep.subr.bf16.mxu0 0
      %525 = vmatpush1.bf16.msra.mxu0 0
      %526 = vmatprep.subr.bf16.mxu0 0
      %527 = vmatpush1.bf16.msra.mxu0 0
      %528 = vmatprep.subr.bf16.mxu0 0
      %529 = vmatpush1.bf16.msra.mxu0 0
      %530 = vmatprep.subr.bf16.mxu0 0
      %531 = vmatpush1.bf16.msra.mxu0 0
      %532 = vmatprep.subr.bf16.mxu0 0
      %533 = vmatpush1.bf16.msra.mxu0 0
      %534 = vmatprep.subr.bf16.mxu0 0
      %535 = vmatpush1.bf16.msra.mxu0 0
      %536 = vmatprep.mubr.bf16.mxu0 0
      %537 = vmatmul.mubr.bf16.gmra.mrb[0].mxu0 %v498
      %v538 = vpop.f32.mrb[0].mxu0
      %v539 = vadd.f32 0.0, %v538
      %v540 = vpop.f32.mrb[0].mxu0
      %v541 = vpop.f32.mrb[0].mxu0
      %v542 = vpop.f32.mrb[0].mxu0
      %543 = vdwg.mxu0
      %v544 = vadd.f32 %v495, %v539
      %545 = vst.msk [vmem:[#allocation4] sm:$0xff] %vm409, %v544
      %546 = vst.msk [vmem:[#allocation2] sm:$0xff] %vm487, %v469
      %v547 = vld [vmem:[%s347] sm:$0xf]
      %v548 = vld [vmem:[%s360] sm:$0xf]
      %v549 = vld [vmem:[%s374] sm:$0xf]
      %v551 = vunpack.c.l.b16 %v547
      %v552 = vpack.c.b16 %v551, %v551
      %553 = vrot.lane.b32.xlu0 %v552, 64
      %v554 = vpop.permute.xlu0 %553
      %v556 = vunpack.c.l.b16 %v548
      %v557 = vpack.c.b16 %v556, %v556
      %558 = vrot.lane.b32.xlu0 %v557, 64
      %v559 = vpop.permute.xlu0 %558
      %v561 = vsel %vm409, %v554, 0
      %v564 = vsel %vm409, %v559, 0
      %566 = vmatprep.subr.bf16.mxu0 0
      %567 = vmatpush1.bf16.xpose.msra.mxu0 %v564
      %568 = vmatprep.subr.bf16.mxu0 0
      %569 = vmatpush1.bf16.xpose.msra.mxu0 0
      %570 = vmatprep.subr.bf16.mxu0 0
      %571 = vmatpush1.bf16.xpose.msra.mxu0 0
      %572 = vmatprep.subr.bf16.mxu0 0
      %573 = vmatpush1.bf16.xpose.msra.mxu0 0
      %574 = vmatprep.subr.bf16.mxu0 0
      %575 = vmatpush1.bf16.xpose.msra.mxu0 0
      %576 = vmatprep.subr.bf16.mxu0 0
      %577 = vmatpush1.bf16.xpose.msra.mxu0 0
      %578 = vmatprep.subr.bf16.mxu0 0
      %579 = vmatpush1.bf16.xpose.msra.mxu0 0
      %580 = vmatprep.subr.bf16.mxu0 0
      %581 = vmatpush1.bf16.xpose.msra.mxu0 0
      %582 = vmatprep.subr.bf16.mxu0 0
      %583 = vmatpush1.bf16.xpose.msra.mxu0 0
      %584 = vmatprep.subr.bf16.mxu0 0
      %585 = vmatpush1.bf16.xpose.msra.mxu0 0
      %586 = vmatprep.subr.bf16.mxu0 0
      %587 = vmatpush1.bf16.xpose.msra.mxu0 0
      %588 = vmatprep.subr.bf16.mxu0 0
      %589 = vmatpush1.bf16.xpose.msra.mxu0 0
      %590 = vmatprep.subr.bf16.mxu0 0
      %591 = vmatpush1.bf16.xpose.msra.mxu0 0
      %592 = vmatprep.subr.bf16.mxu0 0
      %593 = vmatpush1.bf16.xpose.msra.mxu0 0
      %594 = vmatprep.subr.bf16.mxu0 0
      %595 = vmatpush1.bf16.xpose.msra.mxu0 0
      %596 = vmatprep.subr.bf16.mxu0 0
      %597 = vmatpush1.bf16.xpose.msra.mxu0 0
      %598 = vmatprep.mubr.bf16.mxu0 0
      %599 = vmatmul.mubr.bf16.gmra.mrb[0].mxu0 %v561
      %v600 = vpop.f32.mrb[0].mxu0
      %v601 = vadd.f32 0.0, %v600
      %v602 = vpop.f32.mrb[0].mxu0
      %v603 = vpop.f32.mrb[0].mxu0
      %v604 = vpop.f32.mrb[0].mxu0
      %605 = vdwg.mxu0
      %v606 = vmul.f32 %v601, 0.125
      %v607 = vadd.f32 %v606, %v461
      %s608 = scalar_lea.vmem [#allocation2], 8
      %v609 = vld [vmem:[%s608] sm:$0xff]
      %v610 = vsel %vm465, %v607, -inf
      %611 = vmax.xlane.f32.xlu0 %v610
      %v612 = vpop.xlane.xlu0 %611
      %v613 = vmax.f32 %v609, %v612
      %v614 = vsub.f32 %v609, %v613
      %v615 = vmul.f32 %v614, 1.442695
      %v616 = vpow.pop %v615
      %618 = vset.pattern.permute.xlu0 0
      %619 = vperm.xlu0 %618, %v613
      %v620 = vpop.permute.xlu0 %619
      %v622 = vsub.f32 %v607, %v620
      %v623 = vmul.f32 %v622, 1.442695
      %v624 = vpow.pop %v623
      %s625 = scalar_lea.vmem [#allocation3], 8
      %v626 = vld [vmem:[%s625] sm:$0xff]
      %v627 = vmul.f32 %v616, %v626
      %v628 = vsel %vm465, %v624, 0.0
      %629 = vadd.xlane.f32.xlu0 %v628
      %v630 = vpop.xlane.xlu0 %629
      %v631 = vadd.f32 %v627, %v630
      %632 = vst.msk [vmem:[%s625] sm:$0xff] %vm487, %v631
      %s633 = scalar_lea.vmem [#allocation4], 8
      %v634 = vld [vmem:[%s633] sm:$0xff]
      %636 = vset.pattern.permute.xlu0 0
      %637 = vperm.xlu0 %636, %v616
      %v638 = vpop.permute.xlu0 %637
      %v640 = vmul.f32 %v638, %v634
      %v641 = vpack.c.bf16 %v624, %v624
      %v643 = vunpack.c.l.b16 %v549
      %v644 = vpack.c.b16 %v643, %v643
      %645 = vrot.lane.b32.xlu0 %v644, 64
      %v646 = vpop.permute.xlu0 %645
      %v648 = vsel %vm465, %v641, 0
      %v651 = vsel %vm500, %v646, 0
      %653 = vmatprep.subr.bf16.mxu0 0
      %654 = vmatpush1.bf16.msra.mxu0 %v651
      %655 = vmatprep.subr.bf16.mxu0 0
      %656 = vmatpush1.bf16.msra.mxu0 0
      %657 = vmatprep.subr.bf16.mxu0 0
      %658 = vmatpush1.bf16.msra.mxu0 0
      %659 = vmatprep.subr.bf16.mxu0 0
      %660 = vmatpush1.bf16.msra.mxu0 0
      %661 = vmatprep.subr.bf16.mxu0 0
      %662 = vmatpush1.bf16.msra.mxu0 0
      %663 = vmatprep.subr.bf16.mxu0 0
      %664 = vmatpush1.bf16.msra.mxu0 0
      %665 = vmatprep.subr.bf16.mxu0 0
      %666 = vmatpush1.bf16.msra.mxu0 0
      %667 = vmatprep.subr.bf16.mxu0 0
      %668 = vmatpush1.bf16.msra.mxu0 0
      %669 = vmatprep.subr.bf16.mxu0 0
      %670 = vmatpush1.bf16.msra.mxu0 0
      %671 = vmatprep.subr.bf16.mxu0 0
      %672 = vmatpush1.bf16.msra.mxu0 0
      %673 = vmatprep.subr.bf16.mxu0 0
      %674 = vmatpush1.bf16.msra.mxu0 0
      %675 = vmatprep.subr.bf16.mxu0 0
      %676 = vmatpush1.bf16.msra.mxu0 0
      %677 = vmatprep.subr.bf16.mxu0 0
      %678 = vmatpush1.bf16.msra.mxu0 0
      %679 = vmatprep.subr.bf16.mxu0 0
      %680 = vmatpush1.bf16.msra.mxu0 0
      %681 = vmatprep.subr.bf16.mxu0 0
      %682 = vmatpush1.bf16.msra.mxu0 0
      %683 = vmatprep.subr.bf16.mxu0 0
      %684 = vmatpush1.bf16.msra.mxu0 0
      %685 = vmatprep.mubr.bf16.mxu0 0
      %686 = vmatmul.mubr.bf16.gmra.mrb[0].mxu0 %v648
      %v687 = vpop.f32.mrb[0].mxu0
      %v688 = vadd.f32 0.0, %v687
      %v689 = vpop.f32.mrb[0].mxu0
      %v690 = vpop.f32.mrb[0].mxu0
      %v691 = vpop.f32.mrb[0].mxu0
      %692 = vdwg.mxu0
      %v693 = vadd.f32 %v640, %v688
      %694 = vst.msk [vmem:[%s633] sm:$0xff] %vm409, %v693
      %695 = vst.msk [vmem:[%s608] sm:$0xff] %vm487, %v613
      // Predicated region
      $region41: #{forward.16} parent=35 // pred_check
        %p696 = pneg %p393
      $region42: #{forward.16} parent=35 // pred_check_branch
        %698 = sbr.rel (%p696) target = $region44
      $region43: #{forward.16} parent=35 // pred_region
        %v699 = vld [vmem:[#allocation4] sm:$0xff]
        %v700 = vld [vmem:[#allocation3] sm:$0xff]
        %v701 = vrcp.pop %v700
        %703 = vset.pattern.permute.xlu0 0
        %704 = vperm.xlu0 %703, %v701
        %v705 = vpop.permute.xlu0 %704
        %v707 = vmul.f32 %v699, %v705
        %v708 = vld [vmem:[%s633] sm:$0xff]
        %v709 = vld [vmem:[%s625] sm:$0xff]
        %v710 = vrcp.pop %v709
        %712 = vset.pattern.permute.xlu0 0
        %713 = vperm.xlu0 %712, %v710
        %v714 = vpop.permute.xlu0 %713
        %v716 = vmul.f32 %v708, %v714
        %718 = vrot.lane.b32.xlu0 %v716, 64
        %v719 = vpop.permute.xlu0 %718
        %v721 = vsel %vm409, %v707, %v719
        %v722 = vpack.c.bf16 %v721, %v721
        %723 = vst [vmem:[%s391] sm:$0xf] %v722
      $region44: #{forward.16} parent=35 // pred_fallthru
        _
      %p724 = scmp.lt.s32.totalorder %s21, 1
      %s725 = scalar_select %p724, %s21, 1
      %p726 = scmp.lt.s32.totalorder %s23, 0
      %s727 = scalar_select %p726, %s23, 0
      %p728 = scmp.lt.s32.totalorder %s22, 0
      %s729 = scalar_select %p728, %s22, 0
      %s730 = sadd.s32 %s729, %s727
      %s731 = sadd.s32 %s730, %s725
      %s732 = smul.addr %s731, 4
      %s733 = scalar_lea.vmem %s4, %s732
      // Predicated region
      $region45: #{forward.16} parent=35 // pred_check
        %p734 = pneg %p185
      $region46: #{forward.16} parent=35 // pred_check_branch
        %736 = sbr.rel (%p734) target = $region48
      $region47: #{forward.16} parent=35 // pred_region
        _
      $region48: #{forward.16} parent=35 // pred_fallthru
        _
    $region36: #{forward.16} parent=5 // pred_fallthru
      _
    %p737 = scmp.le.s32.totalorder 2, %s10
    // Predicated region
    $region49: #{forward.16} parent=5 // pred_check
      %p738 = pneg %p737
    $region50: #{forward.16} parent=5 // pred_check_branch
      %740 = sbr.rel (%p738) target = $region52
    $region51: #{forward.16} parent=5 // pred_region
      %s741 = ssub.s32 %s10, 2
      // Predicated region
      $region53: #{forward.16} parent=51 // pred_check
        %p742 = pneg %p191
      $region54: #{forward.16} parent=51 // pred_check_branch
        %744 = sbr.rel (%p742) target = $region56
      $region55: #{forward.16} parent=51 // pred_region
        %p745 = scmp.lt.s32.totalorder %s25, 1
        %s746 = scalar_select %p745, %s25, 1
        %p747 = scmp.lt.s32.totalorder %s27, 0
        %s748 = scalar_select %p747, %s27, 0
        %p749 = scmp.lt.s32.totalorder %s26, 0
        %s750 = scalar_select %p749, %s26, 0
        %s751 = sadd.s32 %s750, %s748
        %s752 = sadd.s32 %s751, %s746
        %s753 = smul.addr %s752, 4
        %s754 = scalar_lea.vmem %s4, %s753
      $region56: #{forward.16} parent=51 // pred_fallthru
        _
    $region52: #{forward.16} parent=5 // pred_fallthru
      _
  $region6: #{forward.16} parent=0 // loop_footer
    %s14 = sadd.s32 1, %s10
  $region7: #{forward.16} parent=0 // loop_footer_branch
    %9 = sbr.rel target = $region3
  $region8: #{forward.16} parent=0 // loop_exit
    _

// kernel: forward.18
$region0: #{forward.18}
  #allocation0 [shape = 'u32[]', space=smem, size = 0x4, offset = 0x4, fixed_abs, tag = 'smem constant byte address 0x4 - core index']
  #allocation1 [shape = 'u32[144,128]{1,0:T(1,128)}', space=vmem, size = 0x12000, scoped, tag = 'internal scratch']
  #allocation2 [shape = 'f32[16,256]{1,0:T(8,128)}', space=vmem, size = 0x4000, scoped, tag = 'scratch operand']
  %s0 = inlined_call_operand.vmem [shape: bf16[16,128], index: 0, kind: input, shape index: {}]
  %s1 = inlined_call_operand.vmem [shape: bf16[128,256], index: 1, kind: input, shape index: {}]
  %s2 = inlined_call_operand.vmem [shape: f32[1,256], index: 2, kind: input, shape index: {}]
  %s3 = inlined_call_operand.vmem [shape: bf16[16,256], index: 3, kind: output, shape index: {}]
  %s4 = sld [smem:[#allocation0]]
  $region30: #{forward.18} parent=0
    _
  %s6 = ssub.s32 1, %s4
  %s7 = scalar_select 0, %s6, %s4
  // Predicated region
  $region2: #{forward.18} parent=0 // pred_check
    _
  $region3: #{forward.18} parent=0 // pred_check_branch
    %9 = sbr.rel (0) target = $region5
  $region4: #{forward.18} parent=0 // pred_region
    _
  $region5: #{forward.18} parent=0 // pred_fallthru
    _
  // Predicated region
  $region6: #{forward.18} parent=0 // pred_check
    _
  $region7: #{forward.18} parent=0 // pred_check_branch
    %11 = sbr.rel (0) target = $region9
  $region8: #{forward.18} parent=0 // pred_region
    _
  $region9: #{forward.18} parent=0 // pred_fallthru
    _
  // Predicated region
  $region10: #{forward.18} parent=0 // pred_check
    _
  $region11: #{forward.18} parent=0 // pred_check_branch
    %13 = sbr.rel (0) target = $region13
  $region12: #{forward.18} parent=0 // pred_region
    _
  $region13: #{forward.18} parent=0 // pred_fallthru
    _
  %p15 = scmp.eq.s32.totalorder 0, 0
  // Predicated region
  $region14: #{forward.18} parent=0 // pred_check
    %p16 = pneg %p15
  $region15: #{forward.18} parent=0 // pred_check_branch
    %18 = sbr.rel (%p16) target = $region17
  $region16: #{forward.18} parent=0 // pred_region
    %19 = vst [vmem:[#allocation2] sm:$0xff] 0.0
    %20 = vst [vmem:[#allocation2 + $0x8] sm:$0xff] 0.0
    %21 = vst [vmem:[#allocation2 + $0x10] sm:$0xff] 0.0
    %22 = vst [vmem:[#allocation2 + $0x18] sm:$0xff] 0.0
  $region17: #{forward.18} parent=0 // pred_fallthru
    _
  %v23 = vld [vmem:[#allocation2] sm:$0xff]
  %v24 = vld [vmem:[#allocation2 + $0x8] sm:$0xff]
  %v25 = vld [vmem:[#allocation2 + $0x10] sm:$0xff]
  %v26 = vld [vmem:[#allocation2 + $0x18] sm:$0xff]
  %v27 = vld [vmem:[%s0] sm:$0xf]
  %v28 = vld [vmem:[%s0 + $0x4] sm:$0xf]
  %v29 = vld [vmem:[%s1] sm:$0xff]
  %v30 = vld [vmem:[%s1 + $0x8] sm:$0xff]
  %v31 = vld [vmem:[%s1 + $0x10] sm:$0xff]
  %v32 = vld [vmem:[%s1 + $0x18] sm:$0xff]
  %v33 = vld [vmem:[%s1 + $0x20] sm:$0xff]
  %v34 = vld [vmem:[%s1 + $0x28] sm:$0xff]
  %v35 = vld [vmem:[%s1 + $0x30] sm:$0xff]
  %v36 = vld [vmem:[%s1 + $0x38] sm:$0xff]
  %v37 = vld [vmem:[%s1 + $0x40] sm:$0xff]
  %v38 = vld [vmem:[%s1 + $0x48] sm:$0xff]
  %v39 = vld [vmem:[%s1 + $0x50] sm:$0xff]
  %v40 = vld [vmem:[%s1 + $0x58] sm:$0xff]
  %v41 = vld [vmem:[%s1 + $0x60] sm:$0xff]
  %v42 = vld [vmem:[%s1 + $0x68] sm:$0xff]
  %v43 = vld [vmem:[%s1 + $0x70] sm:$0xff]
  %v44 = vld [vmem:[%s1 + $0x78] sm:$0xff]
  %v47 = vunpack.c.l.b16 %v27
  %v48 = vunpack.c.l.b16 %v28
  %v49 = vpack.c.b16 %v48, %v47
  %v67 = vunpack.c.l.b16 %v29
  %v68 = vunpack.c.h.b16 %v29
  %v69 = vunpack.c.l.b16 %v30
  %v70 = vunpack.c.h.b16 %v30
  %v71 = vunpack.c.l.b16 %v31
  %v72 = vunpack.c.h.b16 %v31
  %v73 = vunpack.c.l.b16 %v32
  %v74 = vunpack.c.h.b16 %v32
  %v75 = vunpack.c.l.b16 %v33
  %v76 = vunpack.c.h.b16 %v33
  %v77 = vunpack.c.l.b16 %v34
  %v78 = vunpack.c.h.b16 %v34
  %v79 = vunpack.c.l.b16 %v35
  %v80 = vunpack.c.h.b16 %v35
  %v81 = vunpack.c.l.b16 %v36
  %v82 = vunpack.c.h.b16 %v36
  %v83 = vunpack.c.l.b16 %v37
  %v84 = vunpack.c.h.b16 %v37
  %v85 = vunpack.c.l.b16 %v38
  %v86 = vunpack.c.h.b16 %v38
  %v87 = vunpack.c.l.b16 %v39
  %v88 = vunpack.c.h.b16 %v39
  %v89 = vunpack.c.l.b16 %v40
  %v90 = vunpack.c.h.b16 %v40
  %v91 = vunpack.c.l.b16 %v41
  %v92 = vunpack.c.h.b16 %v41
  %v93 = vunpack.c.l.b16 %v42
  %v94 = vunpack.c.h.b16 %v42
  %v95 = vunpack.c.l.b16 %v43
  %v96 = vunpack.c.h.b16 %v43
  %v97 = vunpack.c.l.b16 %v44
  %v98 = vunpack.c.h.b16 %v44
  %v99 = vpack.c.b16 %v69, %v67
  %v100 = vpack.c.b16 %v70, %v68
  %v101 = vpack.c.b16 %v73, %v71
  %v102 = vpack.c.b16 %v74, %v72
  %v103 = vpack.c.b16 %v77, %v75
  %v104 = vpack.c.b16 %v78, %v76
  %v105 = vpack.c.b16 %v81, %v79
  %v106 = vpack.c.b16 %v82, %v80
  %v107 = vpack.c.b16 %v85, %v83
  %v108 = vpack.c.b16 %v86, %v84
  %v109 = vpack.c.b16 %v89, %v87
  %v110 = vpack.c.b16 %v90, %v88
  %v111 = vpack.c.b16 %v93, %v91
  %v112 = vpack.c.b16 %v94, %v92
  %v113 = vpack.c.b16 %v97, %v95
  %v114 = vpack.c.b16 %v98, %v96
  %131 = vmatprep.subr.bf16.mxu0 %v100
  %132 = vmatpush1.bf16.msra.mxu0 %v99
  %133 = vmatprep.subr.bf16.mxu0 %v102
  %134 = vmatpush1.bf16.msra.mxu0 %v101
  %135 = vmatprep.subr.bf16.mxu0 %v104
  %136 = vmatpush1.bf16.msra.mxu0 %v103
  %137 = vmatprep.subr.bf16.mxu0 %v106
  %138 = vmatpush1.bf16.msra.mxu0 %v105
  %139 = vmatprep.subr.bf16.mxu0 %v108
  %140 = vmatpush1.bf16.msra.mxu0 %v107
  %141 = vmatprep.subr.bf16.mxu0 %v110
  %142 = vmatpush1.bf16.msra.mxu0 %v109
  %143 = vmatprep.subr.bf16.mxu0 %v112
  %144 = vmatpush1.bf16.msra.mxu0 %v111
  %145 = vmatprep.subr.bf16.mxu0 %v114
  %146 = vmatpush1.bf16.msra.mxu0 %v113
  %147 = vmatprep.subr.bf16.mxu0 0
  %148 = vmatpush1.bf16.msra.mxu0 0
  %149 = vmatprep.subr.bf16.mxu0 0
  %150 = vmatpush1.bf16.msra.mxu0 0
  %151 = vmatprep.subr.bf16.mxu0 0
  %152 = vmatpush1.bf16.msra.mxu0 0
  %153 = vmatprep.subr.bf16.mxu0 0
  %154 = vmatpush1.bf16.msra.mxu0 0
  %155 = vmatprep.subr.bf16.mxu0 0
  %156 = vmatpush1.bf16.msra.mxu0 0
  %157 = vmatprep.subr.bf16.mxu0 0
  %158 = vmatpush1.bf16.msra.mxu0 0
  %159 = vmatprep.subr.bf16.mxu0 0
  %160 = vmatpush1.bf16.msra.mxu0 0
  %161 = vmatprep.subr.bf16.mxu0 0
  %162 = vmatpush1.bf16.msra.mxu0 0
  %163 = vmatprep.mubr.bf16.mxu0 0
  %164 = vmatmul.mubr.bf16.gmra.mrb[0].mxu0 %v49
  %v165 = vpop.f32.mrb[0].mxu0
  %v166 = vadd.f32 0.0, %v165
  %v167 = vpop.f32.mrb[0].mxu0
  %v168 = vadd.f32 0.0, %v167
  %v169 = vpop.f32.mrb[0].mxu0
  %v170 = vadd.f32 0.0, %v169
  %v171 = vpop.f32.mrb[0].mxu0
  %v172 = vadd.f32 0.0, %v171
  %173 = vdwg.mxu0
  %v174 = vadd.f32 %v23, %v166
  %v175 = vadd.f32 %v24, %v168
  %v176 = vadd.f32 %v25, %v170
  %v177 = vadd.f32 %v26, %v172
  %178 = vst [vmem:[#allocation2] sm:$0xff] %v174
  %179 = vst [vmem:[#allocation2 + $0x8] sm:$0xff] %v175
  %180 = vst [vmem:[#allocation2 + $0x10] sm:$0xff] %v176
  %181 = vst [vmem:[#allocation2 + $0x18] sm:$0xff] %v177
  // Predicated region
  $region18: #{forward.18} parent=0 // pred_check
    %p182 = pneg %p15
  $region19: #{forward.18} parent=0 // pred_check_branch
    %184 = sbr.rel (%p182) target = $region21
  $region20: #{forward.18} parent=0 // pred_region
    %v185 = vld [vmem:[#allocation2] sm:$0xff]
    %v186 = vld [vmem:[#allocation2 + $0x8] sm:$0xff]
    %v187 = vld [vmem:[#allocation2 + $0x10] sm:$0xff]
    %v188 = vld [vmem:[#allocation2 + $0x18] sm:$0xff]
    %v189 = vld [vmem:[%s2] sm:$0x3]
    %v191 = vlaneseq
    %v192 = vshrl.u32 %v191, 7
    %v193 = vsub.s32 0, %v192
    %v194 = vrot.slane %v189, %v193
    %v195 = vlaneseq
    %v196 = vshrl.u32 %v195, 7
    %v197 = vsub.s32 1, %v196
    %v198 = vrot.slane %v189, %v197
    %v201 = vadd.f32 %v185, %v194
    %v202 = vadd.f32 %v186, %v198
    %v203 = vadd.f32 %v187, %v194
    %v204 = vadd.f32 %v188, %v198
    %v205 = vmul.f32 %v201, 0.5
    %v206 = vmul.f32 %v202, 0.5
    %v207 = vmul.f32 %v203, 0.5
    %v208 = vmul.f32 %v204, 0.5
    %v209 = vmul.f32 %v201, 0.044715
    %v210 = vmul.f32 %v202, 0.044715
    %v211 = vmul.f32 %v203, 0.044715
    %v212 = vmul.f32 %v204, 0.044715
    %v213 = vmul.f32 %v209, %v201
    %v214 = vmul.f32 %v210, %v202
    %v215 = vmul.f32 %v211, %v203
    %v216 = vmul.f32 %v212, %v204
    %v217 = vmul.f32 %v213, %v201
    %v218 = vmul.f32 %v214, %v202
    %v219 = vmul.f32 %v215, %v203
    %v220 = vmul.f32 %v216, %v204
    %v221 = vadd.f32 %v201, %v217
    %v222 = vadd.f32 %v202, %v218
    %v223 = vadd.f32 %v203, %v219
    %v224 = vadd.f32 %v204, %v220
    %v225 = vmul.f32 %v221, 0.7978846
    %v226 = vmul.f32 %v222, 0.7978846
    %v227 = vmul.f32 %v223, 0.7978846
    %v228 = vmul.f32 %v224, 0.7978846
    %v229 = vtanh.pop %v225
    %v230 = vtanh.pop %v226
    %v231 = vtanh.pop %v227
    %v232 = vtanh.pop %v228
    %v233 = vadd.f32 %v229, 1.0
    %v234 = vadd.f32 %v230, 1.0
    %v235 = vadd.f32 %v231, 1.0
    %v236 = vadd.f32 %v232, 1.0
    %v237 = vmul.f32 %v205, %v233
    %v238 = vmul.f32 %v206, %v234
    %v239 = vmul.f32 %v207, %v235
    %v240 = vmul.f32 %v208, %v236
    %v241 = vpack.c.bf16 %v239, %v237
    %v242 = vpack.c.bf16 %v240, %v238
    %v245 = vunpack.c.l.b16 %v241
    %v246 = vunpack.c.l.b16 %v242
    %v247 = vunpack.c.h.b16 %v241
    %v248 = vunpack.c.h.b16 %v242
    %v249 = vpack.c.b16 %v246, %v245
    %v250 = vpack.c.b16 %v248, %v247
    %253 = vst [vmem:[%s3] sm:$0xff] %v249
    %254 = vst [vmem:[%s3 + $0x8] sm:$0xff] %v250
  $region21: #{forward.18} parent=0 // pred_fallthru
    _
  // Predicated region
  $region22: #{forward.18} parent=0 // pred_check
    _
  $region23: #{forward.18} parent=0 // pred_check_branch
    %256 = sbr.rel (0) target = $region25
  $region24: #{forward.18} parent=0 // pred_region
    _
  $region25: #{forward.18} parent=0 // pred_fallthru
    _
  // Predicated region
  $region26: #{forward.18} parent=0 // pred_check
    _
  $region27: #{forward.18} parent=0 // pred_check_branch
    %258 = sbr.rel (0) target = $region29
  $region28: #{forward.18} parent=0 // pred_region
    _
  $region29: #{forward.18} parent=0 // pred_fallthru
    _

// kernel: forward.25
$region0: #{forward.25}
  #allocation0 [shape = 'u32[]', space=smem, size = 0x4, offset = 0x4, fixed_abs, tag = 'smem constant byte address 0x4 - core index']
  #allocation1 [shape = 'u32[144,128]{1,0:T(1,128)}', space=vmem, size = 0x12000, scoped, tag = 'internal scratch']
  #allocation2 [shape = 'f32[16,512]{1,0:T(8,128)}', space=vmem, size = 0x8000, scoped, tag = 'scratch operand']
  %s0 = inlined_call_operand.vmem [shape: bf16[16,128], index: 0, kind: input, shape index: {}]
  %s1 = inlined_call_operand.vmem [shape: bf16[128,1024], index: 1, kind: input, shape index: {}]
  %s2 = inlined_call_operand.vmem [shape: f32[1,1024], index: 2, kind: input, shape index: {}]
  %s3 = inlined_call_operand.vmem [shape: bf16[16,1024], index: 3, kind: output, shape index: {}]
  %s4 = sld [smem:[#allocation0]]
  $region95: #{forward.25} parent=0
    _
  %s6 = ssub.s32 1, %s4
  %s7 = scalar_select 0, %s6, %s4
  $region1: #{forward.25} parent=0
    #allocation3 [shape = 'u8[262144]{0}', space=vmem, size = 0x40000, scoped, tag = 'input window, operand 1']
    #allocation4 [shape = 'u8[32768]{0}', space=vmem, size = 0x8000, scoped, tag = 'output window, operand 0']
    loop: start=0, step=1, limit=4
    $region2: #{forward.25} parent=1 // loop_pre_header
      _
    $region3: #{forward.25} parent=1 // loop_header
      %s9 = sphi 0, %s13
      %p10 = scmp.ge.s32.totalorder %s9, 4
      %s16 = sphi 0, %s35
      %s17 = sphi 0, %s31
      %s18 = sphi 0, %s27
      %s19 = sphi 0, %s16
      %s20 = sphi 0, %s17
      %s21 = sphi 0, %s18
      %s22 = sphi 0, %s19
      %s23 = sphi 0, %s20
      %s24 = sphi 0, %s21
      %s40 = sphi 0, %s42
      %s43 = sphi 0, %s40
      %s44 = sphi 0, %s43
      %s60 = sphi 0, %s44
      %s68 = sphi 0, %s70
      %s71 = sphi 0, %s68
      %s72 = sphi 0, %s71
      %s88 = sphi 0, %s72
      %s94 = sphi 0, %s96
      %s97 = sphi 0, %s94
      %s98 = sphi 0, %s97
      %s114 = sphi 0, %s98
      %s122 = sphi 0, %s124
      %s125 = sphi 0, %s122
      %s126 = sphi 0, %s125
      %s142 = sphi 0, %s126
    $region4: #{forward.25} parent=1 // loop_header_branch
      %12 = sbr.rel (%p10) target = $region8
    $region5: #{forward.25} parent=1 // loop_body
      %s14 = ssub.s32 %s9, 1
      %s15 = ssub.s32 %s9, 2
      %s25 = sadd.s32 1, %s18
      %p26 = scmp.ge.s32.totalorder %s25, 1
      %s27 = scalar_select %p26, 0, %s25
      %s28 = sadd.s32 1, %s17
      %s29 = scalar_select %p26, %s28, %s17
      %p30 = scmp.ge.s32.totalorder %s29, 2
      %s31 = scalar_select %p30, 0, %s29
      %s32 = sadd.s32 1, %s16
      %s33 = scalar_select %p30, %s32, %s16
      %p34 = scmp.ge.s32.totalorder %s33, 1
      %s35 = scalar_select %p34, 0, %s33
      %s36 = ssub.s32 %s16, %s35
      %s37 = ssub.s32 %s18, %s27
      %s38 = sor.u32 %s36, %s37
      %p39 = scmp.eq.s32.totalorder %s38, 0
      %s41 = sadd.s32 %s40, 1
      %s42 = scalar_select %p39, %s40, %s41
      %p45 = pneg %p39
      %p46 = scmp.eq.s32.totalorder %s9, 1
      %p47 = por %p45, %p46
      %p48 = scmp.ne.s32.totalorder %s40, %s43
      %p49 = scmp.eq.s32.totalorder %s9, 0
      %p50 = por %p48, %p49
      %p51 = scmp.ne.s32.totalorder %s40, %s43
      %p52 = scmp.eq.s32.totalorder %s14, 1
      %p53 = por %p51, %p52
      %p54 = scmp.ne.s32.totalorder %s43, %s44
      %p55 = scmp.eq.s32.totalorder %s14, 0
      %p56 = por %p54, %p55
      %p57 = scmp.ne.s32.totalorder %s43, %s44
      %p58 = scmp.eq.s32.totalorder %s15, 1
      %p59 = por %p57, %p58
      %p61 = scmp.ne.s32.totalorder %s44, %s60
      %p62 = scmp.eq.s32.totalorder %s15, 0
      %p63 = por %p61, %p62
      %s64 = ssub.s32 %s18, %s27
      %s65 = ssub.s32 %s17, %s31
      %s66 = sor.u32 %s64, %s65
      %p67 = scmp.eq.s32.totalorder %s66, 0
      %s69 = sadd.s32 %s68, 1
      %s70 = scalar_select %p67, %s68, %s69
      %p73 = pneg %p67
      %p74 = scmp.eq.s32.totalorder %s9, 1
      %p75 = por %p73, %p74
      %p76 = scmp.ne.s32.totalorder %s68, %s71
      %p77 = scmp.eq.s32.totalorder %s9, 0
      %p78 = por %p76, %p77
      %p79 = scmp.ne.s32.totalorder %s68, %s71
      %p80 = scmp.eq.s32.totalorder %s14, 1
      %p81 = por %p79, %p80
      %p82 = scmp.ne.s32.totalorder %s71, %s72
      %p83 = scmp.eq.s32.totalorder %s14, 0
      %p84 = por %p82, %p83
      %p85 = scmp.ne.s32.totalorder %s71, %s72
      %p86 = scmp.eq.s32.totalorder %s15, 1
      %p87 = por %p85, %p86
      %p89 = scmp.ne.s32.totalorder %s72, %s88
      %p90 = scmp.eq.s32.totalorder %s15, 0
      %p91 = por %p89, %p90
      %s92 = ssub.s32 %s17, %s31
      %p93 = scmp.eq.s32.totalorder %s92, 0
      %s95 = sadd.s32 %s94, 1
      %s96 = scalar_select %p93, %s94, %s95
      %p99 = pneg %p93
      %p100 = scmp.eq.s32.totalorder %s9, 1
      %p101 = por %p99, %p100
      %p102 = scmp.ne.s32.totalorder %s94, %s97
      %p103 = scmp.eq.s32.totalorder %s9, 0
      %p104 = por %p102, %p103
      %p105 = scmp.ne.s32.totalorder %s94, %s97
      %p106 = scmp.eq.s32.totalorder %s14, 1
      %p107 = por %p105, %p106
      %p108 = scmp.ne.s32.totalorder %s97, %s98
      %p109 = scmp.eq.s32.totalorder %s14, 0
      %p110 = por %p108, %p109
      %p111 = scmp.ne.s32.totalorder %s97, %s98
      %p112 = scmp.eq.s32.totalorder %s15, 1
      %p113 = por %p111, %p112
      %p115 = scmp.ne.s32.totalorder %s98, %s114
      %p116 = scmp.eq.s32.totalorder %s15, 0
      %p117 = por %p115, %p116
      %s118 = ssub.s32 %s16, %s35
      %s119 = ssub.s32 %s17, %s31
      %s120 = sor.u32 %s118, %s119
      %p121 = scmp.eq.s32.totalorder %s120, 0
      %s123 = sadd.s32 %s122, 1
      %s124 = scalar_select %p121, %s122, %s123
      %p127 = pneg %p121
      %p128 = scmp.eq.s32.totalorder %s9, 1
      %p129 = por %p127, %p128
      %p130 = scmp.ne.s32.totalorder %s122, %s125
      %p131 = scmp.eq.s32.totalorder %s9, 0
      %p132 = por %p130, %p131
      %p133 = scmp.ne.s32.totalorder %s122, %s125
      %p134 = scmp.eq.s32.totalorder %s14, 1
      %p135 = por %p133, %p134
      %p136 = scmp.ne.s32.totalorder %s125, %s126
      %p137 = scmp.eq.s32.totalorder %s14, 0
      %p138 = por %p136, %p137
      %p139 = scmp.ne.s32.totalorder %s125, %s126
      %p140 = scmp.eq.s32.totalorder %s15, 1
      %p141 = por %p139, %p140
      %p143 = scmp.ne.s32.totalorder %s126, %s142
      %p144 = scmp.eq.s32.totalorder %s15, 0
      %p145 = por %p143, %p144
      %p146 = scmp.le.s32.totalorder 1, %s9
      %p147 = scmp.lt.s32.totalorder %s9, 3
      %p148 = pnand %p146, %p147
      %p149 = pneg %p148
      // Predicated region
      $region9: #{forward.25} parent=5 // pred_check
        _
      $region10: #{forward.25} parent=5 // pred_check_branch
        %151 = sbr.rel (%p148) target = $region12
      $region11: #{forward.25} parent=5 // pred_region
        %s152 = ssub.s32 %s9, 1
        // Predicated region
        $region13: #{forward.25} parent=11 // pred_check
          %p153 = pneg %p56
        $region14: #{forward.25} parent=11 // pred_check_branch
          %155 = sbr.rel (%p153) target = $region16
        $region15: #{forward.25} parent=11 // pred_region
          %s156 = smul.u32 2, %s19
          %p157 = scmp.lt.s32.totalorder %s156, 1
          %s158 = scalar_select %p157, %s156, 1
          %p159 = scmp.lt.s32.totalorder %s21, 0
          %s160 = scalar_select %p159, %s21, 0
          %s161 = sadd.s32 %s160, %s158
          %s162 = smul.addr %s161, 4
          %s163 = scalar_lea.vmem %s0, %s162
          %s164 = smul.u32 2, %s19
        $region16: #{forward.25} parent=11 // pred_fallthru
          _
      $region12: #{forward.25} parent=5 // pred_fallthru
        _
      %p165 = scmp.lt.s32.totalorder %s9, 2
      // Predicated region
      $region17: #{forward.25} parent=5 // pred_check
        %p166 = pneg %p165
      $region18: #{forward.25} parent=5 // pred_check_branch
        %168 = sbr.rel (%p166) target = $region20
      $region19: #{forward.25} parent=5 // pred_region
        // Predicated region
        $region21: #{forward.25} parent=19 // pred_check
          %p169 = pneg %p78
        $region22: #{forward.25} parent=19 // pred_check_branch
          %171 = sbr.rel (%p169) target = $region24
        $region23: #{forward.25} parent=19 // pred_region
          %s172 = sand.u32 %s68, 1
          %s173 = sand.u32 %s68, 1
          %s174 = smul.addr %s173, 256
          %s175 = scalar_lea.vmem [#allocation3], %s174
          %s176 = smul.u32 16, %s18
          %s177 = smul.u32 4, %s17
          %s178 = smul.addr %s176, 8
          %s179 = sadd.s32 %s177, %s178
          %s180 = smul.addr %s179, 4
          %s181 = scalar_lea.vmem %s1, %s180
          // Predicated region
          $region25: #{forward.25} parent=23 // pred_check
            _
          $region26: #{forward.25} parent=23 // pred_check_branch
            %183 = sbr.rel (0) target = $region28
          $region27: #{forward.25} parent=23 // pred_region
            // Predicated region
            $region29: #{forward.25} parent=27 // pred_check
              _
            $region30: #{forward.25} parent=27 // pred_check_branch
              %185 = sbr.rel (0) target = $region32
            $region31: #{forward.25} parent=27 // pred_region
              loop: start=0, step=1, limit=1
              $region33: #{forward.25} parent=31 // loop_pre_header
                _
              $region34: #{forward.25} parent=31 // loop_header
                %s187 = sphi 0, %s191
                %p188 = scmp.ge.s32.totalorder %s187, 1
                %s192 = sphi %s181, %s181
                %s193 = sphi %s175, %s175
              $region35: #{forward.25} parent=31 // loop_header_branch
                %190 = sbr.rel (%p188) target = $region39
              $region36: #{forward.25} parent=31 // loop_body
                %v194 = vld [vmem:[%s192] sm:$0xff]
                %195 = vst [vmem:[%s193] sm:$0xff] %v194
                %v196 = vld [vmem:[%s192 + $0x8] sm:$0xff]
                %197 = vst [vmem:[%s193 + $0x8] sm:$0xff] %v196
                %v198 = vld [vmem:[%s192 + $0x20] sm:$0xff]
                %199 = vst [vmem:[%s193 + $0x10] sm:$0xff] %v198
                %v200 = vld [vmem:[%s192 + $0x28] sm:$0xff]
                %201 = vst [vmem:[%s193 + $0x18] sm:$0xff] %v200
                %v202 = vld [vmem:[%s192 + $0x40] sm:$0xff]
                %203 = vst [vmem:[%s193 + $0x20] sm:$0xff] %v202
                %v204 = vld [vmem:[%s192 + $0x48] sm:$0xff]
                %205 = vst [vmem:[%s193 + $0x28] sm:$0xff] %v204
                %v206 = vld [vmem:[%s192 + $0x60] sm:$0xff]
                %207 = vst [vmem:[%s193 + $0x30] sm:$0xff] %v206
                %v208 = vld [vmem:[%s192 + $0x68] sm:$0xff]
                %209 = vst [vmem:[%s193 + $0x38] sm:$0xff] %v208
                %v210 = vld [vmem:[%s192 + $0x80] sm:$0xff]
                %211 = vst [vmem:[%s193 + $0x40] sm:$0xff] %v210
                %v212 = vld [vmem:[%s192 + $0x88] sm:$0xff]
                %213 = vst [vmem:[%s193 + $0x48] sm:$0xff] %v212
                %v214 = vld [vmem:[%s192 + $0xa0] sm:$0xff]
                %215 = vst [vmem:[%s193 + $0x50] sm:$0xff] %v214
                %v216 = vld [vmem:[%s192 + $0xa8] sm:$0xff]
                %217 = vst [vmem:[%s193 + $0x58] sm:$0xff] %v216
                %v218 = vld [vmem:[%s192 + $0xc0] sm:$0xff]
                %219 = vst [vmem:[%s193 + $0x60] sm:$0xff] %v218
                %v220 = vld [vmem:[%s192 + $0xc8] sm:$0xff]
                %221 = vst [vmem:[%s193 + $0x68] sm:$0xff] %v220
                %v222 = vld [vmem:[%s192 + $0xe0] sm:$0xff]
                %223 = vst [vmem:[%s193 + $0x70] sm:$0xff] %v222
                %v224 = vld [vmem:[%s192 + $0xe8] sm:$0xff]
                %225 = vst [vmem:[%s193 + $0x78] sm:$0xff] %v224
                %v226 = vld [vmem:[%s192 + $0x100] sm:$0xff]
                %227 = vst [vmem:[%s193 + $0x80] sm:$0xff] %v226
                %v228 = vld [vmem:[%s192 + $0x108] sm:$0xff]
                %229 = vst [vmem:[%s193 + $0x88] sm:$0xff] %v228
                %v230 = vld [vmem:[%s192 + $0x120] sm:$0xff]
                %231 = vst [vmem:[%s193 + $0x90] sm:$0xff] %v230
                %v232 = vld [vmem:[%s192 + $0x128] sm:$0xff]
                %233 = vst [vmem:[%s193 + $0x98] sm:$0xff] %v232
                %v234 = vld [vmem:[%s192 + $0x140] sm:$0xff]
                %235 = vst [vmem:[%s193 + $0xa0] sm:$0xff] %v234
                %v236 = vld [vmem:[%s192 + $0x148] sm:$0xff]
                %237 = vst [vmem:[%s193 + $0xa8] sm:$0xff] %v236
                %v238 = vld [vmem:[%s192 + $0x160] sm:$0xff]
                %239 = vst [vmem:[%s193 + $0xb0] sm:$0xff] %v238
                %v240 = vld [vmem:[%s192 + $0x168] sm:$0xff]
                %241 = vst [vmem:[%s193 + $0xb8] sm:$0xff] %v240
                %v242 = vld [vmem:[%s192 + $0x180] sm:$0xff]
                %243 = vst [vmem:[%s193 + $0xc0] sm:$0xff] %v242
                %v244 = vld [vmem:[%s192 + $0x188] sm:$0xff]
                %245 = vst [vmem:[%s193 + $0xc8] sm:$0xff] %v244
                %v246 = vld [vmem:[%s192 + $0x1a0] sm:$0xff]
                %247 = vst [vmem:[%s193 + $0xd0] sm:$0xff] %v246
                %v248 = vld [vmem:[%s192 + $0x1a8] sm:$0xff]
                %249 = vst [vmem:[%s193 + $0xd8] sm:$0xff] %v248
                %v250 = vld [vmem:[%s192 + $0x1c0] sm:$0xff]
                %251 = vst [vmem:[%s193 + $0xe0] sm:$0xff] %v250
                %v252 = vld [vmem:[%s192 + $0x1c8] sm:$0xff]
                %253 = vst [vmem:[%s193 + $0xe8] sm:$0xff] %v252
                %v254 = vld [vmem:[%s192 + $0x1e0] sm:$0xff]
                %255 = vst [vmem:[%s193 + $0xf0] sm:$0xff] %v254
                %v256 = vld [vmem:[%s192 + $0x1e8] sm:$0xff]
                %257 = vst [vmem:[%s193 + $0xf8] sm:$0xff] %v256
              $region37: #{forward.25} parent=31 // loop_footer
                %s191 = sadd.s32 1, %s187
              $region38: #{forward.25} parent=31 // loop_footer_branch
                %186 = sbr.rel target = $region34
              $region39: #{forward.25} parent=31 // loop_exit
                _
            $region32: #{forward.25} parent=27 // pred_fallthru
              _
            // Predicated region
            $region40: #{forward.25} parent=27 // pred_check
              _
            $region41: #{forward.25} parent=27 // pred_check_branch
              %259 = sbr.rel target = $region43
            $region42: #{forward.25} parent=27 // pred_region
              _
            $region43: #{forward.25} parent=27 // pred_fallthru
              _
          $region28: #{forward.25} parent=23 // pred_fallthru
            _
          %260 = vnop
        $region24: #{forward.25} parent=19 // pred_fallthru
          _
        // Predicated region
        $region44: #{forward.25} parent=19 // pred_check
          %p261 = pneg %p104
        $region45: #{forward.25} parent=19 // pred_check_branch
          %263 = sbr.rel (%p261) target = $region47
        $region46: #{forward.25} parent=19 // pred_region
          %s264 = smul.u32 4, %s17
          %p265 = scmp.lt.s32.totalorder %s264, 7
          %s266 = scalar_select %p265, %s264, 7
          %s267 = scalar_lea.vmem %s2, %s266
          %s268 = smul.u32 4, %s17
        $region47: #{forward.25} parent=19 // pred_fallthru
          _
      $region20: #{forward.25} parent=5 // pred_fallthru
        _
      %p269 = scmp.le.s32.totalorder 1, %s9
      %p270 = scmp.lt.s32.totalorder %s9, 3
      %p271 = pnand %p269, %p270
      %p272 = pneg %p271
      // Predicated region
      $region48: #{forward.25} parent=5 // pred_check
        _
      $region49: #{forward.25} parent=5 // pred_check_branch
        %274 = sbr.rel (%p271) target = $region51
      $region50: #{forward.25} parent=5 // pred_region
        %s275 = ssub.s32 %s9, 1
        %s276 = sand.u32 %s71, 1
        %s277 = sand.u32 %s71, 1
        %s278 = smul.addr %s277, 256
        %s279 = scalar_lea.vmem [#allocation3], %s278
        // Predicated region
        $region52: #{forward.25} parent=50 // pred_check
          %p280 = pneg %p84
        $region53: #{forward.25} parent=50 // pred_check_branch
          %282 = sbr.rel (%p280) target = $region55
        $region54: #{forward.25} parent=50 // pred_region
          _
        $region55: #{forward.25} parent=50 // pred_fallthru
          _
        %s283 = smul.u32 2, %s19
        %p284 = scmp.lt.s32.totalorder %s283, 1
        %s285 = scalar_select %p284, %s283, 1
        %p286 = scmp.lt.s32.totalorder %s21, 0
        %s287 = scalar_select %p286, %s21, 0
        %s288 = sadd.s32 %s287, %s285
        %s289 = smul.addr %s288, 4
        %s290 = scalar_lea.vmem %s0, %s289
        %p291 = pneg %p56
        %p292 = pneg %p53
        %s293 = sand.u32 %s71, 1
        %s294 = sand.u32 %s71, 1
        %s295 = smul.addr %s294, 256
        %s296 = scalar_lea.vmem [#allocation3], %s295
        %p297 = pneg %p84
        %p298 = pneg %p81
        %s299 = smul.u32 4, %s20
        %p300 = scmp.lt.s32.totalorder %s299, 7
        %s301 = scalar_select %p300, %s299, 7
        %s302 = scalar_lea.vmem %s2, %s301
        %p303 = pneg %p110
        %p304 = pneg %p107
        %p305 = pneg %p138
        %p306 = pneg %p135
        %s307 = sand.u32 %s125, 1
        %s308 = sand.u32 %s125, 1
        %s309 = smul.addr %s308, 32
        %s310 = scalar_lea.vmem [#allocation4], %s309
        %s311 = smul.u32 2, %s19
        %p312 = scmp.lt.s32.totalorder %s311, 1
        %s313 = scalar_select %p312, %s311, 1
        %p314 = scmp.lt.s32.totalorder %s21, 0
        %s315 = scalar_select %p314, %s21, 0
        %s316 = sadd.s32 %s315, %s313
        %s317 = smul.addr %s316, 4
        %s318 = scalar_lea.vmem %s0, %s317
        %s319 = smul.u32 2, %s19
        %s320 = smul.u32 16, %s21
        %s321 = smul.u32 4, %s20
        %s322 = smul.u32 4, %s20
        %p323 = scmp.lt.s32.totalorder %s322, 7
        %s324 = scalar_select %p323, %s322, 7
        %s325 = scalar_lea.vmem %s2, %s324
        %s326 = smul.u32 4, %s20
        %s327 = smul.u32 2, %s19
        %s328 = smul.u32 4, %s20
        %p330 = scmp.eq.s32.totalorder %s21, 0
        // Predicated region
        $region56: #{forward.25} parent=50 // pred_check
          %p331 = pneg %p330
        $region57: #{forward.25} parent=50 // pred_check_branch
          %333 = sbr.rel (%p331) target = $region59
        $region58: #{forward.25} parent=50 // pred_region
          %334 = vst [vmem:[#allocation2] sm:$0xff] 0.0
          %335 = vst [vmem:[#allocation2 + $0x8] sm:$0xff] 0.0
          %336 = vst [vmem:[#allocation2 + $0x10] sm:$0xff] 0.0
          %337 = vst [vmem:[#allocation2 + $0x18] sm:$0xff] 0.0
          %338 = vst [vmem:[#allocation2 + $0x20] sm:$0xff] 0.0
          %339 = vst [vmem:[#allocation2 + $0x28] sm:$0xff] 0.0
          %340 = vst [vmem:[#allocation2 + $0x30] sm:$0xff] 0.0
          %341 = vst [vmem:[#allocation2 + $0x38] sm:$0xff] 0.0
        $region59: #{forward.25} parent=50 // pred_fallthru
          _
        %v342 = vld [vmem:[#allocation2] sm:$0xff]
        %v343 = vld [vmem:[#allocation2 + $0x8] sm:$0xff]
        %v344 = vld [vmem:[#allocation2 + $0x10] sm:$0xff]
        %v345 = vld [vmem:[#allocation2 + $0x18] sm:$0xff]
        %v346 = vld [vmem:[#allocation2 + $0x20] sm:$0xff]
        %v347 = vld [vmem:[#allocation2 + $0x28] sm:$0xff]
        %v348 = vld [vmem:[#allocation2 + $0x30] sm:$0xff]
        %v349 = vld [vmem:[#allocation2 + $0x38] sm:$0xff]
        %v350 = vld [vmem:[%s318] sm:$0xf]
        %v351 = vld [vmem:[%s318 + $0x4] sm:$0xf]
        %v352 = vld [vmem:[%s279] sm:$0xff]
        %v353 = vld [vmem:[%s279 + $0x8] sm:$0xff]
        %v354 = vld [vmem:[%s279 + $0x10] sm:$0xff]
        %v355 = vld [vmem:[%s279 + $0x18] sm:$0xff]
        %v356 = vld [vmem:[%s279 + $0x20] sm:$0xff]
        %v357 = vld [vmem:[%s279 + $0x28] sm:$0xff]
        %v358 = vld [vmem:[%s279 + $0x30] sm:$0xff]
        %v359 = vld [vmem:[%s279 + $0x38] sm:$0xff]
        %v360 = vld [vmem:[%s279 + $0x40] sm:$0xff]
        %v361 = vld [vmem:[%s279 + $0x48] sm:$0xff]
        %v362 = vld [vmem:[%s279 + $0x50] sm:$0xff]
        %v363 = vld [vmem:[%s279 + $0x58] sm:$0xff]
        %v364 = vld [vmem:[%s279 + $0x60] sm:$0xff]
        %v365 = vld [vmem:[%s279 + $0x68] sm:$0xff]
        %v366 = vld [vmem:[%s279 + $0x70] sm:$0xff]
        %v367 = vld [vmem:[%s279 + $0x78] sm:$0xff]
        %v368 = vld [vmem:[%s279 + $0x80] sm:$0xff]
        %v369 = vld [vmem:[%s279 + $0x88] sm:$0xff]
        %v370 = vld [vmem:[%s279 + $0x90] sm:$0xff]
        %v371 = vld [vmem:[%s279 + $0x98] sm:$0xff]
        %v372 = vld [vmem:[%s279 + $0xa0] sm:$0xff]
        %v373 = vld [vmem:[%s279 + $0xa8] sm:$0xff]
        %v374 = vld [vmem:[%s279 + $0xb0] sm:$0xff]
        %v375 = vld [vmem:[%s279 + $0xb8] sm:$0xff]
        %v376 = vld [vmem:[%s279 + $0xc0] sm:$0xff]
        %v377 = vld [vmem:[%s279 + $0xc8] sm:$0xff]
        %v378 = vld [vmem:[%s279 + $0xd0] sm:$0xff]
        %v379 = vld [vmem:[%s279 + $0xd8] sm:$0xff]
        %v380 = vld [vmem:[%s279 + $0xe0] sm:$0xff]
        %v381 = vld [vmem:[%s279 + $0xe8] sm:$0xff]
        %v382 = vld [vmem:[%s279 + $0xf0] sm:$0xff]
        %v383 = vld [vmem:[%s279 + $0xf8] sm:$0xff]
        %v386 = vunpack.c.l.b16 %v350
        %v387 = vunpack.c.l.b16 %v351
        %v388 = vpack.c.b16 %v387, %v386
        %v422 = vunpack.c.l.b16 %v352
        %v423 = vunpack.c.h.b16 %v352
        %v424 = vunpack.c.l.b16 %v353
        %v425 = vunpack.c.h.b16 %v353
        %v426 = vunpack.c.l.b16 %v354
        %v427 = vunpack.c.h.b16 %v354
        %v428 = vunpack.c.l.b16 %v355
        %v429 = vunpack.c.h.b16 %v355
        %v430 = vunpack.c.l.b16 %v356
        %v431 = vunpack.c.h.b16 %v356
        %v432 = vunpack.c.l.b16 %v357
        %v433 = vunpack.c.h.b16 %v357
        %v434 = vunpack.c.l.b16 %v358
        %v435 = vunpack.c.h.b16 %v358
        %v436 = vunpack.c.l.b16 %v359
        %v437 = vunpack.c.h.b16 %v359
        %v438 = vunpack.c.l.b16 %v360
        %v439 = vunpack.c.h.b16 %v360
        %v440 = vunpack.c.l.b16 %v361
        %v441 = vunpack.c.h.b16 %v361
        %v442 = vunpack.c.l.b16 %v362
        %v443 = vunpack.c.h.b16 %v362
        %v444 = vunpack.c.l.b16 %v363
        %v445 = vunpack.c.h.b16 %v363
        %v446 = vunpack.c.l.b16 %v364
        %v447 = vunpack.c.h.b16 %v364
        %v448 = vunpack.c.l.b16 %v365
        %v449 = vunpack.c.h.b16 %v365
        %v450 = vunpack.c.l.b16 %v366
        %v451 = vunpack.c.h.b16 %v366
        %v452 = vunpack.c.l.b16 %v367
        %v453 = vunpack.c.h.b16 %v367
        %v454 = vunpack.c.l.b16 %v368
        %v455 = vunpack.c.h.b16 %v368
        %v456 = vunpack.c.l.b16 %v369
        %v457 = vunpack.c.h.b16 %v369
        %v458 = vunpack.c.l.b16 %v370
        %v459 = vunpack.c.h.b16 %v370
        %v460 = vunpack.c.l.b16 %v371
        %v461 = vunpack.c.h.b16 %v371
        %v462 = vunpack.c.l.b16 %v372
        %v463 = vunpack.c.h.b16 %v372
        %v464 = vunpack.c.l.b16 %v373
        %v465 = vunpack.c.h.b16 %v373
        %v466 = vunpack.c.l.b16 %v374
        %v467 = vunpack.c.h.b16 %v374
        %v468 = vunpack.c.l.b16 %v375
        %v469 = vunpack.c.h.b16 %v375
        %v470 = vunpack.c.l.b16 %v376
        %v471 = vunpack.c.h.b16 %v376
        %v472 = vunpack.c.l.b16 %v377
        %v473 = vunpack.c.h.b16 %v377
        %v474 = vunpack.c.l.b16 %v378
        %v475 = vunpack.c.h.b16 %v378
        %v476 = vunpack.c.l.b16 %v379
        %v477 = vunpack.c.h.b16 %v379
        %v478 = vunpack.c.l.b16 %v380
        %v479 = vunpack.c.h.b16 %v380
        %v480 = vunpack.c.l.b16 %v381
        %v481 = vunpack.c.h.b16 %v381
        %v482 = vunpack.c.l.b16 %v382
        %v483 = vunpack.c.h.b16 %v382
        %v484 = vunpack.c.l.b16 %v383
        %v485 = vunpack.c.h.b16 %v383
        %v486 = vpack.c.b16 %v426, %v422
        %v487 = vpack.c.b16 %v427, %v423
        %v488 = vpack.c.b16 %v428, %v424
        %v489 = vpack.c.b16 %v429, %v425
        %v490 = vpack.c.b16 %v434, %v430
        %v491 = vpack.c.b16 %v435, %v431
        %v492 = vpack.c.b16 %v436, %v432
        %v493 = vpack.c.b16 %v437, %v433
        %v494 = vpack.c.b16 %v442, %v438
        %v495 = vpack.c.b16 %v443, %v439
        %v496 = vpack.c.b16 %v444, %v440
        %v497 = vpack.c.b16 %v445, %v441
        %v498 = vpack.c.b16 %v450, %v446
        %v499 = vpack.c.b16 %v451, %v447
        %v500 = vpack.c.b16 %v452, %v448
        %v501 = vpack.c.b16 %v453, %v449
        %v502 = vpack.c.b16 %v458, %v454
        %v503 = vpack.c.b16 %v459, %v455
        %v504 = vpack.c.b16 %v460, %v456
        %v505 = vpack.c.b16 %v461, %v457
        %v506 = vpack.c.b16 %v466, %v462
        %v507 = vpack.c.b16 %v467, %v463
        %v508 = vpack.c.b16 %v468, %v464
        %v509 = vpack.c.b16 %v469, %v465
        %v510 = vpack.c.b16 %v474, %v470
        %v511 = vpack.c.b16 %v475, %v471
        %v512 = vpack.c.b16 %v476, %v472
        %v513 = vpack.c.b16 %v477, %v473
        %v514 = vpack.c.b16 %v482, %v478
        %v515 = vpack.c.b16 %v483, %v479
        %v516 = vpack.c.b16 %v484, %v480
        %v517 = vpack.c.b16 %v485, %v481
        %550 = vmatprep.subr.bf16.mxu0 %v487
        %551 = vmatpush1.bf16.msra.mxu0 %v486
        %552 = vmatprep.subr.bf16.mxu0 %v491
        %553 = vmatpush1.bf16.msra.mxu0 %v490
        %554 = vmatprep.subr.bf16.mxu0 %v495
        %555 = vmatpush1.bf16.msra.mxu0 %v494
        %556 = vmatprep.subr.bf16.mxu0 %v499
        %557 = vmatpush1.bf16.msra.mxu0 %v498
        %558 = vmatprep.subr.bf16.mxu0 %v503
        %559 = vmatpush1.bf16.msra.mxu0 %v502
        %560 = vmatprep.subr.bf16.mxu0 %v507
        %561 = vmatpush1.bf16.msra.mxu0 %v506
        %562 = vmatprep.subr.bf16.mxu0 %v511
        %563 = vmatpush1.bf16.msra.mxu0 %v510
        %564 = vmatprep.subr.bf16.mxu0 %v515
        %565 = vmatpush1.bf16.msra.mxu0 %v514
        %566 = vmatprep.subr.bf16.mxu0 0
        %567 = vmatpush1.bf16.msra.mxu0 0
        %568 = vmatprep.subr.bf16.mxu0 0
        %569 = vmatpush1.bf16.msra.mxu0 0
        %570 = vmatprep.subr.bf16.mxu0 0
        %571 = vmatpush1.bf16.msra.mxu0 0
        %572 = vmatprep.subr.bf16.mxu0 0
        %573 = vmatpush1.bf16.msra.mxu0 0
        %574 = vmatprep.subr.bf16.mxu0 0
        %575 = vmatpush1.bf16.msra.mxu0 0
        %576 = vmatprep.subr.bf16.mxu0 0
        %577 = vmatpush1.bf16.msra.mxu0 0
        %578 = vmatprep.subr.bf16.mxu0 0
        %579 = vmatpush1.bf16.msra.mxu0 0
        %580 = vmatprep.subr.bf16.mxu0 0
        %581 = vmatpush1.bf16.msra.mxu0 0
        %582 = vmatprep.mubr.bf16.mxu0 0
        %583 = vmatmul.mubr.bf16.gmra.mrb[0].mxu0 %v388
        %v584 = vpop.f32.mrb[0].mxu0
        %v585 = vadd.f32 0.0, %v584
        %v586 = vpop.f32.mrb[0].mxu0
        %v587 = vadd.f32 0.0, %v586
        %v588 = vpop.f32.mrb[0].mxu0
        %v589 = vadd.f32 0.0, %v588
        %v590 = vpop.f32.mrb[0].mxu0
        %v591 = vadd.f32 0.0, %v590
        %592 = vdwg.mxu0
        %593 = vmatprep.subr.bf16.mxu0 %v489
        %594 = vmatpush1.bf16.msra.mxu0 %v488
        %595 = vmatprep.subr.bf16.mxu0 %v493
        %596 = vmatpush1.bf16.msra.mxu0 %v492
        %597 = vmatprep.subr.bf16.mxu0 %v497
        %598 = vmatpush1.bf16.msra.mxu0 %v496
        %599 = vmatprep.subr.bf16.mxu0 %v501
        %600 = vmatpush1.bf16.msra.mxu0 %v500
        %601 = vmatprep.subr.bf16.mxu0 %v505
        %602 = vmatpush1.bf16.msra.mxu0 %v504
        %603 = vmatprep.subr.bf16.mxu0 %v509
        %604 = vmatpush1.bf16.msra.mxu0 %v508
        %605 = vmatprep.subr.bf16.mxu0 %v513
        %606 = vmatpush1.bf16.msra.mxu0 %v512
        %607 = vmatprep.subr.bf16.mxu0 %v517
        %608 = vmatpush1.bf16.msra.mxu0 %v516
        %609 = vmatprep.subr.bf16.mxu0 0
        %610 = vmatpush1.bf16.msra.mxu0 0
        %611 = vmatprep.subr.bf16.mxu0 0
        %612 = vmatpush1.bf16.msra.mxu0 0
        %613 = vmatprep.subr.bf16.mxu0 0
        %614 = vmatpush1.bf16.msra.mxu0 0
        %615 = vmatprep.subr.bf16.mxu0 0
        %616 = vmatpush1.bf16.msra.mxu0 0
        %617 = vmatprep.subr.bf16.mxu0 0
        %618 = vmatpush1.bf16.msra.mxu0 0
        %619 = vmatprep.subr.bf16.mxu0 0
        %620 = vmatpush1.bf16.msra.mxu0 0
        %621 = vmatprep.subr.bf16.mxu0 0
        %622 = vmatpush1.bf16.msra.mxu0 0
        %623 = vmatprep.subr.bf16.mxu0 0
        %624 = vmatpush1.bf16.msra.mxu0 0
        %625 = vmatprep.mubr.bf16.mxu0 0
        %626 = vmatmul.mubr.bf16.gmra.mrb[0].mxu0 %v388
        %v627 = vpop.f32.mrb[0].mxu0
        %v628 = vadd.f32 0.0, %v627
        %v629 = vpop.f32.mrb[0].mxu0
        %v630 = vadd.f32 0.0, %v629
        %v631 = vpop.f32.mrb[0].mxu0
        %v632 = vadd.f32 0.0, %v631
        %v633 = vpop.f32.mrb[0].mxu0
        %v634 = vadd.f32 0.0, %v633
        %635 = vdwg.mxu0
        %v636 = vadd.f32 %v342, %v585
        %v637 = vadd.f32 %v343, %v587
        %v638 = vadd.f32 %v344, %v628
        %v639 = vadd.f32 %v345, %v630
        %v640 = vadd.f32 %v346, %v589
        %v641 = vadd.f32 %v347, %v591
        %v642 = vadd.f32 %v348, %v632
        %v643 = vadd.f32 %v349, %v634
        %644 = vst [vmem:[#allocation2] sm:$0xff] %v636
        %645 = vst [vmem:[#allocation2 + $0x8] sm:$0xff] %v637
        %646 = vst [vmem:[#allocation2 + $0x10] sm:$0xff] %v638
        %647 = vst [vmem:[#allocation2 + $0x18] sm:$0xff] %v639
        %648 = vst [vmem:[#allocation2 + $0x20] sm:$0xff] %v640
        %649 = vst [vmem:[#allocation2 + $0x28] sm:$0xff] %v641
        %650 = vst [vmem:[#allocation2 + $0x30] sm:$0xff] %v642
        %651 = vst [vmem:[#allocation2 + $0x38] sm:$0xff] %v643
        // Predicated region
        $region60: #{forward.25} parent=50 // pred_check
          %p652 = pneg %p330
        $region61: #{forward.25} parent=50 // pred_check_branch
          %654 = sbr.rel (%p652) target = $region63
        $region62: #{forward.25} parent=50 // pred_region
          %v655 = vld [vmem:[#allocation2] sm:$0xff]
          %v656 = vld [vmem:[#allocation2 + $0x8] sm:$0xff]
          %v657 = vld [vmem:[#allocation2 + $0x10] sm:$0xff]
          %v658 = vld [vmem:[#allocation2 + $0x18] sm:$0xff]
          %v659 = vld [vmem:[#allocation2 + $0x20] sm:$0xff]
          %v660 = vld [vmem:[#allocation2 + $0x28] sm:$0xff]
          %v661 = vld [vmem:[#allocation2 + $0x30] sm:$0xff]
          %v662 = vld [vmem:[#allocation2 + $0x38] sm:$0xff]
          %v663 = vld [vmem:[%s325] sm:$0xf]
          %v665 = vlaneseq
          %v666 = vshrl.u32 %v665, 7
          %v667 = vsub.s32 0, %v666
          %v668 = vrot.slane %v663, %v667
          %v669 = vlaneseq
          %v670 = vshrl.u32 %v669, 7
          %v671 = vsub.s32 1, %v670
          %v672 = vrot.slane %v663, %v671
          %v673 = vlaneseq
          %v674 = vshrl.u32 %v673, 7
          %v675 = vsub.s32 2, %v674
          %v676 = vrot.slane %v663, %v675
          %v677 = vlaneseq
          %v678 = vshrl.u32 %v677, 7
          %v679 = vsub.s32 3, %v678
          %v680 = vrot.slane %v663, %v679
          %v685 = vadd.f32 %v655, %v668
          %v686 = vadd.f32 %v656, %v672
          %v687 = vadd.f32 %v657, %v676
          %v688 = vadd.f32 %v658, %v680
          %v689 = vadd.f32 %v659, %v668
          %v690 = vadd.f32 %v660, %v672
          %v691 = vadd.f32 %v661, %v676
          %v692 = vadd.f32 %v662, %v680
          %v693 = vpack.c.bf16 %v689, %v685
          %v694 = vpack.c.bf16 %v690, %v686
          %v695 = vpack.c.bf16 %v691, %v687
          %v696 = vpack.c.bf16 %v692, %v688
          %v701 = vunpack.c.l.b16 %v693
          %v702 = vunpack.c.l.b16 %v694
          %v703 = vunpack.c.l.b16 %v695
          %v704 = vunpack.c.l.b16 %v696
          %v705 = vunpack.c.h.b16 %v693
          %v706 = vunpack.c.h.b16 %v694
          %v707 = vunpack.c.h.b16 %v695
          %v708 = vunpack.c.h.b16 %v696
          %v709 = vpack.c.b16 %v702, %v701
          %v710 = vpack.c.b16 %v704, %v703
          %v711 = vpack.c.b16 %v706, %v705
          %v712 = vpack.c.b16 %v708, %v707
          %717 = vst [vmem:[%s310] sm:$0xff] %v709
          %718 = vst [vmem:[%s310 + $0x8] sm:$0xff] %v710
          %719 = vst [vmem:[%s310 + $0x10] sm:$0xff] %v711
          %720 = vst [vmem:[%s310 + $0x18] sm:$0xff] %v712
        $region63: #{forward.25} parent=50 // pred_fallthru
          _
        %s721 = sand.u32 %s125, 1
        %s722 = sand.u32 %s125, 1
        %s723 = smul.addr %s722, 32
        %s724 = scalar_lea.vmem [#allocation4], %s723
        // Predicated region
        $region64: #{forward.25} parent=50 // pred_check
          %p725 = pneg %p135
        $region65: #{forward.25} parent=50 // pred_check_branch
          %727 = sbr.rel (%p725) target = $region67
        $region66: #{forward.25} parent=50 // pred_region
          %s728 = smul.u32 2, %s19
          %s729 = smul.u32 4, %s20
          %s730 = smul.addr %s728, 8
          %s731 = sadd.s32 %s729, %s730
          %s732 = smul.addr %s731, 4
          %s733 = scalar_lea.vmem %s3, %s732
          // Predicated region
          $region68: #{forward.25} parent=66 // pred_check
            _
          $region69: #{forward.25} parent=66 // pred_check_branch
            %735 = sbr.rel (0) target = $region71
          $region70: #{forward.25} parent=66 // pred_region
            // Predicated region
            $region72: #{forward.25} parent=70 // pred_check
              _
            $region73: #{forward.25} parent=70 // pred_check_branch
              %737 = sbr.rel (0) target = $region75
            $region74: #{forward.25} parent=70 // pred_region
              loop: start=0, step=1, limit=1
              $region76: #{forward.25} parent=74 // loop_pre_header
                _
              $region77: #{forward.25} parent=74 // loop_header
                %s739 = sphi 0, %s743
                %p740 = scmp.ge.s32.totalorder %s739, 1
                %s744 = sphi %s724, %s724
                %s745 = sphi %s733, %s733
              $region78: #{forward.25} parent=74 // loop_header_branch
                %742 = sbr.rel (%p740) target = $region82
              $region79: #{forward.25} parent=74 // loop_body
                %v746 = vld [vmem:[%s744] sm:$0xff]
                %747 = vst [vmem:[%s745] sm:$0xff] %v746
                %v748 = vld [vmem:[%s744 + $0x8] sm:$0xff]
                %749 = vst [vmem:[%s745 + $0x8] sm:$0xff] %v748
                %v750 = vld [vmem:[%s744 + $0x10] sm:$0xff]
                %751 = vst [vmem:[%s745 + $0x20] sm:$0xff] %v750
                %v752 = vld [vmem:[%s744 + $0x18] sm:$0xff]
                %753 = vst [vmem:[%s745 + $0x28] sm:$0xff] %v752
              $region80: #{forward.25} parent=74 // loop_footer
                %s743 = sadd.s32 1, %s739
              $region81: #{forward.25} parent=74 // loop_footer_branch
                %738 = sbr.rel target = $region77
              $region82: #{forward.25} parent=74 // loop_exit
                _
            $region75: #{forward.25} parent=70 // pred_fallthru
              _
            // Predicated region
            $region83: #{forward.25} parent=70 // pred_check
              _
            $region84: #{forward.25} parent=70 // pred_check_branch
              %755 = sbr.rel target = $region86
            $region85: #{forward.25} parent=70 // pred_region
              _
            $region86: #{forward.25} parent=70 // pred_fallthru
              _
          $region71: #{forward.25} parent=66 // pred_fallthru
            _
          %756 = vnop
        $region67: #{forward.25} parent=50 // pred_fallthru
          _
      $region51: #{forward.25} parent=5 // pred_fallthru
        _
      %p757 = scmp.le.s32.totalorder 2, %s9
      // Predicated region
      $region87: #{forward.25} parent=5 // pred_check
        %p758 = pneg %p757
      $region88: #{forward.25} parent=5 // pred_check_branch
        %760 = sbr.rel (%p758) target = $region90
      $region89: #{forward.25} parent=5 // pred_region
        %s761 = ssub.s32 %s9, 2
        // Predicated region
        $region91: #{forward.25} parent=89 // pred_check
          %p762 = pneg %p141
        $region92: #{forward.25} parent=89 // pred_check_branch
          %764 = sbr.rel (%p762) target = $region94
        $region93: #{forward.25} parent=89 // pred_region
          %s765 = sand.u32 %s126, 1
          %s766 = sand.u32 %s126, 1
          %s767 = smul.addr %s766, 32
          %s768 = scalar_lea.vmem [#allocation4], %s767
        $region94: #{forward.25} parent=89 // pred_fallthru
          _
      $region90: #{forward.25} parent=5 // pred_fallthru
        _
    $region6: #{forward.25} parent=1 // loop_footer
      %s13 = sadd.s32 1, %s9
    $region7: #{forward.25} parent=1 // loop_footer_branch
      %8 = sbr.rel target = $region3
    $region8: #{forward.25} parent=1 // loop_exit
      _

// kernel: forward.19
$region0: #{forward.19}
  #allocation0 [shape = 'u32[]', space=smem, size = 0x4, offset = 0x4, fixed_abs, tag = 'smem constant byte address 0x4 - core index']
  #allocation1 [shape = 'u32[144,128]{1,0:T(1,128)}', space=vmem, size = 0x12000, scoped, tag = 'internal scratch']
  #allocation2 [shape = 'f32[16,128]{1,0:T(8,128)}', space=vmem, size = 0x2000, scoped, tag = 'scratch operand']
  %s0 = inlined_call_operand.vmem [shape: bf16[16,256], index: 0, kind: input, shape index: {}]
  %s1 = inlined_call_operand.vmem [shape: bf16[256,128], index: 1, kind: input, shape index: {}]
  %s2 = inlined_call_operand.vmem [shape: f32[1,128], index: 2, kind: input, shape index: {}]
  %s3 = inlined_call_operand.vmem [shape: bf16[16,128], index: 3, kind: input, shape index: {}]
  %s4 = inlined_call_operand.vmem [shape: f32[1,128], index: 4, kind: input, shape index: {}]
  %s5 = inlined_call_operand.vmem [shape: f32[1,128], index: 5, kind: input, shape index: {}]
  %s6 = inlined_call_operand.vmem [shape: bf16[16,128], index: 6, kind: output, shape index: {}]
  %s7 = sld [smem:[#allocation0]]
  $region42: #{forward.19} parent=0
    _
  %s9 = ssub.s32 1, %s7
  %s10 = scalar_select 0, %s9, %s7
  // Predicated region
  $region2: #{forward.19} parent=0 // pred_check
    _
  $region3: #{forward.19} parent=0 // pred_check_branch
    %12 = sbr.rel (0) target = $region5
  $region4: #{forward.19} parent=0 // pred_region
    _
  $region5: #{forward.19} parent=0 // pred_fallthru
    _
  // Predicated region
  $region6: #{forward.19} parent=0 // pred_check
    _
  $region7: #{forward.19} parent=0 // pred_check_branch
    %14 = sbr.rel (0) target = $region9
  $region8: #{forward.19} parent=0 // pred_region
    _
  $region9: #{forward.19} parent=0 // pred_fallthru
    _
  // Predicated region
  $region10: #{forward.19} parent=0 // pred_check
    _
  $region11: #{forward.19} parent=0 // pred_check_branch
    %16 = sbr.rel (0) target = $region13
  $region12: #{forward.19} parent=0 // pred_region
    _
  $region13: #{forward.19} parent=0 // pred_fallthru
    _
  // Predicated region
  $region14: #{forward.19} parent=0 // pred_check
    _
  $region15: #{forward.19} parent=0 // pred_check_branch
    %18 = sbr.rel (0) target = $region17
  $region16: #{forward.19} parent=0 // pred_region
    _
  $region17: #{forward.19} parent=0 // pred_fallthru
    _
  // Predicated region
  $region18: #{forward.19} parent=0 // pred_check
    _
  $region19: #{forward.19} parent=0 // pred_check_branch
    %20 = sbr.rel (0) target = $region21
  $region20: #{forward.19} parent=0 // pred_region
    _
  $region21: #{forward.19} parent=0 // pred_fallthru
    _
  // Predicated region
  $region22: #{forward.19} parent=0 // pred_check
    _
  $region23: #{forward.19} parent=0 // pred_check_branch
    %22 = sbr.rel (0) target = $region25
  $region24: #{forward.19} parent=0 // pred_region
    _
  $region25: #{forward.19} parent=0 // pred_fallthru
    _
  %p24 = scmp.eq.s32.totalorder 0, 0
  // Predicated region
  $region26: #{forward.19} parent=0 // pred_check
    %p25 = pneg %p24
  $region27: #{forward.19} parent=0 // pred_check_branch
    %27 = sbr.rel (%p25) target = $region29
  $region28: #{forward.19} parent=0 // pred_region
    %28 = vst [vmem:[#allocation2] sm:$0xff] 0.0
    %29 = vst [vmem:[#allocation2 + $0x8] sm:$0xff] 0.0
  $region29: #{forward.19} parent=0 // pred_fallthru
    _
  %v30 = vld [vmem:[#allocation2] sm:$0xff]
  %v31 = vld [vmem:[#allocation2 + $0x8] sm:$0xff]
  %v32 = vld [vmem:[%s0] sm:$0xff]
  %v33 = vld [vmem:[%s0 + $0x8] sm:$0xff]
  %v34 = vld [vmem:[%s1] sm:$0xf]
  %v35 = vld [vmem:[%s1 + $0x4] sm:$0xf]
  %v36 = vld [vmem:[%s1 + $0x8] sm:$0xf]
  %v37 = vld [vmem:[%s1 + $0xc] sm:$0xf]
  %v38 = vld [vmem:[%s1 + $0x10] sm:$0xf]
  %v39 = vld [vmem:[%s1 + $0x14] sm:$0xf]
  %v40 = vld [vmem:[%s1 + $0x18] sm:$0xf]
  %v41 = vld [vmem:[%s1 + $0x1c] sm:$0xf]
  %v42 = vld [vmem:[%s1 + $0x20] sm:$0xf]
  %v43 = vld [vmem:[%s1 + $0x24] sm:$0xf]
  %v44 = vld [vmem:[%s1 + $0x28] sm:$0xf]
  %v45 = vld [vmem:[%s1 + $0x2c] sm:$0xf]
  %v46 = vld [vmem:[%s1 + $0x30] sm:$0xf]
  %v47 = vld [vmem:[%s1 + $0x34] sm:$0xf]
  %v48 = vld [vmem:[%s1 + $0x38] sm:$0xf]
  %v49 = vld [vmem:[%s1 + $0x3c] sm:$0xf]
  %v50 = vld [vmem:[%s1 + $0x40] sm:$0xf]
  %v51 = vld [vmem:[%s1 + $0x44] sm:$0xf]
  %v52 = vld [vmem:[%s1 + $0x48] sm:$0xf]
  %v53 = vld [vmem:[%s1 + $0x4c] sm:$0xf]
  %v54 = vld [vmem:[%s1 + $0x50] sm:$0xf]
  %v55 = vld [vmem:[%s1 + $0x54] sm:$0xf]
  %v56 = vld [vmem:[%s1 + $0x58] sm:$0xf]
  %v57 = vld [vmem:[%s1 + $0x5c] sm:$0xf]
  %v58 = vld [vmem:[%s1 + $0x60] sm:$0xf]
  %v59 = vld [vmem:[%s1 + $0x64] sm:$0xf]
  %v60 = vld [vmem:[%s1 + $0x68] sm:$0xf]
  %v61 = vld [vmem:[%s1 + $0x6c] sm:$0xf]
  %v62 = vld [vmem:[%s1 + $0x70] sm:$0xf]
  %v63 = vld [vmem:[%s1 + $0x74] sm:$0xf]
  %v64 = vld [vmem:[%s1 + $0x78] sm:$0xf]
  %v65 = vld [vmem:[%s1 + $0x7c] sm:$0xf]
  %v68 = vunpack.c.l.b16 %v32
  %v69 = vunpack.c.h.b16 %v32
  %v70 = vunpack.c.l.b16 %v33
  %v71 = vunpack.c.h.b16 %v33
  %v72 = vpack.c.b16 %v70, %v68
  %v73 = vpack.c.b16 %v71, %v69
  %v108 = vunpack.c.l.b16 %v34
  %v109 = vunpack.c.l.b16 %v35
  %v110 = vunpack.c.l.b16 %v36
  %v111 = vunpack.c.l.b16 %v37
  %v112 = vunpack.c.l.b16 %v38
  %v113 = vunpack.c.l.b16 %v39
  %v114 = vunpack.c.l.b16 %v40
  %v115 = vunpack.c.l.b16 %v41
  %v116 = vunpack.c.l.b16 %v42
  %v117 = vunpack.c.l.b16 %v43
  %v118 = vunpack.c.l.b16 %v44
  %v119 = vunpack.c.l.b16 %v45
  %v120 = vunpack.c.l.b16 %v46
  %v121 = vunpack.c.l.b16 %v47
  %v122 = vunpack.c.l.b16 %v48
  %v123 = vunpack.c.l.b16 %v49
  %v124 = vunpack.c.l.b16 %v50
  %v125 = vunpack.c.l.b16 %v51
  %v126 = vunpack.c.l.b16 %v52
  %v127 = vunpack.c.l.b16 %v53
  %v128 = vunpack.c.l.b16 %v54
  %v129 = vunpack.c.l.b16 %v55
  %v130 = vunpack.c.l.b16 %v56
  %v131 = vunpack.c.l.b16 %v57
  %v132 = vunpack.c.l.b16 %v58
  %v133 = vunpack.c.l.b16 %v59
  %v134 = vunpack.c.l.b16 %v60
  %v135 = vunpack.c.l.b16 %v61
  %v136 = vunpack.c.l.b16 %v62
  %v137 = vunpack.c.l.b16 %v63
  %v138 = vunpack.c.l.b16 %v64
  %v139 = vunpack.c.l.b16 %v65
  %v140 = vpack.c.b16 %v109, %v108
  %v141 = vpack.c.b16 %v111, %v110
  %v142 = vpack.c.b16 %v113, %v112
  %v143 = vpack.c.b16 %v115, %v114
  %v144 = vpack.c.b16 %v117, %v116
  %v145 = vpack.c.b16 %v119, %v118
  %v146 = vpack.c.b16 %v121, %v120
  %v147 = vpack.c.b16 %v123, %v122
  %v148 = vpack.c.b16 %v125, %v124
  %v149 = vpack.c.b16 %v127, %v126
  %v150 = vpack.c.b16 %v129, %v128
  %v151 = vpack.c.b16 %v131, %v130
  %v152 = vpack.c.b16 %v133, %v132
  %v153 = vpack.c.b16 %v135, %v134
  %v154 = vpack.c.b16 %v137, %v136
  %v155 = vpack.c.b16 %v139, %v138
  %172 = vmatprep.subr.bf16.mxu0 0
  %173 = vmatpush1.bf16.msra.mxu0 %v140
  %174 = vmatprep.subr.bf16.mxu0 0
  %175 = vmatpush1.bf16.msra.mxu0 %v141
  %176 = vmatprep.subr.bf16.mxu0 0
  %177 = vmatpush1.bf16.msra.mxu0 %v142
  %178 = vmatprep.subr.bf16.mxu0 0
  %179 = vmatpush1.bf16.msra.mxu0 %v143
  %180 = vmatprep.subr.bf16.mxu0 0
  %181 = vmatpush1.bf16.msra.mxu0 %v144
  %182 = vmatprep.subr.bf16.mxu0 0
  %183 = vmatpush1.bf16.msra.mxu0 %v145
  %184 = vmatprep.subr.bf16.mxu0 0
  %185 = vmatpush1.bf16.msra.mxu0 %v146
  %186 = vmatprep.subr.bf16.mxu0 0
  %187 = vmatpush1.bf16.msra.mxu0 %v147
  %188 = vmatprep.subr.bf16.mxu0 0
  %189 = vmatpush1.bf16.msra.mxu0 %v148
  %190 = vmatprep.subr.bf16.mxu0 0
  %191 = vmatpush1.bf16.msra.mxu0 %v149
  %192 = vmatprep.subr.bf16.mxu0 0
  %193 = vmatpush1.bf16.msra.mxu0 %v150
  %194 = vmatprep.subr.bf16.mxu0 0
  %195 = vmatpush1.bf16.msra.mxu0 %v151
  %196 = vmatprep.subr.bf16.mxu0 0
  %197 = vmatpush1.bf16.msra.mxu0 %v152
  %198 = vmatprep.subr.bf16.mxu0 0
  %199 = vmatpush1.bf16.msra.mxu0 %v153
  %200 = vmatprep.subr.bf16.mxu0 0
  %201 = vmatpush1.bf16.msra.mxu0 %v154
  %202 = vmatprep.subr.bf16.mxu0 0
  %203 = vmatpush1.bf16.msra.mxu0 %v155
  %204 = vmatprep.mubr.bf16.mxu0 %v73
  %205 = vmatmul.mubr.bf16.gmra.mrb[0].mxu0 %v72
  %v206 = vpop.f32.mrb[0].mxu0
  %v207 = vadd.f32 0.0, %v206
  %v208 = vpop.f32.mrb[0].mxu0
  %v209 = vpop.f32.mrb[0].mxu0
  %v210 = vadd.f32 0.0, %v209
  %v211 = vpop.f32.mrb[0].mxu0
  %212 = vdwg.mxu0
  %v213 = vadd.f32 %v30, %v207
  %v214 = vadd.f32 %v31, %v210
  %215 = vst [vmem:[#allocation2] sm:$0xff] %v213
  %216 = vst [vmem:[#allocation2 + $0x8] sm:$0xff] %v214
  // Predicated region
  $region30: #{forward.19} parent=0 // pred_check
    %p217 = pneg %p24
  $region31: #{forward.19} parent=0 // pred_check_branch
    %219 = sbr.rel (%p217) target = $region33
  $region32: #{forward.19} parent=0 // pred_region
    %v220 = vld [vmem:[#allocation2] sm:$0xff]
    %v221 = vld [vmem:[#allocation2 + $0x8] sm:$0xff]
    %v222 = vld [vmem:[%s2] sm:$0x1]
    %v224 = vlaneseq
    %v225 = vshrl.u32 %v224, 7
    %v226 = vsub.s32 0, %v225
    %v227 = vrot.slane %v222, %v226
    %v229 = vadd.f32 %v220, %v227
    %v230 = vadd.f32 %v221, %v227
    %v231 = vld [vmem:[%s3] sm:$0xf]
    %v232 = vld [vmem:[%s3 + $0x4] sm:$0xf]
    %v233 = vunpack.c.l.bf16 %v231
    %v234 = vunpack.c.l.bf16 %v232
    %v235 = vadd.f32 %v229, %v233
    %v236 = vadd.f32 %v230, %v234
    %237 = vadd.xlane.f32.xlu0 %v235
    %v238 = vpop.xlane.xlu0 %237
    %239 = vadd.xlane.f32.xlu0 %v236
    %v240 = vpop.xlane.xlu0 %239
    %v241 = vrcp.pop 128.0
    %v242 = vmul.f32 %v238, %v241
    %v243 = vmul.f32 %v240, %v241
    %v244 = vsub.f32 %v235, %v242
    %v245 = vsub.f32 %v236, %v243
    %v246 = vmul.f32 %v244, %v244
    %v247 = vmul.f32 %v245, %v245
    %248 = vadd.xlane.f32.xlu0 %v246
    %v249 = vpop.xlane.xlu0 %248
    %250 = vadd.xlane.f32.xlu0 %v247
    %v251 = vpop.xlane.xlu0 %250
    %v252 = vmul.f32 %v249, %v241
    %v253 = vmul.f32 %v251, %v241
    %v254 = vadd.f32 %v252, 1e-12
    %v255 = vadd.f32 %v253, 1e-12
    %v256 = vrsqrt.pop %v254
    %v257 = vrsqrt.pop %v255
    %v258 = vmul.f32 %v244, %v256
    %v259 = vmul.f32 %v245, %v257
    %v260 = vld [vmem:[%s4] sm:$0x1]
    %v262 = vlaneseq
    %v263 = vshrl.u32 %v262, 7
    %v264 = vsub.s32 0, %v263
    %v265 = vrot.slane %v260, %v264
    %v267 = vmul.f32 %v258, %v265
    %v268 = vmul.f32 %v259, %v265
    %v269 = vld [vmem:[%s5] sm:$0x1]
    %v271 = vlaneseq
    %v272 = vshrl.u32 %v271, 7
    %v273 = vsub.s32 0, %v272
    %v274 = vrot.slane %v269, %v273
    %v276 = vadd.f32 %v267, %v274
    %v277 = vadd.f32 %v268, %v274
    %v278 = vpack.c.bf16 %v277, %v276
    %v280 = vunpack.c.l.b16 %v278
    %v281 = vunpack.c.h.b16 %v278
    %v282 = vpack.c.b16 %v280, %v280
    %v283 = vpack.c.b16 %v281, %v281
    %286 = vst [vmem:[%s6] sm:$0xf] %v282
    %287 = vst [vmem:[%s6 + $0x4] sm:$0xf] %v283
  $region33: #{forward.19} parent=0 // pred_fallthru
    _
  // Predicated region
  $region34: #{forward.19} parent=0 // pred_check
    _
  $region35: #{forward.19} parent=0 // pred_check_branch
    %289 = sbr.rel (0) target = $region37
  $region36: #{forward.19} parent=0 // pred_region
    _
  $region37: #{forward.19} parent=0 // pred_fallthru
    _
  // Predicated region
  $region38: #{forward.19} parent=0 // pred_check
    _
  $region39: #{forward.19} parent=0 // pred_check_branch
    %291 = sbr.rel (0) target = $region41
  $region40: #{forward.19} parent=0 // pred_region
    _
  $region41: #{forward.19} parent=0 // pred_fallthru
    _

// kernel: forward.27
$region0: #{forward.27}
  #allocation0 [shape = 'u32[]', space=smem, size = 0x4, offset = 0x4, fixed_abs, tag = 'smem constant byte address 0x4 - core index']
  #allocation1 [shape = 'u32[144,128]{1,0:T(1,128)}', space=vmem, size = 0x12000, scoped, tag = 'internal scratch']
  %s0 = inlined_call_operand.vmem [shape: bf16[2,8,256], index: 0, kind: input, shape index: {}]
  %s1 = inlined_call_operand.vmem [shape: bf16[256,512], index: 1, kind: input, shape index: {}]
  %s2 = inlined_call_operand.vmem [shape: f32[1,512], index: 2, kind: input, shape index: {}]
  %s3 = inlined_call_operand.vmem [shape: f32[8,512], index: 3, kind: input, shape index: {}]
  %s4 = inlined_call_operand.hbm [shape: f32[2,8,512], index: 4, kind: output, shape index: {}]
  %s5 = sld [smem:[#allocation0]]
  $region49: #{forward.27} parent=0
    _
  %s7 = ssub.s32 1, %s5
  %s8 = scalar_select 0, %s7, %s5
  $region1: #{forward.27} parent=0
    #allocation2 [shape = 'u8[32768]{0}', space=vmem, size = 0x8000, scoped, tag = 'output window, operand 0']
    #allocation3 [shape = 's32[2]{0}', space=sflag, size = 0x8, scoped, tag = 'scoped memory for forward.27']
    %9 = vsyncpa [#allocation3], 0
    %s10 = scalar_lea.sflag [#allocation3], 1
    %11 = vsyncpa %s10, 0
    loop: start=0, step=1, limit=4
    $region2: #{forward.27} parent=1 // loop_pre_header
      _
    $region3: #{forward.27} parent=1 // loop_header
      %s13 = sphi 0, %s17
      %p14 = scmp.ge.s32.totalorder %s13, 4
      %s20 = sphi 0, %s32
      %s21 = sphi 0, %s28
      %s22 = sphi 0, %s20
      %s23 = sphi 0, %s21
      %s24 = sphi 0, %s22
      %s25 = sphi 0, %s23
      %s37 = sphi 0, %s39
      %s40 = sphi 0, %s37
      %s41 = sphi 0, %s40
      %s57 = sphi 0, %s41
      %s61 = sphi 0, %s61
      %s63 = sphi 0, %s61
      %s64 = sphi 0, %s63
      %s78 = sphi 0, %s64
      %s82 = sphi 0, %s82
      %s84 = sphi 0, %s82
      %s85 = sphi 0, %s84
      %s99 = sphi 0, %s85
      %s105 = sphi 0, %s107
      %s108 = sphi 0, %s105
      %s109 = sphi 0, %s108
      %s125 = sphi 0, %s109
      %s133 = sphi 0, %s135
      %s136 = sphi 0, %s133
      %s137 = sphi 0, %s136
      %s153 = sphi 0, %s137
    $region4: #{forward.27} parent=1 // loop_header_branch
      %16 = sbr.rel (%p14) target = $region8
    $region5: #{forward.27} parent=1 // loop_body
      %s18 = ssub.s32 %s13, 1
      %s19 = ssub.s32 %s13, 2
      %s26 = sadd.s32 1, %s21
      %p27 = scmp.ge.s32.totalorder %s26, 1
      %s28 = scalar_select %p27, 0, %s26
      %s29 = sadd.s32 1, %s20
      %s30 = scalar_select %p27, %s29, %s20
      %p31 = scmp.ge.s32.totalorder %s30, 2
      %s32 = scalar_select %p31, 0, %s30
      %s33 = ssub.s32 %s20, %s32
      %s34 = ssub.s32 %s21, %s28
      %s35 = sor.u32 %s33, %s34
      %p36 = scmp.eq.s32.totalorder %s35, 0
      %s38 = sadd.s32 %s37, 1
      %s39 = scalar_select %p36, %s37, %s38
      %p42 = pneg %p36
      %p43 = scmp.eq.s32.totalorder %s13, 1
      %p44 = por %p42, %p43
      %p45 = scmp.ne.s32.totalorder %s37, %s40
      %p46 = scmp.eq.s32.totalorder %s13, 0
      %p47 = por %p45, %p46
      %p48 = scmp.ne.s32.totalorder %s37, %s40
      %p49 = scmp.eq.s32.totalorder %s18, 1
      %p50 = por %p48, %p49
      %p51 = scmp.ne.s32.totalorder %s40, %s41
      %p52 = scmp.eq.s32.totalorder %s18, 0
      %p53 = por %p51, %p52
      %p54 = scmp.ne.s32.totalorder %s40, %s41
      %p55 = scmp.eq.s32.totalorder %s19, 1
      %p56 = por %p54, %p55
      %p58 = scmp.ne.s32.totalorder %s41, %s57
      %p59 = scmp.eq.s32.totalorder %s19, 0
      %p60 = por %p58, %p59
      %s62 = sadd.s32 %s61, 1
      %p65 = scmp.eq.s32.totalorder %s13, 1
      %p66 = scmp.ne.s32.totalorder %s61, %s63
      %p67 = scmp.eq.s32.totalorder %s13, 0
      %p68 = por %p66, %p67
      %p69 = scmp.ne.s32.totalorder %s61, %s63
      %p70 = scmp.eq.s32.totalorder %s18, 1
      %p71 = por %p69, %p70
      %p72 = scmp.ne.s32.totalorder %s63, %s64
      %p73 = scmp.eq.s32.totalorder %s18, 0
      %p74 = por %p72, %p73
      %p75 = scmp.ne.s32.totalorder %s63, %s64
      %p76 = scmp.eq.s32.totalorder %s19, 1
      %p77 = por %p75, %p76
      %p79 = scmp.ne.s32.totalorder %s64, %s78
      %p80 = scmp.eq.s32.totalorder %s19, 0
      %p81 = por %p79, %p80
      %s83 = sadd.s32 %s82, 1
      %p86 = scmp.eq.s32.totalorder %s13, 1
      %p87 = scmp.ne.s32.totalorder %s82, %s84
      %p88 = scmp.eq.s32.totalorder %s13, 0
      %p89 = por %p87, %p88
      %p90 = scmp.ne.s32.totalorder %s82, %s84
      %p91 = scmp.eq.s32.totalorder %s18, 1
      %p92 = por %p90, %p91
      %p93 = scmp.ne.s32.totalorder %s84, %s85
      %p94 = scmp.eq.s32.totalorder %s18, 0
      %p95 = por %p93, %p94
      %p96 = scmp.ne.s32.totalorder %s84, %s85
      %p97 = scmp.eq.s32.totalorder %s19, 1
      %p98 = por %p96, %p97
      %p100 = scmp.ne.s32.totalorder %s85, %s99
      %p101 = scmp.eq.s32.totalorder %s19, 0
      %p102 = por %p100, %p101
      %s103 = ssub.s32 %s21, %s28
      %p104 = scmp.eq.s32.totalorder %s103, 0
      %s106 = sadd.s32 %s105, 1
      %s107 = scalar_select %p104, %s105, %s106
      %p110 = pneg %p104
      %p111 = scmp.eq.s32.totalorder %s13, 1
      %p112 = por %p110, %p111
      %p113 = scmp.ne.s32.totalorder %s105, %s108
      %p114 = scmp.eq.s32.totalorder %s13, 0
      %p115 = por %p113, %p114
      %p116 = scmp.ne.s32.totalorder %s105, %s108
      %p117 = scmp.eq.s32.totalorder %s18, 1
      %p118 = por %p116, %p117
      %p119 = scmp.ne.s32.totalorder %s108, %s109
      %p120 = scmp.eq.s32.totalorder %s18, 0
      %p121 = por %p119, %p120
      %p122 = scmp.ne.s32.totalorder %s108, %s109
      %p123 = scmp.eq.s32.totalorder %s19, 1
      %p124 = por %p122, %p123
      %p126 = scmp.ne.s32.totalorder %s109, %s125
      %p127 = scmp.eq.s32.totalorder %s19, 0
      %p128 = por %p126, %p127
      %s129 = ssub.s32 %s20, %s32
      %s130 = ssub.s32 %s21, %s28
      %s131 = sor.u32 %s129, %s130
      %p132 = scmp.eq.s32.totalorder %s131, 0
      %s134 = sadd.s32 %s133, 1
      %s135 = scalar_select %p132, %s133, %s134
      %p138 = pneg %p132
      %p139 = scmp.eq.s32.totalorder %s13, 1
      %p140 = por %p138, %p139
      %p141 = scmp.ne.s32.totalorder %s133, %s136
      %p142 = scmp.eq.s32.totalorder %s13, 0
      %p143 = por %p141, %p142
      %p144 = scmp.ne.s32.totalorder %s133, %s136
      %p145 = scmp.eq.s32.totalorder %s18, 1
      %p146 = por %p144, %p145
      %p147 = scmp.ne.s32.totalorder %s136, %s137
      %p148 = scmp.eq.s32.totalorder %s18, 0
      %p149 = por %p147, %p148
      %p150 = scmp.ne.s32.totalorder %s136, %s137
      %p151 = scmp.eq.s32.totalorder %s19, 1
      %p152 = por %p150, %p151
      %p154 = scmp.ne.s32.totalorder %s137, %s153
      %p155 = scmp.eq.s32.totalorder %s19, 0
      %p156 = por %p154, %p155
      %p157 = scmp.le.s32.totalorder 1, %s13
      %p158 = scmp.lt.s32.totalorder %s13, 3
      %p159 = pnand %p157, %p158
      %p160 = pneg %p159
      // Predicated region
      $region9: #{forward.27} parent=5 // pred_check
        _
      $region10: #{forward.27} parent=5 // pred_check_branch
        %162 = sbr.rel (%p159) target = $region12
      $region11: #{forward.27} parent=5 // pred_region
        %s163 = ssub.s32 %s13, 1
        // Predicated region
        $region13: #{forward.27} parent=11 // pred_check
          %p164 = pneg %p74
        $region14: #{forward.27} parent=11 // pred_check_branch
          %166 = sbr.rel (%p164) target = $region16
        $region15: #{forward.27} parent=11 // pred_region
          _
        $region16: #{forward.27} parent=11 // pred_fallthru
          _
        // Predicated region
        $region17: #{forward.27} parent=11 // pred_check
          %p167 = pneg %p95
        $region18: #{forward.27} parent=11 // pred_check_branch
          %169 = sbr.rel (%p167) target = $region20
        $region19: #{forward.27} parent=11 // pred_region
          _
        $region20: #{forward.27} parent=11 // pred_fallthru
          _
        // Predicated region
        $region21: #{forward.27} parent=11 // pred_check
          %p170 = pneg %p121
        $region22: #{forward.27} parent=11 // pred_check_branch
          %172 = sbr.rel (%p170) target = $region24
        $region23: #{forward.27} parent=11 // pred_region
          %p173 = scmp.lt.s32.totalorder %s23, 0
          %s174 = scalar_select %p173, %s23, 0
          %s175 = smul.addr %s174, 4
          %s176 = smul.addr %s175, 8
          %s177 = scalar_lea.vmem %s3, %s176
        $region24: #{forward.27} parent=11 // pred_fallthru
          _
      $region12: #{forward.27} parent=5 // pred_fallthru
        _
      %p178 = scmp.lt.s32.totalorder %s13, 2
      // Predicated region
      $region25: #{forward.27} parent=5 // pred_check
        %p179 = pneg %p178
      $region26: #{forward.27} parent=5 // pred_check_branch
        %181 = sbr.rel (%p179) target = $region28
      $region27: #{forward.27} parent=5 // pred_region
        // Predicated region
        $region29: #{forward.27} parent=27 // pred_check
          %p182 = pneg %p47
        $region30: #{forward.27} parent=27 // pred_check_branch
          %184 = sbr.rel (%p182) target = $region32
        $region31: #{forward.27} parent=27 // pred_region
          %p185 = scmp.lt.s32.totalorder %s20, 1
          %s186 = scalar_select %p185, %s20, 1
          %p187 = scmp.lt.s32.totalorder %s21, 0
          %s188 = scalar_select %p187, %s21, 0
          %s189 = smul.addr %s188, 2
          %s190 = smul.addr %s186, 2
          %s191 = sadd.s32 %s189, %s190
          %s192 = smul.addr %s191, 4
          %s193 = scalar_lea.vmem %s0, %s192
        $region32: #{forward.27} parent=27 // pred_fallthru
          _
      $region28: #{forward.27} parent=5 // pred_fallthru
        _
      %p194 = scmp.le.s32.totalorder 1, %s13
      %p195 = scmp.lt.s32.totalorder %s13, 3
      %p196 = pnand %p194, %p195
      %p197 = pneg %p196
      // Predicated region
      $region33: #{forward.27} parent=5 // pred_check
        _
      $region34: #{forward.27} parent=5 // pred_check_branch
        %199 = sbr.rel (%p196) target = $region36
      $region35: #{forward.27} parent=5 // pred_region
        %s200 = ssub.s32 %s13, 1
        %p201 = scmp.lt.s32.totalorder %s22, 1
        %s202 = scalar_select %p201, %s22, 1
        %p203 = scmp.lt.s32.totalorder %s23, 0
        %s204 = scalar_select %p203, %s23, 0
        %s205 = smul.addr %s204, 2
        %s206 = smul.addr %s202, 2
        %s207 = sadd.s32 %s205, %s206
        %s208 = smul.addr %s207, 4
        %s209 = scalar_lea.vmem %s0, %s208
        %p210 = pneg %p53
        %p211 = pneg %p50
        %p212 = pneg %p74
        %p213 = pneg %p71
        %p214 = pneg %p95
        %p215 = pneg %p92
        %p216 = scmp.lt.s32.totalorder %s23, 0
        %s217 = scalar_select %p216, %s23, 0
        %s218 = smul.addr %s217, 4
        %s219 = smul.addr %s218, 8
        %s220 = scalar_lea.vmem %s3, %s219
        %p221 = pneg %p121
        %p222 = pneg %p118
        %p223 = pneg %p149
        %p224 = pneg %p146
        %s225 = sand.u32 %s136, 1
        %s226 = scalar_lea.sflag [#allocation3], %s225
        %s227 = sand.u32 %s136, 1
        %s228 = smul.addr %s227, 32
        %s229 = scalar_lea.vmem [#allocation2], %s228
        %p230 = scmp.lt.s32.totalorder %s22, 1
        %s231 = scalar_select %p230, %s22, 1
        %p232 = scmp.lt.s32.totalorder %s23, 0
        %s233 = scalar_select %p232, %s23, 0
        %s234 = smul.addr %s233, 2
        %s235 = smul.addr %s231, 2
        %s236 = sadd.s32 %s234, %s235
        %s237 = smul.addr %s236, 4
        %s238 = scalar_lea.vmem %s0, %s237
        %p239 = scmp.lt.s32.totalorder %s23, 0
        %s240 = scalar_select %p239, %s23, 0
        %s241 = smul.addr %s240, 4
        %s242 = smul.addr %s241, 8
        %s243 = scalar_lea.vmem %s3, %s242
        %v244 = vld [vmem:[%s238] sm:$0xff]
        %v245 = vld [vmem:[%s1] sm:$0xff]
        %v246 = vld [vmem:[%s1 + $0x8] sm:$0xff]
        %v247 = vld [vmem:[%s1 + $0x10] sm:$0xff]
        %v248 = vld [vmem:[%s1 + $0x18] sm:$0xff]
        %v249 = vld [vmem:[%s1 + $0x20] sm:$0xff]
        %v250 = vld [vmem:[%s1 + $0x28] sm:$0xff]
        %v251 = vld [vmem:[%s1 + $0x30] sm:$0xff]
        %v252 = vld [vmem:[%s1 + $0x38] sm:$0xff]
        %v253 = vld [vmem:[%s1 + $0x40] sm:$0xff]
        %v254 = vld [vmem:[%s1 + $0x48] sm:$0xff]
        %v255 = vld [vmem:[%s1 + $0x50] sm:$0xff]
        %v256 = vld [vmem:[%s1 + $0x58] sm:$0xff]
        %v257 = vld [vmem:[%s1 + $0x60] sm:$0xff]
        %v258 = vld [vmem:[%s1 + $0x68] sm:$0xff]
        %v259 = vld [vmem:[%s1 + $0x70] sm:$0xff]
        %v260 = vld [vmem:[%s1 + $0x78] sm:$0xff]
        %v261 = vld [vmem:[%s1 + $0x80] sm:$0xff]
        %v262 = vld [vmem:[%s1 + $0x88] sm:$0xff]
        %v263 = vld [vmem:[%s1 + $0x90] sm:$0xff]
        %v264 = vld [vmem:[%s1 + $0x98] sm:$0xff]
        %v265 = vld [vmem:[%s1 + $0xa0] sm:$0xff]
        %v266 = vld [vmem:[%s1 + $0xa8] sm:$0xff]
        %v267 = vld [vmem:[%s1 + $0xb0] sm:$0xff]
        %v268 = vld [vmem:[%s1 + $0xb8] sm:$0xff]
        %v269 = vld [vmem:[%s1 + $0xc0] sm:$0xff]
        %v270 = vld [vmem:[%s1 + $0xc8] sm:$0xff]
        %v271 = vld [vmem:[%s1 + $0xd0] sm:$0xff]
        %v272 = vld [vmem:[%s1 + $0xd8] sm:$0xff]
        %v273 = vld [vmem:[%s1 + $0xe0] sm:$0xff]
        %v274 = vld [vmem:[%s1 + $0xe8] sm:$0xff]
        %v275 = vld [vmem:[%s1 + $0xf0] sm:$0xff]
        %v276 = vld [vmem:[%s1 + $0xf8] sm:$0xff]
        %v277 = vld [vmem:[%s1 + $0x100] sm:$0xff]
        %v278 = vld [vmem:[%s1 + $0x108] sm:$0xff]
        %v279 = vld [vmem:[%s1 + $0x110] sm:$0xff]
        %v280 = vld [vmem:[%s1 + $0x118] sm:$0xff]
        %v281 = vld [vmem:[%s1 + $0x120] sm:$0xff]
        %v282 = vld [vmem:[%s1 + $0x128] sm:$0xff]
        %v283 = vld [vmem:[%s1 + $0x130] sm:$0xff]
        %v284 = vld [vmem:[%s1 + $0x138] sm:$0xff]
        %v285 = vld [vmem:[%s1 + $0x140] sm:$0xff]
        %v286 = vld [vmem:[%s1 + $0x148] sm:$0xff]
        %v287 = vld [vmem:[%s1 + $0x150] sm:$0xff]
        %v288 = vld [vmem:[%s1 + $0x158] sm:$0xff]
        %v289 = vld [vmem:[%s1 + $0x160] sm:$0xff]
        %v290 = vld [vmem:[%s1 + $0x168] sm:$0xff]
        %v291 = vld [vmem:[%s1 + $0x170] sm:$0xff]
        %v292 = vld [vmem:[%s1 + $0x178] sm:$0xff]
        %v293 = vld [vmem:[%s1 + $0x180] sm:$0xff]
        %v294 = vld [vmem:[%s1 + $0x188] sm:$0xff]
        %v295 = vld [vmem:[%s1 + $0x190] sm:$0xff]
        %v296 = vld [vmem:[%s1 + $0x198] sm:$0xff]
        %v297 = vld [vmem:[%s1 + $0x1a0] sm:$0xff]
        %v298 = vld [vmem:[%s1 + $0x1a8] sm:$0xff]
        %v299 = vld [vmem:[%s1 + $0x1b0] sm:$0xff]
        %v300 = vld [vmem:[%s1 + $0x1b8] sm:$0xff]
        %v301 = vld [vmem:[%s1 + $0x1c0] sm:$0xff]
        %v302 = vld [vmem:[%s1 + $0x1c8] sm:$0xff]
        %v303 = vld [vmem:[%s1 + $0x1d0] sm:$0xff]
        %v304 = vld [vmem:[%s1 + $0x1d8] sm:$0xff]
        %v305 = vld [vmem:[%s1 + $0x1e0] sm:$0xff]
        %v306 = vld [vmem:[%s1 + $0x1e8] sm:$0xff]
        %v307 = vld [vmem:[%s1 + $0x1f0] sm:$0xff]
        %v308 = vld [vmem:[%s1 + $0x1f8] sm:$0xff]
        %v309 = vld [vmem:[%s2] sm:$0xf]
        %v311 = vlaneseq
        %v312 = vshrl.u32 %v311, 7
        %v313 = vsub.s32 0, %v312
        %v314 = vrot.slane %v309, %v313
        %v315 = vlaneseq
        %v316 = vshrl.u32 %v315, 7
        %v317 = vsub.s32 1, %v316
        %v318 = vrot.slane %v309, %v317
        %v319 = vlaneseq
        %v320 = vshrl.u32 %v319, 7
        %v321 = vsub.s32 2, %v320
        %v322 = vrot.slane %v309, %v321
        %v323 = vlaneseq
        %v324 = vshrl.u32 %v323, 7
        %v325 = vsub.s32 3, %v324
        %v326 = vrot.slane %v309, %v325
        %v332 = vunpack.c.l.b16 %v244
        %v333 = vunpack.c.h.b16 %v244
        %v334 = vpack.c.b16 %v332, %v332
        %v335 = vpack.c.b16 %v333, %v333
        %v402 = vunpack.c.l.b16 %v245
        %v403 = vunpack.c.h.b16 %v245
        %v404 = vunpack.c.l.b16 %v246
        %v405 = vunpack.c.h.b16 %v246
        %v406 = vunpack.c.l.b16 %v247
        %v407 = vunpack.c.h.b16 %v247
        %v408 = vunpack.c.l.b16 %v248
        %v409 = vunpack.c.h.b16 %v248
        %v410 = vunpack.c.l.b16 %v249
        %v411 = vunpack.c.h.b16 %v249
        %v412 = vunpack.c.l.b16 %v250
        %v413 = vunpack.c.h.b16 %v250
        %v414 = vunpack.c.l.b16 %v251
        %v415 = vunpack.c.h.b16 %v251
        %v416 = vunpack.c.l.b16 %v252
        %v417 = vunpack.c.h.b16 %v252
        %v418 = vunpack.c.l.b16 %v253
        %v419 = vunpack.c.h.b16 %v253
        %v420 = vunpack.c.l.b16 %v254
        %v421 = vunpack.c.h.b16 %v254
        %v422 = vunpack.c.l.b16 %v255
        %v423 = vunpack.c.h.b16 %v255
        %v424 = vunpack.c.l.b16 %v256
        %v425 = vunpack.c.h.b16 %v256
        %v426 = vunpack.c.l.b16 %v257
        %v427 = vunpack.c.h.b16 %v257
        %v428 = vunpack.c.l.b16 %v258
        %v429 = vunpack.c.h.b16 %v258
        %v430 = vunpack.c.l.b16 %v259
        %v431 = vunpack.c.h.b16 %v259
        %v432 = vunpack.c.l.b16 %v260
        %v433 = vunpack.c.h.b16 %v260
        %v434 = vunpack.c.l.b16 %v261
        %v435 = vunpack.c.h.b16 %v261
        %v436 = vunpack.c.l.b16 %v262
        %v437 = vunpack.c.h.b16 %v262
        %v438 = vunpack.c.l.b16 %v263
        %v439 = vunpack.c.h.b16 %v263
        %v440 = vunpack.c.l.b16 %v264
        %v441 = vunpack.c.h.b16 %v264
        %v442 = vunpack.c.l.b16 %v265
        %v443 = vunpack.c.h.b16 %v265
        %v444 = vunpack.c.l.b16 %v266
        %v445 = vunpack.c.h.b16 %v266
        %v446 = vunpack.c.l.b16 %v267
        %v447 = vunpack.c.h.b16 %v267
        %v448 = vunpack.c.l.b16 %v268
        %v449 = vunpack.c.h.b16 %v268
        %v450 = vunpack.c.l.b16 %v269
        %v451 = vunpack.c.h.b16 %v269
        %v452 = vunpack.c.l.b16 %v270
        %v453 = vunpack.c.h.b16 %v270
        %v454 = vunpack.c.l.b16 %v271
        %v455 = vunpack.c.h.b16 %v271
        %v456 = vunpack.c.l.b16 %v272
        %v457 = vunpack.c.h.b16 %v272
        %v458 = vunpack.c.l.b16 %v273
        %v459 = vunpack.c.h.b16 %v273
        %v460 = vunpack.c.l.b16 %v274
        %v461 = vunpack.c.h.b16 %v274
        %v462 = vunpack.c.l.b16 %v275
        %v463 = vunpack.c.h.b16 %v275
        %v464 = vunpack.c.l.b16 %v276
        %v465 = vunpack.c.h.b16 %v276
        %v466 = vunpack.c.l.b16 %v277
        %v467 = vunpack.c.h.b16 %v277
        %v468 = vunpack.c.l.b16 %v278
        %v469 = vunpack.c.h.b16 %v278
        %v470 = vunpack.c.l.b16 %v279
        %v471 = vunpack.c.h.b16 %v279
        %v472 = vunpack.c.l.b16 %v280
        %v473 = vunpack.c.h.b16 %v280
        %v474 = vunpack.c.l.b16 %v281
        %v475 = vunpack.c.h.b16 %v281
        %v476 = vunpack.c.l.b16 %v282
        %v477 = vunpack.c.h.b16 %v282
        %v478 = vunpack.c.l.b16 %v283
        %v479 = vunpack.c.h.b16 %v283
        %v480 = vunpack.c.l.b16 %v284
        %v481 = vunpack.c.h.b16 %v284
        %v482 = vunpack.c.l.b16 %v285
        %v483 = vunpack.c.h.b16 %v285
        %v484 = vunpack.c.l.b16 %v286
        %v485 = vunpack.c.h.b16 %v286
        %v486 = vunpack.c.l.b16 %v287
        %v487 = vunpack.c.h.b16 %v287
        %v488 = vunpack.c.l.b16 %v288
        %v489 = vunpack.c.h.b16 %v288
        %v490 = vunpack.c.l.b16 %v289
        %v491 = vunpack.c.h.b16 %v289
        %v492 = vunpack.c.l.b16 %v290
        %v493 = vunpack.c.h.b16 %v290
        %v494 = vunpack.c.l.b16 %v291
        %v495 = vunpack.c.h.b16 %v291
        %v496 = vunpack.c.l.b16 %v292
        %v497 = vunpack.c.h.b16 %v292
        %v498 = vunpack.c.l.b16 %v293
        %v499 = vunpack.c.h.b16 %v293
        %v500 = vunpack.c.l.b16 %v294
        %v501 = vunpack.c.h.b16 %v294
        %v502 = vunpack.c.l.b16 %v295
        %v503 = vunpack.c.h.b16 %v295
        %v504 = vunpack.c.l.b16 %v296
        %v505 = vunpack.c.h.b16 %v296
        %v506 = vunpack.c.l.b16 %v297
        %v507 = vunpack.c.h.b16 %v297
        %v508 = vunpack.c.l.b16 %v298
        %v509 = vunpack.c.h.b16 %v298
        %v510 = vunpack.c.l.b16 %v299
        %v511 = vunpack.c.h.b16 %v299
        %v512 = vunpack.c.l.b16 %v300
        %v513 = vunpack.c.h.b16 %v300
        %v514 = vunpack.c.l.b16 %v301
        %v515 = vunpack.c.h.b16 %v301
        %v516 = vunpack.c.l.b16 %v302
        %v517 = vunpack.c.h.b16 %v302
        %v518 = vunpack.c.l.b16 %v303
        %v519 = vunpack.c.h.b16 %v303
        %v520 = vunpack.c.l.b16 %v304
        %v521 = vunpack.c.h.b16 %v304
        %v522 = vunpack.c.l.b16 %v305
        %v523 = vunpack.c.h.b16 %v305
        %v524 = vunpack.c.l.b16 %v306
        %v525 = vunpack.c.h.b16 %v306
        %v526 = vunpack.c.l.b16 %v307
        %v527 = vunpack.c.h.b16 %v307
        %v528 = vunpack.c.l.b16 %v308
        %v529 = vunpack.c.h.b16 %v308
        %v530 = vpack.c.b16 %v406, %v402
        %v531 = vpack.c.b16 %v407, %v403
        %v532 = vpack.c.b16 %v408, %v404
        %v533 = vpack.c.b16 %v409, %v405
        %v534 = vpack.c.b16 %v414, %v410
        %v535 = vpack.c.b16 %v415, %v411
        %v536 = vpack.c.b16 %v416, %v412
        %v537 = vpack.c.b16 %v417, %v413
        %v538 = vpack.c.b16 %v422, %v418
        %v539 = vpack.c.b16 %v423, %v419
        %v540 = vpack.c.b16 %v424, %v420
        %v541 = vpack.c.b16 %v425, %v421
        %v542 = vpack.c.b16 %v430, %v426
        %v543 = vpack.c.b16 %v431, %v427
        %v544 = vpack.c.b16 %v432, %v428
        %v545 = vpack.c.b16 %v433, %v429
        %v546 = vpack.c.b16 %v438, %v434
        %v547 = vpack.c.b16 %v439, %v435
        %v548 = vpack.c.b16 %v440, %v436
        %v549 = vpack.c.b16 %v441, %v437
        %v550 = vpack.c.b16 %v446, %v442
        %v551 = vpack.c.b16 %v447, %v443
        %v552 = vpack.c.b16 %v448, %v444
        %v553 = vpack.c.b16 %v449, %v445
        %v554 = vpack.c.b16 %v454, %v450
        %v555 = vpack.c.b16 %v455, %v451
        %v556 = vpack.c.b16 %v456, %v452
        %v557 = vpack.c.b16 %v457, %v453
        %v558 = vpack.c.b16 %v462, %v458
        %v559 = vpack.c.b16 %v463, %v459
        %v560 = vpack.c.b16 %v464, %v460
        %v561 = vpack.c.b16 %v465, %v461
        %v562 = vpack.c.b16 %v470, %v466
        %v563 = vpack.c.b16 %v471, %v467
        %v564 = vpack.c.b16 %v472, %v468
        %v565 = vpack.c.b16 %v473, %v469
        %v566 = vpack.c.b16 %v478, %v474
        %v567 = vpack.c.b16 %v479, %v475
        %v568 = vpack.c.b16 %v480, %v476
        %v569 = vpack.c.b16 %v481, %v477
        %v570 = vpack.c.b16 %v486, %v482
        %v571 = vpack.c.b16 %v487, %v483
        %v572 = vpack.c.b16 %v488, %v484
        %v573 = vpack.c.b16 %v489, %v485
        %v574 = vpack.c.b16 %v494, %v490
        %v575 = vpack.c.b16 %v495, %v491
        %v576 = vpack.c.b16 %v496, %v492
        %v577 = vpack.c.b16 %v497, %v493
        %v578 = vpack.c.b16 %v502, %v498
        %v579 = vpack.c.b16 %v503, %v499
        %v580 = vpack.c.b16 %v504, %v500
        %v581 = vpack.c.b16 %v505, %v501
        %v582 = vpack.c.b16 %v510, %v506
        %v583 = vpack.c.b16 %v511, %v507
        %v584 = vpack.c.b16 %v512, %v508
        %v585 = vpack.c.b16 %v513, %v509
        %v586 = vpack.c.b16 %v518, %v514
        %v587 = vpack.c.b16 %v519, %v515
        %v588 = vpack.c.b16 %v520, %v516
        %v589 = vpack.c.b16 %v521, %v517
        %v590 = vpack.c.b16 %v526, %v522
        %v591 = vpack.c.b16 %v527, %v523
        %v592 = vpack.c.b16 %v528, %v524
        %v593 = vpack.c.b16 %v529, %v525
        %658 = vmatprep.subr.bf16.mxu0 %v531
        %659 = vmatpush1.bf16.msra.mxu0 %v530
        %660 = vmatprep.subr.bf16.mxu0 %v535
        %661 = vmatpush1.bf16.msra.mxu0 %v534
        %662 = vmatprep.subr.bf16.mxu0 %v539
        %663 = vmatpush1.bf16.msra.mxu0 %v538
        %664 = vmatprep.subr.bf16.mxu0 %v543
        %665 = vmatpush1.bf16.msra.mxu0 %v542
        %666 = vmatprep.subr.bf16.mxu0 %v547
        %667 = vmatpush1.bf16.msra.mxu0 %v546
        %668 = vmatprep.subr.bf16.mxu0 %v551
        %669 = vmatpush1.bf16.msra.mxu0 %v550
        %670 = vmatprep.subr.bf16.mxu0 %v555
        %671 = vmatpush1.bf16.msra.mxu0 %v554
        %672 = vmatprep.subr.bf16.mxu0 %v559
        %673 = vmatpush1.bf16.msra.mxu0 %v558
        %674 = vmatprep.subr.bf16.mxu0 %v563
        %675 = vmatpush1.bf16.msra.mxu0 %v562
        %676 = vmatprep.subr.bf16.mxu0 %v567
        %677 = vmatpush1.bf16.msra.mxu0 %v566
        %678 = vmatprep.subr.bf16.mxu0 %v571
        %679 = vmatpush1.bf16.msra.mxu0 %v570
        %680 = vmatprep.subr.bf16.mxu0 %v575
        %681 = vmatpush1.bf16.msra.mxu0 %v574
        %682 = vmatprep.subr.bf16.mxu0 %v579
        %683 = vmatpush1.bf16.msra.mxu0 %v578
        %684 = vmatprep.subr.bf16.mxu0 %v583
        %685 = vmatpush1.bf16.msra.mxu0 %v582
        %686 = vmatprep.subr.bf16.mxu0 %v587
        %687 = vmatpush1.bf16.msra.mxu0 %v586
        %688 = vmatprep.subr.bf16.mxu0 %v591
        %689 = vmatpush1.bf16.msra.mxu0 %v590
        %690 = vmatprep.mubr.bf16.mxu0 %v335
        %691 = vmatmul.mubr.bf16.gmra.mrb[0].mxu0 %v334
        %v692 = vpop.f32.mrb[0].mxu0
        %v693 = vadd.f32 %v314, %v692
        %v694 = vpop.f32.mrb[0].mxu0
        %v695 = vadd.f32 %v318, %v694
        %v696 = vpop.f32.mrb[0].mxu0
        %v697 = vpop.f32.mrb[0].mxu0
        %698 = vdwg.mxu0
        %699 = vmatprep.subr.bf16.mxu0 %v533
        %700 = vmatpush1.bf16.msra.mxu0 %v532
        %701 = vmatprep.subr.bf16.mxu0 %v537
        %702 = vmatpush1.bf16.msra.mxu0 %v536
        %703 = vmatprep.subr.bf16.mxu0 %v541
        %704 = vmatpush1.bf16.msra.mxu0 %v540
        %705 = vmatprep.subr.bf16.mxu0 %v545
        %706 = vmatpush1.bf16.msra.mxu0 %v544
        %707 = vmatprep.subr.bf16.mxu0 %v549
        %708 = vmatpush1.bf16.msra.mxu0 %v548
        %709 = vmatprep.subr.bf16.mxu0 %v553
        %710 = vmatpush1.bf16.msra.mxu0 %v552
        %711 = vmatprep.subr.bf16.mxu0 %v557
        %712 = vmatpush1.bf16.msra.mxu0 %v556
        %713 = vmatprep.subr.bf16.mxu0 %v561
        %714 = vmatpush1.bf16.msra.mxu0 %v560
        %715 = vmatprep.subr.bf16.mxu0 %v565
        %716 = vmatpush1.bf16.msra.mxu0 %v564
        %717 = vmatprep.subr.bf16.mxu0 %v569
        %718 = vmatpush1.bf16.msra.mxu0 %v568
        %719 = vmatprep.subr.bf16.mxu0 %v573
        %720 = vmatpush1.bf16.msra.mxu0 %v572
        %721 = vmatprep.subr.bf16.mxu0 %v577
        %722 = vmatpush1.bf16.msra.mxu0 %v576
        %723 = vmatprep.subr.bf16.mxu0 %v581
        %724 = vmatpush1.bf16.msra.mxu0 %v580
        %725 = vmatprep.subr.bf16.mxu0 %v585
        %726 = vmatpush1.bf16.msra.mxu0 %v584
        %727 = vmatprep.subr.bf16.mxu0 %v589
        %728 = vmatpush1.bf16.msra.mxu0 %v588
        %729 = vmatprep.subr.bf16.mxu0 %v593
        %730 = vmatpush1.bf16.msra.mxu0 %v592
        %731 = vmatprep.mubr.bf16.mxu0 %v335
        %732 = vmatmul.mubr.bf16.gmra.mrb[0].mxu0 %v334
        %v733 = vpop.f32.mrb[0].mxu0
        %v734 = vadd.f32 %v322, %v733
        %v735 = vpop.f32.mrb[0].mxu0
        %v736 = vadd.f32 %v326, %v735
        %v737 = vpop.f32.mrb[0].mxu0
        %v738 = vpop.f32.mrb[0].mxu0
        %739 = vdwg.mxu0
        %v740 = vld [vmem:[%s243] sm:$0xff]
        %v741 = vld [vmem:[%s243 + $0x8] sm:$0xff]
        %v742 = vld [vmem:[%s243 + $0x10] sm:$0xff]
        %v743 = vld [vmem:[%s243 + $0x18] sm:$0xff]
        %v744 = vadd.f32 %v693, %v740
        %v745 = vadd.f32 %v695, %v741
        %v746 = vadd.f32 %v734, %v742
        %v747 = vadd.f32 %v736, %v743
        %748 = vst [vmem:[%s229] sm:$0xff] %v744
        %749 = vst [vmem:[%s229 + $0x8] sm:$0xff] %v745
        %750 = vst [vmem:[%s229 + $0x10] sm:$0xff] %v746
        %751 = vst [vmem:[%s229 + $0x18] sm:$0xff] %v747
        %s752 = sand.u32 %s136, 1
        %s753 = scalar_lea.sflag [#allocation3], %s752
        %s754 = sand.u32 %s136, 1
        %s755 = smul.addr %s754, 32
        %s756 = scalar_lea.vmem [#allocation2], %s755
        // Predicated region
        $region37: #{forward.27} parent=35 // pred_check
          %p757 = pneg %p146
        $region38: #{forward.27} parent=35 // pred_check_branch
          %759 = sbr.rel (%p757) target = $region40
        $region39: #{forward.27} parent=35 // pred_region
          %s761 = ssub.s32 512, 512
          %762 = vsyncadd %s753, %s761
          %s763 = smul.addr %s23, 4
          %s764 = smul.addr %s22, 4
          %s765 = sadd.s32 %s763, %s764
          %s766 = smul.addr %s765, 128
          %s767 = scalar_lea.hbm %s4, %s766
          %s769 = sshll.u32 %s756, 4
          %s770 = int_to_ptr.vmem [resolvable:$true] %s769
          %772 = dma.vmem_to_hbm [thread:$0]  %s770, 512, %s767, %s753
        $region40: #{forward.27} parent=35 // pred_fallthru
          _
      $region36: #{forward.27} parent=5 // pred_fallthru
        _
      %p773 = scmp.le.s32.totalorder 2, %s13
      // Predicated region
      $region41: #{forward.27} parent=5 // pred_check
        %p774 = pneg %p773
      $region42: #{forward.27} parent=5 // pred_check_branch
        %776 = sbr.rel (%p774) target = $region44
      $region43: #{forward.27} parent=5 // pred_region
        %s777 = ssub.s32 %s13, 2
        // Predicated region
        $region45: #{forward.27} parent=43 // pred_check
          %p778 = pneg %p152
        $region46: #{forward.27} parent=43 // pred_check_branch
          %780 = sbr.rel (%p778) target = $region48
        $region47: #{forward.27} parent=43 // pred_region
          %s781 = sand.u32 %s137, 1
          %s782 = scalar_lea.sflag [#allocation3], %s781
          %s783 = sand.u32 %s137, 1
          %s784 = smul.addr %s783, 32
          %s785 = scalar_lea.vmem [#allocation2], %s784
          %786 = dma.done %s782, 512
        $region48: #{forward.27} parent=43 // pred_fallthru
          _
      $region44: #{forward.27} parent=5 // pred_fallthru
        _
    $region6: #{forward.27} parent=1 // loop_footer
      %s17 = sadd.s32 1, %s13
    $region7: #{forward.27} parent=1 // loop_footer_branch
      %12 = sbr.rel target = $region3
    $region8: #{forward.27} parent=1 // loop_exit
      _
    %787 = vsyncpa [#allocation3], 1
    %s788 = scalar_lea.sflag [#allocation3], 1
    %789 = vsyncpa %s788, 1

// kernel: forward.26
$region0: #{forward.26}
  #allocation0 [shape = 'u32[]', space=smem, size = 0x4, offset = 0x4, fixed_abs, tag = 'smem constant byte address 0x4 - core index']
  #allocation1 [shape = 'u32[144,128]{1,0:T(1,128)}', space=vmem, size = 0x12000, scoped, tag = 'internal scratch']
  #allocation2 [shape = 'f32[2,128]{1,0:T(2,128)}', space=vmem, size = 0x400, scoped, tag = 'scratch operand']
  #allocation3 [shape = 'f32[2,128]{1,0:T(2,128)}', space=vmem, size = 0x400, scoped, tag = 'scratch operand']
  %s0 = inlined_call_operand.vmem [shape: bf16[2,8,1024], index: 0, kind: input, shape index: {}]
  %s1 = inlined_call_operand.vmem [shape: bf16[2,128,512], index: 1, kind: input, shape index: {}]
  %s2 = inlined_call_operand.vmem [shape: bf16[2,8,256], index: 2, kind: output, shape index: {}]
  %s3 = sld [smem:[#allocation0]]
  $region113: #{forward.26} parent=0
    _
  %s5 = ssub.s32 1, %s3
  %s6 = scalar_select 0, %s5, %s3
  $region1: #{forward.26} parent=0
    #allocation4 [shape = 'u8[32768]{0}', space=vmem, size = 0x8000, scoped, tag = 'input window, operand 0']
    #allocation5 [shape = 'u8[8192]{0}', space=vmem, size = 0x2000, scoped, tag = 'output window, operand 0']
    loop: start=0, step=1, limit=4
    $region2: #{forward.26} parent=1 // loop_pre_header
      _
    $region3: #{forward.26} parent=1 // loop_header
      %s8 = sphi 0, %s12
      %p9 = scmp.ge.s32.totalorder %s8, 4
      %s15 = sphi 0, %s27
      %s16 = sphi 0, %s23
      %s17 = sphi 0, %s15
      %s18 = sphi 0, %s16
      %s19 = sphi 0, %s17
      %s20 = sphi 0, %s18
      %s38 = sphi 0, %s40
      %s41 = sphi 0, %s38
      %s42 = sphi 0, %s41
      %s58 = sphi 0, %s42
      %s64 = sphi 0, %s66
      %s67 = sphi 0, %s64
      %s68 = sphi 0, %s67
      %s84 = sphi 0, %s68
      %s98 = sphi 0, %s100
      %s101 = sphi 0, %s98
      %s102 = sphi 0, %s101
      %s118 = sphi 0, %s102
    $region4: #{forward.26} parent=1 // loop_header_branch
      %11 = sbr.rel (%p9) target = $region8
    $region5: #{forward.26} parent=1 // loop_body
      %s13 = ssub.s32 %s8, 1
      %s14 = ssub.s32 %s8, 2
      %s21 = sadd.s32 1, %s16
      %p22 = scmp.ge.s32.totalorder %s21, 1
      %s23 = scalar_select %p22, 0, %s21
      %s24 = sadd.s32 1, %s15
      %s25 = scalar_select %p22, %s24, %s15
      %p26 = scmp.ge.s32.totalorder %s25, 2
      %s27 = scalar_select %p26, 0, %s25
      %s28 = smul.u32 %s15, 2
      %s29 = ssub.s32 1, %s28
      %s30 = smul.u32 %s29, %s16
      %s31 = smul.u32 %s27, 2
      %s32 = ssub.s32 1, %s31
      %s33 = smul.u32 %s32, %s23
      %s34 = ssub.s32 %s30, %s33
      %s35 = ssub.s32 %s15, %s27
      %s36 = sor.u32 %s34, %s35
      %p37 = scmp.eq.s32.totalorder %s36, 0
      %s39 = sadd.s32 %s38, 1
      %s40 = scalar_select %p37, %s38, %s39
      %p43 = pneg %p37
      %p44 = scmp.eq.s32.totalorder %s8, 1
      %p45 = por %p43, %p44
      %p46 = scmp.ne.s32.totalorder %s38, %s41
      %p47 = scmp.eq.s32.totalorder %s8, 0
      %p48 = por %p46, %p47
      %p49 = scmp.ne.s32.totalorder %s38, %s41
      %p50 = scmp.eq.s32.totalorder %s13, 1
      %p51 = por %p49, %p50
      %p52 = scmp.ne.s32.totalorder %s41, %s42
      %p53 = scmp.eq.s32.totalorder %s13, 0
      %p54 = por %p52, %p53
      %p55 = scmp.ne.s32.totalorder %s41, %s42
      %p56 = scmp.eq.s32.totalorder %s14, 1
      %p57 = por %p55, %p56
      %p59 = scmp.ne.s32.totalorder %s42, %s58
      %p60 = scmp.eq.s32.totalorder %s14, 0
      %p61 = por %p59, %p60
      %s62 = ssub.s32 %s15, %s27
      %p63 = scmp.eq.s32.totalorder %s62, 0
      %s65 = sadd.s32 %s64, 1
      %s66 = scalar_select %p63, %s64, %s65
      %p69 = pneg %p63
      %p70 = scmp.eq.s32.totalorder %s8, 1
      %p71 = por %p69, %p70
      %p72 = scmp.ne.s32.totalorder %s64, %s67
      %p73 = scmp.eq.s32.totalorder %s8, 0
      %p74 = por %p72, %p73
      %p75 = scmp.ne.s32.totalorder %s64, %s67
      %p76 = scmp.eq.s32.totalorder %s13, 1
      %p77 = por %p75, %p76
      %p78 = scmp.ne.s32.totalorder %s67, %s68
      %p79 = scmp.eq.s32.totalorder %s13, 0
      %p80 = por %p78, %p79
      %p81 = scmp.ne.s32.totalorder %s67, %s68
      %p82 = scmp.eq.s32.totalorder %s14, 1
      %p83 = por %p81, %p82
      %p85 = scmp.ne.s32.totalorder %s68, %s84
      %p86 = scmp.eq.s32.totalorder %s14, 0
      %p87 = por %p85, %p86
      %s88 = smul.u32 %s15, 2
      %s89 = ssub.s32 1, %s88
      %s90 = smul.u32 %s89, %s16
      %s91 = smul.u32 %s27, 2
      %s92 = ssub.s32 1, %s91
      %s93 = smul.u32 %s92, %s23
      %s94 = ssub.s32 %s90, %s93
      %s95 = ssub.s32 %s15, %s27
      %s96 = sor.u32 %s94, %s95
      %p97 = scmp.eq.s32.totalorder %s96, 0
      %s99 = sadd.s32 %s98, 1
      %s100 = scalar_select %p97, %s98, %s99
      %p103 = pneg %p97
      %p104 = scmp.eq.s32.totalorder %s8, 1
      %p105 = por %p103, %p104
      %p106 = scmp.ne.s32.totalorder %s98, %s101
      %p107 = scmp.eq.s32.totalorder %s8, 0
      %p108 = por %p106, %p107
      %p109 = scmp.ne.s32.totalorder %s98, %s101
      %p110 = scmp.eq.s32.totalorder %s13, 1
      %p111 = por %p109, %p110
      %p112 = scmp.ne.s32.totalorder %s101, %s102
      %p113 = scmp.eq.s32.totalorder %s13, 0
      %p114 = por %p112, %p113
      %p115 = scmp.ne.s32.totalorder %s101, %s102
      %p116 = scmp.eq.s32.totalorder %s14, 1
      %p117 = por %p115, %p116
      %p119 = scmp.ne.s32.totalorder %s102, %s118
      %p120 = scmp.eq.s32.totalorder %s14, 0
      %p121 = por %p119, %p120
      %p122 = scmp.le.s32.totalorder 1, %s8
      %p123 = scmp.lt.s32.totalorder %s8, 3
      %p124 = pnand %p122, %p123
      %p125 = pneg %p124
      // Predicated region
      $region9: #{forward.26} parent=5 // pred_check
        _
      $region10: #{forward.26} parent=5 // pred_check_branch
        %127 = sbr.rel (%p124) target = $region12
      $region11: #{forward.26} parent=5 // pred_region
        %s128 = ssub.s32 %s8, 1
      $region12: #{forward.26} parent=5 // pred_fallthru
        _
      %p129 = scmp.lt.s32.totalorder %s8, 2
      // Predicated region
      $region13: #{forward.26} parent=5 // pred_check
        %p130 = pneg %p129
      $region14: #{forward.26} parent=5 // pred_check_branch
        %132 = sbr.rel (%p130) target = $region16
      $region15: #{forward.26} parent=5 // pred_region
        // Predicated region
        $region17: #{forward.26} parent=15 // pred_check
          %p133 = pneg %p48
        $region18: #{forward.26} parent=15 // pred_check_branch
          %135 = sbr.rel (%p133) target = $region20
        $region19: #{forward.26} parent=15 // pred_region
          %s136 = sand.u32 %s38, 1
          %s137 = sand.u32 %s38, 1
          %s138 = smul.addr %s137, 32
          %s139 = scalar_lea.vmem [#allocation4], %s138
          %s140 = smul.u32 %s15, 2
          %s141 = ssub.s32 1, %s140
          %s142 = smul.u32 %s141, %s16
          %s143 = smul.u32 4, %s15
          %s144 = smul.addr %s142, 8
          %s145 = sadd.s32 %s143, %s144
          %s146 = smul.addr %s145, 4
          %s147 = scalar_lea.vmem %s0, %s146
          // Predicated region
          $region21: #{forward.26} parent=19 // pred_check
            _
          $region22: #{forward.26} parent=19 // pred_check_branch
            %149 = sbr.rel (0) target = $region24
          $region23: #{forward.26} parent=19 // pred_region
            // Predicated region
            $region25: #{forward.26} parent=23 // pred_check
              _
            $region26: #{forward.26} parent=23 // pred_check_branch
              %151 = sbr.rel (0) target = $region28
            $region27: #{forward.26} parent=23 // pred_region
              loop: start=0, step=1, limit=1
              $region29: #{forward.26} parent=27 // loop_pre_header
                _
              $region30: #{forward.26} parent=27 // loop_header
                %s153 = sphi 0, %s157
                %p154 = scmp.ge.s32.totalorder %s153, 1
                %s158 = sphi %s147, %s147
                %s159 = sphi %s139, %s139
              $region31: #{forward.26} parent=27 // loop_header_branch
                %156 = sbr.rel (%p154) target = $region35
              $region32: #{forward.26} parent=27 // loop_body
                %v160 = vld [vmem:[%s158] sm:$0xff]
                %161 = vst [vmem:[%s159] sm:$0xff] %v160
                %v162 = vld [vmem:[%s158 + $0x8] sm:$0xff]
                %163 = vst [vmem:[%s159 + $0x8] sm:$0xff] %v162
                %v164 = vld [vmem:[%s158 + $0x20] sm:$0xff]
                %165 = vst [vmem:[%s159 + $0x10] sm:$0xff] %v164
                %v166 = vld [vmem:[%s158 + $0x28] sm:$0xff]
                %167 = vst [vmem:[%s159 + $0x18] sm:$0xff] %v166
              $region33: #{forward.26} parent=27 // loop_footer
                %s157 = sadd.s32 1, %s153
              $region34: #{forward.26} parent=27 // loop_footer_branch
                %152 = sbr.rel target = $region30
              $region35: #{forward.26} parent=27 // loop_exit
                _
            $region28: #{forward.26} parent=23 // pred_fallthru
              _
            // Predicated region
            $region36: #{forward.26} parent=23 // pred_check
              _
            $region37: #{forward.26} parent=23 // pred_check_branch
              %169 = sbr.rel target = $region39
            $region38: #{forward.26} parent=23 // pred_region
              _
            $region39: #{forward.26} parent=23 // pred_fallthru
              _
          $region24: #{forward.26} parent=19 // pred_fallthru
            _
          %170 = vnop
        $region20: #{forward.26} parent=15 // pred_fallthru
          _
        // Predicated region
        $region40: #{forward.26} parent=15 // pred_check
          %p171 = pneg %p74
        $region41: #{forward.26} parent=15 // pred_check_branch
          %173 = sbr.rel (%p171) target = $region43
        $region42: #{forward.26} parent=15 // pred_region
          %p174 = scmp.lt.s32.totalorder %s15, 1
          %s175 = scalar_select %p174, %s15, 1
          %s176 = smul.addr %s175, 64
          %s177 = smul.addr %s176, 4
          %s178 = scalar_lea.vmem %s1, %s177
        $region43: #{forward.26} parent=15 // pred_fallthru
          _
      $region16: #{forward.26} parent=5 // pred_fallthru
        _
      %p179 = scmp.le.s32.totalorder 1, %s8
      %p180 = scmp.lt.s32.totalorder %s8, 3
      %p181 = pnand %p179, %p180
      %p182 = pneg %p181
      // Predicated region
      $region44: #{forward.26} parent=5 // pred_check
        _
      $region45: #{forward.26} parent=5 // pred_check_branch
        %184 = sbr.rel (%p181) target = $region47
      $region46: #{forward.26} parent=5 // pred_region
        %s185 = ssub.s32 %s8, 1
        %s186 = sand.u32 %s41, 1
        %s187 = sand.u32 %s41, 1
        %s188 = smul.addr %s187, 32
        %s189 = scalar_lea.vmem [#allocation4], %s188
        // Predicated region
        $region48: #{forward.26} parent=46 // pred_check
          %p190 = pneg %p54
        $region49: #{forward.26} parent=46 // pred_check_branch
          %192 = sbr.rel (%p190) target = $region51
        $region50: #{forward.26} parent=46 // pred_region
          _
        $region51: #{forward.26} parent=46 // pred_fallthru
          _
        %s193 = sand.u32 %s41, 1
        %s194 = sand.u32 %s41, 1
        %s195 = smul.addr %s194, 32
        %s196 = scalar_lea.vmem [#allocation4], %s195
        %p197 = pneg %p54
        %p198 = pneg %p51
        %p199 = scmp.lt.s32.totalorder %s17, 1
        %s200 = scalar_select %p199, %s17, 1
        %s201 = smul.addr %s200, 64
        %s202 = smul.addr %s201, 4
        %s203 = scalar_lea.vmem %s1, %s202
        %p204 = pneg %p80
        %p205 = pneg %p77
        %p206 = pneg %p114
        %p207 = pneg %p111
        %s208 = sand.u32 %s101, 1
        %s209 = sand.u32 %s101, 1
        %s210 = smul.addr %s209, 8
        %s211 = scalar_lea.vmem [#allocation5], %s210
        %s212 = smul.u32 %s17, 2
        %s213 = ssub.s32 1, %s212
        %s214 = smul.u32 %s213, %s18
        %s215 = smul.u32 4, %s17
        %p216 = scmp.lt.s32.totalorder %s17, 1
        %s217 = scalar_select %p216, %s17, 1
        %s218 = smul.addr %s217, 64
        %s219 = smul.addr %s218, 4
        %s220 = scalar_lea.vmem %s1, %s219
        %s221 = smul.u32 %s17, 2
        %s222 = ssub.s32 1, %s221
        %s223 = smul.u32 %s222, %s18
        %p225 = scmp.eq.s32.totalorder %s18, 0
        // Predicated region
        $region52: #{forward.26} parent=46 // pred_check
          %p226 = pneg %p225
        $region53: #{forward.26} parent=46 // pred_check_branch
          %228 = sbr.rel (%p226) target = $region55
        $region54: #{forward.26} parent=46 // pred_region
          %229 = vst [vmem:[#allocation2] sm:$0x3] 0.0
          %230 = vst [vmem:[#allocation3] sm:$0x3] 0.0
        $region55: #{forward.26} parent=46 // pred_fallthru
          _
        %v231 = vld [vmem:[%s220] sm:$0xff]
        %v232 = vld [vmem:[%s220 + $0x8] sm:$0xff]
        %v233 = vld [vmem:[%s220 + $0x10] sm:$0xff]
        %v234 = vld [vmem:[%s220 + $0x18] sm:$0xff]
        %v235 = vld [vmem:[%s220 + $0x20] sm:$0xff]
        %v236 = vld [vmem:[%s220 + $0x28] sm:$0xff]
        %v237 = vld [vmem:[%s220 + $0x30] sm:$0xff]
        %v238 = vld [vmem:[%s220 + $0x38] sm:$0xff]
        %v239 = vld [vmem:[%s220 + $0x40] sm:$0xff]
        %v240 = vld [vmem:[%s220 + $0x48] sm:$0xff]
        %v241 = vld [vmem:[%s220 + $0x50] sm:$0xff]
        %v242 = vld [vmem:[%s220 + $0x58] sm:$0xff]
        %v243 = vld [vmem:[%s220 + $0x60] sm:$0xff]
        %v244 = vld [vmem:[%s220 + $0x68] sm:$0xff]
        %v245 = vld [vmem:[%s220 + $0x70] sm:$0xff]
        %v246 = vld [vmem:[%s220 + $0x78] sm:$0xff]
        %v247 = vld [vmem:[%s220 + $0x80] sm:$0xff]
        %v248 = vld [vmem:[%s220 + $0x88] sm:$0xff]
        %v249 = vld [vmem:[%s220 + $0x90] sm:$0xff]
        %v250 = vld [vmem:[%s220 + $0x98] sm:$0xff]
        %v251 = vld [vmem:[%s220 + $0xa0] sm:$0xff]
        %v252 = vld [vmem:[%s220 + $0xa8] sm:$0xff]
        %v253 = vld [vmem:[%s220 + $0xb0] sm:$0xff]
        %v254 = vld [vmem:[%s220 + $0xb8] sm:$0xff]
        %v255 = vld [vmem:[%s220 + $0xc0] sm:$0xff]
        %v256 = vld [vmem:[%s220 + $0xc8] sm:$0xff]
        %v257 = vld [vmem:[%s220 + $0xd0] sm:$0xff]
        %v258 = vld [vmem:[%s220 + $0xd8] sm:$0xff]
        %v259 = vld [vmem:[%s220 + $0xe0] sm:$0xff]
        %v260 = vld [vmem:[%s220 + $0xe8] sm:$0xff]
        %v261 = vld [vmem:[%s220 + $0xf0] sm:$0xff]
        %v262 = vld [vmem:[%s220 + $0xf8] sm:$0xff]
        %p263 = scmp.eq.s32.totalorder %s17, 0
        // Predicated region
        $region56: #{forward.26} parent=46 // pred_check
          %p264 = pneg %p263
        $region57: #{forward.26} parent=46 // pred_check_branch
          %266 = sbr.rel (%p264) target = $region59
        $region58: #{forward.26} parent=46 // pred_region
          %v267 = vld [vmem:[#allocation2] sm:$0x3]
          %v268 = vld [vmem:[#allocation3] sm:$0x3]
          %v269 = vld [vmem:[%s189] sm:$0x11]
          %v270 = vld [vmem:[%s189 + $0x8] sm:$0x11]
          %v271 = vld [vmem:[%s189 + $0x10] sm:$0x11]
          %v272 = vld [vmem:[%s189 + $0x18] sm:$0x11]
          %v273 = vunpack.c.l.bf16 %v269
          %v274 = vunpack.c.h.bf16 %v269
          %v275 = vunpack.c.l.bf16 %v270
          %v276 = vunpack.c.h.bf16 %v270
          %v277 = vunpack.c.l.bf16 %v271
          %v278 = vunpack.c.h.bf16 %v271
          %v279 = vunpack.c.l.bf16 %v272
          %v280 = vunpack.c.h.bf16 %v272
          %v281 = vpack.c.bf16 %v267, %v267
          %v314 = vunpack.c.l.b16 %v231
          %v315 = vunpack.c.h.b16 %v231
          %v316 = vunpack.c.l.b16 %v232
          %v317 = vunpack.c.h.b16 %v232
          %v318 = vunpack.c.l.b16 %v233
          %v319 = vunpack.c.h.b16 %v233
          %v320 = vunpack.c.l.b16 %v234
          %v321 = vunpack.c.h.b16 %v234
          %v322 = vunpack.c.l.b16 %v235
          %v323 = vunpack.c.h.b16 %v235
          %v324 = vunpack.c.l.b16 %v236
          %v325 = vunpack.c.h.b16 %v236
          %v326 = vunpack.c.l.b16 %v237
          %v327 = vunpack.c.h.b16 %v237
          %v328 = vunpack.c.l.b16 %v238
          %v329 = vunpack.c.h.b16 %v238
          %v330 = vunpack.c.l.b16 %v239
          %v331 = vunpack.c.h.b16 %v239
          %v332 = vunpack.c.l.b16 %v240
          %v333 = vunpack.c.h.b16 %v240
          %v334 = vunpack.c.l.b16 %v241
          %v335 = vunpack.c.h.b16 %v241
          %v336 = vunpack.c.l.b16 %v242
          %v337 = vunpack.c.h.b16 %v242
          %v338 = vunpack.c.l.b16 %v243
          %v339 = vunpack.c.h.b16 %v243
          %v340 = vunpack.c.l.b16 %v244
          %v341 = vunpack.c.h.b16 %v244
          %v342 = vunpack.c.l.b16 %v245
          %v343 = vunpack.c.h.b16 %v245
          %v344 = vunpack.c.l.b16 %v246
          %v345 = vunpack.c.h.b16 %v246
          %v346 = vunpack.c.l.b16 %v247
          %v347 = vunpack.c.h.b16 %v247
          %v348 = vunpack.c.l.b16 %v248
          %v349 = vunpack.c.h.b16 %v248
          %v350 = vunpack.c.l.b16 %v249
          %v351 = vunpack.c.h.b16 %v249
          %v352 = vunpack.c.l.b16 %v250
          %v353 = vunpack.c.h.b16 %v250
          %v354 = vunpack.c.l.b16 %v251
          %v355 = vunpack.c.h.b16 %v251
          %v356 = vunpack.c.l.b16 %v252
          %v357 = vunpack.c.h.b16 %v252
          %v358 = vunpack.c.l.b16 %v253
          %v359 = vunpack.c.h.b16 %v253
          %v360 = vunpack.c.l.b16 %v254
          %v361 = vunpack.c.h.b16 %v254
          %v362 = vunpack.c.l.b16 %v255
          %v363 = vunpack.c.h.b16 %v255
          %v364 = vunpack.c.l.b16 %v256
          %v365 = vunpack.c.h.b16 %v256
          %v366 = vunpack.c.l.b16 %v257
          %v367 = vunpack.c.h.b16 %v257
          %v368 = vunpack.c.l.b16 %v258
          %v369 = vunpack.c.h.b16 %v258
          %v370 = vunpack.c.l.b16 %v259
          %v371 = vunpack.c.h.b16 %v259
          %v372 = vunpack.c.l.b16 %v260
          %v373 = vunpack.c.h.b16 %v260
          %v374 = vunpack.c.l.b16 %v261
          %v375 = vunpack.c.h.b16 %v261
          %v376 = vunpack.c.l.b16 %v262
          %v377 = vunpack.c.h.b16 %v262
          %v378 = vpack.c.b16 %v318, %v314
          %v379 = vpack.c.b16 %v319, %v315
          %v380 = vpack.c.b16 %v320, %v316
          %v381 = vpack.c.b16 %v321, %v317
          %v382 = vpack.c.b16 %v326, %v322
          %v383 = vpack.c.b16 %v327, %v323
          %v384 = vpack.c.b16 %v328, %v324
          %v385 = vpack.c.b16 %v329, %v325
          %v386 = vpack.c.b16 %v334, %v330
          %v387 = vpack.c.b16 %v335, %v331
          %v388 = vpack.c.b16 %v336, %v332
          %v389 = vpack.c.b16 %v337, %v333
          %v390 = vpack.c.b16 %v342, %v338
          %v391 = vpack.c.b16 %v343, %v339
          %v392 = vpack.c.b16 %v344, %v340
          %v393 = vpack.c.b16 %v345, %v341
          %v394 = vpack.c.b16 %v350, %v346
          %v395 = vpack.c.b16 %v351, %v347
          %v396 = vpack.c.b16 %v352, %v348
          %v397 = vpack.c.b16 %v353, %v349
          %v398 = vpack.c.b16 %v358, %v354
          %v399 = vpack.c.b16 %v359, %v355
          %v400 = vpack.c.b16 %v360, %v356
          %v401 = vpack.c.b16 %v361, %v357
          %v402 = vpack.c.b16 %v366, %v362
          %v403 = vpack.c.b16 %v367, %v363
          %v404 = vpack.c.b16 %v368, %v364
          %v405 = vpack.c.b16 %v369, %v365
          %v406 = vpack.c.b16 %v374, %v370
          %v407 = vpack.c.b16 %v375, %v371
          %v408 = vpack.c.b16 %v376, %v372
          %v409 = vpack.c.b16 %v377, %v373
          %442 = vmatprep.subr.bf16.mxu0 %v379
          %443 = vmatpush1.bf16.msra.mxu0 %v378
          %444 = vmatprep.subr.bf16.mxu0 %v383
          %445 = vmatpush1.bf16.msra.mxu0 %v382
          %446 = vmatprep.subr.bf16.mxu0 %v387
          %447 = vmatpush1.bf16.msra.mxu0 %v386
          %448 = vmatprep.subr.bf16.mxu0 %v391
          %449 = vmatpush1.bf16.msra.mxu0 %v390
          %450 = vmatprep.subr.bf16.mxu0 %v395
          %451 = vmatpush1.bf16.msra.mxu0 %v394
          %452 = vmatprep.subr.bf16.mxu0 %v399
          %453 = vmatpush1.bf16.msra.mxu0 %v398
          %454 = vmatprep.subr.bf16.mxu0 %v403
          %455 = vmatpush1.bf16.msra.mxu0 %v402
          %456 = vmatprep.subr.bf16.mxu0 %v407
          %457 = vmatpush1.bf16.msra.mxu0 %v406
          %458 = vmatprep.subr.bf16.mxu0 0
          %459 = vmatpush1.bf16.msra.mxu0 0
          %460 = vmatprep.subr.bf16.mxu0 0
          %461 = vmatpush1.bf16.msra.mxu0 0
          %462 = vmatprep.subr.bf16.mxu0 0
          %463 = vmatpush1.bf16.msra.mxu0 0
          %464 = vmatprep.subr.bf16.mxu0 0
          %465 = vmatpush1.bf16.msra.mxu0 0
          %466 = vmatprep.subr.bf16.mxu0 0
          %467 = vmatpush1.bf16.msra.mxu0 0
          %468 = vmatprep.subr.bf16.mxu0 0
          %469 = vmatpush1.bf16.msra.mxu0 0
          %470 = vmatprep.subr.bf16.mxu0 0
          %471 = vmatpush1.bf16.msra.mxu0 0
          %472 = vmatprep.subr.bf16.mxu0 0
          %473 = vmatpush1.bf16.msra.mxu0 0
          %474 = vmatprep.mubr.bf16.mxu0 0
          %475 = vmatmul.mubr.bf16.gmra.mrb[0].mxu0 %v281
          %v476 = vpop.f32.mrb[0].mxu0
          %v477 = vadd.f32 0.0, %v476
          %v478 = vpop.f32.mrb[0].mxu0
          %v479 = vadd.f32 0.0, %v478
          %v480 = vpop.f32.mrb[0].mxu0
          %v481 = vpop.f32.mrb[0].mxu0
          %482 = vdwg.mxu0
          %483 = vmatprep.subr.bf16.mxu0 %v381
          %484 = vmatpush1.bf16.msra.mxu0 %v380
          %485 = vmatprep.subr.bf16.mxu0 %v385
          %486 = vmatpush1.bf16.msra.mxu0 %v384
          %487 = vmatprep.subr.bf16.mxu0 %v389
          %488 = vmatpush1.bf16.msra.mxu0 %v388
          %489 = vmatprep.subr.bf16.mxu0 %v393
          %490 = vmatpush1.bf16.msra.mxu0 %v392
          %491 = vmatprep.subr.bf16.mxu0 %v397
          %492 = vmatpush1.bf16.msra.mxu0 %v396
          %493 = vmatprep.subr.bf16.mxu0 %v401
          %494 = vmatpush1.bf16.msra.mxu0 %v400
          %495 = vmatprep.subr.bf16.mxu0 %v405
          %496 = vmatpush1.bf16.msra.mxu0 %v404
          %497 = vmatprep.subr.bf16.mxu0 %v409
          %498 = vmatpush1.bf16.msra.mxu0 %v408
          %499 = vmatprep.subr.bf16.mxu0 0
          %500 = vmatpush1.bf16.msra.mxu0 0
          %501 = vmatprep.subr.bf16.mxu0 0
          %502 = vmatpush1.bf16.msra.mxu0 0
          %503 = vmatprep.subr.bf16.mxu0 0
          %504 = vmatpush1.bf16.msra.mxu0 0
          %505 = vmatprep.subr.bf16.mxu0 0
          %506 = vmatpush1.bf16.msra.mxu0 0
          %507 = vmatprep.subr.bf16.mxu0 0
          %508 = vmatpush1.bf16.msra.mxu0 0
          %509 = vmatprep.subr.bf16.mxu0 0
          %510 = vmatpush1.bf16.msra.mxu0 0
          %511 = vmatprep.subr.bf16.mxu0 0
          %512 = vmatpush1.bf16.msra.mxu0 0
          %513 = vmatprep.subr.bf16.mxu0 0
          %514 = vmatpush1.bf16.msra.mxu0 0
          %515 = vmatprep.mubr.bf16.mxu0 0
          %516 = vmatmul.mubr.bf16.gmra.mrb[0].mxu0 %v281
          %v517 = vpop.f32.mrb[0].mxu0
          %v518 = vadd.f32 0.0, %v517
          %v519 = vpop.f32.mrb[0].mxu0
          %v520 = vadd.f32 0.0, %v519
          %v521 = vpop.f32.mrb[0].mxu0
          %v522 = vpop.f32.mrb[0].mxu0
          %523 = vdwg.mxu0
          %v528 = vrot.slane %v477, 1
          %v529 = vrot.slane %v479, 1
          %v530 = vrot.slane %v518, 1
          %v531 = vrot.slane %v520, 1
          %v540 = vadd.f32 %v273, %v477
          %v541 = vadd.f32 %v274, %v479
          %v542 = vadd.f32 %v275, %v518
          %v543 = vadd.f32 %v276, %v520
          %v544 = vadd.f32 %v277, %v528
          %v545 = vadd.f32 %v278, %v529
          %v546 = vadd.f32 %v279, %v530
          %v547 = vadd.f32 %v280, %v531
          %v548 = vxor.u32 %v540, 2147483648
          %v549 = vxor.u32 %v544, 2147483648
          %v550 = vmul.f32 %v548, 1.442695
          %v551 = vpow.pop %v550
          %v552 = vmul.f32 %v549, 1.442695
          %v553 = vpow.pop %v552
          %v554 = vadd.f32 %v551, 1.0
          %v555 = vadd.f32 %v553, 1.0
          %v556 = vrcp.pop %v554
          %v557 = vmul.f32 1.0, %v556
          %v558 = vrcp.pop %v555
          %v559 = vmul.f32 1.0, %v558
          %v560 = vxor.u32 %v541, 2147483648
          %v561 = vxor.u32 %v545, 2147483648
          %v562 = vmul.f32 %v560, 1.442695
          %v563 = vpow.pop %v562
          %v564 = vmul.f32 %v561, 1.442695
          %v565 = vpow.pop %v564
          %v566 = vadd.f32 %v563, 1.0
          %v567 = vadd.f32 %v565, 1.0
          %v568 = vrcp.pop %v566
          %v569 = vmul.f32 1.0, %v568
          %v570 = vrcp.pop %v567
          %v571 = vmul.f32 1.0, %v570
          %v572 = vtanh.pop %v542
          %v573 = vtanh.pop %v546
          %v574 = vxor.u32 %v543, 2147483648
          %v575 = vxor.u32 %v547, 2147483648
          %v576 = vmul.f32 %v574, 1.442695
          %v577 = vpow.pop %v576
          %v578 = vmul.f32 %v575, 1.442695
          %v579 = vpow.pop %v578
          %v580 = vadd.f32 %v577, 1.0
          %v581 = vadd.f32 %v579, 1.0
          %v582 = vrcp.pop %v580
          %v583 = vmul.f32 1.0, %v582
          %v584 = vrcp.pop %v581
          %v585 = vmul.f32 1.0, %v584
          %v587 = vrot.slane %v268, 1
          %v590 = vmul.f32 %v569, %v268
          %v591 = vmul.f32 %v571, %v587
          %v592 = vmul.f32 %v557, %v572
          %v593 = vmul.f32 %v559, %v573
          %v594 = vadd.f32 %v590, %v592
          %v595 = vadd.f32 %v591, %v593
          %v596 = vtanh.pop %v594
          %v597 = vtanh.pop %v595
          %v598 = vmul.f32 %v583, %v596
          %v599 = vmul.f32 %v585, %v597
          %v600 = vpack.c.bf16 %v598, %v598
          %v601 = vpack.c.bf16 %v599, %v599
          %vm602 = vcmask 1040384
          %vm603 = vsmask.f32 256
          %vm604 = vmand %vm602, %vm603
          %v605 = vld [vmem:[%s211] sm:$0x1]
          %v606 = vsel %vm604, %v600, %v605
          %607 = vst [vmem:[%s211] sm:$0x1] %v606
          %v608 = vld [vmem:[%s211 + $0x4] sm:$0x1]
          %v609 = vsel %vm604, %v601, %v608
          %610 = vst [vmem:[%s211 + $0x4] sm:$0x1] %v609
          %v611 = vld [vmem:[%s189] sm:$0x11]
          %v612 = vld [vmem:[%s189 + $0x8] sm:$0x11]
          %v613 = vld [vmem:[%s189 + $0x10] sm:$0x11]
          %v614 = vld [vmem:[%s189 + $0x18] sm:$0x11]
          %v615 = vunpack.c.l.bf16 %v611
          %v616 = vunpack.c.h.bf16 %v611
          %v617 = vunpack.c.l.bf16 %v612
          %v618 = vunpack.c.h.bf16 %v612
          %v619 = vunpack.c.l.bf16 %v613
          %v620 = vunpack.c.h.bf16 %v613
          %v621 = vunpack.c.l.bf16 %v614
          %v622 = vunpack.c.h.bf16 %v614
          %v625 = vunpack.c.l.b16 %v600
          %v626 = vunpack.c.l.b16 %v601
          %v627 = vrot.slane %v626, 7
          %vm628 = vcmask 1041409
          %v629 = vsel %vm628, %v627, %v625
          %v630 = vpack.c.b16 %v629, %v629
          %632 = vmatprep.subr.bf16.mxu0 %v379
          %633 = vmatpush1.bf16.msra.mxu0 %v378
          %634 = vmatprep.subr.bf16.mxu0 %v383
          %635 = vmatpush1.bf16.msra.mxu0 %v382
          %636 = vmatprep.subr.bf16.mxu0 %v387
          %637 = vmatpush1.bf16.msra.mxu0 %v386
          %638 = vmatprep.subr.bf16.mxu0 %v391
          %639 = vmatpush1.bf16.msra.mxu0 %v390
          %640 = vmatprep.subr.bf16.mxu0 %v395
          %641 = vmatpush1.bf16.msra.mxu0 %v394
          %642 = vmatprep.subr.bf16.mxu0 %v399
          %643 = vmatpush1.bf16.msra.mxu0 %v398
          %644 = vmatprep.subr.bf16.mxu0 %v403
          %645 = vmatpush1.bf16.msra.mxu0 %v402
          %646 = vmatprep.subr.bf16.mxu0 %v407
          %647 = vmatpush1.bf16.msra.mxu0 %v406
          %648 = vmatprep.subr.bf16.mxu0 0
          %649 = vmatpush1.bf16.msra.mxu0 0
          %650 = vmatprep.subr.bf16.mxu0 0
          %651 = vmatpush1.bf16.msra.mxu0 0
          %652 = vmatprep.subr.bf16.mxu0 0
          %653 = vmatpush1.bf16.msra.mxu0 0
          %654 = vmatprep.subr.bf16.mxu0 0
          %655 = vmatpush1.bf16.msra.mxu0 0
          %656 = vmatprep.subr.bf16.mxu0 0
          %657 = vmatpush1.bf16.msra.mxu0 0
          %658 = vmatprep.subr.bf16.mxu0 0
          %659 = vmatpush1.bf16.msra.mxu0 0
          %660 = vmatprep.subr.bf16.mxu0 0
          %661 = vmatpush1.bf16.msra.mxu0 0
          %662 = vmatprep.subr.bf16.mxu0 0
          %663 = vmatpush1.bf16.msra.mxu0 0
          %664 = vmatprep.mubr.bf16.mxu0 0
          %665 = vmatmul.mubr.bf16.gmra.mrb[0].mxu0 %v630
          %v666 = vpop.f32.mrb[0].mxu0
          %v667 = vadd.f32 0.0, %v666
          %v668 = vpop.f32.mrb[0].mxu0
          %v669 = vadd.f32 0.0, %v668
          %v670 = vpop.f32.mrb[0].mxu0
          %v671 = vpop.f32.mrb[0].mxu0
          %672 = vdwg.mxu0
          %673 = vmatprep.subr.bf16.mxu0 %v381
          %674 = vmatpush1.bf16.msra.mxu0 %v380
          %675 = vmatprep.subr.bf16.mxu0 %v385
          %676 = vmatpush1.bf16.msra.mxu0 %v384
          %677 = vmatprep.subr.bf16.mxu0 %v389
          %678 = vmatpush1.bf16.msra.mxu0 %v388
          %679 = vmatprep.subr.bf16.mxu0 %v393
          %680 = vmatpush1.bf16.msra.mxu0 %v392
          %681 = vmatprep.subr.bf16.mxu0 %v397
          %682 = vmatpush1.bf16.msra.mxu0 %v396
          %683 = vmatprep.subr.bf16.mxu0 %v401
          %684 = vmatpush1.bf16.msra.mxu0 %v400
          %685 = vmatprep.subr.bf16.mxu0 %v405
          %686 = vmatpush1.bf16.msra.mxu0 %v404
          %687 = vmatprep.subr.bf16.mxu0 %v409
          %688 = vmatpush1.bf16.msra.mxu0 %v408
          %689 = vmatprep.subr.bf16.mxu0 0
          %690 = vmatpush1.bf16.msra.mxu0 0
          %691 = vmatprep.subr.bf16.mxu0 0
          %692 = vmatpush1.bf16.msra.mxu0 0
          %693 = vmatprep.subr.bf16.mxu0 0
          %694 = vmatpush1.bf16.msra.mxu0 0
          %695 = vmatprep.subr.bf16.mxu0 0
          %696 = vmatpush1.bf16.msra.mxu0 0
          %697 = vmatprep.subr.bf16.mxu0 0
          %698 = vmatpush1.bf16.msra.mxu0 0
          %699 = vmatprep.subr.bf16.mxu0 0
          %700 = vmatpush1.bf16.msra.mxu0 0
          %701 = vmatprep.subr.bf16.mxu0 0
          %702 = vmatpush1.bf16.msra.mxu0 0
          %703 = vmatprep.subr.bf16.mxu0 0
          %704 = vmatpush1.bf16.msra.mxu0 0
          %705 = vmatprep.mubr.bf16.mxu0 0
          %706 = vmatmul.mubr.bf16.gmra.mrb[0].mxu0 %v630
          %v707 = vpop.f32.mrb[0].mxu0
          %v708 = vadd.f32 0.0, %v707
          %v709 = vpop.f32.mrb[0].mxu0
          %v710 = vadd.f32 0.0, %v709
          %v711 = vpop.f32.mrb[0].mxu0
          %v712 = vpop.f32.mrb[0].mxu0
          %713 = vdwg.mxu0
          %v718 = vrot.slane %v667, 7
          %v719 = vrot.slane %v669, 7
          %v720 = vrot.slane %v708, 7
          %v721 = vrot.slane %v710, 7
          %v730 = vadd.f32 %v615, %v718
          %v731 = vadd.f32 %v616, %v719
          %v732 = vadd.f32 %v617, %v720
          %v733 = vadd.f32 %v618, %v721
          %v734 = vadd.f32 %v619, %v667
          %v735 = vadd.f32 %v620, %v669
          %v736 = vadd.f32 %v621, %v708
          %v737 = vadd.f32 %v622, %v710
          %v738 = vxor.u32 %v730, 2147483648
          %v739 = vxor.u32 %v734, 2147483648
          %v740 = vmul.f32 %v738, 1.442695
          %v741 = vpow.pop %v740
          %v742 = vmul.f32 %v739, 1.442695
          %v743 = vpow.pop %v742
          %v744 = vadd.f32 %v741, 1.0
          %v745 = vadd.f32 %v743, 1.0
          %v746 = vrcp.pop %v744
          %v747 = vmul.f32 1.0, %v746
          %v748 = vrcp.pop %v745
          %v749 = vmul.f32 1.0, %v748
          %v750 = vxor.u32 %v731, 2147483648
          %v751 = vxor.u32 %v735, 2147483648
          %v752 = vmul.f32 %v750, 1.442695
          %v753 = vpow.pop %v752
          %v754 = vmul.f32 %v751, 1.442695
          %v755 = vpow.pop %v754
          %v756 = vadd.f32 %v753, 1.0
          %v757 = vadd.f32 %v755, 1.0
          %v758 = vrcp.pop %v756
          %v759 = vmul.f32 1.0, %v758
          %v760 = vrcp.pop %v757
          %v761 = vmul.f32 1.0, %v760
          %v762 = vtanh.pop %v732
          %v763 = vtanh.pop %v736
          %v764 = vxor.u32 %v733, 2147483648
          %v765 = vxor.u32 %v737, 2147483648
          %v766 = vmul.f32 %v764, 1.442695
          %v767 = vpow.pop %v766
          %v768 = vmul.f32 %v765, 1.442695
          %v769 = vpow.pop %v768
          %v770 = vadd.f32 %v767, 1.0
          %v771 = vadd.f32 %v769, 1.0
          %v772 = vrcp.pop %v770
          %v773 = vmul.f32 1.0, %v772
          %v774 = vrcp.pop %v771
          %v775 = vmul.f32 1.0, %v774
          %v778 = vrot.slane %v594, 7
          %v779 = vrot.slane %v595, 7
          %v782 = vmul.f32 %v759, %v778
          %v783 = vmul.f32 %v761, %v779
          %v784 = vmul.f32 %v747, %v762
          %v785 = vmul.f32 %v749, %v763
          %v786 = vadd.f32 %v782, %v784
          %v787 = vadd.f32 %v783, %v785
          %v788 = vtanh.pop %v786
          %v789 = vtanh.pop %v787
          %v790 = vmul.f32 %v773, %v788
          %v791 = vmul.f32 %v775, %v789
          %v792 = vpack.c.bf16 %v790, %v790
          %v793 = vpack.c.bf16 %v791, %v791
          %vm794 = vsmask.f32 7938
          %vm795 = vmand %vm602, %vm794
          %v796 = vld [vmem:[%s211] sm:$0x1]
          %v797 = vsel %vm795, %v792, %v796
          %798 = vst [vmem:[%s211] sm:$0x1] %v797
          %v799 = vld [vmem:[%s211 + $0x4] sm:$0x1]
          %v800 = vsel %vm795, %v793, %v799
          %801 = vst [vmem:[%s211 + $0x4] sm:$0x1] %v800
          %v802 = vld [vmem:[%s189] sm:$0x22]
          %v803 = vld [vmem:[%s189 + $0x8] sm:$0x22]
          %v804 = vld [vmem:[%s189 + $0x10] sm:$0x22]
          %v805 = vld [vmem:[%s189 + $0x18] sm:$0x22]
          %v806 = vunpack.c.l.bf16 %v802
          %v807 = vunpack.c.h.bf16 %v802
          %v808 = vunpack.c.l.bf16 %v803
          %v809 = vunpack.c.h.bf16 %v803
          %v810 = vunpack.c.l.bf16 %v804
          %v811 = vunpack.c.h.bf16 %v804
          %v812 = vunpack.c.l.bf16 %v805
          %v813 = vunpack.c.h.bf16 %v805
          %v816 = vunpack.c.l.b16 %v792
          %v817 = vunpack.c.l.b16 %v793
          %v818 = vrot.slane %v816, 1
          %v819 = vsel %vm628, %v817, %v818
          %v820 = vpack.c.b16 %v819, %v819
          %822 = vmatprep.subr.bf16.mxu0 %v379
          %823 = vmatpush1.bf16.msra.mxu0 %v378
          %824 = vmatprep.subr.bf16.mxu0 %v383
          %825 = vmatpush1.bf16.msra.mxu0 %v382
          %826 = vmatprep.subr.bf16.mxu0 %v387
          %827 = vmatpush1.bf16.msra.mxu0 %v386
          %828 = vmatprep.subr.bf16.mxu0 %v391
          %829 = vmatpush1.bf16.msra.mxu0 %v390
          %830 = vmatprep.subr.bf16.mxu0 %v395
          %831 = vmatpush1.bf16.msra.mxu0 %v394
          %832 = vmatprep.subr.bf16.mxu0 %v399
          %833 = vmatpush1.bf16.msra.mxu0 %v398
          %834 = vmatprep.subr.bf16.mxu0 %v403
          %835 = vmatpush1.bf16.msra.mxu0 %v402
          %836 = vmatprep.subr.bf16.mxu0 %v407
          %837 = vmatpush1.bf16.msra.mxu0 %v406
          %838 = vmatprep.subr.bf16.mxu0 0
          %839 = vmatpush1.bf16.msra.mxu0 0
          %840 = vmatprep.subr.bf16.mxu0 0
          %841 = vmatpush1.bf16.msra.mxu0 0
          %842 = vmatprep.subr.bf16.mxu0 0
          %843 = vmatpush1.bf16.msra.mxu0 0
          %844 = vmatprep.subr.bf16.mxu0 0
          %845 = vmatpush1.bf16.msra.mxu0 0
          %846 = vmatprep.subr.bf16.mxu0 0
          %847 = vmatpush1.bf16.msra.mxu0 0
          %848 = vmatprep.subr.bf16.mxu0 0
          %849 = vmatpush1.bf16.msra.mxu0 0
          %850 = vmatprep.subr.bf16.mxu0 0
          %851 = vmatpush1.bf16.msra.mxu0 0
          %852 = vmatprep.subr.bf16.mxu0 0
          %853 = vmatpush1.bf16.msra.mxu0 0
          %854 = vmatprep.mubr.bf16.mxu0 0
          %855 = vmatmul.mubr.bf16.gmra.mrb[0].mxu0 %v820
          %v856 = vpop.f32.mrb[0].mxu0
          %v857 = vadd.f32 0.0, %v856
          %v858 = vpop.f32.mrb[0].mxu0
          %v859 = vadd.f32 0.0, %v858
          %v860 = vpop.f32.mrb[0].mxu0
          %v861 = vpop.f32.mrb[0].mxu0
          %862 = vdwg.mxu0
          %863 = vmatprep.subr.bf16.mxu0 %v381
          %864 = vmatpush1.bf16.msra.mxu0 %v380
          %865 = vmatprep.subr.bf16.mxu0 %v385
          %866 = vmatpush1.bf16.msra.mxu0 %v384
          %867 = vmatprep.subr.bf16.mxu0 %v389
          %868 = vmatpush1.bf16.msra.mxu0 %v388
          %869 = vmatprep.subr.bf16.mxu0 %v393
          %870 = vmatpush1.bf16.msra.mxu0 %v392
          %871 = vmatprep.subr.bf16.mxu0 %v397
          %872 = vmatpush1.bf16.msra.mxu0 %v396
          %873 = vmatprep.subr.bf16.mxu0 %v401
          %874 = vmatpush1.bf16.msra.mxu0 %v400
          %875 = vmatprep.subr.bf16.mxu0 %v405
          %876 = vmatpush1.bf16.msra.mxu0 %v404
          %877 = vmatprep.subr.bf16.mxu0 %v409
          %878 = vmatpush1.bf16.msra.mxu0 %v408
          %879 = vmatprep.subr.bf16.mxu0 0
          %880 = vmatpush1.bf16.msra.mxu0 0
          %881 = vmatprep.subr.bf16.mxu0 0
          %882 = vmatpush1.bf16.msra.mxu0 0
          %883 = vmatprep.subr.bf16.mxu0 0
          %884 = vmatpush1.bf16.msra.mxu0 0
          %885 = vmatprep.subr.bf16.mxu0 0
          %886 = vmatpush1.bf16.msra.mxu0 0
          %887 = vmatprep.subr.bf16.mxu0 0
          %888 = vmatpush1.bf16.msra.mxu0 0
          %889 = vmatprep.subr.bf16.mxu0 0
          %890 = vmatpush1.bf16.msra.mxu0 0
          %891 = vmatprep.subr.bf16.mxu0 0
          %892 = vmatpush1.bf16.msra.mxu0 0
          %893 = vmatprep.subr.bf16.mxu0 0
          %894 = vmatpush1.bf16.msra.mxu0 0
          %895 = vmatprep.mubr.bf16.mxu0 0
          %896 = vmatmul.mubr.bf16.gmra.mrb[0].mxu0 %v820
          %v897 = vpop.f32.mrb[0].mxu0
          %v898 = vadd.f32 0.0, %v897
          %v899 = vpop.f32.mrb[0].mxu0
          %v900 = vadd.f32 0.0, %v899
          %v901 = vpop.f32.mrb[0].mxu0
          %v902 = vpop.f32.mrb[0].mxu0
          %903 = vdwg.mxu0
          %v908 = vrot.slane %v857, 6
          %v909 = vrot.slane %v859, 6
          %v910 = vrot.slane %v898, 6
          %v911 = vrot.slane %v900, 6
          %v912 = vrot.slane %v857, 7
          %v913 = vrot.slane %v859, 7
          %v914 = vrot.slane %v898, 7
          %v915 = vrot.slane %v900, 7
          %v924 = vadd.f32 %v806, %v908
          %v925 = vadd.f32 %v807, %v909
          %v926 = vadd.f32 %v808, %v910
          %v927 = vadd.f32 %v809, %v911
          %v928 = vadd.f32 %v810, %v912
          %v929 = vadd.f32 %v811, %v913
          %v930 = vadd.f32 %v812, %v914
          %v931 = vadd.f32 %v813, %v915
          %v932 = vxor.u32 %v924, 2147483648
          %v933 = vxor.u32 %v928, 2147483648
          %v934 = vmul.f32 %v932, 1.442695
          %v935 = vpow.pop %v934
          %v936 = vmul.f32 %v933, 1.442695
          %v937 = vpow.pop %v936
          %v938 = vadd.f32 %v935, 1.0
          %v939 = vadd.f32 %v937, 1.0
          %v940 = vrcp.pop %v938
          %v941 = vmul.f32 1.0, %v940
          %v942 = vrcp.pop %v939
          %v943 = vmul.f32 1.0, %v942
          %v944 = vxor.u32 %v925, 2147483648
          %v945 = vxor.u32 %v929, 2147483648
          %v946 = vmul.f32 %v944, 1.442695
          %v947 = vpow.pop %v946
          %v948 = vmul.f32 %v945, 1.442695
          %v949 = vpow.pop %v948
          %v950 = vadd.f32 %v947, 1.0
          %v951 = vadd.f32 %v949, 1.0
          %v952 = vrcp.pop %v950
          %v953 = vmul.f32 1.0, %v952
          %v954 = vrcp.pop %v951
          %v955 = vmul.f32 1.0, %v954
          %v956 = vtanh.pop %v926
          %v957 = vtanh.pop %v930
          %v958 = vxor.u32 %v927, 2147483648
          %v959 = vxor.u32 %v931, 2147483648
          %v960 = vmul.f32 %v958, 1.442695
          %v961 = vpow.pop %v960
          %v962 = vmul.f32 %v959, 1.442695
          %v963 = vpow.pop %v962
          %v964 = vadd.f32 %v961, 1.0
          %v965 = vadd.f32 %v963, 1.0
          %v966 = vrcp.pop %v964
          %v967 = vmul.f32 1.0, %v966
          %v968 = vrcp.pop %v965
          %v969 = vmul.f32 1.0, %v968
          %v972 = vrot.slane %v786, 7
          %v973 = vrot.slane %v787, 7
          %v976 = vmul.f32 %v953, %v972
          %v977 = vmul.f32 %v955, %v973
          %v978 = vmul.f32 %v941, %v956
          %v979 = vmul.f32 %v943, %v957
          %v980 = vadd.f32 %v976, %v978
          %v981 = vadd.f32 %v977, %v979
          %v982 = vtanh.pop %v980
          %v983 = vtanh.pop %v981
          %v984 = vmul.f32 %v967, %v982
          %v985 = vmul.f32 %v969, %v983
          %v986 = vpack.c.bf16 %v984, %v984
          %v987 = vpack.c.bf16 %v985, %v985
          %vm988 = vcmask 1041409
          %vm989 = vsmask.f32 1280
          %vm990 = vmand %vm988, %vm989
          %v991 = vld [vmem:[%s211] sm:$0x2]
          %v992 = vsel %vm990, %v986, %v991
          %993 = vst [vmem:[%s211] sm:$0x2] %v992
          %v994 = vld [vmem:[%s211 + $0x4] sm:$0x2]
          %v995 = vsel %vm990, %v987, %v994
          %996 = vst [vmem:[%s211 + $0x4] sm:$0x2] %v995
          %v997 = vld [vmem:[%s189] sm:$0x22]
          %v998 = vld [vmem:[%s189 + $0x8] sm:$0x22]
          %v999 = vld [vmem:[%s189 + $0x10] sm:$0x22]
          %v1000 = vld [vmem:[%s189 + $0x18] sm:$0x22]
          %v1001 = vunpack.c.l.bf16 %v997
          %v1002 = vunpack.c.h.bf16 %v997
          %v1003 = vunpack.c.l.bf16 %v998
          %v1004 = vunpack.c.h.bf16 %v998
          %v1005 = vunpack.c.l.bf16 %v999
          %v1006 = vunpack.c.h.bf16 %v999
          %v1007 = vunpack.c.l.bf16 %v1000
          %v1008 = vunpack.c.h.bf16 %v1000
          %v1011 = vunpack.c.l.b16 %v986
          %v1012 = vunpack.c.l.b16 %v987
          %v1013 = vrot.slane %v1011, 2
          %v1014 = vrot.slane %v1012, 1
          %v1015 = vsel %vm628, %v1014, %v1013
          %v1016 = vpack.c.b16 %v1015, %v1015
          %1018 = vmatprep.subr.bf16.mxu0 %v379
          %1019 = vmatpush1.bf16.msra.mxu0 %v378
          %1020 = vmatprep.subr.bf16.mxu0 %v383
          %1021 = vmatpush1.bf16.msra.mxu0 %v382
          %1022 = vmatprep.subr.bf16.mxu0 %v387
          %1023 = vmatpush1.bf16.msra.mxu0 %v386
          %1024 = vmatprep.subr.bf16.mxu0 %v391
          %1025 = vmatpush1.bf16.msra.mxu0 %v390
          %1026 = vmatprep.subr.bf16.mxu0 %v395
          %1027 = vmatpush1.bf16.msra.mxu0 %v394
          %1028 = vmatprep.subr.bf16.mxu0 %v399
          %1029 = vmatpush1.bf16.msra.mxu0 %v398
          %1030 = vmatprep.subr.bf16.mxu0 %v403
          %1031 = vmatpush1.bf16.msra.mxu0 %v402
          %1032 = vmatprep.subr.bf16.mxu0 %v407
          %1033 = vmatpush1.bf16.msra.mxu0 %v406
          %1034 = vmatprep.subr.bf16.mxu0 0
          %1035 = vmatpush1.bf16.msra.mxu0 0
          %1036 = vmatprep.subr.bf16.mxu0 0
          %1037 = vmatpush1.bf16.msra.mxu0 0
          %1038 = vmatprep.subr.bf16.mxu0 0
          %1039 = vmatpush1.bf16.msra.mxu0 0
          %1040 = vmatprep.subr.bf16.mxu0 0
          %1041 = vmatpush1.bf16.msra.mxu0 0
          %1042 = vmatprep.subr.bf16.mxu0 0
          %1043 = vmatpush1.bf16.msra.mxu0 0
          %1044 = vmatprep.subr.bf16.mxu0 0
          %1045 = vmatpush1.bf16.msra.mxu0 0
          %1046 = vmatprep.subr.bf16.mxu0 0
          %1047 = vmatpush1.bf16.msra.mxu0 0
          %1048 = vmatprep.subr.bf16.mxu0 0
          %1049 = vmatpush1.bf16.msra.mxu0 0
          %1050 = vmatprep.mubr.bf16.mxu0 0
          %1051 = vmatmul.mubr.bf16.gmra.mrb[0].mxu0 %v1016
          %v1052 = vpop.f32.mrb[0].mxu0
          %v1053 = vadd.f32 0.0, %v1052
          %v1054 = vpop.f32.mrb[0].mxu0
          %v1055 = vadd.f32 0.0, %v1054
          %v1056 = vpop.f32.mrb[0].mxu0
          %v1057 = vpop.f32.mrb[0].mxu0
          %1058 = vdwg.mxu0
          %1059 = vmatprep.subr.bf16.mxu0 %v381
          %1060 = vmatpush1.bf16.msra.mxu0 %v380
          %1061 = vmatprep.subr.bf16.mxu0 %v385
          %1062 = vmatpush1.bf16.msra.mxu0 %v384
          %1063 = vmatprep.subr.bf16.mxu0 %v389
          %1064 = vmatpush1.bf16.msra.mxu0 %v388
          %1065 = vmatprep.subr.bf16.mxu0 %v393
          %1066 = vmatpush1.bf16.msra.mxu0 %v392
          %1067 = vmatprep.subr.bf16.mxu0 %v397
          %1068 = vmatpush1.bf16.msra.mxu0 %v396
          %1069 = vmatprep.subr.bf16.mxu0 %v401
          %1070 = vmatpush1.bf16.msra.mxu0 %v400
          %1071 = vmatprep.subr.bf16.mxu0 %v405
          %1072 = vmatpush1.bf16.msra.mxu0 %v404
          %1073 = vmatprep.subr.bf16.mxu0 %v409
          %1074 = vmatpush1.bf16.msra.mxu0 %v408
          %1075 = vmatprep.subr.bf16.mxu0 0
          %1076 = vmatpush1.bf16.msra.mxu0 0
          %1077 = vmatprep.subr.bf16.mxu0 0
          %1078 = vmatpush1.bf16.msra.mxu0 0
          %1079 = vmatprep.subr.bf16.mxu0 0
          %1080 = vmatpush1.bf16.msra.mxu0 0
          %1081 = vmatprep.subr.bf16.mxu0 0
          %1082 = vmatpush1.bf16.msra.mxu0 0
          %1083 = vmatprep.subr.bf16.mxu0 0
          %1084 = vmatpush1.bf16.msra.mxu0 0
          %1085 = vmatprep.subr.bf16.mxu0 0
          %1086 = vmatpush1.bf16.msra.mxu0 0
          %1087 = vmatprep.subr.bf16.mxu0 0
          %1088 = vmatpush1.bf16.msra.mxu0 0
          %1089 = vmatprep.subr.bf16.mxu0 0
          %1090 = vmatpush1.bf16.msra.mxu0 0
          %1091 = vmatprep.mubr.bf16.mxu0 0
          %1092 = vmatmul.mubr.bf16.gmra.mrb[0].mxu0 %v1016
          %v1093 = vpop.f32.mrb[0].mxu0
          %v1094 = vadd.f32 0.0, %v1093
          %v1095 = vpop.f32.mrb[0].mxu0
          %v1096 = vadd.f32 0.0, %v1095
          %v1097 = vpop.f32.mrb[0].mxu0
          %v1098 = vpop.f32.mrb[0].mxu0
          %1099 = vdwg.mxu0
          %v1104 = vrot.slane %v1053, 5
          %v1105 = vrot.slane %v1055, 5
          %v1106 = vrot.slane %v1094, 5
          %v1107 = vrot.slane %v1096, 5
          %v1108 = vrot.slane %v1053, 6
          %v1109 = vrot.slane %v1055, 6
          %v1110 = vrot.slane %v1094, 6
          %v1111 = vrot.slane %v1096, 6
          %v1120 = vadd.f32 %v1001, %v1104
          %v1121 = vadd.f32 %v1002, %v1105
          %v1122 = vadd.f32 %v1003, %v1106
          %v1123 = vadd.f32 %v1004, %v1107
          %v1124 = vadd.f32 %v1005, %v1108
          %v1125 = vadd.f32 %v1006, %v1109
          %v1126 = vadd.f32 %v1007, %v1110
          %v1127 = vadd.f32 %v1008, %v1111
          %v1128 = vxor.u32 %v1120, 2147483648
          %v1129 = vxor.u32 %v1124, 2147483648
          %v1130 = vmul.f32 %v1128, 1.442695
          %v1131 = vpow.pop %v1130
          %v1132 = vmul.f32 %v1129, 1.442695
          %v1133 = vpow.pop %v1132
          %v1134 = vadd.f32 %v1131, 1.0
          %v1135 = vadd.f32 %v1133, 1.0
          %v1136 = vrcp.pop %v1134
          %v1137 = vmul.f32 1.0, %v1136
          %v1138 = vrcp.pop %v1135
          %v1139 = vmul.f32 1.0, %v1138
          %v1140 = vxor.u32 %v1121, 2147483648
          %v1141 = vxor.u32 %v1125, 2147483648
          %v1142 = vmul.f32 %v1140, 1.442695
          %v1143 = vpow.pop %v1142
          %v1144 = vmul.f32 %v1141, 1.442695
          %v1145 = vpow.pop %v1144
          %v1146 = vadd.f32 %v1143, 1.0
          %v1147 = vadd.f32 %v1145, 1.0
          %v1148 = vrcp.pop %v1146
          %v1149 = vmul.f32 1.0, %v1148
          %v1150 = vrcp.pop %v1147
          %v1151 = vmul.f32 1.0, %v1150
          %v1152 = vtanh.pop %v1122
          %v1153 = vtanh.pop %v1126
          %v1154 = vxor.u32 %v1123, 2147483648
          %v1155 = vxor.u32 %v1127, 2147483648
          %v1156 = vmul.f32 %v1154, 1.442695
          %v1157 = vpow.pop %v1156
          %v1158 = vmul.f32 %v1155, 1.442695
          %v1159 = vpow.pop %v1158
          %v1160 = vadd.f32 %v1157, 1.0
          %v1161 = vadd.f32 %v1159, 1.0
          %v1162 = vrcp.pop %v1160
          %v1163 = vmul.f32 1.0, %v1162
          %v1164 = vrcp.pop %v1161
          %v1165 = vmul.f32 1.0, %v1164
          %v1168 = vrot.slane %v980, 7
          %v1169 = vrot.slane %v981, 7
          %v1172 = vmul.f32 %v1149, %v1168
          %v1173 = vmul.f32 %v1151, %v1169
          %v1174 = vmul.f32 %v1137, %v1152
          %v1175 = vmul.f32 %v1139, %v1153
          %v1176 = vadd.f32 %v1172, %v1174
          %v1177 = vadd.f32 %v1173, %v1175
          %v1178 = vtanh.pop %v1176
          %v1179 = vtanh.pop %v1177
          %v1180 = vmul.f32 %v1163, %v1178
          %v1181 = vmul.f32 %v1165, %v1179
          %v1182 = vpack.c.bf16 %v1180, %v1180
          %v1183 = vpack.c.bf16 %v1181, %v1181
          %vm1184 = vsmask.f32 7942
          %vm1185 = vmand %vm988, %vm1184
          %v1186 = vld [vmem:[%s211] sm:$0x2]
          %v1187 = vsel %vm1185, %v1182, %v1186
          %1188 = vst [vmem:[%s211] sm:$0x2] %v1187
          %v1189 = vld [vmem:[%s211 + $0x4] sm:$0x2]
          %v1190 = vsel %vm1185, %v1183, %v1189
          %1191 = vst [vmem:[%s211 + $0x4] sm:$0x2] %v1190
          %v1192 = vld [vmem:[%s189] sm:$0x44]
          %v1193 = vld [vmem:[%s189 + $0x8] sm:$0x44]
          %v1194 = vld [vmem:[%s189 + $0x10] sm:$0x44]
          %v1195 = vld [vmem:[%s189 + $0x18] sm:$0x44]
          %v1196 = vunpack.c.l.bf16 %v1192
          %v1197 = vunpack.c.h.bf16 %v1192
          %v1198 = vunpack.c.l.bf16 %v1193
          %v1199 = vunpack.c.h.bf16 %v1193
          %v1200 = vunpack.c.l.bf16 %v1194
          %v1201 = vunpack.c.h.bf16 %v1194
          %v1202 = vunpack.c.l.bf16 %v1195
          %v1203 = vunpack.c.h.bf16 %v1195
          %v1206 = vunpack.c.l.b16 %v1182
          %v1207 = vunpack.c.l.b16 %v1183
          %v1208 = vrot.slane %v1206, 3
          %v1209 = vrot.slane %v1207, 2
          %v1210 = vsel %vm628, %v1209, %v1208
          %v1211 = vpack.c.b16 %v1210, %v1210
          %1213 = vmatprep.subr.bf16.mxu0 %v379
          %1214 = vmatpush1.bf16.msra.mxu0 %v378
          %1215 = vmatprep.subr.bf16.mxu0 %v383
          %1216 = vmatpush1.bf16.msra.mxu0 %v382
          %1217 = vmatprep.subr.bf16.mxu0 %v387
          %1218 = vmatpush1.bf16.msra.mxu0 %v386
          %1219 = vmatprep.subr.bf16.mxu0 %v391
          %1220 = vmatpush1.bf16.msra.mxu0 %v390
          %1221 = vmatprep.subr.bf16.mxu0 %v395
          %1222 = vmatpush1.bf16.msra.mxu0 %v394
          %1223 = vmatprep.subr.bf16.mxu0 %v399
          %1224 = vmatpush1.bf16.msra.mxu0 %v398
          %1225 = vmatprep.subr.bf16.mxu0 %v403
          %1226 = vmatpush1.bf16.msra.mxu0 %v402
          %1227 = vmatprep.subr.bf16.mxu0 %v407
          %1228 = vmatpush1.bf16.msra.mxu0 %v406
          %1229 = vmatprep.subr.bf16.mxu0 0
          %1230 = vmatpush1.bf16.msra.mxu0 0
          %1231 = vmatprep.subr.bf16.mxu0 0
          %1232 = vmatpush1.bf16.msra.mxu0 0
          %1233 = vmatprep.subr.bf16.mxu0 0
          %1234 = vmatpush1.bf16.msra.mxu0 0
          %1235 = vmatprep.subr.bf16.mxu0 0
          %1236 = vmatpush1.bf16.msra.mxu0 0
          %1237 = vmatprep.subr.bf16.mxu0 0
          %1238 = vmatpush1.bf16.msra.mxu0 0
          %1239 = vmatprep.subr.bf16.mxu0 0
          %1240 = vmatpush1.bf16.msra.mxu0 0
          %1241 = vmatprep.subr.bf16.mxu0 0
          %1242 = vmatpush1.bf16.msra.mxu0 0
          %1243 = vmatprep.subr.bf16.mxu0 0
          %1244 = vmatpush1.bf16.msra.mxu0 0
          %1245 = vmatprep.mubr.bf16.mxu0 0
          %1246 = vmatmul.mubr.bf16.gmra.mrb[0].mxu0 %v1211
          %v1247 = vpop.f32.mrb[0].mxu0
          %v1248 = vadd.f32 0.0, %v1247
          %v1249 = vpop.f32.mrb[0].mxu0
          %v1250 = vadd.f32 0.0, %v1249
          %v1251 = vpop.f32.mrb[0].mxu0
          %v1252 = vpop.f32.mrb[0].mxu0
          %1253 = vdwg.mxu0
          %1254 = vmatprep.subr.bf16.mxu0 %v381
          %1255 = vmatpush1.bf16.msra.mxu0 %v380
          %1256 = vmatprep.subr.bf16.mxu0 %v385
          %1257 = vmatpush1.bf16.msra.mxu0 %v384
          %1258 = vmatprep.subr.bf16.mxu0 %v389
          %1259 = vmatpush1.bf16.msra.mxu0 %v388
          %1260 = vmatprep.subr.bf16.mxu0 %v393
          %1261 = vmatpush1.bf16.msra.mxu0 %v392
          %1262 = vmatprep.subr.bf16.mxu0 %v397
          %1263 = vmatpush1.bf16.msra.mxu0 %v396
          %1264 = vmatprep.subr.bf16.mxu0 %v401
          %1265 = vmatpush1.bf16.msra.mxu0 %v400
          %1266 = vmatprep.subr.bf16.mxu0 %v405
          %1267 = vmatpush1.bf16.msra.mxu0 %v404
          %1268 = vmatprep.subr.bf16.mxu0 %v409
          %1269 = vmatpush1.bf16.msra.mxu0 %v408
          %1270 = vmatprep.subr.bf16.mxu0 0
          %1271 = vmatpush1.bf16.msra.mxu0 0
          %1272 = vmatprep.subr.bf16.mxu0 0
          %1273 = vmatpush1.bf16.msra.mxu0 0
          %1274 = vmatprep.subr.bf16.mxu0 0
          %1275 = vmatpush1.bf16.msra.mxu0 0
          %1276 = vmatprep.subr.bf16.mxu0 0
          %1277 = vmatpush1.bf16.msra.mxu0 0
          %1278 = vmatprep.subr.bf16.mxu0 0
          %1279 = vmatpush1.bf16.msra.mxu0 0
          %1280 = vmatprep.subr.bf16.mxu0 0
          %1281 = vmatpush1.bf16.msra.mxu0 0
          %1282 = vmatprep.subr.bf16.mxu0 0
          %1283 = vmatpush1.bf16.msra.mxu0 0
          %1284 = vmatprep.subr.bf16.mxu0 0
          %1285 = vmatpush1.bf16.msra.mxu0 0
          %1286 = vmatprep.mubr.bf16.mxu0 0
          %1287 = vmatmul.mubr.bf16.gmra.mrb[0].mxu0 %v1211
          %v1288 = vpop.f32.mrb[0].mxu0
          %v1289 = vadd.f32 0.0, %v1288
          %v1290 = vpop.f32.mrb[0].mxu0
          %v1291 = vadd.f32 0.0, %v1290
          %v1292 = vpop.f32.mrb[0].mxu0
          %v1293 = vpop.f32.mrb[0].mxu0
          %1294 = vdwg.mxu0
          %v1299 = vrot.slane %v1248, 4
          %v1300 = vrot.slane %v1250, 4
          %v1301 = vrot.slane %v1289, 4
          %v1302 = vrot.slane %v1291, 4
          %v1303 = vrot.slane %v1248, 5
          %v1304 = vrot.slane %v1250, 5
          %v1305 = vrot.slane %v1289, 5
          %v1306 = vrot.slane %v1291, 5
          %v1315 = vadd.f32 %v1196, %v1299
          %v1316 = vadd.f32 %v1197, %v1300
          %v1317 = vadd.f32 %v1198, %v1301
          %v1318 = vadd.f32 %v1199, %v1302
          %v1319 = vadd.f32 %v1200, %v1303
          %v1320 = vadd.f32 %v1201, %v1304
          %v1321 = vadd.f32 %v1202, %v1305
          %v1322 = vadd.f32 %v1203, %v1306
          %v1323 = vxor.u32 %v1315, 2147483648
          %v1324 = vxor.u32 %v1319, 2147483648
          %v1325 = vmul.f32 %v1323, 1.442695
          %v1326 = vpow.pop %v1325
          %v1327 = vmul.f32 %v1324, 1.442695
          %v1328 = vpow.pop %v1327
          %v1329 = vadd.f32 %v1326, 1.0
          %v1330 = vadd.f32 %v1328, 1.0
          %v1331 = vrcp.pop %v1329
          %v1332 = vmul.f32 1.0, %v1331
          %v1333 = vrcp.pop %v1330
          %v1334 = vmul.f32 1.0, %v1333
          %v1335 = vxor.u32 %v1316, 2147483648
          %v1336 = vxor.u32 %v1320, 2147483648
          %v1337 = vmul.f32 %v1335, 1.442695
          %v1338 = vpow.pop %v1337
          %v1339 = vmul.f32 %v1336, 1.442695
          %v1340 = vpow.pop %v1339
          %v1341 = vadd.f32 %v1338, 1.0
          %v1342 = vadd.f32 %v1340, 1.0
          %v1343 = vrcp.pop %v1341
          %v1344 = vmul.f32 1.0, %v1343
          %v1345 = vrcp.pop %v1342
          %v1346 = vmul.f32 1.0, %v1345
          %v1347 = vtanh.pop %v1317
          %v1348 = vtanh.pop %v1321
          %v1349 = vxor.u32 %v1318, 2147483648
          %v1350 = vxor.u32 %v1322, 2147483648
          %v1351 = vmul.f32 %v1349, 1.442695
          %v1352 = vpow.pop %v1351
          %v1353 = vmul.f32 %v1350, 1.442695
          %v1354 = vpow.pop %v1353
          %v1355 = vadd.f32 %v1352, 1.0
          %v1356 = vadd.f32 %v1354, 1.0
          %v1357 = vrcp.pop %v1355
          %v1358 = vmul.f32 1.0, %v1357
          %v1359 = vrcp.pop %v1356
          %v1360 = vmul.f32 1.0, %v1359
          %v1363 = vrot.slane %v1176, 7
          %v1364 = vrot.slane %v1177, 7
          %v1367 = vmul.f32 %v1344, %v1363
          %v1368 = vmul.f32 %v1346, %v1364
          %v1369 = vmul.f32 %v1332, %v1347
          %v1370 = vmul.f32 %v1334, %v1348
          %v1371 = vadd.f32 %v1367, %v1369
          %v1372 = vadd.f32 %v1368, %v1370
          %v1373 = vtanh.pop %v1371
          %v1374 = vtanh.pop %v1372
          %v1375 = vmul.f32 %v1358, %v1373
          %v1376 = vmul.f32 %v1360, %v1374
          %v1377 = vpack.c.bf16 %v1375, %v1375
          %v1378 = vpack.c.bf16 %v1376, %v1376
          %vm1379 = vcmask 1042434
          %vm1380 = vsmask.f32 2304
          %vm1381 = vmand %vm1379, %vm1380
          %v1382 = vld [vmem:[%s211] sm:$0x4]
          %v1383 = vsel %vm1381, %v1377, %v1382
          %1384 = vst [vmem:[%s211] sm:$0x4] %v1383
          %v1385 = vld [vmem:[%s211 + $0x4] sm:$0x4]
          %v1386 = vsel %vm1381, %v1378, %v1385
          %1387 = vst [vmem:[%s211 + $0x4] sm:$0x4] %v1386
          %v1388 = vld [vmem:[%s189] sm:$0x44]
          %v1389 = vld [vmem:[%s189 + $0x8] sm:$0x44]
          %v1390 = vld [vmem:[%s189 + $0x10] sm:$0x44]
          %v1391 = vld [vmem:[%s189 + $0x18] sm:$0x44]
          %v1392 = vunpack.c.l.bf16 %v1388
          %v1393 = vunpack.c.h.bf16 %v1388
          %v1394 = vunpack.c.l.bf16 %v1389
          %v1395 = vunpack.c.h.bf16 %v1389
          %v1396 = vunpack.c.l.bf16 %v1390
          %v1397 = vunpack.c.h.bf16 %v1390
          %v1398 = vunpack.c.l.bf16 %v1391
          %v1399 = vunpack.c.h.bf16 %v1391
          %v1402 = vunpack.c.l.b16 %v1377
          %v1403 = vunpack.c.l.b16 %v1378
          %v1404 = vrot.slane %v1402, 4
          %v1405 = vrot.slane %v1403, 3
          %v1406 = vsel %vm628, %v1405, %v1404
          %v1407 = vpack.c.b16 %v1406, %v1406
          %1409 = vmatprep.subr.bf16.mxu0 %v379
          %1410 = vmatpush1.bf16.msra.mxu0 %v378
          %1411 = vmatprep.subr.bf16.mxu0 %v383
          %1412 = vmatpush1.bf16.msra.mxu0 %v382
          %1413 = vmatprep.subr.bf16.mxu0 %v387
          %1414 = vmatpush1.bf16.msra.mxu0 %v386
          %1415 = vmatprep.subr.bf16.mxu0 %v391
          %1416 = vmatpush1.bf16.msra.mxu0 %v390
          %1417 = vmatprep.subr.bf16.mxu0 %v395
          %1418 = vmatpush1.bf16.msra.mxu0 %v394
          %1419 = vmatprep.subr.bf16.mxu0 %v399
          %1420 = vmatpush1.bf16.msra.mxu0 %v398
          %1421 = vmatprep.subr.bf16.mxu0 %v403
          %1422 = vmatpush1.bf16.msra.mxu0 %v402
          %1423 = vmatprep.subr.bf16.mxu0 %v407
          %1424 = vmatpush1.bf16.msra.mxu0 %v406
          %1425 = vmatprep.subr.bf16.mxu0 0
          %1426 = vmatpush1.bf16.msra.mxu0 0
          %1427 = vmatprep.subr.bf16.mxu0 0
          %1428 = vmatpush1.bf16.msra.mxu0 0
          %1429 = vmatprep.subr.bf16.mxu0 0
          %1430 = vmatpush1.bf16.msra.mxu0 0
          %1431 = vmatprep.subr.bf16.mxu0 0
          %1432 = vmatpush1.bf16.msra.mxu0 0
          %1433 = vmatprep.subr.bf16.mxu0 0
          %1434 = vmatpush1.bf16.msra.mxu0 0
          %1435 = vmatprep.subr.bf16.mxu0 0
          %1436 = vmatpush1.bf16.msra.mxu0 0
          %1437 = vmatprep.subr.bf16.mxu0 0
          %1438 = vmatpush1.bf16.msra.mxu0 0
          %1439 = vmatprep.subr.bf16.mxu0 0
          %1440 = vmatpush1.bf16.msra.mxu0 0
          %1441 = vmatprep.mubr.bf16.mxu0 0
          %1442 = vmatmul.mubr.bf16.gmra.mrb[0].mxu0 %v1407
          %v1443 = vpop.f32.mrb[0].mxu0
          %v1444 = vadd.f32 0.0, %v1443
          %v1445 = vpop.f32.mrb[0].mxu0
          %v1446 = vadd.f32 0.0, %v1445
          %v1447 = vpop.f32.mrb[0].mxu0
          %v1448 = vpop.f32.mrb[0].mxu0
          %1449 = vdwg.mxu0
          %1450 = vmatprep.subr.bf16.mxu0 %v381
          %1451 = vmatpush1.bf16.msra.mxu0 %v380
          %1452 = vmatprep.subr.bf16.mxu0 %v385
          %1453 = vmatpush1.bf16.msra.mxu0 %v384
          %1454 = vmatprep.subr.bf16.mxu0 %v389
          %1455 = vmatpush1.bf16.msra.mxu0 %v388
          %1456 = vmatprep.subr.bf16.mxu0 %v393
          %1457 = vmatpush1.bf16.msra.mxu0 %v392
          %1458 = vmatprep.subr.bf16.mxu0 %v397
          %1459 = vmatpush1.bf16.msra.mxu0 %v396
          %1460 = vmatprep.subr.bf16.mxu0 %v401
          %1461 = vmatpush1.bf16.msra.mxu0 %v400
          %1462 = vmatprep.subr.bf16.mxu0 %v405
          %1463 = vmatpush1.bf16.msra.mxu0 %v404
          %1464 = vmatprep.subr.bf16.mxu0 %v409
          %1465 = vmatpush1.bf16.msra.mxu0 %v408
          %1466 = vmatprep.subr.bf16.mxu0 0
          %1467 = vmatpush1.bf16.msra.mxu0 0
          %1468 = vmatprep.subr.bf16.mxu0 0
          %1469 = vmatpush1.bf16.msra.mxu0 0
          %1470 = vmatprep.subr.bf16.mxu0 0
          %1471 = vmatpush1.bf16.msra.mxu0 0
          %1472 = vmatprep.subr.bf16.mxu0 0
          %1473 = vmatpush1.bf16.msra.mxu0 0
          %1474 = vmatprep.subr.bf16.mxu0 0
          %1475 = vmatpush1.bf16.msra.mxu0 0
          %1476 = vmatprep.subr.bf16.mxu0 0
          %1477 = vmatpush1.bf16.msra.mxu0 0
          %1478 = vmatprep.subr.bf16.mxu0 0
          %1479 = vmatpush1.bf16.msra.mxu0 0
          %1480 = vmatprep.subr.bf16.mxu0 0
          %1481 = vmatpush1.bf16.msra.mxu0 0
          %1482 = vmatprep.mubr.bf16.mxu0 0
          %1483 = vmatmul.mubr.bf16.gmra.mrb[0].mxu0 %v1407
          %v1484 = vpop.f32.mrb[0].mxu0
          %v1485 = vadd.f32 0.0, %v1484
          %v1486 = vpop.f32.mrb[0].mxu0
          %v1487 = vadd.f32 0.0, %v1486
          %v1488 = vpop.f32.mrb[0].mxu0
          %v1489 = vpop.f32.mrb[0].mxu0
          %1490 = vdwg.mxu0
          %v1495 = vrot.slane %v1444, 3
          %v1496 = vrot.slane %v1446, 3
          %v1497 = vrot.slane %v1485, 3
          %v1498 = vrot.slane %v1487, 3
          %v1499 = vrot.slane %v1444, 4
          %v1500 = vrot.slane %v1446, 4
          %v1501 = vrot.slane %v1485, 4
          %v1502 = vrot.slane %v1487, 4
          %v1511 = vadd.f32 %v1392, %v1495
          %v1512 = vadd.f32 %v1393, %v1496
          %v1513 = vadd.f32 %v1394, %v1497
          %v1514 = vadd.f32 %v1395, %v1498
          %v1515 = vadd.f32 %v1396, %v1499
          %v1516 = vadd.f32 %v1397, %v1500
          %v1517 = vadd.f32 %v1398, %v1501
          %v1518 = vadd.f32 %v1399, %v1502
          %v1519 = vxor.u32 %v1511, 2147483648
          %v1520 = vxor.u32 %v1515, 2147483648
          %v1521 = vmul.f32 %v1519, 1.442695
          %v1522 = vpow.pop %v1521
          %v1523 = vmul.f32 %v1520, 1.442695
          %v1524 = vpow.pop %v1523
          %v1525 = vadd.f32 %v1522, 1.0
          %v1526 = vadd.f32 %v1524, 1.0
          %v1527 = vrcp.pop %v1525
          %v1528 = vmul.f32 1.0, %v1527
          %v1529 = vrcp.pop %v1526
          %v1530 = vmul.f32 1.0, %v1529
          %v1531 = vxor.u32 %v1512, 2147483648
          %v1532 = vxor.u32 %v1516, 2147483648
          %v1533 = vmul.f32 %v1531, 1.442695
          %v1534 = vpow.pop %v1533
          %v1535 = vmul.f32 %v1532, 1.442695
          %v1536 = vpow.pop %v1535
          %v1537 = vadd.f32 %v1534, 1.0
          %v1538 = vadd.f32 %v1536, 1.0
          %v1539 = vrcp.pop %v1537
          %v1540 = vmul.f32 1.0, %v1539
          %v1541 = vrcp.pop %v1538
          %v1542 = vmul.f32 1.0, %v1541
          %v1543 = vtanh.pop %v1513
          %v1544 = vtanh.pop %v1517
          %v1545 = vxor.u32 %v1514, 2147483648
          %v1546 = vxor.u32 %v1518, 2147483648
          %v1547 = vmul.f32 %v1545, 1.442695
          %v1548 = vpow.pop %v1547
          %v1549 = vmul.f32 %v1546, 1.442695
          %v1550 = vpow.pop %v1549
          %v1551 = vadd.f32 %v1548, 1.0
          %v1552 = vadd.f32 %v1550, 1.0
          %v1553 = vrcp.pop %v1551
          %v1554 = vmul.f32 1.0, %v1553
          %v1555 = vrcp.pop %v1552
          %v1556 = vmul.f32 1.0, %v1555
          %v1559 = vrot.slane %v1371, 7
          %v1560 = vrot.slane %v1372, 7
          %v1563 = vmul.f32 %v1540, %v1559
          %v1564 = vmul.f32 %v1542, %v1560
          %v1565 = vmul.f32 %v1528, %v1543
          %v1566 = vmul.f32 %v1530, %v1544
          %v1567 = vadd.f32 %v1563, %v1565
          %v1568 = vadd.f32 %v1564, %v1566
          %v1569 = vtanh.pop %v1567
          %v1570 = vtanh.pop %v1568
          %v1571 = vmul.f32 %v1554, %v1569
          %v1572 = vmul.f32 %v1556, %v1570
          %v1573 = vpack.c.bf16 %v1571, %v1571
          %v1574 = vpack.c.bf16 %v1572, %v1572
          %vm1575 = vsmask.f32 7946
          %vm1576 = vmand %vm1379, %vm1575
          %v1577 = vld [vmem:[%s211] sm:$0x4]
          %v1578 = vsel %vm1576, %v1573, %v1577
          %1579 = vst [vmem:[%s211] sm:$0x4] %v1578
          %v1580 = vld [vmem:[%s211 + $0x4] sm:$0x4]
          %v1581 = vsel %vm1576, %v1574, %v1580
          %1582 = vst [vmem:[%s211 + $0x4] sm:$0x4] %v1581
          %v1583 = vld [vmem:[%s189] sm:$0x88]
          %v1584 = vld [vmem:[%s189 + $0x8] sm:$0x88]
          %v1585 = vld [vmem:[%s189 + $0x10] sm:$0x88]
          %v1586 = vld [vmem:[%s189 + $0x18] sm:$0x88]
          %v1587 = vunpack.c.l.bf16 %v1583
          %v1588 = vunpack.c.h.bf16 %v1583
          %v1589 = vunpack.c.l.bf16 %v1584
          %v1590 = vunpack.c.h.bf16 %v1584
          %v1591 = vunpack.c.l.bf16 %v1585
          %v1592 = vunpack.c.h.bf16 %v1585
          %v1593 = vunpack.c.l.bf16 %v1586
          %v1594 = vunpack.c.h.bf16 %v1586
          %v1597 = vunpack.c.l.b16 %v1573
          %v1598 = vunpack.c.l.b16 %v1574
          %v1599 = vrot.slane %v1597, 5
          %v1600 = vrot.slane %v1598, 4
          %v1601 = vsel %vm628, %v1600, %v1599
          %v1602 = vpack.c.b16 %v1601, %v1601
          %1604 = vmatprep.subr.bf16.mxu0 %v379
          %1605 = vmatpush1.bf16.msra.mxu0 %v378
          %1606 = vmatprep.subr.bf16.mxu0 %v383
          %1607 = vmatpush1.bf16.msra.mxu0 %v382
          %1608 = vmatprep.subr.bf16.mxu0 %v387
          %1609 = vmatpush1.bf16.msra.mxu0 %v386
          %1610 = vmatprep.subr.bf16.mxu0 %v391
          %1611 = vmatpush1.bf16.msra.mxu0 %v390
          %1612 = vmatprep.subr.bf16.mxu0 %v395
          %1613 = vmatpush1.bf16.msra.mxu0 %v394
          %1614 = vmatprep.subr.bf16.mxu0 %v399
          %1615 = vmatpush1.bf16.msra.mxu0 %v398
          %1616 = vmatprep.subr.bf16.mxu0 %v403
          %1617 = vmatpush1.bf16.msra.mxu0 %v402
          %1618 = vmatprep.subr.bf16.mxu0 %v407
          %1619 = vmatpush1.bf16.msra.mxu0 %v406
          %1620 = vmatprep.subr.bf16.mxu0 0
          %1621 = vmatpush1.bf16.msra.mxu0 0
          %1622 = vmatprep.subr.bf16.mxu0 0
          %1623 = vmatpush1.bf16.msra.mxu0 0
          %1624 = vmatprep.subr.bf16.mxu0 0
          %1625 = vmatpush1.bf16.msra.mxu0 0
          %1626 = vmatprep.subr.bf16.mxu0 0
          %1627 = vmatpush1.bf16.msra.mxu0 0
          %1628 = vmatprep.subr.bf16.mxu0 0
          %1629 = vmatpush1.bf16.msra.mxu0 0
          %1630 = vmatprep.subr.bf16.mxu0 0
          %1631 = vmatpush1.bf16.msra.mxu0 0
          %1632 = vmatprep.subr.bf16.mxu0 0
          %1633 = vmatpush1.bf16.msra.mxu0 0
          %1634 = vmatprep.subr.bf16.mxu0 0
          %1635 = vmatpush1.bf16.msra.mxu0 0
          %1636 = vmatprep.mubr.bf16.mxu0 0
          %1637 = vmatmul.mubr.bf16.gmra.mrb[0].mxu0 %v1602
          %v1638 = vpop.f32.mrb[0].mxu0
          %v1639 = vadd.f32 0.0, %v1638
          %v1640 = vpop.f32.mrb[0].mxu0
          %v1641 = vadd.f32 0.0, %v1640
          %v1642 = vpop.f32.mrb[0].mxu0
          %v1643 = vpop.f32.mrb[0].mxu0
          %1644 = vdwg.mxu0
          %1645 = vmatprep.subr.bf16.mxu0 %v381
          %1646 = vmatpush1.bf16.msra.mxu0 %v380
          %1647 = vmatprep.subr.bf16.mxu0 %v385
          %1648 = vmatpush1.bf16.msra.mxu0 %v384
          %1649 = vmatprep.subr.bf16.mxu0 %v389
          %1650 = vmatpush1.bf16.msra.mxu0 %v388
          %1651 = vmatprep.subr.bf16.mxu0 %v393
          %1652 = vmatpush1.bf16.msra.mxu0 %v392
          %1653 = vmatprep.subr.bf16.mxu0 %v397
          %1654 = vmatpush1.bf16.msra.mxu0 %v396
          %1655 = vmatprep.subr.bf16.mxu0 %v401
          %1656 = vmatpush1.bf16.msra.mxu0 %v400
          %1657 = vmatprep.subr.bf16.mxu0 %v405
          %1658 = vmatpush1.bf16.msra.mxu0 %v404
          %1659 = vmatprep.subr.bf16.mxu0 %v409
          %1660 = vmatpush1.bf16.msra.mxu0 %v408
          %1661 = vmatprep.subr.bf16.mxu0 0
          %1662 = vmatpush1.bf16.msra.mxu0 0
          %1663 = vmatprep.subr.bf16.mxu0 0
          %1664 = vmatpush1.bf16.msra.mxu0 0
          %1665 = vmatprep.subr.bf16.mxu0 0
          %1666 = vmatpush1.bf16.msra.mxu0 0
          %1667 = vmatprep.subr.bf16.mxu0 0
          %1668 = vmatpush1.bf16.msra.mxu0 0
          %1669 = vmatprep.subr.bf16.mxu0 0
          %1670 = vmatpush1.bf16.msra.mxu0 0
          %1671 = vmatprep.subr.bf16.mxu0 0
          %1672 = vmatpush1.bf16.msra.mxu0 0
          %1673 = vmatprep.subr.bf16.mxu0 0
          %1674 = vmatpush1.bf16.msra.mxu0 0
          %1675 = vmatprep.subr.bf16.mxu0 0
          %1676 = vmatpush1.bf16.msra.mxu0 0
          %1677 = vmatprep.mubr.bf16.mxu0 0
          %1678 = vmatmul.mubr.bf16.gmra.mrb[0].mxu0 %v1602
          %v1679 = vpop.f32.mrb[0].mxu0
          %v1680 = vadd.f32 0.0, %v1679
          %v1681 = vpop.f32.mrb[0].mxu0
          %v1682 = vadd.f32 0.0, %v1681
          %v1683 = vpop.f32.mrb[0].mxu0
          %v1684 = vpop.f32.mrb[0].mxu0
          %1685 = vdwg.mxu0
          %v1690 = vrot.slane %v1639, 2
          %v1691 = vrot.slane %v1641, 2
          %v1692 = vrot.slane %v1680, 2
          %v1693 = vrot.slane %v1682, 2
          %v1694 = vrot.slane %v1639, 3
          %v1695 = vrot.slane %v1641, 3
          %v1696 = vrot.slane %v1680, 3
          %v1697 = vrot.slane %v1682, 3
          %v1706 = vadd.f32 %v1587, %v1690
          %v1707 = vadd.f32 %v1588, %v1691
          %v1708 = vadd.f32 %v1589, %v1692
          %v1709 = vadd.f32 %v1590, %v1693
          %v1710 = vadd.f32 %v1591, %v1694
          %v1711 = vadd.f32 %v1592, %v1695
          %v1712 = vadd.f32 %v1593, %v1696
          %v1713 = vadd.f32 %v1594, %v1697
          %v1714 = vxor.u32 %v1706, 2147483648
          %v1715 = vxor.u32 %v1710, 2147483648
          %v1716 = vmul.f32 %v1714, 1.442695
          %v1717 = vpow.pop %v1716
          %v1718 = vmul.f32 %v1715, 1.442695
          %v1719 = vpow.pop %v1718
          %v1720 = vadd.f32 %v1717, 1.0
          %v1721 = vadd.f32 %v1719, 1.0
          %v1722 = vrcp.pop %v1720
          %v1723 = vmul.f32 1.0, %v1722
          %v1724 = vrcp.pop %v1721
          %v1725 = vmul.f32 1.0, %v1724
          %v1726 = vxor.u32 %v1707, 2147483648
          %v1727 = vxor.u32 %v1711, 2147483648
          %v1728 = vmul.f32 %v1726, 1.442695
          %v1729 = vpow.pop %v1728
          %v1730 = vmul.f32 %v1727, 1.442695
          %v1731 = vpow.pop %v1730
          %v1732 = vadd.f32 %v1729, 1.0
          %v1733 = vadd.f32 %v1731, 1.0
          %v1734 = vrcp.pop %v1732
          %v1735 = vmul.f32 1.0, %v1734
          %v1736 = vrcp.pop %v1733
          %v1737 = vmul.f32 1.0, %v1736
          %v1738 = vtanh.pop %v1708
          %v1739 = vtanh.pop %v1712
          %v1740 = vxor.u32 %v1709, 2147483648
          %v1741 = vxor.u32 %v1713, 2147483648
          %v1742 = vmul.f32 %v1740, 1.442695
          %v1743 = vpow.pop %v1742
          %v1744 = vmul.f32 %v1741, 1.442695
          %v1745 = vpow.pop %v1744
          %v1746 = vadd.f32 %v1743, 1.0
          %v1747 = vadd.f32 %v1745, 1.0
          %v1748 = vrcp.pop %v1746
          %v1749 = vmul.f32 1.0, %v1748
          %v1750 = vrcp.pop %v1747
          %v1751 = vmul.f32 1.0, %v1750
          %v1754 = vrot.slane %v1567, 7
          %v1755 = vrot.slane %v1568, 7
          %v1758 = vmul.f32 %v1735, %v1754
          %v1759 = vmul.f32 %v1737, %v1755
          %v1760 = vmul.f32 %v1723, %v1738
          %v1761 = vmul.f32 %v1725, %v1739
          %v1762 = vadd.f32 %v1758, %v1760
          %v1763 = vadd.f32 %v1759, %v1761
          %v1764 = vtanh.pop %v1762
          %v1765 = vtanh.pop %v1763
          %v1766 = vmul.f32 %v1749, %v1764
          %v1767 = vmul.f32 %v1751, %v1765
          %v1768 = vpack.c.bf16 %v1766, %v1766
          %v1769 = vpack.c.bf16 %v1767, %v1767
          %vm1770 = vcmask 1043459
          %vm1771 = vsmask.f32 3328
          %vm1772 = vmand %vm1770, %vm1771
          %v1773 = vld [vmem:[%s211] sm:$0x8]
          %v1774 = vsel %vm1772, %v1768, %v1773
          %1775 = vst [vmem:[%s211] sm:$0x8] %v1774
          %v1776 = vld [vmem:[%s211 + $0x4] sm:$0x8]
          %v1777 = vsel %vm1772, %v1769, %v1776
          %1778 = vst [vmem:[%s211 + $0x4] sm:$0x8] %v1777
          %v1779 = vld [vmem:[%s189] sm:$0x88]
          %v1780 = vld [vmem:[%s189 + $0x8] sm:$0x88]
          %v1781 = vld [vmem:[%s189 + $0x10] sm:$0x88]
          %v1782 = vld [vmem:[%s189 + $0x18] sm:$0x88]
          %v1783 = vunpack.c.l.bf16 %v1779
          %v1784 = vunpack.c.h.bf16 %v1779
          %v1785 = vunpack.c.l.bf16 %v1780
          %v1786 = vunpack.c.h.bf16 %v1780
          %v1787 = vunpack.c.l.bf16 %v1781
          %v1788 = vunpack.c.h.bf16 %v1781
          %v1789 = vunpack.c.l.bf16 %v1782
          %v1790 = vunpack.c.h.bf16 %v1782
          %v1793 = vunpack.c.l.b16 %v1768
          %v1794 = vunpack.c.l.b16 %v1769
          %v1795 = vrot.slane %v1793, 6
          %v1796 = vrot.slane %v1794, 5
          %v1797 = vsel %vm628, %v1796, %v1795
          %v1798 = vpack.c.b16 %v1797, %v1797
          %1800 = vmatprep.subr.bf16.mxu0 %v379
          %1801 = vmatpush1.bf16.msra.mxu0 %v378
          %1802 = vmatprep.subr.bf16.mxu0 %v383
          %1803 = vmatpush1.bf16.msra.mxu0 %v382
          %1804 = vmatprep.subr.bf16.mxu0 %v387
          %1805 = vmatpush1.bf16.msra.mxu0 %v386
          %1806 = vmatprep.subr.bf16.mxu0 %v391
          %1807 = vmatpush1.bf16.msra.mxu0 %v390
          %1808 = vmatprep.subr.bf16.mxu0 %v395
          %1809 = vmatpush1.bf16.msra.mxu0 %v394
          %1810 = vmatprep.subr.bf16.mxu0 %v399
          %1811 = vmatpush1.bf16.msra.mxu0 %v398
          %1812 = vmatprep.subr.bf16.mxu0 %v403
          %1813 = vmatpush1.bf16.msra.mxu0 %v402
          %1814 = vmatprep.subr.bf16.mxu0 %v407
          %1815 = vmatpush1.bf16.msra.mxu0 %v406
          %1816 = vmatprep.subr.bf16.mxu0 0
          %1817 = vmatpush1.bf16.msra.mxu0 0
          %1818 = vmatprep.subr.bf16.mxu0 0
          %1819 = vmatpush1.bf16.msra.mxu0 0
          %1820 = vmatprep.subr.bf16.mxu0 0
          %1821 = vmatpush1.bf16.msra.mxu0 0
          %1822 = vmatprep.subr.bf16.mxu0 0
          %1823 = vmatpush1.bf16.msra.mxu0 0
          %1824 = vmatprep.subr.bf16.mxu0 0
          %1825 = vmatpush1.bf16.msra.mxu0 0
          %1826 = vmatprep.subr.bf16.mxu0 0
          %1827 = vmatpush1.bf16.msra.mxu0 0
          %1828 = vmatprep.subr.bf16.mxu0 0
          %1829 = vmatpush1.bf16.msra.mxu0 0
          %1830 = vmatprep.subr.bf16.mxu0 0
          %1831 = vmatpush1.bf16.msra.mxu0 0
          %1832 = vmatprep.mubr.bf16.mxu0 0
          %1833 = vmatmul.mubr.bf16.gmra.mrb[0].mxu0 %v1798
          %v1834 = vpop.f32.mrb[0].mxu0
          %v1835 = vadd.f32 0.0, %v1834
          %v1836 = vpop.f32.mrb[0].mxu0
          %v1837 = vadd.f32 0.0, %v1836
          %v1838 = vpop.f32.mrb[0].mxu0
          %v1839 = vpop.f32.mrb[0].mxu0
          %1840 = vdwg.mxu0
          %1841 = vmatprep.subr.bf16.mxu0 %v381
          %1842 = vmatpush1.bf16.msra.mxu0 %v380
          %1843 = vmatprep.subr.bf16.mxu0 %v385
          %1844 = vmatpush1.bf16.msra.mxu0 %v384
          %1845 = vmatprep.subr.bf16.mxu0 %v389
          %1846 = vmatpush1.bf16.msra.mxu0 %v388
          %1847 = vmatprep.subr.bf16.mxu0 %v393
          %1848 = vmatpush1.bf16.msra.mxu0 %v392
          %1849 = vmatprep.subr.bf16.mxu0 %v397
          %1850 = vmatpush1.bf16.msra.mxu0 %v396
          %1851 = vmatprep.subr.bf16.mxu0 %v401
          %1852 = vmatpush1.bf16.msra.mxu0 %v400
          %1853 = vmatprep.subr.bf16.mxu0 %v405
          %1854 = vmatpush1.bf16.msra.mxu0 %v404
          %1855 = vmatprep.subr.bf16.mxu0 %v409
          %1856 = vmatpush1.bf16.msra.mxu0 %v408
          %1857 = vmatprep.subr.bf16.mxu0 0
          %1858 = vmatpush1.bf16.msra.mxu0 0
          %1859 = vmatprep.subr.bf16.mxu0 0
          %1860 = vmatpush1.bf16.msra.mxu0 0
          %1861 = vmatprep.subr.bf16.mxu0 0
          %1862 = vmatpush1.bf16.msra.mxu0 0
          %1863 = vmatprep.subr.bf16.mxu0 0
          %1864 = vmatpush1.bf16.msra.mxu0 0
          %1865 = vmatprep.subr.bf16.mxu0 0
          %1866 = vmatpush1.bf16.msra.mxu0 0
          %1867 = vmatprep.subr.bf16.mxu0 0
          %1868 = vmatpush1.bf16.msra.mxu0 0
          %1869 = vmatprep.subr.bf16.mxu0 0
          %1870 = vmatpush1.bf16.msra.mxu0 0
          %1871 = vmatprep.subr.bf16.mxu0 0
          %1872 = vmatpush1.bf16.msra.mxu0 0
          %1873 = vmatprep.mubr.bf16.mxu0 0
          %1874 = vmatmul.mubr.bf16.gmra.mrb[0].mxu0 %v1798
          %v1875 = vpop.f32.mrb[0].mxu0
          %v1876 = vadd.f32 0.0, %v1875
          %v1877 = vpop.f32.mrb[0].mxu0
          %v1878 = vadd.f32 0.0, %v1877
          %v1879 = vpop.f32.mrb[0].mxu0
          %v1880 = vpop.f32.mrb[0].mxu0
          %1881 = vdwg.mxu0
          %v1886 = vrot.slane %v1835, 1
          %v1887 = vrot.slane %v1837, 1
          %v1888 = vrot.slane %v1876, 1
          %v1889 = vrot.slane %v1878, 1
          %v1890 = vrot.slane %v1835, 2
          %v1891 = vrot.slane %v1837, 2
          %v1892 = vrot.slane %v1876, 2
          %v1893 = vrot.slane %v1878, 2
          %v1902 = vadd.f32 %v1783, %v1886
          %v1903 = vadd.f32 %v1784, %v1887
          %v1904 = vadd.f32 %v1785, %v1888
          %v1905 = vadd.f32 %v1786, %v1889
          %v1906 = vadd.f32 %v1787, %v1890
          %v1907 = vadd.f32 %v1788, %v1891
          %v1908 = vadd.f32 %v1789, %v1892
          %v1909 = vadd.f32 %v1790, %v1893
          %v1910 = vxor.u32 %v1902, 2147483648
          %v1911 = vxor.u32 %v1906, 2147483648
          %v1912 = vmul.f32 %v1910, 1.442695
          %v1913 = vpow.pop %v1912
          %v1914 = vmul.f32 %v1911, 1.442695
          %v1915 = vpow.pop %v1914
          %v1916 = vadd.f32 %v1913, 1.0
          %v1917 = vadd.f32 %v1915, 1.0
          %v1918 = vrcp.pop %v1916
          %v1919 = vmul.f32 1.0, %v1918
          %v1920 = vrcp.pop %v1917
          %v1921 = vmul.f32 1.0, %v1920
          %v1922 = vxor.u32 %v1903, 2147483648
          %v1923 = vxor.u32 %v1907, 2147483648
          %v1924 = vmul.f32 %v1922, 1.442695
          %v1925 = vpow.pop %v1924
          %v1926 = vmul.f32 %v1923, 1.442695
          %v1927 = vpow.pop %v1926
          %v1928 = vadd.f32 %v1925, 1.0
          %v1929 = vadd.f32 %v1927, 1.0
          %v1930 = vrcp.pop %v1928
          %v1931 = vmul.f32 1.0, %v1930
          %v1932 = vrcp.pop %v1929
          %v1933 = vmul.f32 1.0, %v1932
          %v1934 = vtanh.pop %v1904
          %v1935 = vtanh.pop %v1908
          %v1936 = vxor.u32 %v1905, 2147483648
          %v1937 = vxor.u32 %v1909, 2147483648
          %v1938 = vmul.f32 %v1936, 1.442695
          %v1939 = vpow.pop %v1938
          %v1940 = vmul.f32 %v1937, 1.442695
          %v1941 = vpow.pop %v1940
          %v1942 = vadd.f32 %v1939, 1.0
          %v1943 = vadd.f32 %v1941, 1.0
          %v1944 = vrcp.pop %v1942
          %v1945 = vmul.f32 1.0, %v1944
          %v1946 = vrcp.pop %v1943
          %v1947 = vmul.f32 1.0, %v1946
          %v1950 = vrot.slane %v1762, 7
          %v1951 = vrot.slane %v1763, 7
          %v1954 = vmul.f32 %v1931, %v1950
          %v1955 = vmul.f32 %v1933, %v1951
          %v1956 = vmul.f32 %v1919, %v1934
          %v1957 = vmul.f32 %v1921, %v1935
          %v1958 = vadd.f32 %v1954, %v1956
          %v1959 = vadd.f32 %v1955, %v1957
          %v1960 = vtanh.pop %v1958
          %v1961 = vtanh.pop %v1959
          %v1962 = vmul.f32 %v1945, %v1960
          %v1963 = vmul.f32 %v1947, %v1961
          %v1964 = vpack.c.bf16 %v1962, %v1962
          %v1965 = vpack.c.bf16 %v1963, %v1963
          %vm1966 = vsmask.f32 7950
          %vm1967 = vmand %vm1770, %vm1966
          %v1968 = vld [vmem:[%s211] sm:$0x8]
          %v1969 = vsel %vm1967, %v1964, %v1968
          %1970 = vst [vmem:[%s211] sm:$0x8] %v1969
          %v1971 = vld [vmem:[%s211 + $0x4] sm:$0x8]
          %v1972 = vsel %vm1967, %v1965, %v1971
          %1973 = vst [vmem:[%s211 + $0x4] sm:$0x8] %v1972
          %v1976 = vrot.slane %v1963, 7
          %1979 = vst [vmem:[#allocation2 - $0x7] sm:$0x80] %v1962
          %1980 = vst [vmem:[#allocation2 + $0x1] sm:$0x1] %v1976
          %v1983 = vrot.slane %v1959, 7
          %1986 = vst [vmem:[#allocation3 - $0x7] sm:$0x80] %v1958
          %1987 = vst [vmem:[#allocation3 + $0x1] sm:$0x1] %v1983
        $region59: #{forward.26} parent=46 // pred_fallthru
          _
        %p1988 = scmp.eq.s32.totalorder %s17, 1
        // Predicated region
        $region60: #{forward.26} parent=46 // pred_check
          %p1989 = pneg %p1988
        $region61: #{forward.26} parent=46 // pred_check_branch
          %1991 = sbr.rel (%p1989) target = $region63
        $region62: #{forward.26} parent=46 // pred_region
          %v1992 = vld [vmem:[#allocation2] sm:$0x3]
          %v1993 = vld [vmem:[#allocation3] sm:$0x3]
          %v1994 = vld [vmem:[%s189] sm:$0x88]
          %v1995 = vld [vmem:[%s189 + $0x8] sm:$0x88]
          %v1996 = vld [vmem:[%s189 + $0x10] sm:$0x88]
          %v1997 = vld [vmem:[%s189 + $0x18] sm:$0x88]
          %v1998 = vunpack.c.l.bf16 %v1994
          %v1999 = vunpack.c.h.bf16 %v1994
          %v2000 = vunpack.c.l.bf16 %v1995
          %v2001 = vunpack.c.h.bf16 %v1995
          %v2002 = vunpack.c.l.bf16 %v1996
          %v2003 = vunpack.c.h.bf16 %v1996
          %v2004 = vunpack.c.l.bf16 %v1997
          %v2005 = vunpack.c.h.bf16 %v1997
          %v2006 = vpack.c.bf16 %v1992, %v1992
          %v2039 = vunpack.c.l.b16 %v231
          %v2040 = vunpack.c.h.b16 %v231
          %v2041 = vunpack.c.l.b16 %v232
          %v2042 = vunpack.c.h.b16 %v232
          %v2043 = vunpack.c.l.b16 %v233
          %v2044 = vunpack.c.h.b16 %v233
          %v2045 = vunpack.c.l.b16 %v234
          %v2046 = vunpack.c.h.b16 %v234
          %v2047 = vunpack.c.l.b16 %v235
          %v2048 = vunpack.c.h.b16 %v235
          %v2049 = vunpack.c.l.b16 %v236
          %v2050 = vunpack.c.h.b16 %v236
          %v2051 = vunpack.c.l.b16 %v237
          %v2052 = vunpack.c.h.b16 %v237
          %v2053 = vunpack.c.l.b16 %v238
          %v2054 = vunpack.c.h.b16 %v238
          %v2055 = vunpack.c.l.b16 %v239
          %v2056 = vunpack.c.h.b16 %v239
          %v2057 = vunpack.c.l.b16 %v240
          %v2058 = vunpack.c.h.b16 %v240
          %v2059 = vunpack.c.l.b16 %v241
          %v2060 = vunpack.c.h.b16 %v241
          %v2061 = vunpack.c.l.b16 %v242
          %v2062 = vunpack.c.h.b16 %v242
          %v2063 = vunpack.c.l.b16 %v243
          %v2064 = vunpack.c.h.b16 %v243
          %v2065 = vunpack.c.l.b16 %v244
          %v2066 = vunpack.c.h.b16 %v244
          %v2067 = vunpack.c.l.b16 %v245
          %v2068 = vunpack.c.h.b16 %v245
          %v2069 = vunpack.c.l.b16 %v246
          %v2070 = vunpack.c.h.b16 %v246
          %v2071 = vunpack.c.l.b16 %v247
          %v2072 = vunpack.c.h.b16 %v247
          %v2073 = vunpack.c.l.b16 %v248
          %v2074 = vunpack.c.h.b16 %v248
          %v2075 = vunpack.c.l.b16 %v249
          %v2076 = vunpack.c.h.b16 %v249
          %v2077 = vunpack.c.l.b16 %v250
          %v2078 = vunpack.c.h.b16 %v250
          %v2079 = vunpack.c.l.b16 %v251
          %v2080 = vunpack.c.h.b16 %v251
          %v2081 = vunpack.c.l.b16 %v252
          %v2082 = vunpack.c.h.b16 %v252
          %v2083 = vunpack.c.l.b16 %v253
          %v2084 = vunpack.c.h.b16 %v253
          %v2085 = vunpack.c.l.b16 %v254
          %v2086 = vunpack.c.h.b16 %v254
          %v2087 = vunpack.c.l.b16 %v255
          %v2088 = vunpack.c.h.b16 %v255
          %v2089 = vunpack.c.l.b16 %v256
          %v2090 = vunpack.c.h.b16 %v256
          %v2091 = vunpack.c.l.b16 %v257
          %v2092 = vunpack.c.h.b16 %v257
          %v2093 = vunpack.c.l.b16 %v258
          %v2094 = vunpack.c.h.b16 %v258
          %v2095 = vunpack.c.l.b16 %v259
          %v2096 = vunpack.c.h.b16 %v259
          %v2097 = vunpack.c.l.b16 %v260
          %v2098 = vunpack.c.h.b16 %v260
          %v2099 = vunpack.c.l.b16 %v261
          %v2100 = vunpack.c.h.b16 %v261
          %v2101 = vunpack.c.l.b16 %v262
          %v2102 = vunpack.c.h.b16 %v262
          %v2103 = vpack.c.b16 %v2043, %v2039
          %v2104 = vpack.c.b16 %v2044, %v2040
          %v2105 = vpack.c.b16 %v2045, %v2041
          %v2106 = vpack.c.b16 %v2046, %v2042
          %v2107 = vpack.c.b16 %v2051, %v2047
          %v2108 = vpack.c.b16 %v2052, %v2048
          %v2109 = vpack.c.b16 %v2053, %v2049
          %v2110 = vpack.c.b16 %v2054, %v2050
          %v2111 = vpack.c.b16 %v2059, %v2055
          %v2112 = vpack.c.b16 %v2060, %v2056
          %v2113 = vpack.c.b16 %v2061, %v2057
          %v2114 = vpack.c.b16 %v2062, %v2058
          %v2115 = vpack.c.b16 %v2067, %v2063
          %v2116 = vpack.c.b16 %v2068, %v2064
          %v2117 = vpack.c.b16 %v2069, %v2065
          %v2118 = vpack.c.b16 %v2070, %v2066
          %v2119 = vpack.c.b16 %v2075, %v2071
          %v2120 = vpack.c.b16 %v2076, %v2072
          %v2121 = vpack.c.b16 %v2077, %v2073
          %v2122 = vpack.c.b16 %v2078, %v2074
          %v2123 = vpack.c.b16 %v2083, %v2079
          %v2124 = vpack.c.b16 %v2084, %v2080
          %v2125 = vpack.c.b16 %v2085, %v2081
          %v2126 = vpack.c.b16 %v2086, %v2082
          %v2127 = vpack.c.b16 %v2091, %v2087
          %v2128 = vpack.c.b16 %v2092, %v2088
          %v2129 = vpack.c.b16 %v2093, %v2089
          %v2130 = vpack.c.b16 %v2094, %v2090
          %v2131 = vpack.c.b16 %v2099, %v2095
          %v2132 = vpack.c.b16 %v2100, %v2096
          %v2133 = vpack.c.b16 %v2101, %v2097
          %v2134 = vpack.c.b16 %v2102, %v2098
          %2167 = vmatprep.subr.bf16.mxu0 %v2104
          %2168 = vmatpush1.bf16.msra.mxu0 %v2103
          %2169 = vmatprep.subr.bf16.mxu0 %v2108
          %2170 = vmatpush1.bf16.msra.mxu0 %v2107
          %2171 = vmatprep.subr.bf16.mxu0 %v2112
          %2172 = vmatpush1.bf16.msra.mxu0 %v2111
          %2173 = vmatprep.subr.bf16.mxu0 %v2116
          %2174 = vmatpush1.bf16.msra.mxu0 %v2115
          %2175 = vmatprep.subr.bf16.mxu0 %v2120
          %2176 = vmatpush1.bf16.msra.mxu0 %v2119
          %2177 = vmatprep.subr.bf16.mxu0 %v2124
          %2178 = vmatpush1.bf16.msra.mxu0 %v2123
          %2179 = vmatprep.subr.bf16.mxu0 %v2128
          %2180 = vmatpush1.bf16.msra.mxu0 %v2127
          %2181 = vmatprep.subr.bf16.mxu0 %v2132
          %2182 = vmatpush1.bf16.msra.mxu0 %v2131
          %2183 = vmatprep.subr.bf16.mxu0 0
          %2184 = vmatpush1.bf16.msra.mxu0 0
          %2185 = vmatprep.subr.bf16.mxu0 0
          %2186 = vmatpush1.bf16.msra.mxu0 0
          %2187 = vmatprep.subr.bf16.mxu0 0
          %2188 = vmatpush1.bf16.msra.mxu0 0
          %2189 = vmatprep.subr.bf16.mxu0 0
          %2190 = vmatpush1.bf16.msra.mxu0 0
          %2191 = vmatprep.subr.bf16.mxu0 0
          %2192 = vmatpush1.bf16.msra.mxu0 0
          %2193 = vmatprep.subr.bf16.mxu0 0
          %2194 = vmatpush1.bf16.msra.mxu0 0
          %2195 = vmatprep.subr.bf16.mxu0 0
          %2196 = vmatpush1.bf16.msra.mxu0 0
          %2197 = vmatprep.subr.bf16.mxu0 0
          %2198 = vmatpush1.bf16.msra.mxu0 0
          %2199 = vmatprep.mubr.bf16.mxu0 0
          %2200 = vmatmul.mubr.bf16.gmra.mrb[0].mxu0 %v2006
          %v2201 = vpop.f32.mrb[0].mxu0
          %v2202 = vadd.f32 0.0, %v2201
          %v2203 = vpop.f32.mrb[0].mxu0
          %v2204 = vadd.f32 0.0, %v2203
          %v2205 = vpop.f32.mrb[0].mxu0
          %v2206 = vpop.f32.mrb[0].mxu0
          %2207 = vdwg.mxu0
          %2208 = vmatprep.subr.bf16.mxu0 %v2106
          %2209 = vmatpush1.bf16.msra.mxu0 %v2105
          %2210 = vmatprep.subr.bf16.mxu0 %v2110
          %2211 = vmatpush1.bf16.msra.mxu0 %v2109
          %2212 = vmatprep.subr.bf16.mxu0 %v2114
          %2213 = vmatpush1.bf16.msra.mxu0 %v2113
          %2214 = vmatprep.subr.bf16.mxu0 %v2118
          %2215 = vmatpush1.bf16.msra.mxu0 %v2117
          %2216 = vmatprep.subr.bf16.mxu0 %v2122
          %2217 = vmatpush1.bf16.msra.mxu0 %v2121
          %2218 = vmatprep.subr.bf16.mxu0 %v2126
          %2219 = vmatpush1.bf16.msra.mxu0 %v2125
          %2220 = vmatprep.subr.bf16.mxu0 %v2130
          %2221 = vmatpush1.bf16.msra.mxu0 %v2129
          %2222 = vmatprep.subr.bf16.mxu0 %v2134
          %2223 = vmatpush1.bf16.msra.mxu0 %v2133
          %2224 = vmatprep.subr.bf16.mxu0 0
          %2225 = vmatpush1.bf16.msra.mxu0 0
          %2226 = vmatprep.subr.bf16.mxu0 0
          %2227 = vmatpush1.bf16.msra.mxu0 0
          %2228 = vmatprep.subr.bf16.mxu0 0
          %2229 = vmatpush1.bf16.msra.mxu0 0
          %2230 = vmatprep.subr.bf16.mxu0 0
          %2231 = vmatpush1.bf16.msra.mxu0 0
          %2232 = vmatprep.subr.bf16.mxu0 0
          %2233 = vmatpush1.bf16.msra.mxu0 0
          %2234 = vmatprep.subr.bf16.mxu0 0
          %2235 = vmatpush1.bf16.msra.mxu0 0
          %2236 = vmatprep.subr.bf16.mxu0 0
          %2237 = vmatpush1.bf16.msra.mxu0 0
          %2238 = vmatprep.subr.bf16.mxu0 0
          %2239 = vmatpush1.bf16.msra.mxu0 0
          %2240 = vmatprep.mubr.bf16.mxu0 0
          %2241 = vmatmul.mubr.bf16.gmra.mrb[0].mxu0 %v2006
          %v2242 = vpop.f32.mrb[0].mxu0
          %v2243 = vadd.f32 0.0, %v2242
          %v2244 = vpop.f32.mrb[0].mxu0
          %v2245 = vadd.f32 0.0, %v2244
          %v2246 = vpop.f32.mrb[0].mxu0
          %v2247 = vpop.f32.mrb[0].mxu0
          %2248 = vdwg.mxu0
          %v2253 = vrot.slane %v2202, 1
          %v2254 = vrot.slane %v2204, 1
          %v2255 = vrot.slane %v2243, 1
          %v2256 = vrot.slane %v2245, 1
          %v2257 = vrot.slane %v2202, 2
          %v2258 = vrot.slane %v2204, 2
          %v2259 = vrot.slane %v2243, 2
          %v2260 = vrot.slane %v2245, 2
          %v2269 = vadd.f32 %v1998, %v2253
          %v2270 = vadd.f32 %v1999, %v2254
          %v2271 = vadd.f32 %v2000, %v2255
          %v2272 = vadd.f32 %v2001, %v2256
          %v2273 = vadd.f32 %v2002, %v2257
          %v2274 = vadd.f32 %v2003, %v2258
          %v2275 = vadd.f32 %v2004, %v2259
          %v2276 = vadd.f32 %v2005, %v2260
          %v2277 = vxor.u32 %v2269, 2147483648
          %v2278 = vxor.u32 %v2273, 2147483648
          %v2279 = vmul.f32 %v2277, 1.442695
          %v2280 = vpow.pop %v2279
          %v2281 = vmul.f32 %v2278, 1.442695
          %v2282 = vpow.pop %v2281
          %v2283 = vadd.f32 %v2280, 1.0
          %v2284 = vadd.f32 %v2282, 1.0
          %v2285 = vrcp.pop %v2283
          %v2286 = vmul.f32 1.0, %v2285
          %v2287 = vrcp.pop %v2284
          %v2288 = vmul.f32 1.0, %v2287
          %v2289 = vxor.u32 %v2270, 2147483648
          %v2290 = vxor.u32 %v2274, 2147483648
          %v2291 = vmul.f32 %v2289, 1.442695
          %v2292 = vpow.pop %v2291
          %v2293 = vmul.f32 %v2290, 1.442695
          %v2294 = vpow.pop %v2293
          %v2295 = vadd.f32 %v2292, 1.0
          %v2296 = vadd.f32 %v2294, 1.0
          %v2297 = vrcp.pop %v2295
          %v2298 = vmul.f32 1.0, %v2297
          %v2299 = vrcp.pop %v2296
          %v2300 = vmul.f32 1.0, %v2299
          %v2301 = vtanh.pop %v2271
          %v2302 = vtanh.pop %v2275
          %v2303 = vxor.u32 %v2272, 2147483648
          %v2304 = vxor.u32 %v2276, 2147483648
          %v2305 = vmul.f32 %v2303, 1.442695
          %v2306 = vpow.pop %v2305
          %v2307 = vmul.f32 %v2304, 1.442695
          %v2308 = vpow.pop %v2307
          %v2309 = vadd.f32 %v2306, 1.0
          %v2310 = vadd.f32 %v2308, 1.0
          %v2311 = vrcp.pop %v2309
          %v2312 = vmul.f32 1.0, %v2311
          %v2313 = vrcp.pop %v2310
          %v2314 = vmul.f32 1.0, %v2313
          %v2316 = vrot.slane %v1993, 1
          %v2317 = vrot.slane %v1993, 2
          %v2320 = vmul.f32 %v2298, %v2316
          %v2321 = vmul.f32 %v2300, %v2317
          %v2322 = vmul.f32 %v2286, %v2301
          %v2323 = vmul.f32 %v2288, %v2302
          %v2324 = vadd.f32 %v2320, %v2322
          %v2325 = vadd.f32 %v2321, %v2323
          %v2326 = vtanh.pop %v2324
          %v2327 = vtanh.pop %v2325
          %v2328 = vmul.f32 %v2312, %v2326
          %v2329 = vmul.f32 %v2314, %v2327
          %v2330 = vpack.c.bf16 %v2328, %v2328
          %v2331 = vpack.c.bf16 %v2329, %v2329
          %vm2332 = vcmask 1043459
          %vm2333 = vsmask.f32 7950
          %vm2334 = vmand %vm2332, %vm2333
          %v2335 = vld [vmem:[%s211] sm:$0x8]
          %v2336 = vsel %vm2334, %v2330, %v2335
          %2337 = vst [vmem:[%s211] sm:$0x8] %v2336
          %v2338 = vld [vmem:[%s211 + $0x4] sm:$0x8]
          %v2339 = vsel %vm2334, %v2331, %v2338
          %2340 = vst [vmem:[%s211 + $0x4] sm:$0x8] %v2339
          %v2341 = vld [vmem:[%s189] sm:$0x88]
          %v2342 = vld [vmem:[%s189 + $0x8] sm:$0x88]
          %v2343 = vld [vmem:[%s189 + $0x10] sm:$0x88]
          %v2344 = vld [vmem:[%s189 + $0x18] sm:$0x88]
          %v2345 = vunpack.c.l.bf16 %v2341
          %v2346 = vunpack.c.h.bf16 %v2341
          %v2347 = vunpack.c.l.bf16 %v2342
          %v2348 = vunpack.c.h.bf16 %v2342
          %v2349 = vunpack.c.l.bf16 %v2343
          %v2350 = vunpack.c.h.bf16 %v2343
          %v2351 = vunpack.c.l.bf16 %v2344
          %v2352 = vunpack.c.h.bf16 %v2344
          %v2355 = vunpack.c.l.b16 %v2330
          %v2356 = vunpack.c.l.b16 %v2331
          %v2357 = vrot.slane %v2355, 7
          %v2358 = vrot.slane %v2356, 6
          %vm2359 = vcmask 1041409
          %v2360 = vsel %vm2359, %v2358, %v2357
          %v2361 = vpack.c.b16 %v2360, %v2360
          %2363 = vmatprep.subr.bf16.mxu0 %v2104
          %2364 = vmatpush1.bf16.msra.mxu0 %v2103
          %2365 = vmatprep.subr.bf16.mxu0 %v2108
          %2366 = vmatpush1.bf16.msra.mxu0 %v2107
          %2367 = vmatprep.subr.bf16.mxu0 %v2112
          %2368 = vmatpush1.bf16.msra.mxu0 %v2111
          %2369 = vmatprep.subr.bf16.mxu0 %v2116
          %2370 = vmatpush1.bf16.msra.mxu0 %v2115
          %2371 = vmatprep.subr.bf16.mxu0 %v2120
          %2372 = vmatpush1.bf16.msra.mxu0 %v2119
          %2373 = vmatprep.subr.bf16.mxu0 %v2124
          %2374 = vmatpush1.bf16.msra.mxu0 %v2123
          %2375 = vmatprep.subr.bf16.mxu0 %v2128
          %2376 = vmatpush1.bf16.msra.mxu0 %v2127
          %2377 = vmatprep.subr.bf16.mxu0 %v2132
          %2378 = vmatpush1.bf16.msra.mxu0 %v2131
          %2379 = vmatprep.subr.bf16.mxu0 0
          %2380 = vmatpush1.bf16.msra.mxu0 0
          %2381 = vmatprep.subr.bf16.mxu0 0
          %2382 = vmatpush1.bf16.msra.mxu0 0
          %2383 = vmatprep.subr.bf16.mxu0 0
          %2384 = vmatpush1.bf16.msra.mxu0 0
          %2385 = vmatprep.subr.bf16.mxu0 0
          %2386 = vmatpush1.bf16.msra.mxu0 0
          %2387 = vmatprep.subr.bf16.mxu0 0
          %2388 = vmatpush1.bf16.msra.mxu0 0
          %2389 = vmatprep.subr.bf16.mxu0 0
          %2390 = vmatpush1.bf16.msra.mxu0 0
          %2391 = vmatprep.subr.bf16.mxu0 0
          %2392 = vmatpush1.bf16.msra.mxu0 0
          %2393 = vmatprep.subr.bf16.mxu0 0
          %2394 = vmatpush1.bf16.msra.mxu0 0
          %2395 = vmatprep.mubr.bf16.mxu0 0
          %2396 = vmatmul.mubr.bf16.gmra.mrb[0].mxu0 %v2361
          %v2397 = vpop.f32.mrb[0].mxu0
          %v2398 = vadd.f32 0.0, %v2397
          %v2399 = vpop.f32.mrb[0].mxu0
          %v2400 = vadd.f32 0.0, %v2399
          %v2401 = vpop.f32.mrb[0].mxu0
          %v2402 = vpop.f32.mrb[0].mxu0
          %2403 = vdwg.mxu0
          %2404 = vmatprep.subr.bf16.mxu0 %v2106
          %2405 = vmatpush1.bf16.msra.mxu0 %v2105
          %2406 = vmatprep.subr.bf16.mxu0 %v2110
          %2407 = vmatpush1.bf16.msra.mxu0 %v2109
          %2408 = vmatprep.subr.bf16.mxu0 %v2114
          %2409 = vmatpush1.bf16.msra.mxu0 %v2113
          %2410 = vmatprep.subr.bf16.mxu0 %v2118
          %2411 = vmatpush1.bf16.msra.mxu0 %v2117
          %2412 = vmatprep.subr.bf16.mxu0 %v2122
          %2413 = vmatpush1.bf16.msra.mxu0 %v2121
          %2414 = vmatprep.subr.bf16.mxu0 %v2126
          %2415 = vmatpush1.bf16.msra.mxu0 %v2125
          %2416 = vmatprep.subr.bf16.mxu0 %v2130
          %2417 = vmatpush1.bf16.msra.mxu0 %v2129
          %2418 = vmatprep.subr.bf16.mxu0 %v2134
          %2419 = vmatpush1.bf16.msra.mxu0 %v2133
          %2420 = vmatprep.subr.bf16.mxu0 0
          %2421 = vmatpush1.bf16.msra.mxu0 0
          %2422 = vmatprep.subr.bf16.mxu0 0
          %2423 = vmatpush1.bf16.msra.mxu0 0
          %2424 = vmatprep.subr.bf16.mxu0 0
          %2425 = vmatpush1.bf16.msra.mxu0 0
          %2426 = vmatprep.subr.bf16.mxu0 0
          %2427 = vmatpush1.bf16.msra.mxu0 0
          %2428 = vmatprep.subr.bf16.mxu0 0
          %2429 = vmatpush1.bf16.msra.mxu0 0
          %2430 = vmatprep.subr.bf16.mxu0 0
          %2431 = vmatpush1.bf16.msra.mxu0 0
          %2432 = vmatprep.subr.bf16.mxu0 0
          %2433 = vmatpush1.bf16.msra.mxu0 0
          %2434 = vmatprep.subr.bf16.mxu0 0
          %2435 = vmatpush1.bf16.msra.mxu0 0
          %2436 = vmatprep.mubr.bf16.mxu0 0
          %2437 = vmatmul.mubr.bf16.gmra.mrb[0].mxu0 %v2361
          %v2438 = vpop.f32.mrb[0].mxu0
          %v2439 = vadd.f32 0.0, %v2438
          %v2440 = vpop.f32.mrb[0].mxu0
          %v2441 = vadd.f32 0.0, %v2440
          %v2442 = vpop.f32.mrb[0].mxu0
          %v2443 = vpop.f32.mrb[0].mxu0
          %2444 = vdwg.mxu0
          %v2449 = vrot.slane %v2398, 2
          %v2450 = vrot.slane %v2400, 2
          %v2451 = vrot.slane %v2439, 2
          %v2452 = vrot.slane %v2441, 2
          %v2453 = vrot.slane %v2398, 3
          %v2454 = vrot.slane %v2400, 3
          %v2455 = vrot.slane %v2439, 3
          %v2456 = vrot.slane %v2441, 3
          %v2465 = vadd.f32 %v2345, %v2449
          %v2466 = vadd.f32 %v2346, %v2450
          %v2467 = vadd.f32 %v2347, %v2451
          %v2468 = vadd.f32 %v2348, %v2452
          %v2469 = vadd.f32 %v2349, %v2453
          %v2470 = vadd.f32 %v2350, %v2454
          %v2471 = vadd.f32 %v2351, %v2455
          %v2472 = vadd.f32 %v2352, %v2456
          %v2473 = vxor.u32 %v2465, 2147483648
          %v2474 = vxor.u32 %v2469, 2147483648
          %v2475 = vmul.f32 %v2473, 1.442695
          %v2476 = vpow.pop %v2475
          %v2477 = vmul.f32 %v2474, 1.442695
          %v2478 = vpow.pop %v2477
          %v2479 = vadd.f32 %v2476, 1.0
          %v2480 = vadd.f32 %v2478, 1.0
          %v2481 = vrcp.pop %v2479
          %v2482 = vmul.f32 1.0, %v2481
          %v2483 = vrcp.pop %v2480
          %v2484 = vmul.f32 1.0, %v2483
          %v2485 = vxor.u32 %v2466, 2147483648
          %v2486 = vxor.u32 %v2470, 2147483648
          %v2487 = vmul.f32 %v2485, 1.442695
          %v2488 = vpow.pop %v2487
          %v2489 = vmul.f32 %v2486, 1.442695
          %v2490 = vpow.pop %v2489
          %v2491 = vadd.f32 %v2488, 1.0
          %v2492 = vadd.f32 %v2490, 1.0
          %v2493 = vrcp.pop %v2491
          %v2494 = vmul.f32 1.0, %v2493
          %v2495 = vrcp.pop %v2492
          %v2496 = vmul.f32 1.0, %v2495
          %v2497 = vtanh.pop %v2467
          %v2498 = vtanh.pop %v2471
          %v2499 = vxor.u32 %v2468, 2147483648
          %v2500 = vxor.u32 %v2472, 2147483648
          %v2501 = vmul.f32 %v2499, 1.442695
          %v2502 = vpow.pop %v2501
          %v2503 = vmul.f32 %v2500, 1.442695
          %v2504 = vpow.pop %v2503
          %v2505 = vadd.f32 %v2502, 1.0
          %v2506 = vadd.f32 %v2504, 1.0
          %v2507 = vrcp.pop %v2505
          %v2508 = vmul.f32 1.0, %v2507
          %v2509 = vrcp.pop %v2506
          %v2510 = vmul.f32 1.0, %v2509
          %v2513 = vrot.slane %v2324, 1
          %v2514 = vrot.slane %v2325, 1
          %v2517 = vmul.f32 %v2494, %v2513
          %v2518 = vmul.f32 %v2496, %v2514
          %v2519 = vmul.f32 %v2482, %v2497
          %v2520 = vmul.f32 %v2484, %v2498
          %v2521 = vadd.f32 %v2517, %v2519
          %v2522 = vadd.f32 %v2518, %v2520
          %v2523 = vtanh.pop %v2521
          %v2524 = vtanh.pop %v2522
          %v2525 = vmul.f32 %v2508, %v2523
          %v2526 = vmul.f32 %v2510, %v2524
          %v2527 = vpack.c.bf16 %v2525, %v2525
          %v2528 = vpack.c.bf16 %v2526, %v2526
          %vm2529 = vsmask.f32 3328
          %vm2530 = vmand %vm2332, %vm2529
          %v2531 = vld [vmem:[%s211] sm:$0x8]
          %v2532 = vsel %vm2530, %v2527, %v2531
          %2533 = vst [vmem:[%s211] sm:$0x8] %v2532
          %v2534 = vld [vmem:[%s211 + $0x4] sm:$0x8]
          %v2535 = vsel %vm2530, %v2528, %v2534
          %2536 = vst [vmem:[%s211 + $0x4] sm:$0x8] %v2535
          %v2537 = vld [vmem:[%s189] sm:$0x44]
          %v2538 = vld [vmem:[%s189 + $0x8] sm:$0x44]
          %v2539 = vld [vmem:[%s189 + $0x10] sm:$0x44]
          %v2540 = vld [vmem:[%s189 + $0x18] sm:$0x44]
          %v2541 = vunpack.c.l.bf16 %v2537
          %v2542 = vunpack.c.h.bf16 %v2537
          %v2543 = vunpack.c.l.bf16 %v2538
          %v2544 = vunpack.c.h.bf16 %v2538
          %v2545 = vunpack.c.l.bf16 %v2539
          %v2546 = vunpack.c.h.bf16 %v2539
          %v2547 = vunpack.c.l.bf16 %v2540
          %v2548 = vunpack.c.h.bf16 %v2540
          %v2551 = vunpack.c.l.b16 %v2527
          %v2552 = vunpack.c.l.b16 %v2528
          %v2553 = vrot.slane %v2551, 6
          %v2554 = vrot.slane %v2552, 5
          %v2555 = vsel %vm2359, %v2554, %v2553
          %v2556 = vpack.c.b16 %v2555, %v2555
          %2558 = vmatprep.subr.bf16.mxu0 %v2104
          %2559 = vmatpush1.bf16.msra.mxu0 %v2103
          %2560 = vmatprep.subr.bf16.mxu0 %v2108
          %2561 = vmatpush1.bf16.msra.mxu0 %v2107
          %2562 = vmatprep.subr.bf16.mxu0 %v2112
          %2563 = vmatpush1.bf16.msra.mxu0 %v2111
          %2564 = vmatprep.subr.bf16.mxu0 %v2116
          %2565 = vmatpush1.bf16.msra.mxu0 %v2115
          %2566 = vmatprep.subr.bf16.mxu0 %v2120
          %2567 = vmatpush1.bf16.msra.mxu0 %v2119
          %2568 = vmatprep.subr.bf16.mxu0 %v2124
          %2569 = vmatpush1.bf16.msra.mxu0 %v2123
          %2570 = vmatprep.subr.bf16.mxu0 %v2128
          %2571 = vmatpush1.bf16.msra.mxu0 %v2127
          %2572 = vmatprep.subr.bf16.mxu0 %v2132
          %2573 = vmatpush1.bf16.msra.mxu0 %v2131
          %2574 = vmatprep.subr.bf16.mxu0 0
          %2575 = vmatpush1.bf16.msra.mxu0 0
          %2576 = vmatprep.subr.bf16.mxu0 0
          %2577 = vmatpush1.bf16.msra.mxu0 0
          %2578 = vmatprep.subr.bf16.mxu0 0
          %2579 = vmatpush1.bf16.msra.mxu0 0
          %2580 = vmatprep.subr.bf16.mxu0 0
          %2581 = vmatpush1.bf16.msra.mxu0 0
          %2582 = vmatprep.subr.bf16.mxu0 0
          %2583 = vmatpush1.bf16.msra.mxu0 0
          %2584 = vmatprep.subr.bf16.mxu0 0
          %2585 = vmatpush1.bf16.msra.mxu0 0
          %2586 = vmatprep.subr.bf16.mxu0 0
          %2587 = vmatpush1.bf16.msra.mxu0 0
          %2588 = vmatprep.subr.bf16.mxu0 0
          %2589 = vmatpush1.bf16.msra.mxu0 0
          %2590 = vmatprep.mubr.bf16.mxu0 0
          %2591 = vmatmul.mubr.bf16.gmra.mrb[0].mxu0 %v2556
          %v2592 = vpop.f32.mrb[0].mxu0
          %v2593 = vadd.f32 0.0, %v2592
          %v2594 = vpop.f32.mrb[0].mxu0
          %v2595 = vadd.f32 0.0, %v2594
          %v2596 = vpop.f32.mrb[0].mxu0
          %v2597 = vpop.f32.mrb[0].mxu0
          %2598 = vdwg.mxu0
          %2599 = vmatprep.subr.bf16.mxu0 %v2106
          %2600 = vmatpush1.bf16.msra.mxu0 %v2105
          %2601 = vmatprep.subr.bf16.mxu0 %v2110
          %2602 = vmatpush1.bf16.msra.mxu0 %v2109
          %2603 = vmatprep.subr.bf16.mxu0 %v2114
          %2604 = vmatpush1.bf16.msra.mxu0 %v2113
          %2605 = vmatprep.subr.bf16.mxu0 %v2118
          %2606 = vmatpush1.bf16.msra.mxu0 %v2117
          %2607 = vmatprep.subr.bf16.mxu0 %v2122
          %2608 = vmatpush1.bf16.msra.mxu0 %v2121
          %2609 = vmatprep.subr.bf16.mxu0 %v2126
          %2610 = vmatpush1.bf16.msra.mxu0 %v2125
          %2611 = vmatprep.subr.bf16.mxu0 %v2130
          %2612 = vmatpush1.bf16.msra.mxu0 %v2129
          %2613 = vmatprep.subr.bf16.mxu0 %v2134
          %2614 = vmatpush1.bf16.msra.mxu0 %v2133
          %2615 = vmatprep.subr.bf16.mxu0 0
          %2616 = vmatpush1.bf16.msra.mxu0 0
          %2617 = vmatprep.subr.bf16.mxu0 0
          %2618 = vmatpush1.bf16.msra.mxu0 0
          %2619 = vmatprep.subr.bf16.mxu0 0
          %2620 = vmatpush1.bf16.msra.mxu0 0
          %2621 = vmatprep.subr.bf16.mxu0 0
          %2622 = vmatpush1.bf16.msra.mxu0 0
          %2623 = vmatprep.subr.bf16.mxu0 0
          %2624 = vmatpush1.bf16.msra.mxu0 0
          %2625 = vmatprep.subr.bf16.mxu0 0
          %2626 = vmatpush1.bf16.msra.mxu0 0
          %2627 = vmatprep.subr.bf16.mxu0 0
          %2628 = vmatpush1.bf16.msra.mxu0 0
          %2629 = vmatprep.subr.bf16.mxu0 0
          %2630 = vmatpush1.bf16.msra.mxu0 0
          %2631 = vmatprep.mubr.bf16.mxu0 0
          %2632 = vmatmul.mubr.bf16.gmra.mrb[0].mxu0 %v2556
          %v2633 = vpop.f32.mrb[0].mxu0
          %v2634 = vadd.f32 0.0, %v2633
          %v2635 = vpop.f32.mrb[0].mxu0
          %v2636 = vadd.f32 0.0, %v2635
          %v2637 = vpop.f32.mrb[0].mxu0
          %v2638 = vpop.f32.mrb[0].mxu0
          %2639 = vdwg.mxu0
          %v2644 = vrot.slane %v2593, 3
          %v2645 = vrot.slane %v2595, 3
          %v2646 = vrot.slane %v2634, 3
          %v2647 = vrot.slane %v2636, 3
          %v2648 = vrot.slane %v2593, 4
          %v2649 = vrot.slane %v2595, 4
          %v2650 = vrot.slane %v2634, 4
          %v2651 = vrot.slane %v2636, 4
          %v2660 = vadd.f32 %v2541, %v2644
          %v2661 = vadd.f32 %v2542, %v2645
          %v2662 = vadd.f32 %v2543, %v2646
          %v2663 = vadd.f32 %v2544, %v2647
          %v2664 = vadd.f32 %v2545, %v2648
          %v2665 = vadd.f32 %v2546, %v2649
          %v2666 = vadd.f32 %v2547, %v2650
          %v2667 = vadd.f32 %v2548, %v2651
          %v2668 = vxor.u32 %v2660, 2147483648
          %v2669 = vxor.u32 %v2664, 2147483648
          %v2670 = vmul.f32 %v2668, 1.442695
          %v2671 = vpow.pop %v2670
          %v2672 = vmul.f32 %v2669, 1.442695
          %v2673 = vpow.pop %v2672
          %v2674 = vadd.f32 %v2671, 1.0
          %v2675 = vadd.f32 %v2673, 1.0
          %v2676 = vrcp.pop %v2674
          %v2677 = vmul.f32 1.0, %v2676
          %v2678 = vrcp.pop %v2675
          %v2679 = vmul.f32 1.0, %v2678
          %v2680 = vxor.u32 %v2661, 2147483648
          %v2681 = vxor.u32 %v2665, 2147483648
          %v2682 = vmul.f32 %v2680, 1.442695
          %v2683 = vpow.pop %v2682
          %v2684 = vmul.f32 %v2681, 1.442695
          %v2685 = vpow.pop %v2684
          %v2686 = vadd.f32 %v2683, 1.0
          %v2687 = vadd.f32 %v2685, 1.0
          %v2688 = vrcp.pop %v2686
          %v2689 = vmul.f32 1.0, %v2688
          %v2690 = vrcp.pop %v2687
          %v2691 = vmul.f32 1.0, %v2690
          %v2692 = vtanh.pop %v2662
          %v2693 = vtanh.pop %v2666
          %v2694 = vxor.u32 %v2663, 2147483648
          %v2695 = vxor.u32 %v2667, 2147483648
          %v2696 = vmul.f32 %v2694, 1.442695
          %v2697 = vpow.pop %v2696
          %v2698 = vmul.f32 %v2695, 1.442695
          %v2699 = vpow.pop %v2698
          %v2700 = vadd.f32 %v2697, 1.0
          %v2701 = vadd.f32 %v2699, 1.0
          %v2702 = vrcp.pop %v2700
          %v2703 = vmul.f32 1.0, %v2702
          %v2704 = vrcp.pop %v2701
          %v2705 = vmul.f32 1.0, %v2704
          %v2708 = vrot.slane %v2521, 1
          %v2709 = vrot.slane %v2522, 1
          %v2712 = vmul.f32 %v2689, %v2708
          %v2713 = vmul.f32 %v2691, %v2709
          %v2714 = vmul.f32 %v2677, %v2692
          %v2715 = vmul.f32 %v2679, %v2693
          %v2716 = vadd.f32 %v2712, %v2714
          %v2717 = vadd.f32 %v2713, %v2715
          %v2718 = vtanh.pop %v2716
          %v2719 = vtanh.pop %v2717
          %v2720 = vmul.f32 %v2703, %v2718
          %v2721 = vmul.f32 %v2705, %v2719
          %v2722 = vpack.c.bf16 %v2720, %v2720
          %v2723 = vpack.c.bf16 %v2721, %v2721
          %vm2724 = vcmask 1042434
          %vm2725 = vsmask.f32 7946
          %vm2726 = vmand %vm2724, %vm2725
          %v2727 = vld [vmem:[%s211] sm:$0x4]
          %v2728 = vsel %vm2726, %v2722, %v2727
          %2729 = vst [vmem:[%s211] sm:$0x4] %v2728
          %v2730 = vld [vmem:[%s211 + $0x4] sm:$0x4]
          %v2731 = vsel %vm2726, %v2723, %v2730
          %2732 = vst [vmem:[%s211 + $0x4] sm:$0x4] %v2731
          %v2733 = vld [vmem:[%s189] sm:$0x44]
          %v2734 = vld [vmem:[%s189 + $0x8] sm:$0x44]
          %v2735 = vld [vmem:[%s189 + $0x10] sm:$0x44]
          %v2736 = vld [vmem:[%s189 + $0x18] sm:$0x44]
          %v2737 = vunpack.c.l.bf16 %v2733
          %v2738 = vunpack.c.h.bf16 %v2733
          %v2739 = vunpack.c.l.bf16 %v2734
          %v2740 = vunpack.c.h.bf16 %v2734
          %v2741 = vunpack.c.l.bf16 %v2735
          %v2742 = vunpack.c.h.bf16 %v2735
          %v2743 = vunpack.c.l.bf16 %v2736
          %v2744 = vunpack.c.h.bf16 %v2736
          %v2747 = vunpack.c.l.b16 %v2722
          %v2748 = vunpack.c.l.b16 %v2723
          %v2749 = vrot.slane %v2747, 5
          %v2750 = vrot.slane %v2748, 4
          %v2751 = vsel %vm2359, %v2750, %v2749
          %v2752 = vpack.c.b16 %v2751, %v2751
          %2754 = vmatprep.subr.bf16.mxu0 %v2104
          %2755 = vmatpush1.bf16.msra.mxu0 %v2103
          %2756 = vmatprep.subr.bf16.mxu0 %v2108
          %2757 = vmatpush1.bf16.msra.mxu0 %v2107
          %2758 = vmatprep.subr.bf16.mxu0 %v2112
          %2759 = vmatpush1.bf16.msra.mxu0 %v2111
          %2760 = vmatprep.subr.bf16.mxu0 %v2116
          %2761 = vmatpush1.bf16.msra.mxu0 %v2115
          %2762 = vmatprep.subr.bf16.mxu0 %v2120
          %2763 = vmatpush1.bf16.msra.mxu0 %v2119
          %2764 = vmatprep.subr.bf16.mxu0 %v2124
          %2765 = vmatpush1.bf16.msra.mxu0 %v2123
          %2766 = vmatprep.subr.bf16.mxu0 %v2128
          %2767 = vmatpush1.bf16.msra.mxu0 %v2127
          %2768 = vmatprep.subr.bf16.mxu0 %v2132
          %2769 = vmatpush1.bf16.msra.mxu0 %v2131
          %2770 = vmatprep.subr.bf16.mxu0 0
          %2771 = vmatpush1.bf16.msra.mxu0 0
          %2772 = vmatprep.subr.bf16.mxu0 0
          %2773 = vmatpush1.bf16.msra.mxu0 0
          %2774 = vmatprep.subr.bf16.mxu0 0
          %2775 = vmatpush1.bf16.msra.mxu0 0
          %2776 = vmatprep.subr.bf16.mxu0 0
          %2777 = vmatpush1.bf16.msra.mxu0 0
          %2778 = vmatprep.subr.bf16.mxu0 0
          %2779 = vmatpush1.bf16.msra.mxu0 0
          %2780 = vmatprep.subr.bf16.mxu0 0
          %2781 = vmatpush1.bf16.msra.mxu0 0
          %2782 = vmatprep.subr.bf16.mxu0 0
          %2783 = vmatpush1.bf16.msra.mxu0 0
          %2784 = vmatprep.subr.bf16.mxu0 0
          %2785 = vmatpush1.bf16.msra.mxu0 0
          %2786 = vmatprep.mubr.bf16.mxu0 0
          %2787 = vmatmul.mubr.bf16.gmra.mrb[0].mxu0 %v2752
          %v2788 = vpop.f32.mrb[0].mxu0
          %v2789 = vadd.f32 0.0, %v2788
          %v2790 = vpop.f32.mrb[0].mxu0
          %v2791 = vadd.f32 0.0, %v2790
          %v2792 = vpop.f32.mrb[0].mxu0
          %v2793 = vpop.f32.mrb[0].mxu0
          %2794 = vdwg.mxu0
          %2795 = vmatprep.subr.bf16.mxu0 %v2106
          %2796 = vmatpush1.bf16.msra.mxu0 %v2105
          %2797 = vmatprep.subr.bf16.mxu0 %v2110
          %2798 = vmatpush1.bf16.msra.mxu0 %v2109
          %2799 = vmatprep.subr.bf16.mxu0 %v2114
          %2800 = vmatpush1.bf16.msra.mxu0 %v2113
          %2801 = vmatprep.subr.bf16.mxu0 %v2118
          %2802 = vmatpush1.bf16.msra.mxu0 %v2117
          %2803 = vmatprep.subr.bf16.mxu0 %v2122
          %2804 = vmatpush1.bf16.msra.mxu0 %v2121
          %2805 = vmatprep.subr.bf16.mxu0 %v2126
          %2806 = vmatpush1.bf16.msra.mxu0 %v2125
          %2807 = vmatprep.subr.bf16.mxu0 %v2130
          %2808 = vmatpush1.bf16.msra.mxu0 %v2129
          %2809 = vmatprep.subr.bf16.mxu0 %v2134
          %2810 = vmatpush1.bf16.msra.mxu0 %v2133
          %2811 = vmatprep.subr.bf16.mxu0 0
          %2812 = vmatpush1.bf16.msra.mxu0 0
          %2813 = vmatprep.subr.bf16.mxu0 0
          %2814 = vmatpush1.bf16.msra.mxu0 0
          %2815 = vmatprep.subr.bf16.mxu0 0
          %2816 = vmatpush1.bf16.msra.mxu0 0
          %2817 = vmatprep.subr.bf16.mxu0 0
          %2818 = vmatpush1.bf16.msra.mxu0 0
          %2819 = vmatprep.subr.bf16.mxu0 0
          %2820 = vmatpush1.bf16.msra.mxu0 0
          %2821 = vmatprep.subr.bf16.mxu0 0
          %2822 = vmatpush1.bf16.msra.mxu0 0
          %2823 = vmatprep.subr.bf16.mxu0 0
          %2824 = vmatpush1.bf16.msra.mxu0 0
          %2825 = vmatprep.subr.bf16.mxu0 0
          %2826 = vmatpush1.bf16.msra.mxu0 0
          %2827 = vmatprep.mubr.bf16.mxu0 0
          %2828 = vmatmul.mubr.bf16.gmra.mrb[0].mxu0 %v2752
          %v2829 = vpop.f32.mrb[0].mxu0
          %v2830 = vadd.f32 0.0, %v2829
          %v2831 = vpop.f32.mrb[0].mxu0
          %v2832 = vadd.f32 0.0, %v2831
          %v2833 = vpop.f32.mrb[0].mxu0
          %v2834 = vpop.f32.mrb[0].mxu0
          %2835 = vdwg.mxu0
          %v2840 = vrot.slane %v2789, 4
          %v2841 = vrot.slane %v2791, 4
          %v2842 = vrot.slane %v2830, 4
          %v2843 = vrot.slane %v2832, 4
          %v2844 = vrot.slane %v2789, 5
          %v2845 = vrot.slane %v2791, 5
          %v2846 = vrot.slane %v2830, 5
          %v2847 = vrot.slane %v2832, 5
          %v2856 = vadd.f32 %v2737, %v2840
          %v2857 = vadd.f32 %v2738, %v2841
          %v2858 = vadd.f32 %v2739, %v2842
          %v2859 = vadd.f32 %v2740, %v2843
          %v2860 = vadd.f32 %v2741, %v2844
          %v2861 = vadd.f32 %v2742, %v2845
          %v2862 = vadd.f32 %v2743, %v2846
          %v2863 = vadd.f32 %v2744, %v2847
          %v2864 = vxor.u32 %v2856, 2147483648
          %v2865 = vxor.u32 %v2860, 2147483648
          %v2866 = vmul.f32 %v2864, 1.442695
          %v2867 = vpow.pop %v2866
          %v2868 = vmul.f32 %v2865, 1.442695
          %v2869 = vpow.pop %v2868
          %v2870 = vadd.f32 %v2867, 1.0
          %v2871 = vadd.f32 %v2869, 1.0
          %v2872 = vrcp.pop %v2870
          %v2873 = vmul.f32 1.0, %v2872
          %v2874 = vrcp.pop %v2871
          %v2875 = vmul.f32 1.0, %v2874
          %v2876 = vxor.u32 %v2857, 2147483648
          %v2877 = vxor.u32 %v2861, 2147483648
          %v2878 = vmul.f32 %v2876, 1.442695
          %v2879 = vpow.pop %v2878
          %v2880 = vmul.f32 %v2877, 1.442695
          %v2881 = vpow.pop %v2880
          %v2882 = vadd.f32 %v2879, 1.0
          %v2883 = vadd.f32 %v2881, 1.0
          %v2884 = vrcp.pop %v2882
          %v2885 = vmul.f32 1.0, %v2884
          %v2886 = vrcp.pop %v2883
          %v2887 = vmul.f32 1.0, %v2886
          %v2888 = vtanh.pop %v2858
          %v2889 = vtanh.pop %v2862
          %v2890 = vxor.u32 %v2859, 2147483648
          %v2891 = vxor.u32 %v2863, 2147483648
          %v2892 = vmul.f32 %v2890, 1.442695
          %v2893 = vpow.pop %v2892
          %v2894 = vmul.f32 %v2891, 1.442695
          %v2895 = vpow.pop %v2894
          %v2896 = vadd.f32 %v2893, 1.0
          %v2897 = vadd.f32 %v2895, 1.0
          %v2898 = vrcp.pop %v2896
          %v2899 = vmul.f32 1.0, %v2898
          %v2900 = vrcp.pop %v2897
          %v2901 = vmul.f32 1.0, %v2900
          %v2904 = vrot.slane %v2716, 1
          %v2905 = vrot.slane %v2717, 1
          %v2908 = vmul.f32 %v2885, %v2904
          %v2909 = vmul.f32 %v2887, %v2905
          %v2910 = vmul.f32 %v2873, %v2888
          %v2911 = vmul.f32 %v2875, %v2889
          %v2912 = vadd.f32 %v2908, %v2910
          %v2913 = vadd.f32 %v2909, %v2911
          %v2914 = vtanh.pop %v2912
          %v2915 = vtanh.pop %v2913
          %v2916 = vmul.f32 %v2899, %v2914
          %v2917 = vmul.f32 %v2901, %v2915
          %v2918 = vpack.c.bf16 %v2916, %v2916
          %v2919 = vpack.c.bf16 %v2917, %v2917
          %vm2920 = vsmask.f32 2304
          %vm2921 = vmand %vm2724, %vm2920
          %v2922 = vld [vmem:[%s211] sm:$0x4]
          %v2923 = vsel %vm2921, %v2918, %v2922
          %2924 = vst [vmem:[%s211] sm:$0x4] %v2923
          %v2925 = vld [vmem:[%s211 + $0x4] sm:$0x4]
          %v2926 = vsel %vm2921, %v2919, %v2925
          %2927 = vst [vmem:[%s211 + $0x4] sm:$0x4] %v2926
          %v2928 = vld [vmem:[%s189] sm:$0x22]
          %v2929 = vld [vmem:[%s189 + $0x8] sm:$0x22]
          %v2930 = vld [vmem:[%s189 + $0x10] sm:$0x22]
          %v2931 = vld [vmem:[%s189 + $0x18] sm:$0x22]
          %v2932 = vunpack.c.l.bf16 %v2928
          %v2933 = vunpack.c.h.bf16 %v2928
          %v2934 = vunpack.c.l.bf16 %v2929
          %v2935 = vunpack.c.h.bf16 %v2929
          %v2936 = vunpack.c.l.bf16 %v2930
          %v2937 = vunpack.c.h.bf16 %v2930
          %v2938 = vunpack.c.l.bf16 %v2931
          %v2939 = vunpack.c.h.bf16 %v2931
          %v2942 = vunpack.c.l.b16 %v2918
          %v2943 = vunpack.c.l.b16 %v2919
          %v2944 = vrot.slane %v2942, 4
          %v2945 = vrot.slane %v2943, 3
          %v2946 = vsel %vm2359, %v2945, %v2944
          %v2947 = vpack.c.b16 %v2946, %v2946
          %2949 = vmatprep.subr.bf16.mxu0 %v2104
          %2950 = vmatpush1.bf16.msra.mxu0 %v2103
          %2951 = vmatprep.subr.bf16.mxu0 %v2108
          %2952 = vmatpush1.bf16.msra.mxu0 %v2107
          %2953 = vmatprep.subr.bf16.mxu0 %v2112
          %2954 = vmatpush1.bf16.msra.mxu0 %v2111
          %2955 = vmatprep.subr.bf16.mxu0 %v2116
          %2956 = vmatpush1.bf16.msra.mxu0 %v2115
          %2957 = vmatprep.subr.bf16.mxu0 %v2120
          %2958 = vmatpush1.bf16.msra.mxu0 %v2119
          %2959 = vmatprep.subr.bf16.mxu0 %v2124
          %2960 = vmatpush1.bf16.msra.mxu0 %v2123
          %2961 = vmatprep.subr.bf16.mxu0 %v2128
          %2962 = vmatpush1.bf16.msra.mxu0 %v2127
          %2963 = vmatprep.subr.bf16.mxu0 %v2132
          %2964 = vmatpush1.bf16.msra.mxu0 %v2131
          %2965 = vmatprep.subr.bf16.mxu0 0
          %2966 = vmatpush1.bf16.msra.mxu0 0
          %2967 = vmatprep.subr.bf16.mxu0 0
          %2968 = vmatpush1.bf16.msra.mxu0 0
          %2969 = vmatprep.subr.bf16.mxu0 0
          %2970 = vmatpush1.bf16.msra.mxu0 0
          %2971 = vmatprep.subr.bf16.mxu0 0
          %2972 = vmatpush1.bf16.msra.mxu0 0
          %2973 = vmatprep.subr.bf16.mxu0 0
          %2974 = vmatpush1.bf16.msra.mxu0 0
          %2975 = vmatprep.subr.bf16.mxu0 0
          %2976 = vmatpush1.bf16.msra.mxu0 0
          %2977 = vmatprep.subr.bf16.mxu0 0
          %2978 = vmatpush1.bf16.msra.mxu0 0
          %2979 = vmatprep.subr.bf16.mxu0 0
          %2980 = vmatpush1.bf16.msra.mxu0 0
          %2981 = vmatprep.mubr.bf16.mxu0 0
          %2982 = vmatmul.mubr.bf16.gmra.mrb[0].mxu0 %v2947
          %v2983 = vpop.f32.mrb[0].mxu0
          %v2984 = vadd.f32 0.0, %v2983
          %v2985 = vpop.f32.mrb[0].mxu0
          %v2986 = vadd.f32 0.0, %v2985
          %v2987 = vpop.f32.mrb[0].mxu0
          %v2988 = vpop.f32.mrb[0].mxu0
          %2989 = vdwg.mxu0
          %2990 = vmatprep.subr.bf16.mxu0 %v2106
          %2991 = vmatpush1.bf16.msra.mxu0 %v2105
          %2992 = vmatprep.subr.bf16.mxu0 %v2110
          %2993 = vmatpush1.bf16.msra.mxu0 %v2109
          %2994 = vmatprep.subr.bf16.mxu0 %v2114
          %2995 = vmatpush1.bf16.msra.mxu0 %v2113
          %2996 = vmatprep.subr.bf16.mxu0 %v2118
          %2997 = vmatpush1.bf16.msra.mxu0 %v2117
          %2998 = vmatprep.subr.bf16.mxu0 %v2122
          %2999 = vmatpush1.bf16.msra.mxu0 %v2121
          %3000 = vmatprep.subr.bf16.mxu0 %v2126
          %3001 = vmatpush1.bf16.msra.mxu0 %v2125
          %3002 = vmatprep.subr.bf16.mxu0 %v2130
          %3003 = vmatpush1.bf16.msra.mxu0 %v2129
          %3004 = vmatprep.subr.bf16.mxu0 %v2134
          %3005 = vmatpush1.bf16.msra.mxu0 %v2133
          %3006 = vmatprep.subr.bf16.mxu0 0
          %3007 = vmatpush1.bf16.msra.mxu0 0
          %3008 = vmatprep.subr.bf16.mxu0 0
          %3009 = vmatpush1.bf16.msra.mxu0 0
          %3010 = vmatprep.subr.bf16.mxu0 0
          %3011 = vmatpush1.bf16.msra.mxu0 0
          %3012 = vmatprep.subr.bf16.mxu0 0
          %3013 = vmatpush1.bf16.msra.mxu0 0
          %3014 = vmatprep.subr.bf16.mxu0 0
          %3015 = vmatpush1.bf16.msra.mxu0 0
          %3016 = vmatprep.subr.bf16.mxu0 0
          %3017 = vmatpush1.bf16.msra.mxu0 0
          %3018 = vmatprep.subr.bf16.mxu0 0
          %3019 = vmatpush1.bf16.msra.mxu0 0
          %3020 = vmatprep.subr.bf16.mxu0 0
          %3021 = vmatpush1.bf16.msra.mxu0 0
          %3022 = vmatprep.mubr.bf16.mxu0 0
          %3023 = vmatmul.mubr.bf16.gmra.mrb[0].mxu0 %v2947
          %v3024 = vpop.f32.mrb[0].mxu0
          %v3025 = vadd.f32 0.0, %v3024
          %v3026 = vpop.f32.mrb[0].mxu0
          %v3027 = vadd.f32 0.0, %v3026
          %v3028 = vpop.f32.mrb[0].mxu0
          %v3029 = vpop.f32.mrb[0].mxu0
          %3030 = vdwg.mxu0
          %v3035 = vrot.slane %v2984, 5
          %v3036 = vrot.slane %v2986, 5
          %v3037 = vrot.slane %v3025, 5
          %v3038 = vrot.slane %v3027, 5
          %v3039 = vrot.slane %v2984, 6
          %v3040 = vrot.slane %v2986, 6
          %v3041 = vrot.slane %v3025, 6
          %v3042 = vrot.slane %v3027, 6
          %v3051 = vadd.f32 %v2932, %v3035
          %v3052 = vadd.f32 %v2933, %v3036
          %v3053 = vadd.f32 %v2934, %v3037
          %v3054 = vadd.f32 %v2935, %v3038
          %v3055 = vadd.f32 %v2936, %v3039
          %v3056 = vadd.f32 %v2937, %v3040
          %v3057 = vadd.f32 %v2938, %v3041
          %v3058 = vadd.f32 %v2939, %v3042
          %v3059 = vxor.u32 %v3051, 2147483648
          %v3060 = vxor.u32 %v3055, 2147483648
          %v3061 = vmul.f32 %v3059, 1.442695
          %v3062 = vpow.pop %v3061
          %v3063 = vmul.f32 %v3060, 1.442695
          %v3064 = vpow.pop %v3063
          %v3065 = vadd.f32 %v3062, 1.0
          %v3066 = vadd.f32 %v3064, 1.0
          %v3067 = vrcp.pop %v3065
          %v3068 = vmul.f32 1.0, %v3067
          %v3069 = vrcp.pop %v3066
          %v3070 = vmul.f32 1.0, %v3069
          %v3071 = vxor.u32 %v3052, 2147483648
          %v3072 = vxor.u32 %v3056, 2147483648
          %v3073 = vmul.f32 %v3071, 1.442695
          %v3074 = vpow.pop %v3073
          %v3075 = vmul.f32 %v3072, 1.442695
          %v3076 = vpow.pop %v3075
          %v3077 = vadd.f32 %v3074, 1.0
          %v3078 = vadd.f32 %v3076, 1.0
          %v3079 = vrcp.pop %v3077
          %v3080 = vmul.f32 1.0, %v3079
          %v3081 = vrcp.pop %v3078
          %v3082 = vmul.f32 1.0, %v3081
          %v3083 = vtanh.pop %v3053
          %v3084 = vtanh.pop %v3057
          %v3085 = vxor.u32 %v3054, 2147483648
          %v3086 = vxor.u32 %v3058, 2147483648
          %v3087 = vmul.f32 %v3085, 1.442695
          %v3088 = vpow.pop %v3087
          %v3089 = vmul.f32 %v3086, 1.442695
          %v3090 = vpow.pop %v3089
          %v3091 = vadd.f32 %v3088, 1.0
          %v3092 = vadd.f32 %v3090, 1.0
          %v3093 = vrcp.pop %v3091
          %v3094 = vmul.f32 1.0, %v3093
          %v3095 = vrcp.pop %v3092
          %v3096 = vmul.f32 1.0, %v3095
          %v3099 = vrot.slane %v2912, 1
          %v3100 = vrot.slane %v2913, 1
          %v3103 = vmul.f32 %v3080, %v3099
          %v3104 = vmul.f32 %v3082, %v3100
          %v3105 = vmul.f32 %v3068, %v3083
          %v3106 = vmul.f32 %v3070, %v3084
          %v3107 = vadd.f32 %v3103, %v3105
          %v3108 = vadd.f32 %v3104, %v3106
          %v3109 = vtanh.pop %v3107
          %v3110 = vtanh.pop %v3108
          %v3111 = vmul.f32 %v3094, %v3109
          %v3112 = vmul.f32 %v3096, %v3110
          %v3113 = vpack.c.bf16 %v3111, %v3111
          %v3114 = vpack.c.bf16 %v3112, %v3112
          %vm3115 = vcmask 1041409
          %vm3116 = vsmask.f32 7942
          %vm3117 = vmand %vm3115, %vm3116
          %v3118 = vld [vmem:[%s211] sm:$0x2]
          %v3119 = vsel %vm3117, %v3113, %v3118
          %3120 = vst [vmem:[%s211] sm:$0x2] %v3119
          %v3121 = vld [vmem:[%s211 + $0x4] sm:$0x2]
          %v3122 = vsel %vm3117, %v3114, %v3121
          %3123 = vst [vmem:[%s211 + $0x4] sm:$0x2] %v3122
          %v3124 = vld [vmem:[%s189] sm:$0x22]
          %v3125 = vld [vmem:[%s189 + $0x8] sm:$0x22]
          %v3126 = vld [vmem:[%s189 + $0x10] sm:$0x22]
          %v3127 = vld [vmem:[%s189 + $0x18] sm:$0x22]
          %v3128 = vunpack.c.l.bf16 %v3124
          %v3129 = vunpack.c.h.bf16 %v3124
          %v3130 = vunpack.c.l.bf16 %v3125
          %v3131 = vunpack.c.h.bf16 %v3125
          %v3132 = vunpack.c.l.bf16 %v3126
          %v3133 = vunpack.c.h.bf16 %v3126
          %v3134 = vunpack.c.l.bf16 %v3127
          %v3135 = vunpack.c.h.bf16 %v3127
          %v3138 = vunpack.c.l.b16 %v3113
          %v3139 = vunpack.c.l.b16 %v3114
          %v3140 = vrot.slane %v3138, 3
          %v3141 = vrot.slane %v3139, 2
          %v3142 = vsel %vm2359, %v3141, %v3140
          %v3143 = vpack.c.b16 %v3142, %v3142
          %3145 = vmatprep.subr.bf16.mxu0 %v2104
          %3146 = vmatpush1.bf16.msra.mxu0 %v2103
          %3147 = vmatprep.subr.bf16.mxu0 %v2108
          %3148 = vmatpush1.bf16.msra.mxu0 %v2107
          %3149 = vmatprep.subr.bf16.mxu0 %v2112
          %3150 = vmatpush1.bf16.msra.mxu0 %v2111
          %3151 = vmatprep.subr.bf16.mxu0 %v2116
          %3152 = vmatpush1.bf16.msra.mxu0 %v2115
          %3153 = vmatprep.subr.bf16.mxu0 %v2120
          %3154 = vmatpush1.bf16.msra.mxu0 %v2119
          %3155 = vmatprep.subr.bf16.mxu0 %v2124
          %3156 = vmatpush1.bf16.msra.mxu0 %v2123
          %3157 = vmatprep.subr.bf16.mxu0 %v2128
          %3158 = vmatpush1.bf16.msra.mxu0 %v2127
          %3159 = vmatprep.subr.bf16.mxu0 %v2132
          %3160 = vmatpush1.bf16.msra.mxu0 %v2131
          %3161 = vmatprep.subr.bf16.mxu0 0
          %3162 = vmatpush1.bf16.msra.mxu0 0
          %3163 = vmatprep.subr.bf16.mxu0 0
          %3164 = vmatpush1.bf16.msra.mxu0 0
          %3165 = vmatprep.subr.bf16.mxu0 0
          %3166 = vmatpush1.bf16.msra.mxu0 0
          %3167 = vmatprep.subr.bf16.mxu0 0
          %3168 = vmatpush1.bf16.msra.mxu0 0
          %3169 = vmatprep.subr.bf16.mxu0 0
          %3170 = vmatpush1.bf16.msra.mxu0 0
          %3171 = vmatprep.subr.bf16.mxu0 0
          %3172 = vmatpush1.bf16.msra.mxu0 0
          %3173 = vmatprep.subr.bf16.mxu0 0
          %3174 = vmatpush1.bf16.msra.mxu0 0
          %3175 = vmatprep.subr.bf16.mxu0 0
          %3176 = vmatpush1.bf16.msra.mxu0 0
          %3177 = vmatprep.mubr.bf16.mxu0 0
          %3178 = vmatmul.mubr.bf16.gmra.mrb[0].mxu0 %v3143
          %v3179 = vpop.f32.mrb[0].mxu0
          %v3180 = vadd.f32 0.0, %v3179
          %v3181 = vpop.f32.mrb[0].mxu0
          %v3182 = vadd.f32 0.0, %v3181
          %v3183 = vpop.f32.mrb[0].mxu0
          %v3184 = vpop.f32.mrb[0].mxu0
          %3185 = vdwg.mxu0
          %3186 = vmatprep.subr.bf16.mxu0 %v2106
          %3187 = vmatpush1.bf16.msra.mxu0 %v2105
          %3188 = vmatprep.subr.bf16.mxu0 %v2110
          %3189 = vmatpush1.bf16.msra.mxu0 %v2109
          %3190 = vmatprep.subr.bf16.mxu0 %v2114
          %3191 = vmatpush1.bf16.msra.mxu0 %v2113
          %3192 = vmatprep.subr.bf16.mxu0 %v2118
          %3193 = vmatpush1.bf16.msra.mxu0 %v2117
          %3194 = vmatprep.subr.bf16.mxu0 %v2122
          %3195 = vmatpush1.bf16.msra.mxu0 %v2121
          %3196 = vmatprep.subr.bf16.mxu0 %v2126
          %3197 = vmatpush1.bf16.msra.mxu0 %v2125
          %3198 = vmatprep.subr.bf16.mxu0 %v2130
          %3199 = vmatpush1.bf16.msra.mxu0 %v2129
          %3200 = vmatprep.subr.bf16.mxu0 %v2134
          %3201 = vmatpush1.bf16.msra.mxu0 %v2133
          %3202 = vmatprep.subr.bf16.mxu0 0
          %3203 = vmatpush1.bf16.msra.mxu0 0
          %3204 = vmatprep.subr.bf16.mxu0 0
          %3205 = vmatpush1.bf16.msra.mxu0 0
          %3206 = vmatprep.subr.bf16.mxu0 0
          %3207 = vmatpush1.bf16.msra.mxu0 0
          %3208 = vmatprep.subr.bf16.mxu0 0
          %3209 = vmatpush1.bf16.msra.mxu0 0
          %3210 = vmatprep.subr.bf16.mxu0 0
          %3211 = vmatpush1.bf16.msra.mxu0 0
          %3212 = vmatprep.subr.bf16.mxu0 0
          %3213 = vmatpush1.bf16.msra.mxu0 0
          %3214 = vmatprep.subr.bf16.mxu0 0
          %3215 = vmatpush1.bf16.msra.mxu0 0
          %3216 = vmatprep.subr.bf16.mxu0 0
          %3217 = vmatpush1.bf16.msra.mxu0 0
          %3218 = vmatprep.mubr.bf16.mxu0 0
          %3219 = vmatmul.mubr.bf16.gmra.mrb[0].mxu0 %v3143
          %v3220 = vpop.f32.mrb[0].mxu0
          %v3221 = vadd.f32 0.0, %v3220
          %v3222 = vpop.f32.mrb[0].mxu0
          %v3223 = vadd.f32 0.0, %v3222
          %v3224 = vpop.f32.mrb[0].mxu0
          %v3225 = vpop.f32.mrb[0].mxu0
          %3226 = vdwg.mxu0
          %v3231 = vrot.slane %v3180, 6
          %v3232 = vrot.slane %v3182, 6
          %v3233 = vrot.slane %v3221, 6
          %v3234 = vrot.slane %v3223, 6
          %v3235 = vrot.slane %v3180, 7
          %v3236 = vrot.slane %v3182, 7
          %v3237 = vrot.slane %v3221, 7
          %v3238 = vrot.slane %v3223, 7
          %v3247 = vadd.f32 %v3128, %v3231
          %v3248 = vadd.f32 %v3129, %v3232
          %v3249 = vadd.f32 %v3130, %v3233
          %v3250 = vadd.f32 %v3131, %v3234
          %v3251 = vadd.f32 %v3132, %v3235
          %v3252 = vadd.f32 %v3133, %v3236
          %v3253 = vadd.f32 %v3134, %v3237
          %v3254 = vadd.f32 %v3135, %v3238
          %v3255 = vxor.u32 %v3247, 2147483648
          %v3256 = vxor.u32 %v3251, 2147483648
          %v3257 = vmul.f32 %v3255, 1.442695
          %v3258 = vpow.pop %v3257
          %v3259 = vmul.f32 %v3256, 1.442695
          %v3260 = vpow.pop %v3259
          %v3261 = vadd.f32 %v3258, 1.0
          %v3262 = vadd.f32 %v3260, 1.0
          %v3263 = vrcp.pop %v3261
          %v3264 = vmul.f32 1.0, %v3263
          %v3265 = vrcp.pop %v3262
          %v3266 = vmul.f32 1.0, %v3265
          %v3267 = vxor.u32 %v3248, 2147483648
          %v3268 = vxor.u32 %v3252, 2147483648
          %v3269 = vmul.f32 %v3267, 1.442695
          %v3270 = vpow.pop %v3269
          %v3271 = vmul.f32 %v3268, 1.442695
          %v3272 = vpow.pop %v3271
          %v3273 = vadd.f32 %v3270, 1.0
          %v3274 = vadd.f32 %v3272, 1.0
          %v3275 = vrcp.pop %v3273
          %v3276 = vmul.f32 1.0, %v3275
          %v3277 = vrcp.pop %v3274
          %v3278 = vmul.f32 1.0, %v3277
          %v3279 = vtanh.pop %v3249
          %v3280 = vtanh.pop %v3253
          %v3281 = vxor.u32 %v3250, 2147483648
          %v3282 = vxor.u32 %v3254, 2147483648
          %v3283 = vmul.f32 %v3281, 1.442695
          %v3284 = vpow.pop %v3283
          %v3285 = vmul.f32 %v3282, 1.442695
          %v3286 = vpow.pop %v3285
          %v3287 = vadd.f32 %v3284, 1.0
          %v3288 = vadd.f32 %v3286, 1.0
          %v3289 = vrcp.pop %v3287
          %v3290 = vmul.f32 1.0, %v3289
          %v3291 = vrcp.pop %v3288
          %v3292 = vmul.f32 1.0, %v3291
          %v3295 = vrot.slane %v3107, 1
          %v3296 = vrot.slane %v3108, 1
          %v3299 = vmul.f32 %v3276, %v3295
          %v3300 = vmul.f32 %v3278, %v3296
          %v3301 = vmul.f32 %v3264, %v3279
          %v3302 = vmul.f32 %v3266, %v3280
          %v3303 = vadd.f32 %v3299, %v3301
          %v3304 = vadd.f32 %v3300, %v3302
          %v3305 = vtanh.pop %v3303
          %v3306 = vtanh.pop %v3304
          %v3307 = vmul.f32 %v3290, %v3305
          %v3308 = vmul.f32 %v3292, %v3306
          %v3309 = vpack.c.bf16 %v3307, %v3307
          %v3310 = vpack.c.bf16 %v3308, %v3308
          %vm3311 = vsmask.f32 1280
          %vm3312 = vmand %vm3115, %vm3311
          %v3313 = vld [vmem:[%s211] sm:$0x2]
          %v3314 = vsel %vm3312, %v3309, %v3313
          %3315 = vst [vmem:[%s211] sm:$0x2] %v3314
          %v3316 = vld [vmem:[%s211 + $0x4] sm:$0x2]
          %v3317 = vsel %vm3312, %v3310, %v3316
          %3318 = vst [vmem:[%s211 + $0x4] sm:$0x2] %v3317
          %v3319 = vld [vmem:[%s189] sm:$0x11]
          %v3320 = vld [vmem:[%s189 + $0x8] sm:$0x11]
          %v3321 = vld [vmem:[%s189 + $0x10] sm:$0x11]
          %v3322 = vld [vmem:[%s189 + $0x18] sm:$0x11]
          %v3323 = vunpack.c.l.bf16 %v3319
          %v3324 = vunpack.c.h.bf16 %v3319
          %v3325 = vunpack.c.l.bf16 %v3320
          %v3326 = vunpack.c.h.bf16 %v3320
          %v3327 = vunpack.c.l.bf16 %v3321
          %v3328 = vunpack.c.h.bf16 %v3321
          %v3329 = vunpack.c.l.bf16 %v3322
          %v3330 = vunpack.c.h.bf16 %v3322
          %v3333 = vunpack.c.l.b16 %v3309
          %v3334 = vunpack.c.l.b16 %v3310
          %v3335 = vrot.slane %v3333, 2
          %v3336 = vrot.slane %v3334, 1
          %v3337 = vsel %vm2359, %v3336, %v3335
          %v3338 = vpack.c.b16 %v3337, %v3337
          %3340 = vmatprep.subr.bf16.mxu0 %v2104
          %3341 = vmatpush1.bf16.msra.mxu0 %v2103
          %3342 = vmatprep.subr.bf16.mxu0 %v2108
          %3343 = vmatpush1.bf16.msra.mxu0 %v2107
          %3344 = vmatprep.subr.bf16.mxu0 %v2112
          %3345 = vmatpush1.bf16.msra.mxu0 %v2111
          %3346 = vmatprep.subr.bf16.mxu0 %v2116
          %3347 = vmatpush1.bf16.msra.mxu0 %v2115
          %3348 = vmatprep.subr.bf16.mxu0 %v2120
          %3349 = vmatpush1.bf16.msra.mxu0 %v2119
          %3350 = vmatprep.subr.bf16.mxu0 %v2124
          %3351 = vmatpush1.bf16.msra.mxu0 %v2123
          %3352 = vmatprep.subr.bf16.mxu0 %v2128
          %3353 = vmatpush1.bf16.msra.mxu0 %v2127
          %3354 = vmatprep.subr.bf16.mxu0 %v2132
          %3355 = vmatpush1.bf16.msra.mxu0 %v2131
          %3356 = vmatprep.subr.bf16.mxu0 0
          %3357 = vmatpush1.bf16.msra.mxu0 0
          %3358 = vmatprep.subr.bf16.mxu0 0
          %3359 = vmatpush1.bf16.msra.mxu0 0
          %3360 = vmatprep.subr.bf16.mxu0 0
          %3361 = vmatpush1.bf16.msra.mxu0 0
          %3362 = vmatprep.subr.bf16.mxu0 0
          %3363 = vmatpush1.bf16.msra.mxu0 0
          %3364 = vmatprep.subr.bf16.mxu0 0
          %3365 = vmatpush1.bf16.msra.mxu0 0
          %3366 = vmatprep.subr.bf16.mxu0 0
          %3367 = vmatpush1.bf16.msra.mxu0 0
          %3368 = vmatprep.subr.bf16.mxu0 0
          %3369 = vmatpush1.bf16.msra.mxu0 0
          %3370 = vmatprep.subr.bf16.mxu0 0
          %3371 = vmatpush1.bf16.msra.mxu0 0
          %3372 = vmatprep.mubr.bf16.mxu0 0
          %3373 = vmatmul.mubr.bf16.gmra.mrb[0].mxu0 %v3338
          %v3374 = vpop.f32.mrb[0].mxu0
          %v3375 = vadd.f32 0.0, %v3374
          %v3376 = vpop.f32.mrb[0].mxu0
          %v3377 = vadd.f32 0.0, %v3376
          %v3378 = vpop.f32.mrb[0].mxu0
          %v3379 = vpop.f32.mrb[0].mxu0
          %3380 = vdwg.mxu0
          %3381 = vmatprep.subr.bf16.mxu0 %v2106
          %3382 = vmatpush1.bf16.msra.mxu0 %v2105
          %3383 = vmatprep.subr.bf16.mxu0 %v2110
          %3384 = vmatpush1.bf16.msra.mxu0 %v2109
          %3385 = vmatprep.subr.bf16.mxu0 %v2114
          %3386 = vmatpush1.bf16.msra.mxu0 %v2113
          %3387 = vmatprep.subr.bf16.mxu0 %v2118
          %3388 = vmatpush1.bf16.msra.mxu0 %v2117
          %3389 = vmatprep.subr.bf16.mxu0 %v2122
          %3390 = vmatpush1.bf16.msra.mxu0 %v2121
          %3391 = vmatprep.subr.bf16.mxu0 %v2126
          %3392 = vmatpush1.bf16.msra.mxu0 %v2125
          %3393 = vmatprep.subr.bf16.mxu0 %v2130
          %3394 = vmatpush1.bf16.msra.mxu0 %v2129
          %3395 = vmatprep.subr.bf16.mxu0 %v2134
          %3396 = vmatpush1.bf16.msra.mxu0 %v2133
          %3397 = vmatprep.subr.bf16.mxu0 0
          %3398 = vmatpush1.bf16.msra.mxu0 0
          %3399 = vmatprep.subr.bf16.mxu0 0
          %3400 = vmatpush1.bf16.msra.mxu0 0
          %3401 = vmatprep.subr.bf16.mxu0 0
          %3402 = vmatpush1.bf16.msra.mxu0 0
          %3403 = vmatprep.subr.bf16.mxu0 0
          %3404 = vmatpush1.bf16.msra.mxu0 0
          %3405 = vmatprep.subr.bf16.mxu0 0
          %3406 = vmatpush1.bf16.msra.mxu0 0
          %3407 = vmatprep.subr.bf16.mxu0 0
          %3408 = vmatpush1.bf16.msra.mxu0 0
          %3409 = vmatprep.subr.bf16.mxu0 0
          %3410 = vmatpush1.bf16.msra.mxu0 0
          %3411 = vmatprep.subr.bf16.mxu0 0
          %3412 = vmatpush1.bf16.msra.mxu0 0
          %3413 = vmatprep.mubr.bf16.mxu0 0
          %3414 = vmatmul.mubr.bf16.gmra.mrb[0].mxu0 %v3338
          %v3415 = vpop.f32.mrb[0].mxu0
          %v3416 = vadd.f32 0.0, %v3415
          %v3417 = vpop.f32.mrb[0].mxu0
          %v3418 = vadd.f32 0.0, %v3417
          %v3419 = vpop.f32.mrb[0].mxu0
          %v3420 = vpop.f32.mrb[0].mxu0
          %3421 = vdwg.mxu0
          %v3426 = vrot.slane %v3375, 7
          %v3427 = vrot.slane %v3377, 7
          %v3428 = vrot.slane %v3416, 7
          %v3429 = vrot.slane %v3418, 7
          %v3438 = vadd.f32 %v3323, %v3426
          %v3439 = vadd.f32 %v3324, %v3427
          %v3440 = vadd.f32 %v3325, %v3428
          %v3441 = vadd.f32 %v3326, %v3429
          %v3442 = vadd.f32 %v3327, %v3375
          %v3443 = vadd.f32 %v3328, %v3377
          %v3444 = vadd.f32 %v3329, %v3416
          %v3445 = vadd.f32 %v3330, %v3418
          %v3446 = vxor.u32 %v3438, 2147483648
          %v3447 = vxor.u32 %v3442, 2147483648
          %v3448 = vmul.f32 %v3446, 1.442695
          %v3449 = vpow.pop %v3448
          %v3450 = vmul.f32 %v3447, 1.442695
          %v3451 = vpow.pop %v3450
          %v3452 = vadd.f32 %v3449, 1.0
          %v3453 = vadd.f32 %v3451, 1.0
          %v3454 = vrcp.pop %v3452
          %v3455 = vmul.f32 1.0, %v3454
          %v3456 = vrcp.pop %v3453
          %v3457 = vmul.f32 1.0, %v3456
          %v3458 = vxor.u32 %v3439, 2147483648
          %v3459 = vxor.u32 %v3443, 2147483648
          %v3460 = vmul.f32 %v3458, 1.442695
          %v3461 = vpow.pop %v3460
          %v3462 = vmul.f32 %v3459, 1.442695
          %v3463 = vpow.pop %v3462
          %v3464 = vadd.f32 %v3461, 1.0
          %v3465 = vadd.f32 %v3463, 1.0
          %v3466 = vrcp.pop %v3464
          %v3467 = vmul.f32 1.0, %v3466
          %v3468 = vrcp.pop %v3465
          %v3469 = vmul.f32 1.0, %v3468
          %v3470 = vtanh.pop %v3440
          %v3471 = vtanh.pop %v3444
          %v3472 = vxor.u32 %v3441, 2147483648
          %v3473 = vxor.u32 %v3445, 2147483648
          %v3474 = vmul.f32 %v3472, 1.442695
          %v3475 = vpow.pop %v3474
          %v3476 = vmul.f32 %v3473, 1.442695
          %v3477 = vpow.pop %v3476
          %v3478 = vadd.f32 %v3475, 1.0
          %v3479 = vadd.f32 %v3477, 1.0
          %v3480 = vrcp.pop %v3478
          %v3481 = vmul.f32 1.0, %v3480
          %v3482 = vrcp.pop %v3479
          %v3483 = vmul.f32 1.0, %v3482
          %v3486 = vrot.slane %v3303, 1
          %v3487 = vrot.slane %v3304, 1
          %v3490 = vmul.f32 %v3467, %v3486
          %v3491 = vmul.f32 %v3469, %v3487
          %v3492 = vmul.f32 %v3455, %v3470
          %v3493 = vmul.f32 %v3457, %v3471
          %v3494 = vadd.f32 %v3490, %v3492
          %v3495 = vadd.f32 %v3491, %v3493
          %v3496 = vtanh.pop %v3494
          %v3497 = vtanh.pop %v3495
          %v3498 = vmul.f32 %v3481, %v3496
          %v3499 = vmul.f32 %v3483, %v3497
          %v3500 = vpack.c.bf16 %v3498, %v3498
          %v3501 = vpack.c.bf16 %v3499, %v3499
          %vm3502 = vcmask 1040384
          %vm3503 = vsmask.f32 7938
          %vm3504 = vmand %vm3502, %vm3503
          %v3505 = vld [vmem:[%s211] sm:$0x1]
          %v3506 = vsel %vm3504, %v3500, %v3505
          %3507 = vst [vmem:[%s211] sm:$0x1] %v3506
          %v3508 = vld [vmem:[%s211 + $0x4] sm:$0x1]
          %v3509 = vsel %vm3504, %v3501, %v3508
          %3510 = vst [vmem:[%s211 + $0x4] sm:$0x1] %v3509
          %v3511 = vld [vmem:[%s189] sm:$0x11]
          %v3512 = vld [vmem:[%s189 + $0x8] sm:$0x11]
          %v3513 = vld [vmem:[%s189 + $0x10] sm:$0x11]
          %v3514 = vld [vmem:[%s189 + $0x18] sm:$0x11]
          %v3515 = vunpack.c.l.bf16 %v3511
          %v3516 = vunpack.c.h.bf16 %v3511
          %v3517 = vunpack.c.l.bf16 %v3512
          %v3518 = vunpack.c.h.bf16 %v3512
          %v3519 = vunpack.c.l.bf16 %v3513
          %v3520 = vunpack.c.h.bf16 %v3513
          %v3521 = vunpack.c.l.bf16 %v3514
          %v3522 = vunpack.c.h.bf16 %v3514
          %v3525 = vunpack.c.l.b16 %v3500
          %v3526 = vunpack.c.l.b16 %v3501
          %v3527 = vrot.slane %v3525, 1
          %v3528 = vsel %vm2359, %v3526, %v3527
          %v3529 = vpack.c.b16 %v3528, %v3528
          %3531 = vmatprep.subr.bf16.mxu0 %v2104
          %3532 = vmatpush1.bf16.msra.mxu0 %v2103
          %3533 = vmatprep.subr.bf16.mxu0 %v2108
          %3534 = vmatpush1.bf16.msra.mxu0 %v2107
          %3535 = vmatprep.subr.bf16.mxu0 %v2112
          %3536 = vmatpush1.bf16.msra.mxu0 %v2111
          %3537 = vmatprep.subr.bf16.mxu0 %v2116
          %3538 = vmatpush1.bf16.msra.mxu0 %v2115
          %3539 = vmatprep.subr.bf16.mxu0 %v2120
          %3540 = vmatpush1.bf16.msra.mxu0 %v2119
          %3541 = vmatprep.subr.bf16.mxu0 %v2124
          %3542 = vmatpush1.bf16.msra.mxu0 %v2123
          %3543 = vmatprep.subr.bf16.mxu0 %v2128
          %3544 = vmatpush1.bf16.msra.mxu0 %v2127
          %3545 = vmatprep.subr.bf16.mxu0 %v2132
          %3546 = vmatpush1.bf16.msra.mxu0 %v2131
          %3547 = vmatprep.subr.bf16.mxu0 0
          %3548 = vmatpush1.bf16.msra.mxu0 0
          %3549 = vmatprep.subr.bf16.mxu0 0
          %3550 = vmatpush1.bf16.msra.mxu0 0
          %3551 = vmatprep.subr.bf16.mxu0 0
          %3552 = vmatpush1.bf16.msra.mxu0 0
          %3553 = vmatprep.subr.bf16.mxu0 0
          %3554 = vmatpush1.bf16.msra.mxu0 0
          %3555 = vmatprep.subr.bf16.mxu0 0
          %3556 = vmatpush1.bf16.msra.mxu0 0
          %3557 = vmatprep.subr.bf16.mxu0 0
          %3558 = vmatpush1.bf16.msra.mxu0 0
          %3559 = vmatprep.subr.bf16.mxu0 0
          %3560 = vmatpush1.bf16.msra.mxu0 0
          %3561 = vmatprep.subr.bf16.mxu0 0
          %3562 = vmatpush1.bf16.msra.mxu0 0
          %3563 = vmatprep.mubr.bf16.mxu0 0
          %3564 = vmatmul.mubr.bf16.gmra.mrb[0].mxu0 %v3529
          %v3565 = vpop.f32.mrb[0].mxu0
          %v3566 = vadd.f32 0.0, %v3565
          %v3567 = vpop.f32.mrb[0].mxu0
          %v3568 = vadd.f32 0.0, %v3567
          %v3569 = vpop.f32.mrb[0].mxu0
          %v3570 = vpop.f32.mrb[0].mxu0
          %3571 = vdwg.mxu0
          %3572 = vmatprep.subr.bf16.mxu0 %v2106
          %3573 = vmatpush1.bf16.msra.mxu0 %v2105
          %3574 = vmatprep.subr.bf16.mxu0 %v2110
          %3575 = vmatpush1.bf16.msra.mxu0 %v2109
          %3576 = vmatprep.subr.bf16.mxu0 %v2114
          %3577 = vmatpush1.bf16.msra.mxu0 %v2113
          %3578 = vmatprep.subr.bf16.mxu0 %v2118
          %3579 = vmatpush1.bf16.msra.mxu0 %v2117
          %3580 = vmatprep.subr.bf16.mxu0 %v2122
          %3581 = vmatpush1.bf16.msra.mxu0 %v2121
          %3582 = vmatprep.subr.bf16.mxu0 %v2126
          %3583 = vmatpush1.bf16.msra.mxu0 %v2125
          %3584 = vmatprep.subr.bf16.mxu0 %v2130
          %3585 = vmatpush1.bf16.msra.mxu0 %v2129
          %3586 = vmatprep.subr.bf16.mxu0 %v2134
          %3587 = vmatpush1.bf16.msra.mxu0 %v2133
          %3588 = vmatprep.subr.bf16.mxu0 0
          %3589 = vmatpush1.bf16.msra.mxu0 0
          %3590 = vmatprep.subr.bf16.mxu0 0
          %3591 = vmatpush1.bf16.msra.mxu0 0
          %3592 = vmatprep.subr.bf16.mxu0 0
          %3593 = vmatpush1.bf16.msra.mxu0 0
          %3594 = vmatprep.subr.bf16.mxu0 0
          %3595 = vmatpush1.bf16.msra.mxu0 0
          %3596 = vmatprep.subr.bf16.mxu0 0
          %3597 = vmatpush1.bf16.msra.mxu0 0
          %3598 = vmatprep.subr.bf16.mxu0 0
          %3599 = vmatpush1.bf16.msra.mxu0 0
          %3600 = vmatprep.subr.bf16.mxu0 0
          %3601 = vmatpush1.bf16.msra.mxu0 0
          %3602 = vmatprep.subr.bf16.mxu0 0
          %3603 = vmatpush1.bf16.msra.mxu0 0
          %3604 = vmatprep.mubr.bf16.mxu0 0
          %3605 = vmatmul.mubr.bf16.gmra.mrb[0].mxu0 %v3529
          %v3606 = vpop.f32.mrb[0].mxu0
          %v3607 = vadd.f32 0.0, %v3606
          %v3608 = vpop.f32.mrb[0].mxu0
          %v3609 = vadd.f32 0.0, %v3608
          %v3610 = vpop.f32.mrb[0].mxu0
          %v3611 = vpop.f32.mrb[0].mxu0
          %3612 = vdwg.mxu0
          %v3617 = vrot.slane %v3566, 1
          %v3618 = vrot.slane %v3568, 1
          %v3619 = vrot.slane %v3607, 1
          %v3620 = vrot.slane %v3609, 1
          %v3629 = vadd.f32 %v3515, %v3566
          %v3630 = vadd.f32 %v3516, %v3568
          %v3631 = vadd.f32 %v3517, %v3607
          %v3632 = vadd.f32 %v3518, %v3609
          %v3633 = vadd.f32 %v3519, %v3617
          %v3634 = vadd.f32 %v3520, %v3618
          %v3635 = vadd.f32 %v3521, %v3619
          %v3636 = vadd.f32 %v3522, %v3620
          %v3637 = vxor.u32 %v3629, 2147483648
          %v3638 = vxor.u32 %v3633, 2147483648
          %v3639 = vmul.f32 %v3637, 1.442695
          %v3640 = vpow.pop %v3639
          %v3641 = vmul.f32 %v3638, 1.442695
          %v3642 = vpow.pop %v3641
          %v3643 = vadd.f32 %v3640, 1.0
          %v3644 = vadd.f32 %v3642, 1.0
          %v3645 = vrcp.pop %v3643
          %v3646 = vmul.f32 1.0, %v3645
          %v3647 = vrcp.pop %v3644
          %v3648 = vmul.f32 1.0, %v3647
          %v3649 = vxor.u32 %v3630, 2147483648
          %v3650 = vxor.u32 %v3634, 2147483648
          %v3651 = vmul.f32 %v3649, 1.442695
          %v3652 = vpow.pop %v3651
          %v3653 = vmul.f32 %v3650, 1.442695
          %v3654 = vpow.pop %v3653
          %v3655 = vadd.f32 %v3652, 1.0
          %v3656 = vadd.f32 %v3654, 1.0
          %v3657 = vrcp.pop %v3655
          %v3658 = vmul.f32 1.0, %v3657
          %v3659 = vrcp.pop %v3656
          %v3660 = vmul.f32 1.0, %v3659
          %v3661 = vtanh.pop %v3631
          %v3662 = vtanh.pop %v3635
          %v3663 = vxor.u32 %v3632, 2147483648
          %v3664 = vxor.u32 %v3636, 2147483648
          %v3665 = vmul.f32 %v3663, 1.442695
          %v3666 = vpow.pop %v3665
          %v3667 = vmul.f32 %v3664, 1.442695
          %v3668 = vpow.pop %v3667
          %v3669 = vadd.f32 %v3666, 1.0
          %v3670 = vadd.f32 %v3668, 1.0
          %v3671 = vrcp.pop %v3669
          %v3672 = vmul.f32 1.0, %v3671
          %v3673 = vrcp.pop %v3670
          %v3674 = vmul.f32 1.0, %v3673
          %v3677 = vrot.slane %v3494, 1
          %v3678 = vrot.slane %v3495, 1
          %v3681 = vmul.f32 %v3658, %v3677
          %v3682 = vmul.f32 %v3660, %v3678
          %v3683 = vmul.f32 %v3646, %v3661
          %v3684 = vmul.f32 %v3648, %v3662
          %v3685 = vadd.f32 %v3681, %v3683
          %v3686 = vadd.f32 %v3682, %v3684
          %v3687 = vtanh.pop %v3685
          %v3688 = vtanh.pop %v3686
          %v3689 = vmul.f32 %v3672, %v3687
          %v3690 = vmul.f32 %v3674, %v3688
          %v3691 = vpack.c.bf16 %v3689, %v3689
          %v3692 = vpack.c.bf16 %v3690, %v3690
          %vm3693 = vsmask.f32 256
          %vm3694 = vmand %vm3502, %vm3693
          %v3695 = vld [vmem:[%s211] sm:$0x1]
          %v3696 = vsel %vm3694, %v3691, %v3695
          %3697 = vst [vmem:[%s211] sm:$0x1] %v3696
          %v3698 = vld [vmem:[%s211 + $0x4] sm:$0x1]
          %v3699 = vsel %vm3694, %v3692, %v3698
          %3700 = vst [vmem:[%s211 + $0x4] sm:$0x1] %v3699
          %v3703 = vrot.slane %v3690, 7
          %v3704 = vsel %vm2359, %v3703, %v3689
          %3706 = vst [vmem:[#allocation2] sm:$0x3] %v3704
          %v3709 = vrot.slane %v3686, 7
          %v3710 = vsel %vm2359, %v3709, %v3685
          %3712 = vst [vmem:[#allocation3] sm:$0x3] %v3710
        $region63: #{forward.26} parent=46 // pred_fallthru
          _
        %s3713 = sand.u32 %s101, 1
        %s3714 = sand.u32 %s101, 1
        %s3715 = smul.addr %s3714, 8
        %s3716 = scalar_lea.vmem [#allocation5], %s3715
        // Predicated region
        $region64: #{forward.26} parent=46 // pred_check
          %p3717 = pneg %p111
        $region65: #{forward.26} parent=46 // pred_check_branch
          %3719 = sbr.rel (%p3717) target = $region67
        $region66: #{forward.26} parent=46 // pred_region
          %s3720 = smul.u32 %s17, 2
          %s3721 = ssub.s32 1, %s3720
          %s3722 = smul.u32 %s3721, %s18
          %s3723 = smul.addr %s3722, 2
          %s3724 = sadd.s32 %s17, %s3723
          %s3725 = smul.addr %s3724, 4
          %s3726 = scalar_lea.vmem %s2, %s3725
          // Predicated region
          $region68: #{forward.26} parent=66 // pred_check
            _
          $region69: #{forward.26} parent=66 // pred_check_branch
            %3728 = sbr.rel (0) target = $region71
          $region70: #{forward.26} parent=66 // pred_region
            // Predicated region
            $region72: #{forward.26} parent=70 // pred_check
              _
            $region73: #{forward.26} parent=70 // pred_check_branch
              %3730 = sbr.rel target = $region75
            $region74: #{forward.26} parent=70 // pred_region
              // Predicated region
              $region87: #{forward.26} parent=74 // pred_check
                _
              $region88: #{forward.26} parent=74 // pred_check_branch
                %3747 = sbr.rel (0) target = $region90
              $region89: #{forward.26} parent=74 // pred_region
                loop: start=0, step=1, limit=1
                $region91: #{forward.26} parent=89 // loop_pre_header
                  _
                $region92: #{forward.26} parent=89 // loop_header
                  %s3749 = sphi 0, %s3753
                  %p3750 = scmp.ge.s32.totalorder %s3749, 1
                  %s3754 = sphi %s3716, %s3716
                  %s3755 = sphi %s3726, %s3726
                $region93: #{forward.26} parent=89 // loop_header_branch
                  %3752 = sbr.rel (%p3750) target = $region97
                $region94: #{forward.26} parent=89 // loop_body
                  _
                $region95: #{forward.26} parent=89 // loop_footer
                  %s3753 = sadd.s32 1, %s3749
                $region96: #{forward.26} parent=89 // loop_footer_branch
                  %3748 = sbr.rel target = $region92
                $region97: #{forward.26} parent=89 // loop_exit
                  _
                loop: start=0, step=1, limit=1
                $region98: #{forward.26} parent=89 // loop_pre_header
                  _
                $region99: #{forward.26} parent=89 // loop_header
                  %s3758 = sphi 0, %s3762
                  %p3759 = scmp.ge.s32.totalorder %s3758, 1
                  %s3763 = sphi %s3716, %s3716
                  %s3764 = sphi %s3726, %s3726
                $region100: #{forward.26} parent=89 // loop_header_branch
                  %3761 = sbr.rel (%p3759) target = $region104
                $region101: #{forward.26} parent=89 // loop_body
                  %v3765 = vld [vmem:[%s3763] sm:$0xf]
                  %3766 = vst [vmem:[%s3764] sm:$0xf] %v3765
                  %v3767 = vld [vmem:[%s3763 + $0x4] sm:$0xf]
                  %3768 = vst [vmem:[%s3764 + $0x8] sm:$0xf] %v3767
                $region102: #{forward.26} parent=89 // loop_footer
                  %s3762 = sadd.s32 1, %s3758
                $region103: #{forward.26} parent=89 // loop_footer_branch
                  %3757 = sbr.rel target = $region99
                $region104: #{forward.26} parent=89 // loop_exit
                  _
              $region90: #{forward.26} parent=74 // pred_fallthru
                _
            $region75: #{forward.26} parent=70 // pred_fallthru
              _
            // Predicated region
            $region76: #{forward.26} parent=70 // pred_check
              _
            $region77: #{forward.26} parent=70 // pred_check_branch
              %3732 = sbr.rel (0) target = $region79
            $region78: #{forward.26} parent=70 // pred_region
              loop: start=0, step=1, limit=1
              $region80: #{forward.26} parent=78 // loop_pre_header
                _
              $region81: #{forward.26} parent=78 // loop_header
                %s3735 = sphi 0, %s3739
                %p3736 = scmp.ge.s32.totalorder %s3735, 1
                %s3740 = sphi %s3716, %s3716
                %s3741 = sphi %s3726, %s3726
              $region82: #{forward.26} parent=78 // loop_header_branch
                %3738 = sbr.rel (%p3736) target = $region86
              $region83: #{forward.26} parent=78 // loop_body
                %v3742 = vld [vmem:[%s3740] sm:$0xf]
                %3743 = vst [vmem:[%s3741] sm:$0xf] %v3742
                %v3744 = vld [vmem:[%s3740 + $0x4] sm:$0xf]
                %3745 = vst [vmem:[%s3741 + $0x8] sm:$0xf] %v3744
              $region84: #{forward.26} parent=78 // loop_footer
                %s3739 = sadd.s32 1, %s3735
              $region85: #{forward.26} parent=78 // loop_footer_branch
                %3734 = sbr.rel target = $region81
              $region86: #{forward.26} parent=78 // loop_exit
                _
            $region79: #{forward.26} parent=70 // pred_fallthru
              _
          $region71: #{forward.26} parent=66 // pred_fallthru
            _
          %3769 = vnop
        $region67: #{forward.26} parent=46 // pred_fallthru
          _
      $region47: #{forward.26} parent=5 // pred_fallthru
        _
      %p3770 = scmp.le.s32.totalorder 2, %s8
      // Predicated region
      $region105: #{forward.26} parent=5 // pred_check
        %p3771 = pneg %p3770
      $region106: #{forward.26} parent=5 // pred_check_branch
        %3773 = sbr.rel (%p3771) target = $region108
      $region107: #{forward.26} parent=5 // pred_region
        %s3774 = ssub.s32 %s8, 2
        // Predicated region
        $region109: #{forward.26} parent=107 // pred_check
          %p3775 = pneg %p117
        $region110: #{forward.26} parent=107 // pred_check_branch
          %3777 = sbr.rel (%p3775) target = $region112
        $region111: #{forward.26} parent=107 // pred_region
          %s3778 = sand.u32 %s102, 1
          %s3779 = sand.u32 %s102, 1
          %s3780 = smul.addr %s3779, 8
          %s3781 = scalar_lea.vmem [#allocation5], %s3780
        $region112: #{forward.26} parent=107 // pred_fallthru
          _
      $region108: #{forward.26} parent=5 // pred_fallthru
        _
    $region6: #{forward.26} parent=1 // loop_footer
      %s12 = sadd.s32 1, %s8
    $region7: #{forward.26} parent=1 // loop_footer_branch
      %7 = sbr.rel target = $region3
    $region8: #{forward.26} parent=1 // loop_exit
      _

</llo_original>
